<compile_context>
chip_gen: v6e
topology: v6e:2x2x1
jax: 0.10.0
libtpu: 0.0.40
codegen_flags: <defaults>
</compile_context>

<pallas_src>
import math

import jax
import jax.numpy as jnp
from jax import lax
from jax.experimental import pallas as pl
from jax.experimental.pallas import tpu as pltpu

INPUT_DIM = 8          # x is (B, INPUT_DIM); the TFT forward reuses input_dim as seq_len
HIDDEN_DIM = 32
NUM_HEADS = 4          # must divide HIDDEN_DIM
HEAD_DIM = HIDDEN_DIM // NUM_HEADS
LN_EPS = 1e-5
BATCH_TILE = 8         # f32 sublane count; batch is padded/tiled to a multiple of this
SLOT = 128             # lane-aligned column slot per packed parameter block

# Packed-parameter layout: (name, n_in, n_out) for weights (stored transposed to
# (in, out) so the kernel computes x @ W + b), (name, n_out) for biases / LN params.
_D, _H = INPUT_DIM, HIDDEN_DIM
W_LAYOUT = [
    ("vs_w1", _D, _H), ("vs_w2", _H, _H), ("vs_w3", _H, _D), ("vs_w4", _D, _H),
    ("se_w", _H, _H),
    ("w_ih", _H, 4 * _H), ("w_hh", _H, 4 * _H),          # LSTM gate order i,f,g,o
    ("wq", _H, _H), ("wk", _H, _H), ("wv", _H, _H), ("wo", _H, _H),
    ("ff_w1", _H, 4 * _H), ("ff_w2", 4 * _H, _H),
    ("out_w1", _H, _H // 2), ("out_w2", _H // 2, 1),
]
B_LAYOUT = [
    ("vs_b1", _H), ("vs_b2", _H), ("vs_b3", _D), ("vs_b4", _H),
    ("se_b", _H),
    ("b_ih", 4 * _H), ("b_hh", 4 * _H),
    ("bq", _H), ("bk", _H), ("bv", _H), ("bo", _H),
    ("ff_b1", 4 * _H), ("ff_b2", _H),
    ("ln_g1", _H), ("ln_b1", _H), ("ln_g2", _H), ("ln_b2", _H),
    ("out_b1", _H // 2), ("out_b2", 1),
]
W_IDX = {name: i for i, (name, _, _) in enumerate(W_LAYOUT)}
B_IDX = {name: i for i, (name, _) in enumerate(B_LAYOUT)}
W_SLAB_SHAPE = (4 * _H, SLOT * len(W_LAYOUT))   # (128, 1920)  ~0.94 MiB f32
B_SLAB_SHAPE = (1, SLOT * len(B_LAYOUT))        # (1, 2432)


def _layernorm(x, gamma, beta):
    mu = jnp.mean(x, axis=-1, keepdims=True)
    var = jnp.mean((x - mu) ** 2, axis=-1, keepdims=True)
    return (x - mu) * lax.rsqrt(var + LN_EPS) * gamma + beta


def tft_kernel(x_ref, w_ref, b_ref, o_ref):
    f32 = jnp.float32
    D, H, S = INPUT_DIM, HIDDEN_DIM, INPUT_DIM            # seq_len == input_dim
    NH, HD = NUM_HEADS, HEAD_DIM

    x = x_ref[...]                                        # (TB, D)
    TB = x.shape[0]

    def W(name):                                          # static, 128-aligned slab slice
        i = W_IDX[name]
        _, n_in, n_out = W_LAYOUT[i]
        return w_ref[0:n_in, i * SLOT:i * SLOT + n_out]

    def Bv(name):
        i = B_IDX[name]
        _, n_out = B_LAYOUT[i]
        return b_ref[0:1, i * SLOT:i * SLOT + n_out]

    def dense(a, wn, bn):
        return jnp.dot(a, W(wn), preferred_element_type=f32) + Bv(bn)

    # ---- Variable Selection Network (internal seq_len == 1) ----
    projected = dense(x, "vs_w1", "vs_b1")
    hid = jnp.maximum(dense(projected, "vs_w2", "vs_b2"), 0.0)
    logits = dense(hid, "vs_w3", "vs_b3")
    logits = logits - jnp.max(logits, axis=-1, keepdims=True)
    ex = jnp.exp(logits)
    vs_w = ex * pl.reciprocal(jnp.sum(ex, axis=-1, keepdims=True), approx=True)
    selected = x * vs_w
    processed = jnp.maximum(dense(selected, "vs_w4", "vs_b4"), 0.0)     # (TB, H)

    # ---- Static enrichment (mean over the length-1 VSN sequence == identity) ----
    enriched = processed + dense(processed, "se_w", "se_b")             # (TB, H), same for every t

    # ---- LSTM over S timesteps (input identical at every step) ----
    gates_x = (jnp.dot(enriched, W("w_ih"), preferred_element_type=f32)
               + Bv("b_ih") + Bv("b_hh"))                               # (TB, 4H), hoisted
    w_hh = W("w_hh")                                                    # (H, 4H), hoisted
    lane = lax.broadcasted_iota(jnp.int32, (TB, 4 * H), 1)
    tanh_mask = jnp.logical_and(lane >= 2 * H, lane < 3 * H)            # g-gate lanes

    h = jnp.zeros((TB, H), f32)
    c = jnp.zeros((TB, H), f32)
    hs = []
    for _t in range(S):                                                 # static unroll, S == 8
        gates = gates_x + jnp.dot(h, w_hh, preferred_element_type=f32)  # (TB, 4H)
        # one full-vreg nonlinearity pass instead of four 32-lane slices
        act = jnp.where(tanh_mask, jnp.tanh(gates), jax.nn.sigmoid(gates))
        i_g = act[:, 0 * H:1 * H]
        f_g = act[:, 1 * H:2 * H]
        g_g = act[:, 2 * H:3 * H]
        o_g = act[:, 3 * H:4 * H]
        c = f_g * c + i_g * g_g
        h = o_g * jnp.tanh(c)
        hs.append(h)
    lstm_seq = jnp.stack(hs, axis=1)                                    # (TB, S, H), built in vregs
    h_last = h                                                          # == lstm_out[:, -1, :]

    # ---- Multi-head self attention over the LSTM sequence ----
    lstm2d = lstm_seq.reshape(TB * S, H)
    q = (jnp.dot(lstm2d, W("wq"), preferred_element_type=f32) + Bv("bq")).reshape(TB, S, H)
    k = (jnp.dot(lstm2d, W("wk"), preferred_element_type=f32) + Bv("bk")).reshape(TB, S, H)
    v = (jnp.dot(lstm2d, W("wv"), preferred_element_type=f32) + Bv("bv")).reshape(TB, S, H)
    scale = 1.0 / math.sqrt(HD)
    ctx_heads = []
    for hd in range(NH):                                                # tiny static loop; outputs
        sl = slice(hd * HD, (hd + 1) * HD)                              # gathered by lane concat
        qh, kh, vh = q[:, :, sl], k[:, :, sl], v[:, :, sl]
        scores = jnp.einsum('bqd,bkd->bqk', qh, kh, preferred_element_type=f32) * scale
        scores = scores - jnp.max(scores, axis=-1, keepdims=True)
        p = jnp.exp(scores)
        p = p * pl.reciprocal(jnp.sum(p, axis=-1, keepdims=True), approx=True)
        ctx_heads.append(jnp.einsum('bqk,bkd->bqd', p, vh, preferred_element_type=f32))
    ctx = jnp.concatenate(ctx_heads, axis=-1)                           # (TB, S, H)

    # out_proj / LayerNorm / FFN are position-wise and only the last position reaches
    # the output head -> restrict the remaining work to that row (exact result).
    ctx_last = ctx[:, S - 1, :]                                         # (TB, H)
    attn_last = jnp.dot(ctx_last, W("wo"), preferred_element_type=f32) + Bv("bo")

    # ---- Residual + LN1, FFN, Residual + LN2 (last position only) ----
    y = _layernorm(attn_last + h_last, Bv("ln_g1"), Bv("ln_b1"))        # (TB, H)
    ff = jnp.maximum(dense(y, "ff_w1", "ff_b1"), 0.0)                   # (TB, 4H)
    ff = dense(ff, "ff_w2", "ff_b2")                                    # (TB, H)
    y2 = _layernorm(ff + y, Bv("ln_g2"), Bv("ln_b2"))

    # ---- Output head ----
    o1 = jnp.maximum(dense(y2, "out_w1", "out_b1"), 0.0)                # (TB, H//2)
    o_ref[...] = dense(o1, "out_w2", "out_b2")                          # (TB, 1)


def init_params(key):
    """Deterministic synthetic parameters, shapes matching the PyTorch module
    (Linear weights stored transposed to (in, out), biases as (1, out))."""
    keys = iter(jax.random.split(key, len(W_LAYOUT) + len(B_LAYOUT)))
    p = {}
    for name, n_in, n_out in W_LAYOUT:
        p[name] = jax.random.normal(next(keys), (n_in, n_out), jnp.float32) * 0.05
    for name, n_out in B_LAYOUT:
        k = next(keys)
        if name in ("ln_g1", "ln_g2"):
            p[name] = jnp.ones((1, n_out), jnp.float32)
        elif name in ("ln_b1", "ln_b2"):
            p[name] = jnp.zeros((1, n_out), jnp.float32)
        else:
            p[name] = jax.random.normal(k, (1, n_out), jnp.float32) * 0.05
    return p


def pack_params(p):
    """Pack every weight/bias into two lane-dense, 128-aligned slabs (one DMA each)."""
    w_slab = jnp.zeros(W_SLAB_SHAPE, jnp.float32)
    for i, (name, n_in, n_out) in enumerate(W_LAYOUT):
        w_slab = w_slab.at[:n_in, i * SLOT:i * SLOT + n_out].set(p[name])
    b_slab = jnp.zeros(B_SLAB_SHAPE, jnp.float32)
    for i, (name, n_out) in enumerate(B_LAYOUT):
        b_slab = b_slab.at[:, i * SLOT:i * SLOT + n_out].set(p[name])
    return w_slab, b_slab


def tft_forward(x, w_slab, b_slab, *, batch_tile=BATCH_TILE):
    B, D = x.shape
    assert D == INPUT_DIM
    pad = (-B) % batch_tile
    if pad:
        x = jnp.concatenate([x, jnp.zeros((pad, D), x.dtype)], axis=0)
    bp = B + pad
    out = pl.pallas_call(
        tft_kernel,
        out_shape=jax.ShapeDtypeStruct((bp, 1), jnp.float32),
        grid=(bp // batch_tile,),
        in_specs=[
            pl.BlockSpec((batch_tile, D), lambda i: (i, 0)),   # per-tile batch rows
            pl.BlockSpec(W_SLAB_SHAPE, lambda i: (0, 0)),      # weight slab, resident
            pl.BlockSpec(B_SLAB_SHAPE, lambda i: (0, 0)),      # bias slab, resident
        ],
        out_specs=pl.BlockSpec((batch_tile, 1), lambda i: (i, 0)),
        compiler_params=pltpu.CompilerParams(
            dimension_semantics=("parallel",)),                # shard batch tiles (v7x 2 TCs)
    )(x, w_slab, b_slab)
    return out[:B]


if __name__ == "__main__":
    key = jax.random.PRNGKey(0)
    kx, kp = jax.random.split(key)
    batch = 16                       # 2 batch tiles of 8 rows -> grid=(2,), "parallel"
    x = jax.random.normal(kx, (batch, INPUT_DIM), jnp.float32)
    params = init_params(kp)
    w_slab, b_slab = pack_params(params)

    out = jax.block_until_ready(tft_forward(x, w_slab, b_slab))

    assert out.shape == (batch, 1), out.shape
    assert bool(jnp.all(jnp.isfinite(out)))
    print("KERNEL_OK")
</pallas_src>

<mosaic_0001>
module attributes {stable_mosaic.version = 11 : i64} {
  func.func @tft_kernel(%arg0: i32, %arg1: memref<8x8xf32, #tpu.memory_space<vmem>>, %arg2: memref<128x1920xf32, #tpu.memory_space<vmem>>, %arg3: memref<1x2432xf32, #tpu.memory_space<vmem>>, %arg4: memref<8x1xf32, #tpu.memory_space<vmem>>) attributes {dimension_semantics = [#tpu.dimension_semantics<parallel>], iteration_bounds = array<i64: 2>, scalar_prefetch = 0 : i64, scratch_operands = 0 : i64, tpu.core_type = #tpu.core_type<tc>, window_params = [{transform_indices = @transform_0, window_bounds = array<i64: 8, 8>}, {pipeline_mode = #tpu.pipeline_mode<synchronous>, transform_indices = @transform_1, window_bounds = array<i64: 128, 1920>}, {pipeline_mode = #tpu.pipeline_mode<synchronous>, transform_indices = @transform_2, window_bounds = array<i64: 1, 2432>}, {transform_indices = @transform_3, window_bounds = array<i64: 8, 1>}]} {
    %c0 = arith.constant 0 : index
    %c0_0 = arith.constant 0 : index
    %0 = vector.load %arg1[%c0, %c0_0] : memref<8x8xf32, #tpu.memory_space<vmem>>, vector<8x8xf32>
    %c0_1 = arith.constant 0 : index
    %c0_2 = arith.constant 0 : index
    %1 = vector.load %arg2[%c0_1, %c0_2] : memref<128x1920xf32, #tpu.memory_space<vmem>>, vector<8x32xf32>
    %cst = arith.constant dense<0.000000e+00> : vector<8x32xf32>
    %2 = tpu.matmul %0, %1, %cst {dimension_numbers = #tpu.dot_dimension_numbers<[1], [0], [0], [1], [0, 0, 1, 1], [], []>} : vector<8x8xf32>, vector<8x32xf32>, vector<8x32xf32> -> vector<8x32xf32>
    %c0_3 = arith.constant 0 : index
    %c0_4 = arith.constant 0 : index
    %3 = vector.load %arg3[%c0_3, %c0_4] : memref<1x2432xf32, #tpu.memory_space<vmem>>, vector<1x32xf32>
    %4 = vector.broadcast %3 : vector<1x32xf32> to vector<8x32xf32>
    %5 = arith.addf %2, %4 : vector<8x32xf32>
    %c0_5 = arith.constant 0 : index
    %c128 = arith.constant 128 : index
    %6 = vector.load %arg2[%c0_5, %c128] : memref<128x1920xf32, #tpu.memory_space<vmem>>, vector<32x32xf32>
    %cst_6 = arith.constant dense<0.000000e+00> : vector<8x32xf32>
    %7 = tpu.matmul %5, %6, %cst_6 {dimension_numbers = #tpu.dot_dimension_numbers<[1], [0], [0], [1], [0, 0, 1, 1], [], []>} : vector<8x32xf32>, vector<32x32xf32>, vector<8x32xf32> -> vector<8x32xf32>
    %c0_7 = arith.constant 0 : index
    %c128_8 = arith.constant 128 : index
    %8 = vector.load %arg3[%c0_7, %c128_8] : memref<1x2432xf32, #tpu.memory_space<vmem>>, vector<1x32xf32>
    %9 = vector.broadcast %8 : vector<1x32xf32> to vector<8x32xf32>
    %10 = arith.addf %7, %9 : vector<8x32xf32>
    %cst_9 = arith.constant 0.000000e+00 : f32
    %11 = vector.broadcast %cst_9 : f32 to vector<8x32xf32>
    %12 = arith.maximumf %10, %11 : vector<8x32xf32>
    %c0_10 = arith.constant 0 : index
    %c256 = arith.constant 256 : index
    %13 = vector.load %arg2[%c0_10, %c256] : memref<128x1920xf32, #tpu.memory_space<vmem>>, vector<32x8xf32>
    %cst_11 = arith.constant dense<0.000000e+00> : vector<8x8xf32>
    %14 = tpu.matmul %12, %13, %cst_11 {dimension_numbers = #tpu.dot_dimension_numbers<[1], [0], [0], [1], [0, 0, 1, 1], [], []>} : vector<8x32xf32>, vector<32x8xf32>, vector<8x8xf32> -> vector<8x8xf32>
    %c0_12 = arith.constant 0 : index
    %c256_13 = arith.constant 256 : index
    %15 = vector.load %arg3[%c0_12, %c256_13] : memref<1x2432xf32, #tpu.memory_space<vmem>>, vector<1x8xf32>
    %16 = vector.broadcast %15 : vector<1x8xf32> to vector<8x8xf32>
    %17 = arith.addf %14, %16 : vector<8x8xf32>
    %cst_14 = arith.constant dense<0xFF800000> : vector<8xf32>
    %18 = vector.multi_reduction <maximumf>, %17, %cst_14 [1] : vector<8x8xf32> to vector<8xf32>
    %19 = vector.shape_cast %18 : vector<8xf32> to vector<8x1xf32>
    %20 = vector.broadcast %19 : vector<8x1xf32> to vector<8x8xf32>
    %21 = arith.subf %17, %20 : vector<8x8xf32>
    %22 = math.exp %21 : vector<8x8xf32>
    %cst_15 = arith.constant dense<0.000000e+00> : vector<8xf32>
    %23 = vector.multi_reduction <add>, %22, %cst_15 [1] : vector<8x8xf32> to vector<8xf32>
    %24 = vector.shape_cast %23 : vector<8xf32> to vector<8x1xf32>
    %25 = tpu.reciprocal %24 {approx = true} : vector<8x1xf32> -> vector<8x1xf32>
    %26 = vector.broadcast %25 : vector<8x1xf32> to vector<8x8xf32>
    %27 = arith.mulf %22, %26 : vector<8x8xf32>
    %28 = arith.mulf %0, %27 : vector<8x8xf32>
    %c0_16 = arith.constant 0 : index
    %c384 = arith.constant 384 : index
    %29 = vector.load %arg2[%c0_16, %c384] : memref<128x1920xf32, #tpu.memory_space<vmem>>, vector<8x32xf32>
    %cst_17 = arith.constant dense<0.000000e+00> : vector<8x32xf32>
    %30 = tpu.matmul %28, %29, %cst_17 {dimension_numbers = #tpu.dot_dimension_numbers<[1], [0], [0], [1], [0, 0, 1, 1], [], []>} : vector<8x8xf32>, vector<8x32xf32>, vector<8x32xf32> -> vector<8x32xf32>
    %c0_18 = arith.constant 0 : index
    %c384_19 = arith.constant 384 : index
    %31 = vector.load %arg3[%c0_18, %c384_19] : memref<1x2432xf32, #tpu.memory_space<vmem>>, vector<1x32xf32>
    %32 = vector.broadcast %31 : vector<1x32xf32> to vector<8x32xf32>
    %33 = arith.addf %30, %32 : vector<8x32xf32>
    %cst_20 = arith.constant 0.000000e+00 : f32
    %34 = vector.broadcast %cst_20 : f32 to vector<8x32xf32>
    %35 = arith.maximumf %33, %34 : vector<8x32xf32>
    %c0_21 = arith.constant 0 : index
    %c512 = arith.constant 512 : index
    %36 = vector.load %arg2[%c0_21, %c512] : memref<128x1920xf32, #tpu.memory_space<vmem>>, vector<32x32xf32>
    %cst_22 = arith.constant dense<0.000000e+00> : vector<8x32xf32>
    %37 = tpu.matmul %35, %36, %cst_22 {dimension_numbers = #tpu.dot_dimension_numbers<[1], [0], [0], [1], [0, 0, 1, 1], [], []>} : vector<8x32xf32>, vector<32x32xf32>, vector<8x32xf32> -> vector<8x32xf32>
    %c0_23 = arith.constant 0 : index
    %c512_24 = arith.constant 512 : index
    %38 = vector.load %arg3[%c0_23, %c512_24] : memref<1x2432xf32, #tpu.memory_space<vmem>>, vector<1x32xf32>
    %39 = vector.broadcast %38 : vector<1x32xf32> to vector<8x32xf32>
    %40 = arith.addf %37, %39 : vector<8x32xf32>
    %41 = arith.addf %35, %40 : vector<8x32xf32>
    %c0_25 = arith.constant 0 : index
    %c640 = arith.constant 640 : index
    %42 = vector.load %arg2[%c0_25, %c640] : memref<128x1920xf32, #tpu.memory_space<vmem>>, vector<32x128xf32>
    %cst_26 = arith.constant dense<0.000000e+00> : vector<8x128xf32>
    %43 = tpu.matmul %41, %42, %cst_26 {dimension_numbers = #tpu.dot_dimension_numbers<[1], [0], [0], [1], [0, 0, 1, 1], [], []>} : vector<8x32xf32>, vector<32x128xf32>, vector<8x128xf32> -> vector<8x128xf32>
    %c0_27 = arith.constant 0 : index
    %c640_28 = arith.constant 640 : index
    %44 = vector.load %arg3[%c0_27, %c640_28] : memref<1x2432xf32, #tpu.memory_space<vmem>>, vector<1x128xf32>
    %45 = vector.broadcast %44 : vector<1x128xf32> to vector<8x128xf32>
    %46 = arith.addf %43, %45 : vector<8x128xf32>
    %c0_29 = arith.constant 0 : index
    %c768 = arith.constant 768 : index
    %47 = vector.load %arg3[%c0_29, %c768] : memref<1x2432xf32, #tpu.memory_space<vmem>>, vector<1x128xf32>
    %48 = vector.broadcast %47 : vector<1x128xf32> to vector<8x128xf32>
    %49 = arith.addf %46, %48 : vector<8x128xf32>
    %c0_30 = arith.constant 0 : index
    %c768_31 = arith.constant 768 : index
    %50 = vector.load %arg2[%c0_30, %c768_31] : memref<128x1920xf32, #tpu.memory_space<vmem>>, vector<32x128xf32>
    %51 = tpu.iota {dimensions = array<i32: 1>} : vector<8x128xi32>
    %c64_i32 = arith.constant 64 : i32
    %52 = vector.broadcast %c64_i32 : i32 to vector<8x128xi32>
    %53 = arith.cmpi sge, %51, %52 : vector<8x128xi32>
    %c96_i32 = arith.constant 96 : i32
    %54 = vector.broadcast %c96_i32 : i32 to vector<8x128xi32>
    %55 = arith.cmpi slt, %51, %54 : vector<8x128xi32>
    %56 = arith.andi %53, %55 : vector<8x128xi1>
    %cst_32 = arith.constant 0.000000e+00 : f32
    %57 = vector.broadcast %cst_32 : f32 to vector<8x32xf32>
    %cst_33 = arith.constant 0.000000e+00 : f32
    %58 = vector.broadcast %cst_33 : f32 to vector<8x32xf32>
    %cst_34 = arith.constant dense<0.000000e+00> : vector<8x128xf32>
    %59 = tpu.matmul %57, %50, %cst_34 {dimension_numbers = #tpu.dot_dimension_numbers<[1], [0], [0], [1], [0, 0, 1, 1], [], []>} : vector<8x32xf32>, vector<32x128xf32>, vector<8x128xf32> -> vector<8x128xf32>
    %60 = arith.addf %49, %59 : vector<8x128xf32>
    %61 = math.tanh %60 : vector<8x128xf32>
    %62 = arith.negf %60 : vector<8x128xf32>
    %63 = math.exp %62 : vector<8x128xf32>
    %cst_35 = arith.constant 1.000000e+00 : f32
    %64 = vector.broadcast %cst_35 : f32 to vector<8x128xf32>
    %65 = arith.addf %64, %63 : vector<8x128xf32>
    %66 = arith.divf %64, %65 : vector<8x128xf32>
    %67 = arith.select %56, %61, %66 : vector<8x128xi1>, vector<8x128xf32>
    %68 = vector.extract_strided_slice %67 {offsets = [0, 0], sizes = [8, 32], strides = [1, 1]} : vector<8x128xf32> to vector<8x32xf32>
    %69 = vector.extract_strided_slice %67 {offsets = [0, 32], sizes = [8, 32], strides = [1, 1]} : vector<8x128xf32> to vector<8x32xf32>
    %70 = vector.extract_strided_slice %67 {offsets = [0, 64], sizes = [8, 32], strides = [1, 1]} : vector<8x128xf32> to vector<8x32xf32>
    %71 = vector.extract_strided_slice %67 {offsets = [0, 96], sizes = [8, 32], strides = [1, 1]} : vector<8x128xf32> to vector<8x32xf32>
    %72 = arith.mulf %69, %58 : vector<8x32xf32>
    %73 = arith.mulf %68, %70 : vector<8x32xf32>
    %74 = arith.addf %72, %73 : vector<8x32xf32>
    %75 = math.tanh %74 : vector<8x32xf32>
    %76 = arith.mulf %71, %75 : vector<8x32xf32>
    %cst_36 = arith.constant dense<0.000000e+00> : vector<8x128xf32>
    %77 = tpu.matmul %76, %50, %cst_36 {dimension_numbers = #tpu.dot_dimension_numbers<[1], [0], [0], [1], [0, 0, 1, 1], [], []>} : vector<8x32xf32>, vector<32x128xf32>, vector<8x128xf32> -> vector<8x128xf32>
    %78 = arith.addf %49, %77 : vector<8x128xf32>
    %79 = math.tanh %78 : vector<8x128xf32>
    %80 = arith.negf %78 : vector<8x128xf32>
    %81 = math.exp %80 : vector<8x128xf32>
    %cst_37 = arith.constant 1.000000e+00 : f32
    %82 = vector.broadcast %cst_37 : f32 to vector<8x128xf32>
    %83 = arith.addf %82, %81 : vector<8x128xf32>
    %84 = arith.divf %82, %83 : vector<8x128xf32>
    %85 = arith.select %56, %79, %84 : vector<8x128xi1>, vector<8x128xf32>
    %86 = vector.extract_strided_slice %85 {offsets = [0, 0], sizes = [8, 32], strides = [1, 1]} : vector<8x128xf32> to vector<8x32xf32>
    %87 = vector.extract_strided_slice %85 {offsets = [0, 32], sizes = [8, 32], strides = [1, 1]} : vector<8x128xf32> to vector<8x32xf32>
    %88 = vector.extract_strided_slice %85 {offsets = [0, 64], sizes = [8, 32], strides = [1, 1]} : vector<8x128xf32> to vector<8x32xf32>
    %89 = vector.extract_strided_slice %85 {offsets = [0, 96], sizes = [8, 32], strides = [1, 1]} : vector<8x128xf32> to vector<8x32xf32>
    %90 = arith.mulf %87, %74 : vector<8x32xf32>
    %91 = arith.mulf %86, %88 : vector<8x32xf32>
    %92 = arith.addf %90, %91 : vector<8x32xf32>
    %93 = math.tanh %92 : vector<8x32xf32>
    %94 = arith.mulf %89, %93 : vector<8x32xf32>
    %cst_38 = arith.constant dense<0.000000e+00> : vector<8x128xf32>
    %95 = tpu.matmul %94, %50, %cst_38 {dimension_numbers = #tpu.dot_dimension_numbers<[1], [0], [0], [1], [0, 0, 1, 1], [], []>} : vector<8x32xf32>, vector<32x128xf32>, vector<8x128xf32> -> vector<8x128xf32>
    %96 = arith.addf %49, %95 : vector<8x128xf32>
    %97 = math.tanh %96 : vector<8x128xf32>
    %98 = arith.negf %96 : vector<8x128xf32>
    %99 = math.exp %98 : vector<8x128xf32>
    %cst_39 = arith.constant 1.000000e+00 : f32
    %100 = vector.broadcast %cst_39 : f32 to vector<8x128xf32>
    %101 = arith.addf %100, %99 : vector<8x128xf32>
    %102 = arith.divf %100, %101 : vector<8x128xf32>
    %103 = arith.select %56, %97, %102 : vector<8x128xi1>, vector<8x128xf32>
    %104 = vector.extract_strided_slice %103 {offsets = [0, 0], sizes = [8, 32], strides = [1, 1]} : vector<8x128xf32> to vector<8x32xf32>
    %105 = vector.extract_strided_slice %103 {offsets = [0, 32], sizes = [8, 32], strides = [1, 1]} : vector<8x128xf32> to vector<8x32xf32>
    %106 = vector.extract_strided_slice %103 {offsets = [0, 64], sizes = [8, 32], strides = [1, 1]} : vector<8x128xf32> to vector<8x32xf32>
    %107 = vector.extract_strided_slice %103 {offsets = [0, 96], sizes = [8, 32], strides = [1, 1]} : vector<8x128xf32> to vector<8x32xf32>
    %108 = arith.mulf %105, %92 : vector<8x32xf32>
    %109 = arith.mulf %104, %106 : vector<8x32xf32>
    %110 = arith.addf %108, %109 : vector<8x32xf32>
    %111 = math.tanh %110 : vector<8x32xf32>
    %112 = arith.mulf %107, %111 : vector<8x32xf32>
    %cst_40 = arith.constant dense<0.000000e+00> : vector<8x128xf32>
    %113 = tpu.matmul %112, %50, %cst_40 {dimension_numbers = #tpu.dot_dimension_numbers<[1], [0], [0], [1], [0, 0, 1, 1], [], []>} : vector<8x32xf32>, vector<32x128xf32>, vector<8x128xf32> -> vector<8x128xf32>
    %114 = arith.addf %49, %113 : vector<8x128xf32>
    %115 = math.tanh %114 : vector<8x128xf32>
    %116 = arith.negf %114 : vector<8x128xf32>
    %117 = math.exp %116 : vector<8x128xf32>
    %cst_41 = arith.constant 1.000000e+00 : f32
    %118 = vector.broadcast %cst_41 : f32 to vector<8x128xf32>
    %119 = arith.addf %118, %117 : vector<8x128xf32>
    %120 = arith.divf %118, %119 : vector<8x128xf32>
    %121 = arith.select %56, %115, %120 : vector<8x128xi1>, vector<8x128xf32>
    %122 = vector.extract_strided_slice %121 {offsets = [0, 0], sizes = [8, 32], strides = [1, 1]} : vector<8x128xf32> to vector<8x32xf32>
    %123 = vector.extract_strided_slice %121 {offsets = [0, 32], sizes = [8, 32], strides = [1, 1]} : vector<8x128xf32> to vector<8x32xf32>
    %124 = vector.extract_strided_slice %121 {offsets = [0, 64], sizes = [8, 32], strides = [1, 1]} : vector<8x128xf32> to vector<8x32xf32>
    %125 = vector.extract_strided_slice %121 {offsets = [0, 96], sizes = [8, 32], strides = [1, 1]} : vector<8x128xf32> to vector<8x32xf32>
    %126 = arith.mulf %123, %110 : vector<8x32xf32>
    %127 = arith.mulf %122, %124 : vector<8x32xf32>
    %128 = arith.addf %126, %127 : vector<8x32xf32>
    %129 = math.tanh %128 : vector<8x32xf32>
    %130 = arith.mulf %125, %129 : vector<8x32xf32>
    %cst_42 = arith.constant dense<0.000000e+00> : vector<8x128xf32>
    %131 = tpu.matmul %130, %50, %cst_42 {dimension_numbers = #tpu.dot_dimension_numbers<[1], [0], [0], [1], [0, 0, 1, 1], [], []>} : vector<8x32xf32>, vector<32x128xf32>, vector<8x128xf32> -> vector<8x128xf32>
    %132 = arith.addf %49, %131 : vector<8x128xf32>
    %133 = math.tanh %132 : vector<8x128xf32>
    %134 = arith.negf %132 : vector<8x128xf32>
    %135 = math.exp %134 : vector<8x128xf32>
    %cst_43 = arith.constant 1.000000e+00 : f32
    %136 = vector.broadcast %cst_43 : f32 to vector<8x128xf32>
    %137 = arith.addf %136, %135 : vector<8x128xf32>
    %138 = arith.divf %136, %137 : vector<8x128xf32>
    %139 = arith.select %56, %133, %138 : vector<8x128xi1>, vector<8x128xf32>
    %140 = vector.extract_strided_slice %139 {offsets = [0, 0], sizes = [8, 32], strides = [1, 1]} : vector<8x128xf32> to vector<8x32xf32>
    %141 = vector.extract_strided_slice %139 {offsets = [0, 32], sizes = [8, 32], strides = [1, 1]} : vector<8x128xf32> to vector<8x32xf32>
    %142 = vector.extract_strided_slice %139 {offsets = [0, 64], sizes = [8, 32], strides = [1, 1]} : vector<8x128xf32> to vector<8x32xf32>
    %143 = vector.extract_strided_slice %139 {offsets = [0, 96], sizes = [8, 32], strides = [1, 1]} : vector<8x128xf32> to vector<8x32xf32>
    %144 = arith.mulf %141, %128 : vector<8x32xf32>
    %145 = arith.mulf %140, %142 : vector<8x32xf32>
    %146 = arith.addf %144, %145 : vector<8x32xf32>
    %147 = math.tanh %146 : vector<8x32xf32>
    %148 = arith.mulf %143, %147 : vector<8x32xf32>
    %cst_44 = arith.constant dense<0.000000e+00> : vector<8x128xf32>
    %149 = tpu.matmul %148, %50, %cst_44 {dimension_numbers = #tpu.dot_dimension_numbers<[1], [0], [0], [1], [0, 0, 1, 1], [], []>} : vector<8x32xf32>, vector<32x128xf32>, vector<8x128xf32> -> vector<8x128xf32>
    %150 = arith.addf %49, %149 : vector<8x128xf32>
    %151 = math.tanh %150 : vector<8x128xf32>
    %152 = arith.negf %150 : vector<8x128xf32>
    %153 = math.exp %152 : vector<8x128xf32>
    %cst_45 = arith.constant 1.000000e+00 : f32
    %154 = vector.broadcast %cst_45 : f32 to vector<8x128xf32>
    %155 = arith.addf %154, %153 : vector<8x128xf32>
    %156 = arith.divf %154, %155 : vector<8x128xf32>
    %157 = arith.select %56, %151, %156 : vector<8x128xi1>, vector<8x128xf32>
    %158 = vector.extract_strided_slice %157 {offsets = [0, 0], sizes = [8, 32], strides = [1, 1]} : vector<8x128xf32> to vector<8x32xf32>
    %159 = vector.extract_strided_slice %157 {offsets = [0, 32], sizes = [8, 32], strides = [1, 1]} : vector<8x128xf32> to vector<8x32xf32>
    %160 = vector.extract_strided_slice %157 {offsets = [0, 64], sizes = [8, 32], strides = [1, 1]} : vector<8x128xf32> to vector<8x32xf32>
    %161 = vector.extract_strided_slice %157 {offsets = [0, 96], sizes = [8, 32], strides = [1, 1]} : vector<8x128xf32> to vector<8x32xf32>
    %162 = arith.mulf %159, %146 : vector<8x32xf32>
    %163 = arith.mulf %158, %160 : vector<8x32xf32>
    %164 = arith.addf %162, %163 : vector<8x32xf32>
    %165 = math.tanh %164 : vector<8x32xf32>
    %166 = arith.mulf %161, %165 : vector<8x32xf32>
    %cst_46 = arith.constant dense<0.000000e+00> : vector<8x128xf32>
    %167 = tpu.matmul %166, %50, %cst_46 {dimension_numbers = #tpu.dot_dimension_numbers<[1], [0], [0], [1], [0, 0, 1, 1], [], []>} : vector<8x32xf32>, vector<32x128xf32>, vector<8x128xf32> -> vector<8x128xf32>
    %168 = arith.addf %49, %167 : vector<8x128xf32>
    %169 = math.tanh %168 : vector<8x128xf32>
    %170 = arith.negf %168 : vector<8x128xf32>
    %171 = math.exp %170 : vector<8x128xf32>
    %cst_47 = arith.constant 1.000000e+00 : f32
    %172 = vector.broadcast %cst_47 : f32 to vector<8x128xf32>
    %173 = arith.addf %172, %171 : vector<8x128xf32>
    %174 = arith.divf %172, %173 : vector<8x128xf32>
    %175 = arith.select %56, %169, %174 : vector<8x128xi1>, vector<8x128xf32>
    %176 = vector.extract_strided_slice %175 {offsets = [0, 0], sizes = [8, 32], strides = [1, 1]} : vector<8x128xf32> to vector<8x32xf32>
    %177 = vector.extract_strided_slice %175 {offsets = [0, 32], sizes = [8, 32], strides = [1, 1]} : vector<8x128xf32> to vector<8x32xf32>
    %178 = vector.extract_strided_slice %175 {offsets = [0, 64], sizes = [8, 32], strides = [1, 1]} : vector<8x128xf32> to vector<8x32xf32>
    %179 = vector.extract_strided_slice %175 {offsets = [0, 96], sizes = [8, 32], strides = [1, 1]} : vector<8x128xf32> to vector<8x32xf32>
    %180 = arith.mulf %177, %164 : vector<8x32xf32>
    %181 = arith.mulf %176, %178 : vector<8x32xf32>
    %182 = arith.addf %180, %181 : vector<8x32xf32>
    %183 = math.tanh %182 : vector<8x32xf32>
    %184 = arith.mulf %179, %183 : vector<8x32xf32>
    %cst_48 = arith.constant dense<0.000000e+00> : vector<8x128xf32>
    %185 = tpu.matmul %184, %50, %cst_48 {dimension_numbers = #tpu.dot_dimension_numbers<[1], [0], [0], [1], [0, 0, 1, 1], [], []>} : vector<8x32xf32>, vector<32x128xf32>, vector<8x128xf32> -> vector<8x128xf32>
    %186 = arith.addf %49, %185 : vector<8x128xf32>
    %187 = math.tanh %186 : vector<8x128xf32>
    %188 = arith.negf %186 : vector<8x128xf32>
    %189 = math.exp %188 : vector<8x128xf32>
    %cst_49 = arith.constant 1.000000e+00 : f32
    %190 = vector.broadcast %cst_49 : f32 to vector<8x128xf32>
    %191 = arith.addf %190, %189 : vector<8x128xf32>
    %192 = arith.divf %190, %191 : vector<8x128xf32>
    %193 = arith.select %56, %187, %192 : vector<8x128xi1>, vector<8x128xf32>
    %194 = vector.extract_strided_slice %193 {offsets = [0, 0], sizes = [8, 32], strides = [1, 1]} : vector<8x128xf32> to vector<8x32xf32>
    %195 = vector.extract_strided_slice %193 {offsets = [0, 32], sizes = [8, 32], strides = [1, 1]} : vector<8x128xf32> to vector<8x32xf32>
    %196 = vector.extract_strided_slice %193 {offsets = [0, 64], sizes = [8, 32], strides = [1, 1]} : vector<8x128xf32> to vector<8x32xf32>
    %197 = vector.extract_strided_slice %193 {offsets = [0, 96], sizes = [8, 32], strides = [1, 1]} : vector<8x128xf32> to vector<8x32xf32>
    %198 = arith.mulf %195, %182 : vector<8x32xf32>
    %199 = arith.mulf %194, %196 : vector<8x32xf32>
    %200 = arith.addf %198, %199 : vector<8x32xf32>
    %201 = math.tanh %200 : vector<8x32xf32>
    %202 = arith.mulf %197, %201 : vector<8x32xf32>
    %203 = vector.shape_cast %76 : vector<8x32xf32> to vector<8x1x32xf32>
    %204 = vector.shape_cast %94 : vector<8x32xf32> to vector<8x1x32xf32>
    %205 = vector.shape_cast %112 : vector<8x32xf32> to vector<8x1x32xf32>
    %206 = vector.shape_cast %130 : vector<8x32xf32> to vector<8x1x32xf32>
    %207 = vector.shape_cast %148 : vector<8x32xf32> to vector<8x1x32xf32>
    %208 = vector.shape_cast %166 : vector<8x32xf32> to vector<8x1x32xf32>
    %209 = vector.shape_cast %184 : vector<8x32xf32> to vector<8x1x32xf32>
    %210 = vector.shape_cast %202 : vector<8x32xf32> to vector<8x1x32xf32>
    %211 = tpu.concatenate %203, %204, %205, %206, %207, %208, %209, %210 in 1 : vector<8x1x32xf32>, vector<8x1x32xf32>, vector<8x1x32xf32>, vector<8x1x32xf32>, vector<8x1x32xf32>, vector<8x1x32xf32>, vector<8x1x32xf32>, vector<8x1x32xf32> -> vector<8x8x32xf32>
    %212 = vector.shape_cast %211 : vector<8x8x32xf32> to vector<64x32xf32>
    %c0_50 = arith.constant 0 : index
    %c896 = arith.constant 896 : index
    %213 = vector.load %arg2[%c0_50, %c896] : memref<128x1920xf32, #tpu.memory_space<vmem>>, vector<32x32xf32>
    %cst_51 = arith.constant dense<0.000000e+00> : vector<64x32xf32>
    %214 = tpu.matmul %212, %213, %cst_51 {dimension_numbers = #tpu.dot_dimension_numbers<[1], [0], [0], [1], [0, 0, 1, 1], [], []>} : vector<64x32xf32>, vector<32x32xf32>, vector<64x32xf32> -> vector<64x32xf32>
    %c0_52 = arith.constant 0 : index
    %c896_53 = arith.constant 896 : index
    %215 = vector.load %arg3[%c0_52, %c896_53] : memref<1x2432xf32, #tpu.memory_space<vmem>>, vector<1x32xf32>
    %216 = vector.broadcast %215 : vector<1x32xf32> to vector<64x32xf32>
    %217 = arith.addf %214, %216 : vector<64x32xf32>
    %218 = vector.shape_cast %217 : vector<64x32xf32> to vector<8x8x32xf32>
    %c0_54 = arith.constant 0 : index
    %c1024 = arith.constant 1024 : index
    %219 = vector.load %arg2[%c0_54, %c1024] : memref<128x1920xf32, #tpu.memory_space<vmem>>, vector<32x32xf32>
    %cst_55 = arith.constant dense<0.000000e+00> : vector<64x32xf32>
    %220 = tpu.matmul %212, %219, %cst_55 {dimension_numbers = #tpu.dot_dimension_numbers<[1], [0], [0], [1], [0, 0, 1, 1], [], []>} : vector<64x32xf32>, vector<32x32xf32>, vector<64x32xf32> -> vector<64x32xf32>
    %c0_56 = arith.constant 0 : index
    %c1024_57 = arith.constant 1024 : index
    %221 = vector.load %arg3[%c0_56, %c1024_57] : memref<1x2432xf32, #tpu.memory_space<vmem>>, vector<1x32xf32>
    %222 = vector.broadcast %221 : vector<1x32xf32> to vector<64x32xf32>
    %223 = arith.addf %220, %222 : vector<64x32xf32>
    %224 = vector.shape_cast %223 : vector<64x32xf32> to vector<8x8x32xf32>
    %c0_58 = arith.constant 0 : index
    %c1152 = arith.constant 1152 : index
    %225 = vector.load %arg2[%c0_58, %c1152] : memref<128x1920xf32, #tpu.memory_space<vmem>>, vector<32x32xf32>
    %cst_59 = arith.constant dense<0.000000e+00> : vector<64x32xf32>
    %226 = tpu.matmul %212, %225, %cst_59 {dimension_numbers = #tpu.dot_dimension_numbers<[1], [0], [0], [1], [0, 0, 1, 1], [], []>} : vector<64x32xf32>, vector<32x32xf32>, vector<64x32xf32> -> vector<64x32xf32>
    %c0_60 = arith.constant 0 : index
    %c1152_61 = arith.constant 1152 : index
    %227 = vector.load %arg3[%c0_60, %c1152_61] : memref<1x2432xf32, #tpu.memory_space<vmem>>, vector<1x32xf32>
    %228 = vector.broadcast %227 : vector<1x32xf32> to vector<64x32xf32>
    %229 = arith.addf %226, %228 : vector<64x32xf32>
    %230 = vector.shape_cast %229 : vector<64x32xf32> to vector<8x8x32xf32>
    %231 = vector.extract_strided_slice %218 {offsets = [0, 0, 0], sizes = [8, 8, 8], strides = [1, 1, 1]} : vector<8x8x32xf32> to vector<8x8x8xf32>
    %232 = vector.extract_strided_slice %224 {offsets = [0, 0, 0], sizes = [8, 8, 8], strides = [1, 1, 1]} : vector<8x8x32xf32> to vector<8x8x8xf32>
    %233 = vector.extract_strided_slice %230 {offsets = [0, 0, 0], sizes = [8, 8, 8], strides = [1, 1, 1]} : vector<8x8x32xf32> to vector<8x8x8xf32>
    "tpu.trace_start"() <{level = 10 : i32, message = "bqd,bkd->bqk"}> : () -> ()
    %cst_62 = arith.constant dense<0.000000e+00> : vector<8x8x8xf32>
    %234 = tpu.matmul %231, %232, %cst_62 {dimension_numbers = #tpu.dot_dimension_numbers<[2], [2], [1], [1], [0, 0, 0, 1, 1, 1], [0], [0]>} : vector<8x8x8xf32>, vector<8x8x8xf32>, vector<8x8x8xf32> -> vector<8x8x8xf32>
    "tpu.trace_stop"() : () -> ()
    %cst_63 = arith.constant 0.353553385 : f32
    %235 = vector.broadcast %cst_63 : f32 to vector<8x8x8xf32>
    %236 = arith.mulf %234, %235 : vector<8x8x8xf32>
    %cst_64 = arith.constant dense<0xFF800000> : vector<8x8xf32>
    %237 = vector.multi_reduction <maximumf>, %236, %cst_64 [2] : vector<8x8x8xf32> to vector<8x8xf32>
    %238 = vector.shape_cast %237 : vector<8x8xf32> to vector<8x8x1xf32>
    %239 = vector.broadcast %238 : vector<8x8x1xf32> to vector<8x8x8xf32>
    %240 = arith.subf %236, %239 : vector<8x8x8xf32>
    %241 = math.exp %240 : vector<8x8x8xf32>
    %cst_65 = arith.constant dense<0.000000e+00> : vector<8x8xf32>
    %242 = vector.multi_reduction <add>, %241, %cst_65 [2] : vector<8x8x8xf32> to vector<8x8xf32>
    %243 = vector.shape_cast %242 : vector<8x8xf32> to vector<8x8x1xf32>
    %244 = tpu.reciprocal %243 {approx = true} : vector<8x8x1xf32> -> vector<8x8x1xf32>
    %245 = vector.broadcast %244 : vector<8x8x1xf32> to vector<8x8x8xf32>
    %246 = arith.mulf %241, %245 : vector<8x8x8xf32>
    "tpu.trace_start"() <{level = 10 : i32, message = "bqk,bkd->bqd"}> : () -> ()
    %cst_66 = arith.constant dense<0.000000e+00> : vector<8x8x8xf32>
    %247 = tpu.matmul %246, %233, %cst_66 {dimension_numbers = #tpu.dot_dimension_numbers<[2], [1], [1], [2], [0, 0, 0, 1, 1, 2], [0], [0]>} : vector<8x8x8xf32>, vector<8x8x8xf32>, vector<8x8x8xf32> -> vector<8x8x8xf32>
    "tpu.trace_stop"() : () -> ()
    %248 = vector.extract_strided_slice %218 {offsets = [0, 0, 8], sizes = [8, 8, 8], strides = [1, 1, 1]} : vector<8x8x32xf32> to vector<8x8x8xf32>
    %249 = vector.extract_strided_slice %224 {offsets = [0, 0, 8], sizes = [8, 8, 8], strides = [1, 1, 1]} : vector<8x8x32xf32> to vector<8x8x8xf32>
    %250 = vector.extract_strided_slice %230 {offsets = [0, 0, 8], sizes = [8, 8, 8], strides = [1, 1, 1]} : vector<8x8x32xf32> to vector<8x8x8xf32>
    "tpu.trace_start"() <{level = 10 : i32, message = "bqd,bkd->bqk"}> : () -> ()
    %cst_67 = arith.constant dense<0.000000e+00> : vector<8x8x8xf32>
    %251 = tpu.matmul %248, %249, %cst_67 {dimension_numbers = #tpu.dot_dimension_numbers<[2], [2], [1], [1], [0, 0, 0, 1, 1, 1], [0], [0]>} : vector<8x8x8xf32>, vector<8x8x8xf32>, vector<8x8x8xf32> -> vector<8x8x8xf32>
    "tpu.trace_stop"() : () -> ()
    %cst_68 = arith.constant 0.353553385 : f32
    %252 = vector.broadcast %cst_68 : f32 to vector<8x8x8xf32>
    %253 = arith.mulf %251, %252 : vector<8x8x8xf32>
    %cst_69 = arith.constant dense<0xFF800000> : vector<8x8xf32>
    %254 = vector.multi_reduction <maximumf>, %253, %cst_69 [2] : vector<8x8x8xf32> to vector<8x8xf32>
    %255 = vector.shape_cast %254 : vector<8x8xf32> to vector<8x8x1xf32>
    %256 = vector.broadcast %255 : vector<8x8x1xf32> to vector<8x8x8xf32>
    %257 = arith.subf %253, %256 : vector<8x8x8xf32>
    %258 = math.exp %257 : vector<8x8x8xf32>
    %cst_70 = arith.constant dense<0.000000e+00> : vector<8x8xf32>
    %259 = vector.multi_reduction <add>, %258, %cst_70 [2] : vector<8x8x8xf32> to vector<8x8xf32>
    %260 = vector.shape_cast %259 : vector<8x8xf32> to vector<8x8x1xf32>
    %261 = tpu.reciprocal %260 {approx = true} : vector<8x8x1xf32> -> vector<8x8x1xf32>
    %262 = vector.broadcast %261 : vector<8x8x1xf32> to vector<8x8x8xf32>
    %263 = arith.mulf %258, %262 : vector<8x8x8xf32>
    "tpu.trace_start"() <{level = 10 : i32, message = "bqk,bkd->bqd"}> : () -> ()
    %cst_71 = arith.constant dense<0.000000e+00> : vector<8x8x8xf32>
    %264 = tpu.matmul %263, %250, %cst_71 {dimension_numbers = #tpu.dot_dimension_numbers<[2], [1], [1], [2], [0, 0, 0, 1, 1, 2], [0], [0]>} : vector<8x8x8xf32>, vector<8x8x8xf32>, vector<8x8x8xf32> -> vector<8x8x8xf32>
    "tpu.trace_stop"() : () -> ()
    %265 = vector.extract_strided_slice %218 {offsets = [0, 0, 16], sizes = [8, 8, 8], strides = [1, 1, 1]} : vector<8x8x32xf32> to vector<8x8x8xf32>
    %266 = vector.extract_strided_slice %224 {offsets = [0, 0, 16], sizes = [8, 8, 8], strides = [1, 1, 1]} : vector<8x8x32xf32> to vector<8x8x8xf32>
    %267 = vector.extract_strided_slice %230 {offsets = [0, 0, 16], sizes = [8, 8, 8], strides = [1, 1, 1]} : vector<8x8x32xf32> to vector<8x8x8xf32>
    "tpu.trace_start"() <{level = 10 : i32, message = "bqd,bkd->bqk"}> : () -> ()
    %cst_72 = arith.constant dense<0.000000e+00> : vector<8x8x8xf32>
    %268 = tpu.matmul %265, %266, %cst_72 {dimension_numbers = #tpu.dot_dimension_numbers<[2], [2], [1], [1], [0, 0, 0, 1, 1, 1], [0], [0]>} : vector<8x8x8xf32>, vector<8x8x8xf32>, vector<8x8x8xf32> -> vector<8x8x8xf32>
    "tpu.trace_stop"() : () -> ()
    %cst_73 = arith.constant 0.353553385 : f32
    %269 = vector.broadcast %cst_73 : f32 to vector<8x8x8xf32>
    %270 = arith.mulf %268, %269 : vector<8x8x8xf32>
    %cst_74 = arith.constant dense<0xFF800000> : vector<8x8xf32>
    %271 = vector.multi_reduction <maximumf>, %270, %cst_74 [2] : vector<8x8x8xf32> to vector<8x8xf32>
    %272 = vector.shape_cast %271 : vector<8x8xf32> to vector<8x8x1xf32>
    %273 = vector.broadcast %272 : vector<8x8x1xf32> to vector<8x8x8xf32>
    %274 = arith.subf %270, %273 : vector<8x8x8xf32>
    %275 = math.exp %274 : vector<8x8x8xf32>
    %cst_75 = arith.constant dense<0.000000e+00> : vector<8x8xf32>
    %276 = vector.multi_reduction <add>, %275, %cst_75 [2] : vector<8x8x8xf32> to vector<8x8xf32>
    %277 = vector.shape_cast %276 : vector<8x8xf32> to vector<8x8x1xf32>
    %278 = tpu.reciprocal %277 {approx = true} : vector<8x8x1xf32> -> vector<8x8x1xf32>
    %279 = vector.broadcast %278 : vector<8x8x1xf32> to vector<8x8x8xf32>
    %280 = arith.mulf %275, %279 : vector<8x8x8xf32>
    "tpu.trace_start"() <{level = 10 : i32, message = "bqk,bkd->bqd"}> : () -> ()
    %cst_76 = arith.constant dense<0.000000e+00> : vector<8x8x8xf32>
    %281 = tpu.matmul %280, %267, %cst_76 {dimension_numbers = #tpu.dot_dimension_numbers<[2], [1], [1], [2], [0, 0, 0, 1, 1, 2], [0], [0]>} : vector<8x8x8xf32>, vector<8x8x8xf32>, vector<8x8x8xf32> -> vector<8x8x8xf32>
    "tpu.trace_stop"() : () -> ()
    %282 = vector.extract_strided_slice %218 {offsets = [0, 0, 24], sizes = [8, 8, 8], strides = [1, 1, 1]} : vector<8x8x32xf32> to vector<8x8x8xf32>
    %283 = vector.extract_strided_slice %224 {offsets = [0, 0, 24], sizes = [8, 8, 8], strides = [1, 1, 1]} : vector<8x8x32xf32> to vector<8x8x8xf32>
    %284 = vector.extract_strided_slice %230 {offsets = [0, 0, 24], sizes = [8, 8, 8], strides = [1, 1, 1]} : vector<8x8x32xf32> to vector<8x8x8xf32>
    "tpu.trace_start"() <{level = 10 : i32, message = "bqd,bkd->bqk"}> : () -> ()
    %cst_77 = arith.constant dense<0.000000e+00> : vector<8x8x8xf32>
    %285 = tpu.matmul %282, %283, %cst_77 {dimension_numbers = #tpu.dot_dimension_numbers<[2], [2], [1], [1], [0, 0, 0, 1, 1, 1], [0], [0]>} : vector<8x8x8xf32>, vector<8x8x8xf32>, vector<8x8x8xf32> -> vector<8x8x8xf32>
    "tpu.trace_stop"() : () -> ()
    %cst_78 = arith.constant 0.353553385 : f32
    %286 = vector.broadcast %cst_78 : f32 to vector<8x8x8xf32>
    %287 = arith.mulf %285, %286 : vector<8x8x8xf32>
    %cst_79 = arith.constant dense<0xFF800000> : vector<8x8xf32>
    %288 = vector.multi_reduction <maximumf>, %287, %cst_79 [2] : vector<8x8x8xf32> to vector<8x8xf32>
    %289 = vector.shape_cast %288 : vector<8x8xf32> to vector<8x8x1xf32>
    %290 = vector.broadcast %289 : vector<8x8x1xf32> to vector<8x8x8xf32>
    %291 = arith.subf %287, %290 : vector<8x8x8xf32>
    %292 = math.exp %291 : vector<8x8x8xf32>
    %cst_80 = arith.constant dense<0.000000e+00> : vector<8x8xf32>
    %293 = vector.multi_reduction <add>, %292, %cst_80 [2] : vector<8x8x8xf32> to vector<8x8xf32>
    %294 = vector.shape_cast %293 : vector<8x8xf32> to vector<8x8x1xf32>
    %295 = tpu.reciprocal %294 {approx = true} : vector<8x8x1xf32> -> vector<8x8x1xf32>
    %296 = vector.broadcast %295 : vector<8x8x1xf32> to vector<8x8x8xf32>
    %297 = arith.mulf %292, %296 : vector<8x8x8xf32>
    "tpu.trace_start"() <{level = 10 : i32, message = "bqk,bkd->bqd"}> : () -> ()
    %cst_81 = arith.constant dense<0.000000e+00> : vector<8x8x8xf32>
    %298 = tpu.matmul %297, %284, %cst_81 {dimension_numbers = #tpu.dot_dimension_numbers<[2], [1], [1], [2], [0, 0, 0, 1, 1, 2], [0], [0]>} : vector<8x8x8xf32>, vector<8x8x8xf32>, vector<8x8x8xf32> -> vector<8x8x8xf32>
    "tpu.trace_stop"() : () -> ()
    %299 = tpu.concatenate %247, %264, %281, %298 in 2 : vector<8x8x8xf32>, vector<8x8x8xf32>, vector<8x8x8xf32>, vector<8x8x8xf32> -> vector<8x8x32xf32>
    %300 = vector.extract_strided_slice %299 {offsets = [0, 7, 0], sizes = [8, 1, 32], strides = [1, 1, 1]} : vector<8x8x32xf32> to vector<8x1x32xf32>
    %301 = vector.shape_cast %300 : vector<8x1x32xf32> to vector<8x32xf32>
    %c0_82 = arith.constant 0 : index
    %c1280 = arith.constant 1280 : index
    %302 = vector.load %arg2[%c0_82, %c1280] : memref<128x1920xf32, #tpu.memory_space<vmem>>, vector<32x32xf32>
    %cst_83 = arith.constant dense<0.000000e+00> : vector<8x32xf32>
    %303 = tpu.matmul %301, %302, %cst_83 {dimension_numbers = #tpu.dot_dimension_numbers<[1], [0], [0], [1], [0, 0, 1, 1], [], []>} : vector<8x32xf32>, vector<32x32xf32>, vector<8x32xf32> -> vector<8x32xf32>
    %c0_84 = arith.constant 0 : index
    %c1280_85 = arith.constant 1280 : index
    %304 = vector.load %arg3[%c0_84, %c1280_85] : memref<1x2432xf32, #tpu.memory_space<vmem>>, vector<1x32xf32>
    %305 = vector.broadcast %304 : vector<1x32xf32> to vector<8x32xf32>
    %306 = arith.addf %303, %305 : vector<8x32xf32>
    %307 = arith.addf %306, %202 : vector<8x32xf32>
    %c0_86 = arith.constant 0 : index
    %c1664 = arith.constant 1664 : index
    %308 = vector.load %arg3[%c0_86, %c1664] : memref<1x2432xf32, #tpu.memory_space<vmem>>, vector<1x32xf32>
    %c0_87 = arith.constant 0 : index
    %c1792 = arith.constant 1792 : index
    %309 = vector.load %arg3[%c0_87, %c1792] : memref<1x2432xf32, #tpu.memory_space<vmem>>, vector<1x32xf32>
    %cst_88 = arith.constant dense<0.000000e+00> : vector<8xf32>
    %310 = vector.multi_reduction <add>, %307, %cst_88 [1] : vector<8x32xf32> to vector<8xf32>
    %311 = vector.shape_cast %310 : vector<8xf32> to vector<8x1xf32>
    %cst_89 = arith.constant 3.200000e+01 : f32
    %312 = vector.broadcast %cst_89 : f32 to vector<8x1xf32>
    %313 = arith.divf %311, %312 : vector<8x1xf32>
    %314 = vector.broadcast %313 : vector<8x1xf32> to vector<8x32xf32>
    %315 = arith.subf %307, %314 : vector<8x32xf32>
    %316 = arith.mulf %315, %315 : vector<8x32xf32>
    %cst_90 = arith.constant dense<0.000000e+00> : vector<8xf32>
    %317 = vector.multi_reduction <add>, %316, %cst_90 [1] : vector<8x32xf32> to vector<8xf32>
    %318 = vector.shape_cast %317 : vector<8xf32> to vector<8x1xf32>
    %cst_91 = arith.constant 3.200000e+01 : f32
    %319 = vector.broadcast %cst_91 : f32 to vector<8x1xf32>
    %320 = arith.divf %318, %319 : vector<8x1xf32>
    %321 = vector.broadcast %313 : vector<8x1xf32> to vector<8x32xf32>
    %322 = arith.subf %307, %321 : vector<8x32xf32>
    %cst_92 = arith.constant 9.99999974E-6 : f32
    %323 = vector.broadcast %cst_92 : f32 to vector<8x1xf32>
    %324 = arith.addf %320, %323 : vector<8x1xf32>
    %325 = math.rsqrt %324 : vector<8x1xf32>
    %326 = vector.broadcast %325 : vector<8x1xf32> to vector<8x32xf32>
    %327 = arith.mulf %322, %326 : vector<8x32xf32>
    %328 = vector.broadcast %308 : vector<1x32xf32> to vector<8x32xf32>
    %329 = arith.mulf %327, %328 : vector<8x32xf32>
    %330 = vector.broadcast %309 : vector<1x32xf32> to vector<8x32xf32>
    %331 = arith.addf %329, %330 : vector<8x32xf32>
    %c0_93 = arith.constant 0 : index
    %c1408 = arith.constant 1408 : index
    %332 = vector.load %arg2[%c0_93, %c1408] : memref<128x1920xf32, #tpu.memory_space<vmem>>, vector<32x128xf32>
    %cst_94 = arith.constant dense<0.000000e+00> : vector<8x128xf32>
    %333 = tpu.matmul %331, %332, %cst_94 {dimension_numbers = #tpu.dot_dimension_numbers<[1], [0], [0], [1], [0, 0, 1, 1], [], []>} : vector<8x32xf32>, vector<32x128xf32>, vector<8x128xf32> -> vector<8x128xf32>
    %c0_95 = arith.constant 0 : index
    %c1408_96 = arith.constant 1408 : index
    %334 = vector.load %arg3[%c0_95, %c1408_96] : memref<1x2432xf32, #tpu.memory_space<vmem>>, vector<1x128xf32>
    %335 = vector.broadcast %334 : vector<1x128xf32> to vector<8x128xf32>
    %336 = arith.addf %333, %335 : vector<8x128xf32>
    %cst_97 = arith.constant 0.000000e+00 : f32
    %337 = vector.broadcast %cst_97 : f32 to vector<8x128xf32>
    %338 = arith.maximumf %336, %337 : vector<8x128xf32>
    %c0_98 = arith.constant 0 : index
    %c1536 = arith.constant 1536 : index
    %339 = vector.load %arg2[%c0_98, %c1536] : memref<128x1920xf32, #tpu.memory_space<vmem>>, vector<128x32xf32>
    %cst_99 = arith.constant dense<0.000000e+00> : vector<8x32xf32>
    %340 = tpu.matmul %338, %339, %cst_99 {dimension_numbers = #tpu.dot_dimension_numbers<[1], [0], [0], [1], [0, 0, 1, 1], [], []>} : vector<8x128xf32>, vector<128x32xf32>, vector<8x32xf32> -> vector<8x32xf32>
    %c0_100 = arith.constant 0 : index
    %c1536_101 = arith.constant 1536 : index
    %341 = vector.load %arg3[%c0_100, %c1536_101] : memref<1x2432xf32, #tpu.memory_space<vmem>>, vector<1x32xf32>
    %342 = vector.broadcast %341 : vector<1x32xf32> to vector<8x32xf32>
    %343 = arith.addf %340, %342 : vector<8x32xf32>
    %344 = arith.addf %343, %331 : vector<8x32xf32>
    %c0_102 = arith.constant 0 : index
    %c1920 = arith.constant 1920 : index
    %345 = vector.load %arg3[%c0_102, %c1920] : memref<1x2432xf32, #tpu.memory_space<vmem>>, vector<1x32xf32>
    %c0_103 = arith.constant 0 : index
    %c2048 = arith.constant 2048 : index
    %346 = vector.load %arg3[%c0_103, %c2048] : memref<1x2432xf32, #tpu.memory_space<vmem>>, vector<1x32xf32>
    %cst_104 = arith.constant dense<0.000000e+00> : vector<8xf32>
    %347 = vector.multi_reduction <add>, %344, %cst_104 [1] : vector<8x32xf32> to vector<8xf32>
    %348 = vector.shape_cast %347 : vector<8xf32> to vector<8x1xf32>
    %cst_105 = arith.constant 3.200000e+01 : f32
    %349 = vector.broadcast %cst_105 : f32 to vector<8x1xf32>
    %350 = arith.divf %348, %349 : vector<8x1xf32>
    %351 = vector.broadcast %350 : vector<8x1xf32> to vector<8x32xf32>
    %352 = arith.subf %344, %351 : vector<8x32xf32>
    %353 = arith.mulf %352, %352 : vector<8x32xf32>
    %cst_106 = arith.constant dense<0.000000e+00> : vector<8xf32>
    %354 = vector.multi_reduction <add>, %353, %cst_106 [1] : vector<8x32xf32> to vector<8xf32>
    %355 = vector.shape_cast %354 : vector<8xf32> to vector<8x1xf32>
    %cst_107 = arith.constant 3.200000e+01 : f32
    %356 = vector.broadcast %cst_107 : f32 to vector<8x1xf32>
    %357 = arith.divf %355, %356 : vector<8x1xf32>
    %358 = vector.broadcast %350 : vector<8x1xf32> to vector<8x32xf32>
    %359 = arith.subf %344, %358 : vector<8x32xf32>
    %cst_108 = arith.constant 9.99999974E-6 : f32
    %360 = vector.broadcast %cst_108 : f32 to vector<8x1xf32>
    %361 = arith.addf %357, %360 : vector<8x1xf32>
    %362 = math.rsqrt %361 : vector<8x1xf32>
    %363 = vector.broadcast %362 : vector<8x1xf32> to vector<8x32xf32>
    %364 = arith.mulf %359, %363 : vector<8x32xf32>
    %365 = vector.broadcast %345 : vector<1x32xf32> to vector<8x32xf32>
    %366 = arith.mulf %364, %365 : vector<8x32xf32>
    %367 = vector.broadcast %346 : vector<1x32xf32> to vector<8x32xf32>
    %368 = arith.addf %366, %367 : vector<8x32xf32>
    %c0_109 = arith.constant 0 : index
    %c1664_110 = arith.constant 1664 : index
    %369 = vector.load %arg2[%c0_109, %c1664_110] : memref<128x1920xf32, #tpu.memory_space<vmem>>, vector<32x16xf32>
    %cst_111 = arith.constant dense<0.000000e+00> : vector<8x16xf32>
    %370 = tpu.matmul %368, %369, %cst_111 {dimension_numbers = #tpu.dot_dimension_numbers<[1], [0], [0], [1], [0, 0, 1, 1], [], []>} : vector<8x32xf32>, vector<32x16xf32>, vector<8x16xf32> -> vector<8x16xf32>
    %c0_112 = arith.constant 0 : index
    %c2176 = arith.constant 2176 : index
    %371 = vector.load %arg3[%c0_112, %c2176] : memref<1x2432xf32, #tpu.memory_space<vmem>>, vector<1x16xf32>
    %372 = vector.broadcast %371 : vector<1x16xf32> to vector<8x16xf32>
    %373 = arith.addf %370, %372 : vector<8x16xf32>
    %cst_113 = arith.constant 0.000000e+00 : f32
    %374 = vector.broadcast %cst_113 : f32 to vector<8x16xf32>
    %375 = arith.maximumf %373, %374 : vector<8x16xf32>
    %c0_114 = arith.constant 0 : index
    %c1792_115 = arith.constant 1792 : index
    %376 = vector.load %arg2[%c0_114, %c1792_115] : memref<128x1920xf32, #tpu.memory_space<vmem>>, vector<16x1xf32>
    %cst_116 = arith.constant dense<0.000000e+00> : vector<8x1xf32>
    %377 = tpu.matmul %375, %376, %cst_116 {dimension_numbers = #tpu.dot_dimension_numbers<[1], [0], [0], [1], [0, 0, 1, 1], [], []>} : vector<8x16xf32>, vector<16x1xf32>, vector<8x1xf32> -> vector<8x1xf32>
    %c0_117 = arith.constant 0 : index
    %c2304 = arith.constant 2304 : index
    %378 = vector.load %arg3[%c0_117, %c2304] : memref<1x2432xf32, #tpu.memory_space<vmem>>, vector<1x1xf32>
    %379 = vector.broadcast %378 : vector<1x1xf32> to vector<8x1xf32>
    %380 = arith.addf %377, %379 : vector<8x1xf32>
    %c0_118 = arith.constant 0 : index
    %c0_119 = arith.constant 0 : index
    %381 = vector.load %arg4[%c0_118, %c0_119] : memref<8x1xf32, #tpu.memory_space<vmem>>, vector<8x1xf32>
    tpu.vector_store %arg4[%c0_118, %c0_119], %380 {strides = array<i32>} : memref<8x1xf32, #tpu.memory_space<vmem>>, vector<8x1xf32>,
    return
  }
  func.func @transform_0(%arg0: i32) -> (i32, i32) {
    %c0_i32 = arith.constant 0 : i32
    %c0_i32_0 = arith.constant 0 : i32
    return %arg0, %c0_i32 : i32, i32
  }
  func.func @transform_1(%arg0: i32) -> (i32, i32) {
    %c0_i32 = arith.constant 0 : i32
    %c0_i32_0 = arith.constant 0 : i32
    %c0_i32_1 = arith.constant 0 : i32
    return %c0_i32, %c0_i32_0 : i32, i32
  }
  func.func @transform_2(%arg0: i32) -> (i32, i32) {
    %c0_i32 = arith.constant 0 : i32
    %c0_i32_0 = arith.constant 0 : i32
    %c0_i32_1 = arith.constant 0 : i32
    return %c0_i32, %c0_i32_0 : i32, i32
  }
  func.func @transform_3(%arg0: i32) -> (i32, i32) {
    %c0_i32 = arith.constant 0 : i32
    %c0_i32_0 = arith.constant 0 : i32
    return %arg0, %c0_i32 : i32, i32
  }
}

</mosaic_0001>

<llo_original>
// kernel: tpu_custom_call.1
$region0: #{tpu_custom_call.1}
  #allocation0 [shape = 'u32[]', space=smem, size = 0x4, offset = 0x4, fixed_abs, tag = 'smem constant byte address 0x4 - core index']
  #allocation1 [shape = 'u32[144,128]{1,0:T(1,128)}', space=vmem, size = 0x12000, scoped, tag = 'internal scratch']
  %s0 = inlined_call_operand.vmem [shape: f32[16,8], index: 0, kind: input, shape index: {}]
  %s1 = inlined_call_operand.hbm [shape: f32[128,1920], index: 1, kind: input, shape index: {}]
  %s2 = inlined_call_operand.vmem [shape: f32[1,2432], index: 2, kind: input, shape index: {}]
  %s3 = inlined_call_operand.vmem [shape: f32[16,1], index: 3, kind: output, shape index: {}]
  %s4 = sld [smem:[#allocation0]]
  $region49: #{tpu_custom_call.1} parent=0
    _
  %s6 = ssub.s32 1, %s4
  %s7 = scalar_select 0, %s6, %s4
  $region1: #{tpu_custom_call.1} parent=0
    #allocation2 [shape = 'u8[983040]{0}', space=vmem, size = 0xf0000, scoped, tag = 'input window, operand 1, single buffered']
    #allocation3 [shape = 's32[2]{0}', space=sflag, size = 0x8, scoped, tag = 'scoped memory for tpu_custom_call.1']
    %8 = vsyncpa [#allocation3], 0
    loop: start=0, step=1, limit=4
    $region2: #{tpu_custom_call.1} parent=1 // loop_pre_header
      _
    $region3: #{tpu_custom_call.1} parent=1 // loop_header
      %s10 = sphi 0, %s14
      %p11 = scmp.ge.s32.totalorder %s10, 4
      %s20 = sphi 0, %s22
      %s23 = sphi 0, %s20
      %s24 = sphi 0, %s23
      %s40 = sphi 0, %s24
      %s44 = sphi 0, %s44
      %s46 = sphi 0, %s44
      %s47 = sphi 0, %s46
      %s61 = sphi 0, %s47
      %s65 = sphi 0, %s65
      %s67 = sphi 0, %s65
      %s68 = sphi 0, %s67
      %s82 = sphi 0, %s68
      %s88 = sphi 0, %s90
      %s91 = sphi 0, %s88
      %s92 = sphi 0, %s91
      %s108 = sphi 0, %s92
    $region4: #{tpu_custom_call.1} parent=1 // loop_header_branch
      %13 = sbr.rel (%p11) target = $region8
    $region5: #{tpu_custom_call.1} parent=1 // loop_body
      %s15 = ssub.s32 %s10, 1
      %s16 = ssub.s32 %s10, 2
      %s17 = sadd.s32 %s10, 1
      %s18 = ssub.s32 %s10, %s17
      %p19 = scmp.eq.s32.totalorder %s18, 0
      %s21 = sadd.s32 %s20, 1
      %s22 = scalar_select %p19, %s20, %s21
      %p25 = pneg %p19
      %p26 = scmp.eq.s32.totalorder %s10, 1
      %p27 = por %p25, %p26
      %p28 = scmp.ne.s32.totalorder %s20, %s23
      %p29 = scmp.eq.s32.totalorder %s10, 0
      %p30 = por %p28, %p29
      %p31 = scmp.ne.s32.totalorder %s20, %s23
      %p32 = scmp.eq.s32.totalorder %s15, 1
      %p33 = por %p31, %p32
      %p34 = scmp.ne.s32.totalorder %s23, %s24
      %p35 = scmp.eq.s32.totalorder %s15, 0
      %p36 = por %p34, %p35
      %p37 = scmp.ne.s32.totalorder %s23, %s24
      %p38 = scmp.eq.s32.totalorder %s16, 1
      %p39 = por %p37, %p38
      %p41 = scmp.ne.s32.totalorder %s24, %s40
      %p42 = scmp.eq.s32.totalorder %s16, 0
      %p43 = por %p41, %p42
      %s45 = sadd.s32 %s44, 1
      %p48 = scmp.eq.s32.totalorder %s10, 1
      %p49 = scmp.ne.s32.totalorder %s44, %s46
      %p50 = scmp.eq.s32.totalorder %s10, 0
      %p51 = por %p49, %p50
      %p52 = scmp.ne.s32.totalorder %s44, %s46
      %p53 = scmp.eq.s32.totalorder %s15, 1
      %p54 = por %p52, %p53
      %p55 = scmp.ne.s32.totalorder %s46, %s47
      %p56 = scmp.eq.s32.totalorder %s15, 0
      %p57 = por %p55, %p56
      %p58 = scmp.ne.s32.totalorder %s46, %s47
      %p59 = scmp.eq.s32.totalorder %s16, 1
      %p60 = por %p58, %p59
      %p62 = scmp.ne.s32.totalorder %s47, %s61
      %p63 = scmp.eq.s32.totalorder %s16, 0
      %p64 = por %p62, %p63
      %s66 = sadd.s32 %s65, 1
      %p69 = scmp.eq.s32.totalorder %s10, 1
      %p70 = scmp.ne.s32.totalorder %s65, %s67
      %p71 = scmp.eq.s32.totalorder %s10, 0
      %p72 = por %p70, %p71
      %p73 = scmp.ne.s32.totalorder %s65, %s67
      %p74 = scmp.eq.s32.totalorder %s15, 1
      %p75 = por %p73, %p74
      %p76 = scmp.ne.s32.totalorder %s67, %s68
      %p77 = scmp.eq.s32.totalorder %s15, 0
      %p78 = por %p76, %p77
      %p79 = scmp.ne.s32.totalorder %s67, %s68
      %p80 = scmp.eq.s32.totalorder %s16, 1
      %p81 = por %p79, %p80
      %p83 = scmp.ne.s32.totalorder %s68, %s82
      %p84 = scmp.eq.s32.totalorder %s16, 0
      %p85 = por %p83, %p84
      %s86 = ssub.s32 %s10, %s17
      %p87 = scmp.eq.s32.totalorder %s86, 0
      %s89 = sadd.s32 %s88, 1
      %s90 = scalar_select %p87, %s88, %s89
      %p93 = pneg %p87
      %p94 = scmp.eq.s32.totalorder %s10, 1
      %p95 = por %p93, %p94
      %p96 = scmp.ne.s32.totalorder %s88, %s91
      %p97 = scmp.eq.s32.totalorder %s10, 0
      %p98 = por %p96, %p97
      %p99 = scmp.ne.s32.totalorder %s88, %s91
      %p100 = scmp.eq.s32.totalorder %s15, 1
      %p101 = por %p99, %p100
      %p102 = scmp.ne.s32.totalorder %s91, %s92
      %p103 = scmp.eq.s32.totalorder %s15, 0
      %p104 = por %p102, %p103
      %p105 = scmp.ne.s32.totalorder %s91, %s92
      %p106 = scmp.eq.s32.totalorder %s16, 1
      %p107 = por %p105, %p106
      %p109 = scmp.ne.s32.totalorder %s92, %s108
      %p110 = scmp.eq.s32.totalorder %s16, 0
      %p111 = por %p109, %p110
      %p112 = scmp.le.s32.totalorder 1, %s10
      %p113 = scmp.lt.s32.totalorder %s10, 3
      %p114 = pnand %p112, %p113
      %p115 = pneg %p114
      // Predicated region
      $region9: #{tpu_custom_call.1} parent=5 // pred_check
        _
      $region10: #{tpu_custom_call.1} parent=5 // pred_check_branch
        %117 = sbr.rel (%p114) target = $region12
      $region11: #{tpu_custom_call.1} parent=5 // pred_region
        %s118 = ssub.s32 %s10, 1
        // Predicated region
        $region13: #{tpu_custom_call.1} parent=11 // pred_check
          %p119 = pneg %p57
        $region14: #{tpu_custom_call.1} parent=11 // pred_check_branch
          %121 = sbr.rel (%p119) target = $region16
        $region15: #{tpu_custom_call.1} parent=11 // pred_region
          %s123 = ssub.s32 30720, 30720
          %124 = vsyncadd [#allocation3], %s123
          %s125 = sshll.u32 [#allocation2], 4
          %s126 = int_to_ptr.vmem [resolvable:$true] %s125
          %131 = dma.hbm_to_vmem [thread:$0]  %s1, 30720, %s126, [#allocation3], 1920, 1920, 120
        $region16: #{tpu_custom_call.1} parent=11 // pred_fallthru
          _
        // Predicated region
        $region17: #{tpu_custom_call.1} parent=11 // pred_check
          %p132 = pneg %p78
        $region18: #{tpu_custom_call.1} parent=11 // pred_check_branch
          %134 = sbr.rel (%p132) target = $region20
        $region19: #{tpu_custom_call.1} parent=11 // pred_region
          _
        $region20: #{tpu_custom_call.1} parent=11 // pred_fallthru
          _
      $region12: #{tpu_custom_call.1} parent=5 // pred_fallthru
        _
      %p135 = scmp.lt.s32.totalorder %s10, 2
      // Predicated region
      $region21: #{tpu_custom_call.1} parent=5 // pred_check
        %p136 = pneg %p135
      $region22: #{tpu_custom_call.1} parent=5 // pred_check_branch
        %138 = sbr.rel (%p136) target = $region24
      $region23: #{tpu_custom_call.1} parent=5 // pred_region
        // Predicated region
        $region25: #{tpu_custom_call.1} parent=23 // pred_check
          %p139 = pneg %p30
        $region26: #{tpu_custom_call.1} parent=23 // pred_check_branch
          %141 = sbr.rel (%p139) target = $region28
        $region27: #{tpu_custom_call.1} parent=23 // pred_region
          %p142 = scmp.lt.s32.totalorder %s10, 1
          %s143 = scalar_select %p142, %s10, 1
          %s144 = smul.addr %s143, 8
          %s145 = scalar_lea.vmem %s0, %s144
        $region28: #{tpu_custom_call.1} parent=23 // pred_fallthru
          _
      $region24: #{tpu_custom_call.1} parent=5 // pred_fallthru
        _
      %p146 = scmp.le.s32.totalorder 1, %s10
      %p147 = scmp.lt.s32.totalorder %s10, 3
      %p148 = pnand %p146, %p147
      %p149 = pneg %p148
      // Predicated region
      $region29: #{tpu_custom_call.1} parent=5 // pred_check
        _
      $region30: #{tpu_custom_call.1} parent=5 // pred_check_branch
        %151 = sbr.rel (%p148) target = $region32
      $region31: #{tpu_custom_call.1} parent=5 // pred_region
        %s152 = ssub.s32 %s10, 1
        // Predicated region
        $region33: #{tpu_custom_call.1} parent=31 // pred_check
          %p153 = pneg %p57
        $region34: #{tpu_custom_call.1} parent=31 // pred_check_branch
          %155 = sbr.rel (%p153) target = $region36
        $region35: #{tpu_custom_call.1} parent=31 // pred_region
          %156 = dma.done [#allocation3], 30720
        $region36: #{tpu_custom_call.1} parent=31 // pred_fallthru
          _
        %p157 = scmp.lt.s32.totalorder %s15, 1
        %s158 = scalar_select %p157, %s15, 1
        %s159 = smul.addr %s158, 8
        %s160 = scalar_lea.vmem %s0, %s159
        %p161 = pneg %p36
        %p162 = pneg %p33
        %p163 = pneg %p57
        %p164 = pneg %p54
        %p165 = pneg %p78
        %p166 = pneg %p75
        %p167 = pneg %p104
        %p168 = pneg %p101
        %p169 = scmp.lt.s32.totalorder %s15, 1
        %s170 = scalar_select %p169, %s15, 1
        %s171 = smul.addr %s170, 8
        %s172 = scalar_lea.vmem %s3, %s171
        %p173 = scmp.lt.s32.totalorder %s15, 1
        %s174 = scalar_select %p173, %s15, 1
        %s175 = smul.addr %s174, 8
        %s176 = scalar_lea.vmem %s0, %s175
        %p177 = scmp.lt.s32.totalorder %s15, 1
        %s178 = scalar_select %p177, %s15, 1
        %s179 = smul.addr %s178, 8
        %s180 = scalar_lea.vmem %s3, %s179
        %v181 = vld [vmem:[%s176] sm:$0xff]
        %v182 = vld [vmem:[#allocation2] sm:$0xff]
        %v183 = vld [vmem:[%s2] sm:$0x1]
        %v185 = vlaneseq
        %v186 = vshrl.u32 %v185, 7
        %v187 = vsub.s32 0, %v186
        %v188 = vrot.slane %v183, %v187
        %vm190 = vcmask 64512
        %v192 = vsel %vm190, %v181, 0
        %194 = vmatprep.subr.mxu0 0.0
        %195 = vmatpush1.msra.mxu0 0.0
        %196 = vmatprep.subr.mxu0 0.0
        %197 = vmatpush1.msra.mxu0 0.0
        %198 = vmatprep.subr.mxu0 0.0
        %199 = vmatpush1.msra.mxu0 0.0
        %200 = vmatprep.subr.mxu0 0.0
        %201 = vmatpush1.msra.mxu0 0.0
        %202 = vmatprep.subr.mxu0 0.0
        %203 = vmatpush1.msra.mxu0 0.0
        %204 = vmatprep.subr.mxu0 0.0
        %205 = vmatpush1.msra.mxu0 0.0
        %206 = vmatprep.subr.mxu0 0.0
        %207 = vmatpush1.msra.mxu0 0.0
        %208 = vmatprep.subr.mxu0 0.0
        %209 = vmatpush1.msra.mxu0 0.0
        %210 = vmatprep.subr.mxu0 0.0
        %211 = vmatpush1.msra.mxu0 0.0
        %212 = vmatprep.subr.mxu0 0.0
        %213 = vmatpush1.msra.mxu0 0.0
        %214 = vmatprep.subr.mxu0 0.0
        %215 = vmatpush1.msra.mxu0 0.0
        %216 = vmatprep.subr.mxu0 0.0
        %217 = vmatpush1.msra.mxu0 0.0
        %218 = vmatprep.subr.mxu0 0.0
        %219 = vmatpush1.msra.mxu0 0.0
        %220 = vmatprep.subr.mxu0 0.0
        %221 = vmatpush1.msra.mxu0 0.0
        %222 = vmatprep.subr.mxu0 0.0
        %223 = vmatpush1.msra.mxu0 0.0
        %224 = vmatprep.subr.mxu0 0.0
        %225 = vmatpush1.msra.mxu0 %v182
        %226 = vmatprep.subr.mxu0 0.0
        %227 = vmatpush2.msra.mxu0 0.0
        %228 = vmatprep.subr.mxu0 0.0
        %229 = vmatpush2.msra.mxu0 0.0
        %230 = vmatprep.subr.mxu0 0.0
        %231 = vmatpush2.msra.mxu0 0.0
        %232 = vmatprep.subr.mxu0 0.0
        %233 = vmatpush2.msra.mxu0 0.0
        %234 = vmatprep.subr.mxu0 0.0
        %235 = vmatpush2.msra.mxu0 0.0
        %236 = vmatprep.subr.mxu0 0.0
        %237 = vmatpush2.msra.mxu0 0.0
        %238 = vmatprep.subr.mxu0 0.0
        %239 = vmatpush2.msra.mxu0 0.0
        %240 = vmatprep.subr.mxu0 0.0
        %241 = vmatpush2.msra.mxu0 0.0
        %242 = vmatprep.subr.mxu0 0.0
        %243 = vmatpush2.msra.mxu0 0.0
        %244 = vmatprep.subr.mxu0 0.0
        %245 = vmatpush2.msra.mxu0 0.0
        %246 = vmatprep.subr.mxu0 0.0
        %247 = vmatpush2.msra.mxu0 0.0
        %248 = vmatprep.subr.mxu0 0.0
        %249 = vmatpush2.msra.mxu0 0.0
        %250 = vmatprep.subr.mxu0 0.0
        %251 = vmatpush2.msra.mxu0 0.0
        %252 = vmatprep.subr.mxu0 0.0
        %253 = vmatpush2.msra.mxu0 0.0
        %254 = vmatprep.subr.mxu0 0.0
        %255 = vmatpush2.msra.mxu0 0.0
        %256 = vmatprep.subr.mxu0 0.0
        %257 = vmatpush2.msra.mxu0 0.0
        %258 = vmatprep.mubr.f32.mxu0 0.0
        %259 = vmatmul.mubr.f32.gmra.mxu0 %v192
        %v260 = vpop.f32.mrf.mxu0
        %v261 = vadd.f32 %v188, %v260
        %v262 = vpop.f32.mrf.mxu0
        %263 = vdwg.mxu0
        %v264 = vld [vmem:[#allocation2 + $0x8] sm:$0xff]
        %v265 = vld [vmem:[#allocation2 + $0x80] sm:$0xff]
        %v266 = vld [vmem:[#allocation2 + $0xf8] sm:$0xff]
        %v267 = vld [vmem:[#allocation2 + $0x170] sm:$0xff]
        %v268 = vld [vmem:[%s2 + $0x1] sm:$0x1]
        %v270 = vlaneseq
        %v271 = vshrl.u32 %v270, 7
        %v272 = vsub.s32 0, %v271
        %v273 = vrot.slane %v268, %v272
        %vm275 = vcmask 261120
        %v277 = vsel %vm275, %v261, 0
        %279 = vmatprep.subr.mxu0 0.0
        %280 = vmatpush1.msra.mxu0 0.0
        %281 = vmatprep.subr.mxu0 0.0
        %282 = vmatpush1.msra.mxu0 0.0
        %283 = vmatprep.subr.mxu0 0.0
        %284 = vmatpush1.msra.mxu0 0.0
        %285 = vmatprep.subr.mxu0 0.0
        %286 = vmatpush1.msra.mxu0 0.0
        %287 = vmatprep.subr.mxu0 0.0
        %288 = vmatpush1.msra.mxu0 0.0
        %289 = vmatprep.subr.mxu0 0.0
        %290 = vmatpush1.msra.mxu0 0.0
        %291 = vmatprep.subr.mxu0 0.0
        %292 = vmatpush1.msra.mxu0 0.0
        %293 = vmatprep.subr.mxu0 0.0
        %294 = vmatpush1.msra.mxu0 0.0
        %295 = vmatprep.subr.mxu0 0.0
        %296 = vmatpush1.msra.mxu0 0.0
        %297 = vmatprep.subr.mxu0 0.0
        %298 = vmatpush1.msra.mxu0 0.0
        %299 = vmatprep.subr.mxu0 0.0
        %300 = vmatpush1.msra.mxu0 0.0
        %301 = vmatprep.subr.mxu0 0.0
        %302 = vmatpush1.msra.mxu0 0.0
        %303 = vmatprep.subr.mxu0 0.0
        %304 = vmatpush1.msra.mxu0 %v267
        %305 = vmatprep.subr.mxu0 0.0
        %306 = vmatpush1.msra.mxu0 %v266
        %307 = vmatprep.subr.mxu0 0.0
        %308 = vmatpush1.msra.mxu0 %v265
        %309 = vmatprep.subr.mxu0 0.0
        %310 = vmatpush1.msra.mxu0 %v264
        %311 = vmatprep.subr.mxu0 0.0
        %312 = vmatpush2.msra.mxu0 0.0
        %313 = vmatprep.subr.mxu0 0.0
        %314 = vmatpush2.msra.mxu0 0.0
        %315 = vmatprep.subr.mxu0 0.0
        %316 = vmatpush2.msra.mxu0 0.0
        %317 = vmatprep.subr.mxu0 0.0
        %318 = vmatpush2.msra.mxu0 0.0
        %319 = vmatprep.subr.mxu0 0.0
        %320 = vmatpush2.msra.mxu0 0.0
        %321 = vmatprep.subr.mxu0 0.0
        %322 = vmatpush2.msra.mxu0 0.0
        %323 = vmatprep.subr.mxu0 0.0
        %324 = vmatpush2.msra.mxu0 0.0
        %325 = vmatprep.subr.mxu0 0.0
        %326 = vmatpush2.msra.mxu0 0.0
        %327 = vmatprep.subr.mxu0 0.0
        %328 = vmatpush2.msra.mxu0 0.0
        %329 = vmatprep.subr.mxu0 0.0
        %330 = vmatpush2.msra.mxu0 0.0
        %331 = vmatprep.subr.mxu0 0.0
        %332 = vmatpush2.msra.mxu0 0.0
        %333 = vmatprep.subr.mxu0 0.0
        %334 = vmatpush2.msra.mxu0 0.0
        %335 = vmatprep.subr.mxu0 0.0
        %336 = vmatpush2.msra.mxu0 0.0
        %337 = vmatprep.subr.mxu0 0.0
        %338 = vmatpush2.msra.mxu0 0.0
        %339 = vmatprep.subr.mxu0 0.0
        %340 = vmatpush2.msra.mxu0 0.0
        %341 = vmatprep.subr.mxu0 0.0
        %342 = vmatpush2.msra.mxu0 0.0
        %343 = vmatprep.mubr.f32.mxu0 0.0
        %344 = vmatmul.mubr.f32.gmra.mxu0 %v277
        %v345 = vpop.f32.mrf.mxu0
        %v346 = vadd.f32 %v273, %v345
        %v347 = vpop.f32.mrf.mxu0
        %348 = vdwg.mxu0
        %v349 = vmax.f32 %v346, 0.0
        %v350 = vld [vmem:[#allocation2 + $0x10] sm:$0xff]
        %v351 = vld [vmem:[#allocation2 + $0x88] sm:$0xff]
        %v352 = vld [vmem:[#allocation2 + $0x100] sm:$0xff]
        %v353 = vld [vmem:[#allocation2 + $0x178] sm:$0xff]
        %v354 = vld [vmem:[%s2 + $0x2] sm:$0x1]
        %v356 = vlaneseq
        %v357 = vshrl.u32 %v356, 7
        %v358 = vsub.s32 0, %v357
        %v359 = vrot.slane %v354, %v358
        %v362 = vsel %vm275, %v349, 0
        %364 = vmatprep.subr.mxu0 0.0
        %365 = vmatpush1.msra.mxu0 0.0
        %366 = vmatprep.subr.mxu0 0.0
        %367 = vmatpush1.msra.mxu0 0.0
        %368 = vmatprep.subr.mxu0 0.0
        %369 = vmatpush1.msra.mxu0 0.0
        %370 = vmatprep.subr.mxu0 0.0
        %371 = vmatpush1.msra.mxu0 0.0
        %372 = vmatprep.subr.mxu0 0.0
        %373 = vmatpush1.msra.mxu0 0.0
        %374 = vmatprep.subr.mxu0 0.0
        %375 = vmatpush1.msra.mxu0 0.0
        %376 = vmatprep.subr.mxu0 0.0
        %377 = vmatpush1.msra.mxu0 0.0
        %378 = vmatprep.subr.mxu0 0.0
        %379 = vmatpush1.msra.mxu0 0.0
        %380 = vmatprep.subr.mxu0 0.0
        %381 = vmatpush1.msra.mxu0 0.0
        %382 = vmatprep.subr.mxu0 0.0
        %383 = vmatpush1.msra.mxu0 0.0
        %384 = vmatprep.subr.mxu0 0.0
        %385 = vmatpush1.msra.mxu0 0.0
        %386 = vmatprep.subr.mxu0 0.0
        %387 = vmatpush1.msra.mxu0 0.0
        %388 = vmatprep.subr.mxu0 0.0
        %389 = vmatpush1.msra.mxu0 %v353
        %390 = vmatprep.subr.mxu0 0.0
        %391 = vmatpush1.msra.mxu0 %v352
        %392 = vmatprep.subr.mxu0 0.0
        %393 = vmatpush1.msra.mxu0 %v351
        %394 = vmatprep.subr.mxu0 0.0
        %395 = vmatpush1.msra.mxu0 %v350
        %396 = vmatprep.subr.mxu0 0.0
        %397 = vmatpush2.msra.mxu0 0.0
        %398 = vmatprep.subr.mxu0 0.0
        %399 = vmatpush2.msra.mxu0 0.0
        %400 = vmatprep.subr.mxu0 0.0
        %401 = vmatpush2.msra.mxu0 0.0
        %402 = vmatprep.subr.mxu0 0.0
        %403 = vmatpush2.msra.mxu0 0.0
        %404 = vmatprep.subr.mxu0 0.0
        %405 = vmatpush2.msra.mxu0 0.0
        %406 = vmatprep.subr.mxu0 0.0
        %407 = vmatpush2.msra.mxu0 0.0
        %408 = vmatprep.subr.mxu0 0.0
        %409 = vmatpush2.msra.mxu0 0.0
        %410 = vmatprep.subr.mxu0 0.0
        %411 = vmatpush2.msra.mxu0 0.0
        %412 = vmatprep.subr.mxu0 0.0
        %413 = vmatpush2.msra.mxu0 0.0
        %414 = vmatprep.subr.mxu0 0.0
        %415 = vmatpush2.msra.mxu0 0.0
        %416 = vmatprep.subr.mxu0 0.0
        %417 = vmatpush2.msra.mxu0 0.0
        %418 = vmatprep.subr.mxu0 0.0
        %419 = vmatpush2.msra.mxu0 0.0
        %420 = vmatprep.subr.mxu0 0.0
        %421 = vmatpush2.msra.mxu0 0.0
        %422 = vmatprep.subr.mxu0 0.0
        %423 = vmatpush2.msra.mxu0 0.0
        %424 = vmatprep.subr.mxu0 0.0
        %425 = vmatpush2.msra.mxu0 0.0
        %426 = vmatprep.subr.mxu0 0.0
        %427 = vmatpush2.msra.mxu0 0.0
        %428 = vmatprep.mubr.f32.mxu0 0.0
        %429 = vmatmul.mubr.f32.gmra.mxu0 %v362
        %v430 = vpop.f32.mrf.mxu0
        %v431 = vadd.f32 %v359, %v430
        %v432 = vpop.f32.mrf.mxu0
        %433 = vdwg.mxu0
        %v434 = vsel %vm190, %v431, -inf
        %435 = vmax.xlane.f32.xlu0 %v434
        %v436 = vpop.xlane.xlu0 %435
        %v437 = vsub.f32 %v431, %v436
        %v438 = vmul.f32 %v437, 1.442695
        %v439 = vpow.pop %v438
        %v440 = vsel %vm190, %v439, 0.0
        %441 = vadd.xlane.f32.xlu0 %v440
        %v442 = vpop.xlane.xlu0 %441
        %v443 = vrcp.pop %v442
        %v444 = vmul.f32 %v439, %v443
        %v445 = vmul.f32 %v181, %v444
        %v446 = vld [vmem:[#allocation2 + $0x18] sm:$0xff]
        %v447 = vld [vmem:[%s2 + $0x3] sm:$0x1]
        %v449 = vlaneseq
        %v450 = vshrl.u32 %v449, 7
        %v451 = vsub.s32 0, %v450
        %v452 = vrot.slane %v447, %v451
        %v455 = vsel %vm190, %v445, 0
        %457 = vmatprep.subr.mxu0 0.0
        %458 = vmatpush1.msra.mxu0 0.0
        %459 = vmatprep.subr.mxu0 0.0
        %460 = vmatpush1.msra.mxu0 0.0
        %461 = vmatprep.subr.mxu0 0.0
        %462 = vmatpush1.msra.mxu0 0.0
        %463 = vmatprep.subr.mxu0 0.0
        %464 = vmatpush1.msra.mxu0 0.0
        %465 = vmatprep.subr.mxu0 0.0
        %466 = vmatpush1.msra.mxu0 0.0
        %467 = vmatprep.subr.mxu0 0.0
        %468 = vmatpush1.msra.mxu0 0.0
        %469 = vmatprep.subr.mxu0 0.0
        %470 = vmatpush1.msra.mxu0 0.0
        %471 = vmatprep.subr.mxu0 0.0
        %472 = vmatpush1.msra.mxu0 0.0
        %473 = vmatprep.subr.mxu0 0.0
        %474 = vmatpush1.msra.mxu0 0.0
        %475 = vmatprep.subr.mxu0 0.0
        %476 = vmatpush1.msra.mxu0 0.0
        %477 = vmatprep.subr.mxu0 0.0
        %478 = vmatpush1.msra.mxu0 0.0
        %479 = vmatprep.subr.mxu0 0.0
        %480 = vmatpush1.msra.mxu0 0.0
        %481 = vmatprep.subr.mxu0 0.0
        %482 = vmatpush1.msra.mxu0 0.0
        %483 = vmatprep.subr.mxu0 0.0
        %484 = vmatpush1.msra.mxu0 0.0
        %485 = vmatprep.subr.mxu0 0.0
        %486 = vmatpush1.msra.mxu0 0.0
        %487 = vmatprep.subr.mxu0 0.0
        %488 = vmatpush1.msra.mxu0 %v446
        %489 = vmatprep.subr.mxu0 0.0
        %490 = vmatpush2.msra.mxu0 0.0
        %491 = vmatprep.subr.mxu0 0.0
        %492 = vmatpush2.msra.mxu0 0.0
        %493 = vmatprep.subr.mxu0 0.0
        %494 = vmatpush2.msra.mxu0 0.0
        %495 = vmatprep.subr.mxu0 0.0
        %496 = vmatpush2.msra.mxu0 0.0
        %497 = vmatprep.subr.mxu0 0.0
        %498 = vmatpush2.msra.mxu0 0.0
        %499 = vmatprep.subr.mxu0 0.0
        %500 = vmatpush2.msra.mxu0 0.0
        %501 = vmatprep.subr.mxu0 0.0
        %502 = vmatpush2.msra.mxu0 0.0
        %503 = vmatprep.subr.mxu0 0.0
        %504 = vmatpush2.msra.mxu0 0.0
        %505 = vmatprep.subr.mxu0 0.0
        %506 = vmatpush2.msra.mxu0 0.0
        %507 = vmatprep.subr.mxu0 0.0
        %508 = vmatpush2.msra.mxu0 0.0
        %509 = vmatprep.subr.mxu0 0.0
        %510 = vmatpush2.msra.mxu0 0.0
        %511 = vmatprep.subr.mxu0 0.0
        %512 = vmatpush2.msra.mxu0 0.0
        %513 = vmatprep.subr.mxu0 0.0
        %514 = vmatpush2.msra.mxu0 0.0
        %515 = vmatprep.subr.mxu0 0.0
        %516 = vmatpush2.msra.mxu0 0.0
        %517 = vmatprep.subr.mxu0 0.0
        %518 = vmatpush2.msra.mxu0 0.0
        %519 = vmatprep.subr.mxu0 0.0
        %520 = vmatpush2.msra.mxu0 0.0
        %521 = vmatprep.mubr.f32.mxu0 0.0
        %522 = vmatmul.mubr.f32.gmra.mxu0 %v455
        %v523 = vpop.f32.mrf.mxu0
        %v524 = vadd.f32 %v452, %v523
        %v525 = vpop.f32.mrf.mxu0
        %526 = vdwg.mxu0
        %v527 = vmax.f32 %v524, 0.0
        %v528 = vld [vmem:[#allocation2 + $0x20] sm:$0xff]
        %v529 = vld [vmem:[#allocation2 + $0x98] sm:$0xff]
        %v530 = vld [vmem:[#allocation2 + $0x110] sm:$0xff]
        %v531 = vld [vmem:[#allocation2 + $0x188] sm:$0xff]
        %v532 = vld [vmem:[%s2 + $0x4] sm:$0x1]
        %v534 = vlaneseq
        %v535 = vshrl.u32 %v534, 7
        %v536 = vsub.s32 0, %v535
        %v537 = vrot.slane %v532, %v536
        %v540 = vsel %vm275, %v527, 0
        %542 = vmatprep.subr.mxu0 0.0
        %543 = vmatpush1.msra.mxu0 0.0
        %544 = vmatprep.subr.mxu0 0.0
        %545 = vmatpush1.msra.mxu0 0.0
        %546 = vmatprep.subr.mxu0 0.0
        %547 = vmatpush1.msra.mxu0 0.0
        %548 = vmatprep.subr.mxu0 0.0
        %549 = vmatpush1.msra.mxu0 0.0
        %550 = vmatprep.subr.mxu0 0.0
        %551 = vmatpush1.msra.mxu0 0.0
        %552 = vmatprep.subr.mxu0 0.0
        %553 = vmatpush1.msra.mxu0 0.0
        %554 = vmatprep.subr.mxu0 0.0
        %555 = vmatpush1.msra.mxu0 0.0
        %556 = vmatprep.subr.mxu0 0.0
        %557 = vmatpush1.msra.mxu0 0.0
        %558 = vmatprep.subr.mxu0 0.0
        %559 = vmatpush1.msra.mxu0 0.0
        %560 = vmatprep.subr.mxu0 0.0
        %561 = vmatpush1.msra.mxu0 0.0
        %562 = vmatprep.subr.mxu0 0.0
        %563 = vmatpush1.msra.mxu0 0.0
        %564 = vmatprep.subr.mxu0 0.0
        %565 = vmatpush1.msra.mxu0 0.0
        %566 = vmatprep.subr.mxu0 0.0
        %567 = vmatpush1.msra.mxu0 %v531
        %568 = vmatprep.subr.mxu0 0.0
        %569 = vmatpush1.msra.mxu0 %v530
        %570 = vmatprep.subr.mxu0 0.0
        %571 = vmatpush1.msra.mxu0 %v529
        %572 = vmatprep.subr.mxu0 0.0
        %573 = vmatpush1.msra.mxu0 %v528
        %574 = vmatprep.subr.mxu0 0.0
        %575 = vmatpush2.msra.mxu0 0.0
        %576 = vmatprep.subr.mxu0 0.0
        %577 = vmatpush2.msra.mxu0 0.0
        %578 = vmatprep.subr.mxu0 0.0
        %579 = vmatpush2.msra.mxu0 0.0
        %580 = vmatprep.subr.mxu0 0.0
        %581 = vmatpush2.msra.mxu0 0.0
        %582 = vmatprep.subr.mxu0 0.0
        %583 = vmatpush2.msra.mxu0 0.0
        %584 = vmatprep.subr.mxu0 0.0
        %585 = vmatpush2.msra.mxu0 0.0
        %586 = vmatprep.subr.mxu0 0.0
        %587 = vmatpush2.msra.mxu0 0.0
        %588 = vmatprep.subr.mxu0 0.0
        %589 = vmatpush2.msra.mxu0 0.0
        %590 = vmatprep.subr.mxu0 0.0
        %591 = vmatpush2.msra.mxu0 0.0
        %592 = vmatprep.subr.mxu0 0.0
        %593 = vmatpush2.msra.mxu0 0.0
        %594 = vmatprep.subr.mxu0 0.0
        %595 = vmatpush2.msra.mxu0 0.0
        %596 = vmatprep.subr.mxu0 0.0
        %597 = vmatpush2.msra.mxu0 0.0
        %598 = vmatprep.subr.mxu0 0.0
        %599 = vmatpush2.msra.mxu0 0.0
        %600 = vmatprep.subr.mxu0 0.0
        %601 = vmatpush2.msra.mxu0 0.0
        %602 = vmatprep.subr.mxu0 0.0
        %603 = vmatpush2.msra.mxu0 0.0
        %604 = vmatprep.subr.mxu0 0.0
        %605 = vmatpush2.msra.mxu0 0.0
        %606 = vmatprep.mubr.f32.mxu0 0.0
        %607 = vmatmul.mubr.f32.gmra.mxu0 %v540
        %v608 = vpop.f32.mrf.mxu0
        %v609 = vadd.f32 %v537, %v608
        %v610 = vpop.f32.mrf.mxu0
        %611 = vdwg.mxu0
        %v612 = vadd.f32 %v527, %v609
        %v613 = vld [vmem:[#allocation2 + $0x28] sm:$0xff]
        %v614 = vld [vmem:[#allocation2 + $0xa0] sm:$0xff]
        %v615 = vld [vmem:[#allocation2 + $0x118] sm:$0xff]
        %v616 = vld [vmem:[#allocation2 + $0x190] sm:$0xff]
        %v617 = vld [vmem:[%s2 + $0x5] sm:$0x1]
        %v619 = vlaneseq
        %v620 = vshrl.u32 %v619, 7
        %v621 = vsub.s32 0, %v620
        %v622 = vrot.slane %v617, %v621
        %v625 = vsel %vm275, %v612, 0
        %627 = vmatprep.subr.mxu0 0.0
        %628 = vmatpush1.msra.mxu0 0.0
        %629 = vmatprep.subr.mxu0 0.0
        %630 = vmatpush1.msra.mxu0 0.0
        %631 = vmatprep.subr.mxu0 0.0
        %632 = vmatpush1.msra.mxu0 0.0
        %633 = vmatprep.subr.mxu0 0.0
        %634 = vmatpush1.msra.mxu0 0.0
        %635 = vmatprep.subr.mxu0 0.0
        %636 = vmatpush1.msra.mxu0 0.0
        %637 = vmatprep.subr.mxu0 0.0
        %638 = vmatpush1.msra.mxu0 0.0
        %639 = vmatprep.subr.mxu0 0.0
        %640 = vmatpush1.msra.mxu0 0.0
        %641 = vmatprep.subr.mxu0 0.0
        %642 = vmatpush1.msra.mxu0 0.0
        %643 = vmatprep.subr.mxu0 0.0
        %644 = vmatpush1.msra.mxu0 0.0
        %645 = vmatprep.subr.mxu0 0.0
        %646 = vmatpush1.msra.mxu0 0.0
        %647 = vmatprep.subr.mxu0 0.0
        %648 = vmatpush1.msra.mxu0 0.0
        %649 = vmatprep.subr.mxu0 0.0
        %650 = vmatpush1.msra.mxu0 0.0
        %651 = vmatprep.subr.mxu0 0.0
        %652 = vmatpush1.msra.mxu0 %v616
        %653 = vmatprep.subr.mxu0 0.0
        %654 = vmatpush1.msra.mxu0 %v615
        %655 = vmatprep.subr.mxu0 0.0
        %656 = vmatpush1.msra.mxu0 %v614
        %657 = vmatprep.subr.mxu0 0.0
        %658 = vmatpush1.msra.mxu0 %v613
        %659 = vmatprep.subr.mxu0 0.0
        %660 = vmatpush2.msra.mxu0 0.0
        %661 = vmatprep.subr.mxu0 0.0
        %662 = vmatpush2.msra.mxu0 0.0
        %663 = vmatprep.subr.mxu0 0.0
        %664 = vmatpush2.msra.mxu0 0.0
        %665 = vmatprep.subr.mxu0 0.0
        %666 = vmatpush2.msra.mxu0 0.0
        %667 = vmatprep.subr.mxu0 0.0
        %668 = vmatpush2.msra.mxu0 0.0
        %669 = vmatprep.subr.mxu0 0.0
        %670 = vmatpush2.msra.mxu0 0.0
        %671 = vmatprep.subr.mxu0 0.0
        %672 = vmatpush2.msra.mxu0 0.0
        %673 = vmatprep.subr.mxu0 0.0
        %674 = vmatpush2.msra.mxu0 0.0
        %675 = vmatprep.subr.mxu0 0.0
        %676 = vmatpush2.msra.mxu0 0.0
        %677 = vmatprep.subr.mxu0 0.0
        %678 = vmatpush2.msra.mxu0 0.0
        %679 = vmatprep.subr.mxu0 0.0
        %680 = vmatpush2.msra.mxu0 0.0
        %681 = vmatprep.subr.mxu0 0.0
        %682 = vmatpush2.msra.mxu0 0.0
        %683 = vmatprep.subr.mxu0 0.0
        %684 = vmatpush2.msra.mxu0 0.0
        %685 = vmatprep.subr.mxu0 0.0
        %686 = vmatpush2.msra.mxu0 0.0
        %687 = vmatprep.subr.mxu0 0.0
        %688 = vmatpush2.msra.mxu0 0.0
        %689 = vmatprep.subr.mxu0 0.0
        %690 = vmatpush2.msra.mxu0 0.0
        %691 = vmatprep.mubr.f32.mxu0 0.0
        %692 = vmatmul.mubr.f32.gmra.mxu0 %v625
        %v693 = vpop.f32.mrf.mxu0
        %v694 = vadd.f32 %v622, %v693
        %v695 = vpop.f32.mrf.mxu0
        %696 = vdwg.mxu0
        %v697 = vld [vmem:[%s2 + $0x6] sm:$0x1]
        %v699 = vlaneseq
        %v700 = vshrl.u32 %v699, 7
        %v701 = vsub.s32 0, %v700
        %v702 = vrot.slane %v697, %v701
        %v704 = vadd.f32 %v694, %v702
        %v705 = vld [vmem:[#allocation2 + $0x30] sm:$0xff]
        %v706 = vld [vmem:[#allocation2 + $0xa8] sm:$0xff]
        %v707 = vld [vmem:[#allocation2 + $0x120] sm:$0xff]
        %v708 = vld [vmem:[#allocation2 + $0x198] sm:$0xff]
        %v709 = vlaneseq
        %v710 = vand.u32 %v709, 127
        %vm711 = vcmp.ge.s32.totalorder %v710, 64
        %vm712 = vcmp.lt.s32.totalorder %v710, 96
        %vm713 = vmand %vm711, %vm712
        %v715 = vsel %vm275, 0.0, 0
        %717 = vmatprep.subr.mxu0 0.0
        %718 = vmatpush1.msra.mxu0 0.0
        %719 = vmatprep.subr.mxu0 0.0
        %720 = vmatpush1.msra.mxu0 0.0
        %721 = vmatprep.subr.mxu0 0.0
        %722 = vmatpush1.msra.mxu0 0.0
        %723 = vmatprep.subr.mxu0 0.0
        %724 = vmatpush1.msra.mxu0 0.0
        %725 = vmatprep.subr.mxu0 0.0
        %726 = vmatpush1.msra.mxu0 0.0
        %727 = vmatprep.subr.mxu0 0.0
        %728 = vmatpush1.msra.mxu0 0.0
        %729 = vmatprep.subr.mxu0 0.0
        %730 = vmatpush1.msra.mxu0 0.0
        %731 = vmatprep.subr.mxu0 0.0
        %732 = vmatpush1.msra.mxu0 0.0
        %733 = vmatprep.subr.mxu0 0.0
        %734 = vmatpush1.msra.mxu0 0.0
        %735 = vmatprep.subr.mxu0 0.0
        %736 = vmatpush1.msra.mxu0 0.0
        %737 = vmatprep.subr.mxu0 0.0
        %738 = vmatpush1.msra.mxu0 0.0
        %739 = vmatprep.subr.mxu0 0.0
        %740 = vmatpush1.msra.mxu0 0.0
        %741 = vmatprep.subr.mxu0 0.0
        %742 = vmatpush1.msra.mxu0 %v708
        %743 = vmatprep.subr.mxu0 0.0
        %744 = vmatpush1.msra.mxu0 %v707
        %745 = vmatprep.subr.mxu0 0.0
        %746 = vmatpush1.msra.mxu0 %v706
        %747 = vmatprep.subr.mxu0 0.0
        %748 = vmatpush1.msra.mxu0 %v705
        %749 = vmatprep.subr.mxu0 0.0
        %750 = vmatpush2.msra.mxu0 0.0
        %751 = vmatprep.subr.mxu0 0.0
        %752 = vmatpush2.msra.mxu0 0.0
        %753 = vmatprep.subr.mxu0 0.0
        %754 = vmatpush2.msra.mxu0 0.0
        %755 = vmatprep.subr.mxu0 0.0
        %756 = vmatpush2.msra.mxu0 0.0
        %757 = vmatprep.subr.mxu0 0.0
        %758 = vmatpush2.msra.mxu0 0.0
        %759 = vmatprep.subr.mxu0 0.0
        %760 = vmatpush2.msra.mxu0 0.0
        %761 = vmatprep.subr.mxu0 0.0
        %762 = vmatpush2.msra.mxu0 0.0
        %763 = vmatprep.subr.mxu0 0.0
        %764 = vmatpush2.msra.mxu0 0.0
        %765 = vmatprep.subr.mxu0 0.0
        %766 = vmatpush2.msra.mxu0 0.0
        %767 = vmatprep.subr.mxu0 0.0
        %768 = vmatpush2.msra.mxu0 0.0
        %769 = vmatprep.subr.mxu0 0.0
        %770 = vmatpush2.msra.mxu0 0.0
        %771 = vmatprep.subr.mxu0 0.0
        %772 = vmatpush2.msra.mxu0 0.0
        %773 = vmatprep.subr.mxu0 0.0
        %774 = vmatpush2.msra.mxu0 0.0
        %775 = vmatprep.subr.mxu0 0.0
        %776 = vmatpush2.msra.mxu0 0.0
        %777 = vmatprep.subr.mxu0 0.0
        %778 = vmatpush2.msra.mxu0 0.0
        %779 = vmatprep.subr.mxu0 0.0
        %780 = vmatpush2.msra.mxu0 0.0
        %781 = vmatprep.mubr.f32.mxu0 0.0
        %782 = vmatmul.mubr.f32.gmra.mxu0 %v715
        %v783 = vpop.f32.mrf.mxu0
        %v784 = vadd.f32 0.0, %v783
        %v785 = vpop.f32.mrf.mxu0
        %786 = vdwg.mxu0
        %v787 = vadd.f32 %v704, %v784
        %v788 = vtanh.pop %v787
        %v789 = vxor.u32 %v787, 2147483648
        %v790 = vmul.f32 %v789, 1.442695
        %v791 = vpow.pop %v790
        %v792 = vadd.f32 %v791, 1.0
        %v793 = vrcp.pop %v792
        %v794 = vmul.f32 1.0, %v793
        %v795 = vsel %vm713, %v788, %v794
        %v796 = vmul.f32 %v795, 0.0
        %798 = vrot.lane.b32.xlu0 %v795, 64
        %v799 = vpop.permute.xlu0 %798
        %v801 = vmul.f32 %v795, %v799
        %803 = vrot.lane.b32.xlu0 %v801, 32
        %v804 = vpop.permute.xlu0 %803
        %v806 = vadd.f32 %v796, %v804
        %v807 = vtanh.pop %v806
        %809 = vrot.lane.b32.xlu0 %v807, 64
        %v810 = vpop.permute.xlu0 %809
        %v812 = vmul.f32 %v795, %v810
        %814 = vrot.lane.b32.xlu0 %v812, 32
        %v815 = vpop.permute.xlu0 %814
        %v816 = vsel %vm275, %v815, 0
        %818 = vmatprep.subr.mxu0 0.0
        %819 = vmatpush1.msra.mxu0 0.0
        %820 = vmatprep.subr.mxu0 0.0
        %821 = vmatpush1.msra.mxu0 0.0
        %822 = vmatprep.subr.mxu0 0.0
        %823 = vmatpush1.msra.mxu0 0.0
        %824 = vmatprep.subr.mxu0 0.0
        %825 = vmatpush1.msra.mxu0 0.0
        %826 = vmatprep.subr.mxu0 0.0
        %827 = vmatpush1.msra.mxu0 0.0
        %828 = vmatprep.subr.mxu0 0.0
        %829 = vmatpush1.msra.mxu0 0.0
        %830 = vmatprep.subr.mxu0 0.0
        %831 = vmatpush1.msra.mxu0 0.0
        %832 = vmatprep.subr.mxu0 0.0
        %833 = vmatpush1.msra.mxu0 0.0
        %834 = vmatprep.subr.mxu0 0.0
        %835 = vmatpush1.msra.mxu0 0.0
        %836 = vmatprep.subr.mxu0 0.0
        %837 = vmatpush1.msra.mxu0 0.0
        %838 = vmatprep.subr.mxu0 0.0
        %839 = vmatpush1.msra.mxu0 0.0
        %840 = vmatprep.subr.mxu0 0.0
        %841 = vmatpush1.msra.mxu0 0.0
        %842 = vmatprep.subr.mxu0 0.0
        %843 = vmatpush1.msra.mxu0 %v708
        %844 = vmatprep.subr.mxu0 0.0
        %845 = vmatpush1.msra.mxu0 %v707
        %846 = vmatprep.subr.mxu0 0.0
        %847 = vmatpush1.msra.mxu0 %v706
        %848 = vmatprep.subr.mxu0 0.0
        %849 = vmatpush1.msra.mxu0 %v705
        %850 = vmatprep.subr.mxu0 0.0
        %851 = vmatpush2.msra.mxu0 0.0
        %852 = vmatprep.subr.mxu0 0.0
        %853 = vmatpush2.msra.mxu0 0.0
        %854 = vmatprep.subr.mxu0 0.0
        %855 = vmatpush2.msra.mxu0 0.0
        %856 = vmatprep.subr.mxu0 0.0
        %857 = vmatpush2.msra.mxu0 0.0
        %858 = vmatprep.subr.mxu0 0.0
        %859 = vmatpush2.msra.mxu0 0.0
        %860 = vmatprep.subr.mxu0 0.0
        %861 = vmatpush2.msra.mxu0 0.0
        %862 = vmatprep.subr.mxu0 0.0
        %863 = vmatpush2.msra.mxu0 0.0
        %864 = vmatprep.subr.mxu0 0.0
        %865 = vmatpush2.msra.mxu0 0.0
        %866 = vmatprep.subr.mxu0 0.0
        %867 = vmatpush2.msra.mxu0 0.0
        %868 = vmatprep.subr.mxu0 0.0
        %869 = vmatpush2.msra.mxu0 0.0
        %870 = vmatprep.subr.mxu0 0.0
        %871 = vmatpush2.msra.mxu0 0.0
        %872 = vmatprep.subr.mxu0 0.0
        %873 = vmatpush2.msra.mxu0 0.0
        %874 = vmatprep.subr.mxu0 0.0
        %875 = vmatpush2.msra.mxu0 0.0
        %876 = vmatprep.subr.mxu0 0.0
        %877 = vmatpush2.msra.mxu0 0.0
        %878 = vmatprep.subr.mxu0 0.0
        %879 = vmatpush2.msra.mxu0 0.0
        %880 = vmatprep.subr.mxu0 0.0
        %881 = vmatpush2.msra.mxu0 0.0
        %882 = vmatprep.mubr.f32.mxu0 0.0
        %883 = vmatmul.mubr.f32.gmra.mxu0 %v816
        %v884 = vpop.f32.mrf.mxu0
        %v885 = vadd.f32 0.0, %v884
        %v886 = vpop.f32.mrf.mxu0
        %887 = vdwg.mxu0
        %v888 = vadd.f32 %v704, %v885
        %v889 = vtanh.pop %v888
        %v890 = vxor.u32 %v888, 2147483648
        %v891 = vmul.f32 %v890, 1.442695
        %v892 = vpow.pop %v891
        %v893 = vadd.f32 %v892, 1.0
        %v894 = vrcp.pop %v893
        %v895 = vmul.f32 1.0, %v894
        %v896 = vsel %vm713, %v889, %v895
        %v897 = vmul.f32 %v896, %v806
        %899 = vrot.lane.b32.xlu0 %v896, 64
        %v900 = vpop.permute.xlu0 %899
        %v902 = vmul.f32 %v896, %v900
        %904 = vrot.lane.b32.xlu0 %v902, 32
        %v905 = vpop.permute.xlu0 %904
        %v907 = vadd.f32 %v897, %v905
        %v908 = vtanh.pop %v907
        %910 = vrot.lane.b32.xlu0 %v908, 64
        %v911 = vpop.permute.xlu0 %910
        %v913 = vmul.f32 %v896, %v911
        %915 = vrot.lane.b32.xlu0 %v913, 32
        %v916 = vpop.permute.xlu0 %915
        %v917 = vsel %vm275, %v916, 0
        %919 = vmatprep.subr.mxu0 0.0
        %920 = vmatpush1.msra.mxu0 0.0
        %921 = vmatprep.subr.mxu0 0.0
        %922 = vmatpush1.msra.mxu0 0.0
        %923 = vmatprep.subr.mxu0 0.0
        %924 = vmatpush1.msra.mxu0 0.0
        %925 = vmatprep.subr.mxu0 0.0
        %926 = vmatpush1.msra.mxu0 0.0
        %927 = vmatprep.subr.mxu0 0.0
        %928 = vmatpush1.msra.mxu0 0.0
        %929 = vmatprep.subr.mxu0 0.0
        %930 = vmatpush1.msra.mxu0 0.0
        %931 = vmatprep.subr.mxu0 0.0
        %932 = vmatpush1.msra.mxu0 0.0
        %933 = vmatprep.subr.mxu0 0.0
        %934 = vmatpush1.msra.mxu0 0.0
        %935 = vmatprep.subr.mxu0 0.0
        %936 = vmatpush1.msra.mxu0 0.0
        %937 = vmatprep.subr.mxu0 0.0
        %938 = vmatpush1.msra.mxu0 0.0
        %939 = vmatprep.subr.mxu0 0.0
        %940 = vmatpush1.msra.mxu0 0.0
        %941 = vmatprep.subr.mxu0 0.0
        %942 = vmatpush1.msra.mxu0 0.0
        %943 = vmatprep.subr.mxu0 0.0
        %944 = vmatpush1.msra.mxu0 %v708
        %945 = vmatprep.subr.mxu0 0.0
        %946 = vmatpush1.msra.mxu0 %v707
        %947 = vmatprep.subr.mxu0 0.0
        %948 = vmatpush1.msra.mxu0 %v706
        %949 = vmatprep.subr.mxu0 0.0
        %950 = vmatpush1.msra.mxu0 %v705
        %951 = vmatprep.subr.mxu0 0.0
        %952 = vmatpush2.msra.mxu0 0.0
        %953 = vmatprep.subr.mxu0 0.0
        %954 = vmatpush2.msra.mxu0 0.0
        %955 = vmatprep.subr.mxu0 0.0
        %956 = vmatpush2.msra.mxu0 0.0
        %957 = vmatprep.subr.mxu0 0.0
        %958 = vmatpush2.msra.mxu0 0.0
        %959 = vmatprep.subr.mxu0 0.0
        %960 = vmatpush2.msra.mxu0 0.0
        %961 = vmatprep.subr.mxu0 0.0
        %962 = vmatpush2.msra.mxu0 0.0
        %963 = vmatprep.subr.mxu0 0.0
        %964 = vmatpush2.msra.mxu0 0.0
        %965 = vmatprep.subr.mxu0 0.0
        %966 = vmatpush2.msra.mxu0 0.0
        %967 = vmatprep.subr.mxu0 0.0
        %968 = vmatpush2.msra.mxu0 0.0
        %969 = vmatprep.subr.mxu0 0.0
        %970 = vmatpush2.msra.mxu0 0.0
        %971 = vmatprep.subr.mxu0 0.0
        %972 = vmatpush2.msra.mxu0 0.0
        %973 = vmatprep.subr.mxu0 0.0
        %974 = vmatpush2.msra.mxu0 0.0
        %975 = vmatprep.subr.mxu0 0.0
        %976 = vmatpush2.msra.mxu0 0.0
        %977 = vmatprep.subr.mxu0 0.0
        %978 = vmatpush2.msra.mxu0 0.0
        %979 = vmatprep.subr.mxu0 0.0
        %980 = vmatpush2.msra.mxu0 0.0
        %981 = vmatprep.subr.mxu0 0.0
        %982 = vmatpush2.msra.mxu0 0.0
        %983 = vmatprep.mubr.f32.mxu0 0.0
        %984 = vmatmul.mubr.f32.gmra.mxu0 %v917
        %v985 = vpop.f32.mrf.mxu0
        %v986 = vadd.f32 0.0, %v985
        %v987 = vpop.f32.mrf.mxu0
        %988 = vdwg.mxu0
        %v989 = vadd.f32 %v704, %v986
        %v990 = vtanh.pop %v989
        %v991 = vxor.u32 %v989, 2147483648
        %v992 = vmul.f32 %v991, 1.442695
        %v993 = vpow.pop %v992
        %v994 = vadd.f32 %v993, 1.0
        %v995 = vrcp.pop %v994
        %v996 = vmul.f32 1.0, %v995
        %v997 = vsel %vm713, %v990, %v996
        %v998 = vmul.f32 %v997, %v907
        %1000 = vrot.lane.b32.xlu0 %v997, 64
        %v1001 = vpop.permute.xlu0 %1000
        %v1003 = vmul.f32 %v997, %v1001
        %1005 = vrot.lane.b32.xlu0 %v1003, 32
        %v1006 = vpop.permute.xlu0 %1005
        %v1008 = vadd.f32 %v998, %v1006
        %v1009 = vtanh.pop %v1008
        %1011 = vrot.lane.b32.xlu0 %v1009, 64
        %v1012 = vpop.permute.xlu0 %1011
        %v1014 = vmul.f32 %v997, %v1012
        %1016 = vrot.lane.b32.xlu0 %v1014, 32
        %v1017 = vpop.permute.xlu0 %1016
        %v1018 = vsel %vm275, %v1017, 0
        %1020 = vmatprep.subr.mxu0 0.0
        %1021 = vmatpush1.msra.mxu0 0.0
        %1022 = vmatprep.subr.mxu0 0.0
        %1023 = vmatpush1.msra.mxu0 0.0
        %1024 = vmatprep.subr.mxu0 0.0
        %1025 = vmatpush1.msra.mxu0 0.0
        %1026 = vmatprep.subr.mxu0 0.0
        %1027 = vmatpush1.msra.mxu0 0.0
        %1028 = vmatprep.subr.mxu0 0.0
        %1029 = vmatpush1.msra.mxu0 0.0
        %1030 = vmatprep.subr.mxu0 0.0
        %1031 = vmatpush1.msra.mxu0 0.0
        %1032 = vmatprep.subr.mxu0 0.0
        %1033 = vmatpush1.msra.mxu0 0.0
        %1034 = vmatprep.subr.mxu0 0.0
        %1035 = vmatpush1.msra.mxu0 0.0
        %1036 = vmatprep.subr.mxu0 0.0
        %1037 = vmatpush1.msra.mxu0 0.0
        %1038 = vmatprep.subr.mxu0 0.0
        %1039 = vmatpush1.msra.mxu0 0.0
        %1040 = vmatprep.subr.mxu0 0.0
        %1041 = vmatpush1.msra.mxu0 0.0
        %1042 = vmatprep.subr.mxu0 0.0
        %1043 = vmatpush1.msra.mxu0 0.0
        %1044 = vmatprep.subr.mxu0 0.0
        %1045 = vmatpush1.msra.mxu0 %v708
        %1046 = vmatprep.subr.mxu0 0.0
        %1047 = vmatpush1.msra.mxu0 %v707
        %1048 = vmatprep.subr.mxu0 0.0
        %1049 = vmatpush1.msra.mxu0 %v706
        %1050 = vmatprep.subr.mxu0 0.0
        %1051 = vmatpush1.msra.mxu0 %v705
        %1052 = vmatprep.subr.mxu0 0.0
        %1053 = vmatpush2.msra.mxu0 0.0
        %1054 = vmatprep.subr.mxu0 0.0
        %1055 = vmatpush2.msra.mxu0 0.0
        %1056 = vmatprep.subr.mxu0 0.0
        %1057 = vmatpush2.msra.mxu0 0.0
        %1058 = vmatprep.subr.mxu0 0.0
        %1059 = vmatpush2.msra.mxu0 0.0
        %1060 = vmatprep.subr.mxu0 0.0
        %1061 = vmatpush2.msra.mxu0 0.0
        %1062 = vmatprep.subr.mxu0 0.0
        %1063 = vmatpush2.msra.mxu0 0.0
        %1064 = vmatprep.subr.mxu0 0.0
        %1065 = vmatpush2.msra.mxu0 0.0
        %1066 = vmatprep.subr.mxu0 0.0
        %1067 = vmatpush2.msra.mxu0 0.0
        %1068 = vmatprep.subr.mxu0 0.0
        %1069 = vmatpush2.msra.mxu0 0.0
        %1070 = vmatprep.subr.mxu0 0.0
        %1071 = vmatpush2.msra.mxu0 0.0
        %1072 = vmatprep.subr.mxu0 0.0
        %1073 = vmatpush2.msra.mxu0 0.0
        %1074 = vmatprep.subr.mxu0 0.0
        %1075 = vmatpush2.msra.mxu0 0.0
        %1076 = vmatprep.subr.mxu0 0.0
        %1077 = vmatpush2.msra.mxu0 0.0
        %1078 = vmatprep.subr.mxu0 0.0
        %1079 = vmatpush2.msra.mxu0 0.0
        %1080 = vmatprep.subr.mxu0 0.0
        %1081 = vmatpush2.msra.mxu0 0.0
        %1082 = vmatprep.subr.mxu0 0.0
        %1083 = vmatpush2.msra.mxu0 0.0
        %1084 = vmatprep.mubr.f32.mxu0 0.0
        %1085 = vmatmul.mubr.f32.gmra.mxu0 %v1018
        %v1086 = vpop.f32.mrf.mxu0
        %v1087 = vadd.f32 0.0, %v1086
        %v1088 = vpop.f32.mrf.mxu0
        %1089 = vdwg.mxu0
        %v1090 = vadd.f32 %v704, %v1087
        %v1091 = vtanh.pop %v1090
        %v1092 = vxor.u32 %v1090, 2147483648
        %v1093 = vmul.f32 %v1092, 1.442695
        %v1094 = vpow.pop %v1093
        %v1095 = vadd.f32 %v1094, 1.0
        %v1096 = vrcp.pop %v1095
        %v1097 = vmul.f32 1.0, %v1096
        %v1098 = vsel %vm713, %v1091, %v1097
        %v1099 = vmul.f32 %v1098, %v1008
        %1101 = vrot.lane.b32.xlu0 %v1098, 64
        %v1102 = vpop.permute.xlu0 %1101
        %v1104 = vmul.f32 %v1098, %v1102
        %1106 = vrot.lane.b32.xlu0 %v1104, 32
        %v1107 = vpop.permute.xlu0 %1106
        %v1109 = vadd.f32 %v1099, %v1107
        %v1110 = vtanh.pop %v1109
        %1112 = vrot.lane.b32.xlu0 %v1110, 64
        %v1113 = vpop.permute.xlu0 %1112
        %v1115 = vmul.f32 %v1098, %v1113
        %1117 = vrot.lane.b32.xlu0 %v1115, 32
        %v1118 = vpop.permute.xlu0 %1117
        %v1119 = vsel %vm275, %v1118, 0
        %1121 = vmatprep.subr.mxu0 0.0
        %1122 = vmatpush1.msra.mxu0 0.0
        %1123 = vmatprep.subr.mxu0 0.0
        %1124 = vmatpush1.msra.mxu0 0.0
        %1125 = vmatprep.subr.mxu0 0.0
        %1126 = vmatpush1.msra.mxu0 0.0
        %1127 = vmatprep.subr.mxu0 0.0
        %1128 = vmatpush1.msra.mxu0 0.0
        %1129 = vmatprep.subr.mxu0 0.0
        %1130 = vmatpush1.msra.mxu0 0.0
        %1131 = vmatprep.subr.mxu0 0.0
        %1132 = vmatpush1.msra.mxu0 0.0
        %1133 = vmatprep.subr.mxu0 0.0
        %1134 = vmatpush1.msra.mxu0 0.0
        %1135 = vmatprep.subr.mxu0 0.0
        %1136 = vmatpush1.msra.mxu0 0.0
        %1137 = vmatprep.subr.mxu0 0.0
        %1138 = vmatpush1.msra.mxu0 0.0
        %1139 = vmatprep.subr.mxu0 0.0
        %1140 = vmatpush1.msra.mxu0 0.0
        %1141 = vmatprep.subr.mxu0 0.0
        %1142 = vmatpush1.msra.mxu0 0.0
        %1143 = vmatprep.subr.mxu0 0.0
        %1144 = vmatpush1.msra.mxu0 0.0
        %1145 = vmatprep.subr.mxu0 0.0
        %1146 = vmatpush1.msra.mxu0 %v708
        %1147 = vmatprep.subr.mxu0 0.0
        %1148 = vmatpush1.msra.mxu0 %v707
        %1149 = vmatprep.subr.mxu0 0.0
        %1150 = vmatpush1.msra.mxu0 %v706
        %1151 = vmatprep.subr.mxu0 0.0
        %1152 = vmatpush1.msra.mxu0 %v705
        %1153 = vmatprep.subr.mxu0 0.0
        %1154 = vmatpush2.msra.mxu0 0.0
        %1155 = vmatprep.subr.mxu0 0.0
        %1156 = vmatpush2.msra.mxu0 0.0
        %1157 = vmatprep.subr.mxu0 0.0
        %1158 = vmatpush2.msra.mxu0 0.0
        %1159 = vmatprep.subr.mxu0 0.0
        %1160 = vmatpush2.msra.mxu0 0.0
        %1161 = vmatprep.subr.mxu0 0.0
        %1162 = vmatpush2.msra.mxu0 0.0
        %1163 = vmatprep.subr.mxu0 0.0
        %1164 = vmatpush2.msra.mxu0 0.0
        %1165 = vmatprep.subr.mxu0 0.0
        %1166 = vmatpush2.msra.mxu0 0.0
        %1167 = vmatprep.subr.mxu0 0.0
        %1168 = vmatpush2.msra.mxu0 0.0
        %1169 = vmatprep.subr.mxu0 0.0
        %1170 = vmatpush2.msra.mxu0 0.0
        %1171 = vmatprep.subr.mxu0 0.0
        %1172 = vmatpush2.msra.mxu0 0.0
        %1173 = vmatprep.subr.mxu0 0.0
        %1174 = vmatpush2.msra.mxu0 0.0
        %1175 = vmatprep.subr.mxu0 0.0
        %1176 = vmatpush2.msra.mxu0 0.0
        %1177 = vmatprep.subr.mxu0 0.0
        %1178 = vmatpush2.msra.mxu0 0.0
        %1179 = vmatprep.subr.mxu0 0.0
        %1180 = vmatpush2.msra.mxu0 0.0
        %1181 = vmatprep.subr.mxu0 0.0
        %1182 = vmatpush2.msra.mxu0 0.0
        %1183 = vmatprep.subr.mxu0 0.0
        %1184 = vmatpush2.msra.mxu0 0.0
        %1185 = vmatprep.mubr.f32.mxu0 0.0
        %1186 = vmatmul.mubr.f32.gmra.mxu0 %v1119
        %v1187 = vpop.f32.mrf.mxu0
        %v1188 = vadd.f32 0.0, %v1187
        %v1189 = vpop.f32.mrf.mxu0
        %1190 = vdwg.mxu0
        %v1191 = vadd.f32 %v704, %v1188
        %v1192 = vtanh.pop %v1191
        %v1193 = vxor.u32 %v1191, 2147483648
        %v1194 = vmul.f32 %v1193, 1.442695
        %v1195 = vpow.pop %v1194
        %v1196 = vadd.f32 %v1195, 1.0
        %v1197 = vrcp.pop %v1196
        %v1198 = vmul.f32 1.0, %v1197
        %v1199 = vsel %vm713, %v1192, %v1198
        %v1200 = vmul.f32 %v1199, %v1109
        %1202 = vrot.lane.b32.xlu0 %v1199, 64
        %v1203 = vpop.permute.xlu0 %1202
        %v1205 = vmul.f32 %v1199, %v1203
        %1207 = vrot.lane.b32.xlu0 %v1205, 32
        %v1208 = vpop.permute.xlu0 %1207
        %v1210 = vadd.f32 %v1200, %v1208
        %v1211 = vtanh.pop %v1210
        %1213 = vrot.lane.b32.xlu0 %v1211, 64
        %v1214 = vpop.permute.xlu0 %1213
        %v1216 = vmul.f32 %v1199, %v1214
        %1218 = vrot.lane.b32.xlu0 %v1216, 32
        %v1219 = vpop.permute.xlu0 %1218
        %v1220 = vsel %vm275, %v1219, 0
        %1222 = vmatprep.subr.mxu0 0.0
        %1223 = vmatpush1.msra.mxu0 0.0
        %1224 = vmatprep.subr.mxu0 0.0
        %1225 = vmatpush1.msra.mxu0 0.0
        %1226 = vmatprep.subr.mxu0 0.0
        %1227 = vmatpush1.msra.mxu0 0.0
        %1228 = vmatprep.subr.mxu0 0.0
        %1229 = vmatpush1.msra.mxu0 0.0
        %1230 = vmatprep.subr.mxu0 0.0
        %1231 = vmatpush1.msra.mxu0 0.0
        %1232 = vmatprep.subr.mxu0 0.0
        %1233 = vmatpush1.msra.mxu0 0.0
        %1234 = vmatprep.subr.mxu0 0.0
        %1235 = vmatpush1.msra.mxu0 0.0
        %1236 = vmatprep.subr.mxu0 0.0
        %1237 = vmatpush1.msra.mxu0 0.0
        %1238 = vmatprep.subr.mxu0 0.0
        %1239 = vmatpush1.msra.mxu0 0.0
        %1240 = vmatprep.subr.mxu0 0.0
        %1241 = vmatpush1.msra.mxu0 0.0
        %1242 = vmatprep.subr.mxu0 0.0
        %1243 = vmatpush1.msra.mxu0 0.0
        %1244 = vmatprep.subr.mxu0 0.0
        %1245 = vmatpush1.msra.mxu0 0.0
        %1246 = vmatprep.subr.mxu0 0.0
        %1247 = vmatpush1.msra.mxu0 %v708
        %1248 = vmatprep.subr.mxu0 0.0
        %1249 = vmatpush1.msra.mxu0 %v707
        %1250 = vmatprep.subr.mxu0 0.0
        %1251 = vmatpush1.msra.mxu0 %v706
        %1252 = vmatprep.subr.mxu0 0.0
        %1253 = vmatpush1.msra.mxu0 %v705
        %1254 = vmatprep.subr.mxu0 0.0
        %1255 = vmatpush2.msra.mxu0 0.0
        %1256 = vmatprep.subr.mxu0 0.0
        %1257 = vmatpush2.msra.mxu0 0.0
        %1258 = vmatprep.subr.mxu0 0.0
        %1259 = vmatpush2.msra.mxu0 0.0
        %1260 = vmatprep.subr.mxu0 0.0
        %1261 = vmatpush2.msra.mxu0 0.0
        %1262 = vmatprep.subr.mxu0 0.0
        %1263 = vmatpush2.msra.mxu0 0.0
        %1264 = vmatprep.subr.mxu0 0.0
        %1265 = vmatpush2.msra.mxu0 0.0
        %1266 = vmatprep.subr.mxu0 0.0
        %1267 = vmatpush2.msra.mxu0 0.0
        %1268 = vmatprep.subr.mxu0 0.0
        %1269 = vmatpush2.msra.mxu0 0.0
        %1270 = vmatprep.subr.mxu0 0.0
        %1271 = vmatpush2.msra.mxu0 0.0
        %1272 = vmatprep.subr.mxu0 0.0
        %1273 = vmatpush2.msra.mxu0 0.0
        %1274 = vmatprep.subr.mxu0 0.0
        %1275 = vmatpush2.msra.mxu0 0.0
        %1276 = vmatprep.subr.mxu0 0.0
        %1277 = vmatpush2.msra.mxu0 0.0
        %1278 = vmatprep.subr.mxu0 0.0
        %1279 = vmatpush2.msra.mxu0 0.0
        %1280 = vmatprep.subr.mxu0 0.0
        %1281 = vmatpush2.msra.mxu0 0.0
        %1282 = vmatprep.subr.mxu0 0.0
        %1283 = vmatpush2.msra.mxu0 0.0
        %1284 = vmatprep.subr.mxu0 0.0
        %1285 = vmatpush2.msra.mxu0 0.0
        %1286 = vmatprep.mubr.f32.mxu0 0.0
        %1287 = vmatmul.mubr.f32.gmra.mxu0 %v1220
        %v1288 = vpop.f32.mrf.mxu0
        %v1289 = vadd.f32 0.0, %v1288
        %v1290 = vpop.f32.mrf.mxu0
        %1291 = vdwg.mxu0
        %v1292 = vadd.f32 %v704, %v1289
        %v1293 = vtanh.pop %v1292
        %v1294 = vxor.u32 %v1292, 2147483648
        %v1295 = vmul.f32 %v1294, 1.442695
        %v1296 = vpow.pop %v1295
        %v1297 = vadd.f32 %v1296, 1.0
        %v1298 = vrcp.pop %v1297
        %v1299 = vmul.f32 1.0, %v1298
        %v1300 = vsel %vm713, %v1293, %v1299
        %v1301 = vmul.f32 %v1300, %v1210
        %1303 = vrot.lane.b32.xlu0 %v1300, 64
        %v1304 = vpop.permute.xlu0 %1303
        %v1306 = vmul.f32 %v1300, %v1304
        %1308 = vrot.lane.b32.xlu0 %v1306, 32
        %v1309 = vpop.permute.xlu0 %1308
        %v1311 = vadd.f32 %v1301, %v1309
        %v1312 = vtanh.pop %v1311
        %1314 = vrot.lane.b32.xlu0 %v1312, 64
        %v1315 = vpop.permute.xlu0 %1314
        %v1317 = vmul.f32 %v1300, %v1315
        %1319 = vrot.lane.b32.xlu0 %v1317, 32
        %v1320 = vpop.permute.xlu0 %1319
        %v1321 = vsel %vm275, %v1320, 0
        %1323 = vmatprep.subr.mxu0 0.0
        %1324 = vmatpush1.msra.mxu0 0.0
        %1325 = vmatprep.subr.mxu0 0.0
        %1326 = vmatpush1.msra.mxu0 0.0
        %1327 = vmatprep.subr.mxu0 0.0
        %1328 = vmatpush1.msra.mxu0 0.0
        %1329 = vmatprep.subr.mxu0 0.0
        %1330 = vmatpush1.msra.mxu0 0.0
        %1331 = vmatprep.subr.mxu0 0.0
        %1332 = vmatpush1.msra.mxu0 0.0
        %1333 = vmatprep.subr.mxu0 0.0
        %1334 = vmatpush1.msra.mxu0 0.0
        %1335 = vmatprep.subr.mxu0 0.0
        %1336 = vmatpush1.msra.mxu0 0.0
        %1337 = vmatprep.subr.mxu0 0.0
        %1338 = vmatpush1.msra.mxu0 0.0
        %1339 = vmatprep.subr.mxu0 0.0
        %1340 = vmatpush1.msra.mxu0 0.0
        %1341 = vmatprep.subr.mxu0 0.0
        %1342 = vmatpush1.msra.mxu0 0.0
        %1343 = vmatprep.subr.mxu0 0.0
        %1344 = vmatpush1.msra.mxu0 0.0
        %1345 = vmatprep.subr.mxu0 0.0
        %1346 = vmatpush1.msra.mxu0 0.0
        %1347 = vmatprep.subr.mxu0 0.0
        %1348 = vmatpush1.msra.mxu0 %v708
        %1349 = vmatprep.subr.mxu0 0.0
        %1350 = vmatpush1.msra.mxu0 %v707
        %1351 = vmatprep.subr.mxu0 0.0
        %1352 = vmatpush1.msra.mxu0 %v706
        %1353 = vmatprep.subr.mxu0 0.0
        %1354 = vmatpush1.msra.mxu0 %v705
        %1355 = vmatprep.subr.mxu0 0.0
        %1356 = vmatpush2.msra.mxu0 0.0
        %1357 = vmatprep.subr.mxu0 0.0
        %1358 = vmatpush2.msra.mxu0 0.0
        %1359 = vmatprep.subr.mxu0 0.0
        %1360 = vmatpush2.msra.mxu0 0.0
        %1361 = vmatprep.subr.mxu0 0.0
        %1362 = vmatpush2.msra.mxu0 0.0
        %1363 = vmatprep.subr.mxu0 0.0
        %1364 = vmatpush2.msra.mxu0 0.0
        %1365 = vmatprep.subr.mxu0 0.0
        %1366 = vmatpush2.msra.mxu0 0.0
        %1367 = vmatprep.subr.mxu0 0.0
        %1368 = vmatpush2.msra.mxu0 0.0
        %1369 = vmatprep.subr.mxu0 0.0
        %1370 = vmatpush2.msra.mxu0 0.0
        %1371 = vmatprep.subr.mxu0 0.0
        %1372 = vmatpush2.msra.mxu0 0.0
        %1373 = vmatprep.subr.mxu0 0.0
        %1374 = vmatpush2.msra.mxu0 0.0
        %1375 = vmatprep.subr.mxu0 0.0
        %1376 = vmatpush2.msra.mxu0 0.0
        %1377 = vmatprep.subr.mxu0 0.0
        %1378 = vmatpush2.msra.mxu0 0.0
        %1379 = vmatprep.subr.mxu0 0.0
        %1380 = vmatpush2.msra.mxu0 0.0
        %1381 = vmatprep.subr.mxu0 0.0
        %1382 = vmatpush2.msra.mxu0 0.0
        %1383 = vmatprep.subr.mxu0 0.0
        %1384 = vmatpush2.msra.mxu0 0.0
        %1385 = vmatprep.subr.mxu0 0.0
        %1386 = vmatpush2.msra.mxu0 0.0
        %1387 = vmatprep.mubr.f32.mxu0 0.0
        %1388 = vmatmul.mubr.f32.gmra.mxu0 %v1321
        %v1389 = vpop.f32.mrf.mxu0
        %v1390 = vadd.f32 0.0, %v1389
        %v1391 = vpop.f32.mrf.mxu0
        %1392 = vdwg.mxu0
        %v1393 = vadd.f32 %v704, %v1390
        %v1394 = vtanh.pop %v1393
        %v1395 = vxor.u32 %v1393, 2147483648
        %v1396 = vmul.f32 %v1395, 1.442695
        %v1397 = vpow.pop %v1396
        %v1398 = vadd.f32 %v1397, 1.0
        %v1399 = vrcp.pop %v1398
        %v1400 = vmul.f32 1.0, %v1399
        %v1401 = vsel %vm713, %v1394, %v1400
        %v1402 = vmul.f32 %v1401, %v1311
        %1404 = vrot.lane.b32.xlu0 %v1401, 64
        %v1405 = vpop.permute.xlu0 %1404
        %v1407 = vmul.f32 %v1401, %v1405
        %1409 = vrot.lane.b32.xlu0 %v1407, 32
        %v1410 = vpop.permute.xlu0 %1409
        %v1412 = vadd.f32 %v1402, %v1410
        %v1413 = vtanh.pop %v1412
        %1415 = vrot.lane.b32.xlu0 %v1413, 64
        %v1416 = vpop.permute.xlu0 %1415
        %v1418 = vmul.f32 %v1401, %v1416
        %1420 = vrot.lane.b32.xlu0 %v1418, 32
        %v1421 = vpop.permute.xlu0 %1420
        %v1422 = vsel %vm275, %v1421, 0
        %1424 = vmatprep.subr.mxu0 0.0
        %1425 = vmatpush1.msra.mxu0 0.0
        %1426 = vmatprep.subr.mxu0 0.0
        %1427 = vmatpush1.msra.mxu0 0.0
        %1428 = vmatprep.subr.mxu0 0.0
        %1429 = vmatpush1.msra.mxu0 0.0
        %1430 = vmatprep.subr.mxu0 0.0
        %1431 = vmatpush1.msra.mxu0 0.0
        %1432 = vmatprep.subr.mxu0 0.0
        %1433 = vmatpush1.msra.mxu0 0.0
        %1434 = vmatprep.subr.mxu0 0.0
        %1435 = vmatpush1.msra.mxu0 0.0
        %1436 = vmatprep.subr.mxu0 0.0
        %1437 = vmatpush1.msra.mxu0 0.0
        %1438 = vmatprep.subr.mxu0 0.0
        %1439 = vmatpush1.msra.mxu0 0.0
        %1440 = vmatprep.subr.mxu0 0.0
        %1441 = vmatpush1.msra.mxu0 0.0
        %1442 = vmatprep.subr.mxu0 0.0
        %1443 = vmatpush1.msra.mxu0 0.0
        %1444 = vmatprep.subr.mxu0 0.0
        %1445 = vmatpush1.msra.mxu0 0.0
        %1446 = vmatprep.subr.mxu0 0.0
        %1447 = vmatpush1.msra.mxu0 0.0
        %1448 = vmatprep.subr.mxu0 0.0
        %1449 = vmatpush1.msra.mxu0 %v708
        %1450 = vmatprep.subr.mxu0 0.0
        %1451 = vmatpush1.msra.mxu0 %v707
        %1452 = vmatprep.subr.mxu0 0.0
        %1453 = vmatpush1.msra.mxu0 %v706
        %1454 = vmatprep.subr.mxu0 0.0
        %1455 = vmatpush1.msra.mxu0 %v705
        %1456 = vmatprep.subr.mxu0 0.0
        %1457 = vmatpush2.msra.mxu0 0.0
        %1458 = vmatprep.subr.mxu0 0.0
        %1459 = vmatpush2.msra.mxu0 0.0
        %1460 = vmatprep.subr.mxu0 0.0
        %1461 = vmatpush2.msra.mxu0 0.0
        %1462 = vmatprep.subr.mxu0 0.0
        %1463 = vmatpush2.msra.mxu0 0.0
        %1464 = vmatprep.subr.mxu0 0.0
        %1465 = vmatpush2.msra.mxu0 0.0
        %1466 = vmatprep.subr.mxu0 0.0
        %1467 = vmatpush2.msra.mxu0 0.0
        %1468 = vmatprep.subr.mxu0 0.0
        %1469 = vmatpush2.msra.mxu0 0.0
        %1470 = vmatprep.subr.mxu0 0.0
        %1471 = vmatpush2.msra.mxu0 0.0
        %1472 = vmatprep.subr.mxu0 0.0
        %1473 = vmatpush2.msra.mxu0 0.0
        %1474 = vmatprep.subr.mxu0 0.0
        %1475 = vmatpush2.msra.mxu0 0.0
        %1476 = vmatprep.subr.mxu0 0.0
        %1477 = vmatpush2.msra.mxu0 0.0
        %1478 = vmatprep.subr.mxu0 0.0
        %1479 = vmatpush2.msra.mxu0 0.0
        %1480 = vmatprep.subr.mxu0 0.0
        %1481 = vmatpush2.msra.mxu0 0.0
        %1482 = vmatprep.subr.mxu0 0.0
        %1483 = vmatpush2.msra.mxu0 0.0
        %1484 = vmatprep.subr.mxu0 0.0
        %1485 = vmatpush2.msra.mxu0 0.0
        %1486 = vmatprep.subr.mxu0 0.0
        %1487 = vmatpush2.msra.mxu0 0.0
        %1488 = vmatprep.mubr.f32.mxu0 0.0
        %1489 = vmatmul.mubr.f32.gmra.mxu0 %v1422
        %v1490 = vpop.f32.mrf.mxu0
        %v1491 = vadd.f32 0.0, %v1490
        %v1492 = vpop.f32.mrf.mxu0
        %1493 = vdwg.mxu0
        %v1494 = vadd.f32 %v704, %v1491
        %v1495 = vtanh.pop %v1494
        %v1496 = vxor.u32 %v1494, 2147483648
        %v1497 = vmul.f32 %v1496, 1.442695
        %v1498 = vpow.pop %v1497
        %v1499 = vadd.f32 %v1498, 1.0
        %v1500 = vrcp.pop %v1499
        %v1501 = vmul.f32 1.0, %v1500
        %v1502 = vsel %vm713, %v1495, %v1501
        %v1503 = vmul.f32 %v1502, %v1412
        %1505 = vrot.lane.b32.xlu0 %v1502, 64
        %v1506 = vpop.permute.xlu0 %1505
        %v1508 = vmul.f32 %v1502, %v1506
        %1510 = vrot.lane.b32.xlu0 %v1508, 32
        %v1511 = vpop.permute.xlu0 %1510
        %v1513 = vadd.f32 %v1503, %v1511
        %v1514 = vtanh.pop %v1513
        %1516 = vrot.lane.b32.xlu0 %v1514, 64
        %v1517 = vpop.permute.xlu0 %1516
        %v1519 = vmul.f32 %v1502, %v1517
        %v1520 = vcombine.high %v812, %v812
        %v1522 = vunpack.c.l.s4 1966171168
        %v1523 = vunpack.c.0.s8 %v1522
        %v1524 = vlaneseq
        %v1525 = vshrl.u32 %v1524, 7
        %v1526 = vsub.s32 %v1523, %v1525
        %v1527 = vrot.slane %v812, %v1526
        %v1529 = vunpack.c.l.s4 1966171168
        %v1530 = vunpack.c.0.s8 %v1529
        %v1531 = vlaneseq
        %v1532 = vshrl.u32 %v1531, 7
        %v1533 = vsub.s32 %v1530, %v1532
        %v1534 = vrot.slane %v1520, %v1533
        %v1535 = vcombine.high %v1527, %v1527
        %v1536 = vcombine.high %v1534, %v1534
        %v1538 = vunpack.c.l.s4 1966171168
        %v1539 = vunpack.c.0.s8 %v1538
        %v1540 = vlaneseq
        %v1541 = vshrl.u32 %v1540, 7
        %v1542 = vsub.s32 %v1539, %v1541
        %v1543 = vrot.slane %v1527, %v1542
        %v1545 = vunpack.c.l.s4 1966171168
        %v1546 = vunpack.c.0.s8 %v1545
        %v1547 = vlaneseq
        %v1548 = vshrl.u32 %v1547, 7
        %v1549 = vsub.s32 %v1546, %v1548
        %v1550 = vrot.slane %v1534, %v1549
        %v1552 = vunpack.c.l.s4 1966171168
        %v1553 = vunpack.c.0.s8 %v1552
        %v1554 = vlaneseq
        %v1555 = vshrl.u32 %v1554, 7
        %v1556 = vsub.s32 %v1553, %v1555
        %v1557 = vrot.slane %v1535, %v1556
        %v1559 = vunpack.c.l.s4 1966171168
        %v1560 = vunpack.c.0.s8 %v1559
        %v1561 = vlaneseq
        %v1562 = vshrl.u32 %v1561, 7
        %v1563 = vsub.s32 %v1560, %v1562
        %v1564 = vrot.slane %v1536, %v1563
        %v1565 = vcombine.high %v1543, %v1543
        %v1566 = vcombine.high %v1550, %v1550
        %v1567 = vcombine.high %v1557, %v1557
        %v1568 = vcombine.high %v1564, %v1564
        %v1577 = vcombine.high %v913, %v913
        %v1579 = vunpack.c.l.s4 1966171168
        %v1580 = vunpack.c.0.s8 %v1579
        %v1581 = vlaneseq
        %v1582 = vshrl.u32 %v1581, 7
        %v1583 = vsub.s32 %v1580, %v1582
        %v1584 = vrot.slane %v913, %v1583
        %v1586 = vunpack.c.l.s4 1966171168
        %v1587 = vunpack.c.0.s8 %v1586
        %v1588 = vlaneseq
        %v1589 = vshrl.u32 %v1588, 7
        %v1590 = vsub.s32 %v1587, %v1589
        %v1591 = vrot.slane %v1577, %v1590
        %v1592 = vcombine.high %v1584, %v1584
        %v1593 = vcombine.high %v1591, %v1591
        %v1595 = vunpack.c.l.s4 1966171168
        %v1596 = vunpack.c.0.s8 %v1595
        %v1597 = vlaneseq
        %v1598 = vshrl.u32 %v1597, 7
        %v1599 = vsub.s32 %v1596, %v1598
        %v1600 = vrot.slane %v1584, %v1599
        %v1602 = vunpack.c.l.s4 1966171168
        %v1603 = vunpack.c.0.s8 %v1602
        %v1604 = vlaneseq
        %v1605 = vshrl.u32 %v1604, 7
        %v1606 = vsub.s32 %v1603, %v1605
        %v1607 = vrot.slane %v1591, %v1606
        %v1609 = vunpack.c.l.s4 1966171168
        %v1610 = vunpack.c.0.s8 %v1609
        %v1611 = vlaneseq
        %v1612 = vshrl.u32 %v1611, 7
        %v1613 = vsub.s32 %v1610, %v1612
        %v1614 = vrot.slane %v1592, %v1613
        %v1616 = vunpack.c.l.s4 1966171168
        %v1617 = vunpack.c.0.s8 %v1616
        %v1618 = vlaneseq
        %v1619 = vshrl.u32 %v1618, 7
        %v1620 = vsub.s32 %v1617, %v1619
        %v1621 = vrot.slane %v1593, %v1620
        %v1622 = vcombine.high %v1600, %v1600
        %v1623 = vcombine.high %v1607, %v1607
        %v1624 = vcombine.high %v1614, %v1614
        %v1625 = vcombine.high %v1621, %v1621
        %v1626 = vcombine.high %v1014, %v1014
        %v1628 = vunpack.c.l.s4 1966171168
        %v1629 = vunpack.c.0.s8 %v1628
        %v1630 = vlaneseq
        %v1631 = vshrl.u32 %v1630, 7
        %v1632 = vsub.s32 %v1629, %v1631
        %v1633 = vrot.slane %v1014, %v1632
        %v1635 = vunpack.c.l.s4 1966171168
        %v1636 = vunpack.c.0.s8 %v1635
        %v1637 = vlaneseq
        %v1638 = vshrl.u32 %v1637, 7
        %v1639 = vsub.s32 %v1636, %v1638
        %v1640 = vrot.slane %v1626, %v1639
        %v1641 = vcombine.high %v1633, %v1633
        %v1642 = vcombine.high %v1640, %v1640
        %v1644 = vunpack.c.l.s4 1966171168
        %v1645 = vunpack.c.0.s8 %v1644
        %v1646 = vlaneseq
        %v1647 = vshrl.u32 %v1646, 7
        %v1648 = vsub.s32 %v1645, %v1647
        %v1649 = vrot.slane %v1633, %v1648
        %v1651 = vunpack.c.l.s4 1966171168
        %v1652 = vunpack.c.0.s8 %v1651
        %v1653 = vlaneseq
        %v1654 = vshrl.u32 %v1653, 7
        %v1655 = vsub.s32 %v1652, %v1654
        %v1656 = vrot.slane %v1640, %v1655
        %v1658 = vunpack.c.l.s4 1966171168
        %v1659 = vunpack.c.0.s8 %v1658
        %v1660 = vlaneseq
        %v1661 = vshrl.u32 %v1660, 7
        %v1662 = vsub.s32 %v1659, %v1661
        %v1663 = vrot.slane %v1641, %v1662
        %v1665 = vunpack.c.l.s4 1966171168
        %v1666 = vunpack.c.0.s8 %v1665
        %v1667 = vlaneseq
        %v1668 = vshrl.u32 %v1667, 7
        %v1669 = vsub.s32 %v1666, %v1668
        %v1670 = vrot.slane %v1642, %v1669
        %v1671 = vcombine.high %v1649, %v1649
        %v1672 = vcombine.high %v1656, %v1656
        %v1673 = vcombine.high %v1663, %v1663
        %v1674 = vcombine.high %v1670, %v1670
        %v1675 = vcombine.high %v1115, %v1115
        %v1677 = vunpack.c.l.s4 1966171168
        %v1678 = vunpack.c.0.s8 %v1677
        %v1679 = vlaneseq
        %v1680 = vshrl.u32 %v1679, 7
        %v1681 = vsub.s32 %v1678, %v1680
        %v1682 = vrot.slane %v1115, %v1681
        %v1684 = vunpack.c.l.s4 1966171168
        %v1685 = vunpack.c.0.s8 %v1684
        %v1686 = vlaneseq
        %v1687 = vshrl.u32 %v1686, 7
        %v1688 = vsub.s32 %v1685, %v1687
        %v1689 = vrot.slane %v1675, %v1688
        %v1690 = vcombine.high %v1682, %v1682
        %v1691 = vcombine.high %v1689, %v1689
        %v1693 = vunpack.c.l.s4 1966171168
        %v1694 = vunpack.c.0.s8 %v1693
        %v1695 = vlaneseq
        %v1696 = vshrl.u32 %v1695, 7
        %v1697 = vsub.s32 %v1694, %v1696
        %v1698 = vrot.slane %v1682, %v1697
        %v1700 = vunpack.c.l.s4 1966171168
        %v1701 = vunpack.c.0.s8 %v1700
        %v1702 = vlaneseq
        %v1703 = vshrl.u32 %v1702, 7
        %v1704 = vsub.s32 %v1701, %v1703
        %v1705 = vrot.slane %v1689, %v1704
        %v1707 = vunpack.c.l.s4 1966171168
        %v1708 = vunpack.c.0.s8 %v1707
        %v1709 = vlaneseq
        %v1710 = vshrl.u32 %v1709, 7
        %v1711 = vsub.s32 %v1708, %v1710
        %v1712 = vrot.slane %v1690, %v1711
        %v1714 = vunpack.c.l.s4 1966171168
        %v1715 = vunpack.c.0.s8 %v1714
        %v1716 = vlaneseq
        %v1717 = vshrl.u32 %v1716, 7
        %v1718 = vsub.s32 %v1715, %v1717
        %v1719 = vrot.slane %v1691, %v1718
        %v1720 = vcombine.high %v1698, %v1698
        %v1721 = vcombine.high %v1705, %v1705
        %v1722 = vcombine.high %v1712, %v1712
        %v1723 = vcombine.high %v1719, %v1719
        %v1724 = vcombine.high %v1216, %v1216
        %v1726 = vunpack.c.l.s4 1966171168
        %v1727 = vunpack.c.0.s8 %v1726
        %v1728 = vlaneseq
        %v1729 = vshrl.u32 %v1728, 7
        %v1730 = vsub.s32 %v1727, %v1729
        %v1731 = vrot.slane %v1216, %v1730
        %v1733 = vunpack.c.l.s4 1966171168
        %v1734 = vunpack.c.0.s8 %v1733
        %v1735 = vlaneseq
        %v1736 = vshrl.u32 %v1735, 7
        %v1737 = vsub.s32 %v1734, %v1736
        %v1738 = vrot.slane %v1724, %v1737
        %v1739 = vcombine.high %v1731, %v1731
        %v1740 = vcombine.high %v1738, %v1738
        %v1742 = vunpack.c.l.s4 1966171168
        %v1743 = vunpack.c.0.s8 %v1742
        %v1744 = vlaneseq
        %v1745 = vshrl.u32 %v1744, 7
        %v1746 = vsub.s32 %v1743, %v1745
        %v1747 = vrot.slane %v1731, %v1746
        %v1749 = vunpack.c.l.s4 1966171168
        %v1750 = vunpack.c.0.s8 %v1749
        %v1751 = vlaneseq
        %v1752 = vshrl.u32 %v1751, 7
        %v1753 = vsub.s32 %v1750, %v1752
        %v1754 = vrot.slane %v1738, %v1753
        %v1756 = vunpack.c.l.s4 1966171168
        %v1757 = vunpack.c.0.s8 %v1756
        %v1758 = vlaneseq
        %v1759 = vshrl.u32 %v1758, 7
        %v1760 = vsub.s32 %v1757, %v1759
        %v1761 = vrot.slane %v1739, %v1760
        %v1763 = vunpack.c.l.s4 1966171168
        %v1764 = vunpack.c.0.s8 %v1763
        %v1765 = vlaneseq
        %v1766 = vshrl.u32 %v1765, 7
        %v1767 = vsub.s32 %v1764, %v1766
        %v1768 = vrot.slane %v1740, %v1767
        %v1769 = vcombine.high %v1747, %v1747
        %v1770 = vcombine.high %v1754, %v1754
        %v1771 = vcombine.high %v1761, %v1761
        %v1772 = vcombine.high %v1768, %v1768
        %v1773 = vcombine.high %v1317, %v1317
        %v1775 = vunpack.c.l.s4 1966171168
        %v1776 = vunpack.c.0.s8 %v1775
        %v1777 = vlaneseq
        %v1778 = vshrl.u32 %v1777, 7
        %v1779 = vsub.s32 %v1776, %v1778
        %v1780 = vrot.slane %v1317, %v1779
        %v1782 = vunpack.c.l.s4 1966171168
        %v1783 = vunpack.c.0.s8 %v1782
        %v1784 = vlaneseq
        %v1785 = vshrl.u32 %v1784, 7
        %v1786 = vsub.s32 %v1783, %v1785
        %v1787 = vrot.slane %v1773, %v1786
        %v1788 = vcombine.high %v1780, %v1780
        %v1789 = vcombine.high %v1787, %v1787
        %v1791 = vunpack.c.l.s4 1966171168
        %v1792 = vunpack.c.0.s8 %v1791
        %v1793 = vlaneseq
        %v1794 = vshrl.u32 %v1793, 7
        %v1795 = vsub.s32 %v1792, %v1794
        %v1796 = vrot.slane %v1780, %v1795
        %v1798 = vunpack.c.l.s4 1966171168
        %v1799 = vunpack.c.0.s8 %v1798
        %v1800 = vlaneseq
        %v1801 = vshrl.u32 %v1800, 7
        %v1802 = vsub.s32 %v1799, %v1801
        %v1803 = vrot.slane %v1787, %v1802
        %v1805 = vunpack.c.l.s4 1966171168
        %v1806 = vunpack.c.0.s8 %v1805
        %v1807 = vlaneseq
        %v1808 = vshrl.u32 %v1807, 7
        %v1809 = vsub.s32 %v1806, %v1808
        %v1810 = vrot.slane %v1788, %v1809
        %v1812 = vunpack.c.l.s4 1966171168
        %v1813 = vunpack.c.0.s8 %v1812
        %v1814 = vlaneseq
        %v1815 = vshrl.u32 %v1814, 7
        %v1816 = vsub.s32 %v1813, %v1815
        %v1817 = vrot.slane %v1789, %v1816
        %v1818 = vcombine.high %v1796, %v1796
        %v1819 = vcombine.high %v1803, %v1803
        %v1820 = vcombine.high %v1810, %v1810
        %v1821 = vcombine.high %v1817, %v1817
        %v1822 = vcombine.high %v1418, %v1418
        %v1824 = vunpack.c.l.s4 1966171168
        %v1825 = vunpack.c.0.s8 %v1824
        %v1826 = vlaneseq
        %v1827 = vshrl.u32 %v1826, 7
        %v1828 = vsub.s32 %v1825, %v1827
        %v1829 = vrot.slane %v1418, %v1828
        %v1831 = vunpack.c.l.s4 1966171168
        %v1832 = vunpack.c.0.s8 %v1831
        %v1833 = vlaneseq
        %v1834 = vshrl.u32 %v1833, 7
        %v1835 = vsub.s32 %v1832, %v1834
        %v1836 = vrot.slane %v1822, %v1835
        %v1837 = vcombine.high %v1829, %v1829
        %v1838 = vcombine.high %v1836, %v1836
        %v1840 = vunpack.c.l.s4 1966171168
        %v1841 = vunpack.c.0.s8 %v1840
        %v1842 = vlaneseq
        %v1843 = vshrl.u32 %v1842, 7
        %v1844 = vsub.s32 %v1841, %v1843
        %v1845 = vrot.slane %v1829, %v1844
        %v1847 = vunpack.c.l.s4 1966171168
        %v1848 = vunpack.c.0.s8 %v1847
        %v1849 = vlaneseq
        %v1850 = vshrl.u32 %v1849, 7
        %v1851 = vsub.s32 %v1848, %v1850
        %v1852 = vrot.slane %v1836, %v1851
        %v1854 = vunpack.c.l.s4 1966171168
        %v1855 = vunpack.c.0.s8 %v1854
        %v1856 = vlaneseq
        %v1857 = vshrl.u32 %v1856, 7
        %v1858 = vsub.s32 %v1855, %v1857
        %v1859 = vrot.slane %v1837, %v1858
        %v1861 = vunpack.c.l.s4 1966171168
        %v1862 = vunpack.c.0.s8 %v1861
        %v1863 = vlaneseq
        %v1864 = vshrl.u32 %v1863, 7
        %v1865 = vsub.s32 %v1862, %v1864
        %v1866 = vrot.slane %v1838, %v1865
        %v1867 = vcombine.high %v1845, %v1845
        %v1868 = vcombine.high %v1852, %v1852
        %v1869 = vcombine.high %v1859, %v1859
        %v1870 = vcombine.high %v1866, %v1866
        %v1872 = vcombine.high %v1519, %v1519
        %v1874 = vunpack.c.l.s4 1966171168
        %v1875 = vunpack.c.0.s8 %v1874
        %v1876 = vlaneseq
        %v1877 = vshrl.u32 %v1876, 7
        %v1878 = vsub.s32 %v1875, %v1877
        %v1879 = vrot.slane %v1519, %v1878
        %v1881 = vunpack.c.l.s4 1966171168
        %v1882 = vunpack.c.0.s8 %v1881
        %v1883 = vlaneseq
        %v1884 = vshrl.u32 %v1883, 7
        %v1885 = vsub.s32 %v1882, %v1884
        %v1886 = vrot.slane %v1872, %v1885
        %v1887 = vcombine.high %v1879, %v1879
        %v1888 = vcombine.high %v1886, %v1886
        %v1890 = vunpack.c.l.s4 1966171168
        %v1891 = vunpack.c.0.s8 %v1890
        %v1892 = vlaneseq
        %v1893 = vshrl.u32 %v1892, 7
        %v1894 = vsub.s32 %v1891, %v1893
        %v1895 = vrot.slane %v1879, %v1894
        %v1897 = vunpack.c.l.s4 1966171168
        %v1898 = vunpack.c.0.s8 %v1897
        %v1899 = vlaneseq
        %v1900 = vshrl.u32 %v1899, 7
        %v1901 = vsub.s32 %v1898, %v1900
        %v1902 = vrot.slane %v1886, %v1901
        %v1904 = vunpack.c.l.s4 1966171168
        %v1905 = vunpack.c.0.s8 %v1904
        %v1906 = vlaneseq
        %v1907 = vshrl.u32 %v1906, 7
        %v1908 = vsub.s32 %v1905, %v1907
        %v1909 = vrot.slane %v1887, %v1908
        %v1911 = vunpack.c.l.s4 1966171168
        %v1912 = vunpack.c.0.s8 %v1911
        %v1913 = vlaneseq
        %v1914 = vshrl.u32 %v1913, 7
        %v1915 = vsub.s32 %v1912, %v1914
        %v1916 = vrot.slane %v1888, %v1915
        %v1917 = vcombine.high %v1895, %v1895
        %v1918 = vcombine.high %v1902, %v1902
        %v1919 = vcombine.high %v1909, %v1909
        %v1920 = vcombine.high %v1916, %v1916
        %v1921 = vlaneseq
        %v1922 = vshrl.u32 %v1921, 7
        %v1923 = vsub.s32 0, %v1922
        %v1924 = vrot.slane %v1600, %v1923
        %v1925 = vlaneseq
        %v1926 = vshrl.u32 %v1925, 7
        %v1927 = vsub.s32 0, %v1926
        %v1928 = vrot.slane %v1614, %v1927
        %v1929 = vlaneseq
        %v1930 = vshrl.u32 %v1929, 7
        %v1931 = vsub.s32 0, %v1930
        %v1932 = vrot.slane %v1622, %v1931
        %v1933 = vlaneseq
        %v1934 = vshrl.u32 %v1933, 7
        %v1935 = vsub.s32 0, %v1934
        %v1936 = vrot.slane %v1624, %v1935
        %v1937 = vlaneseq
        %v1938 = vshrl.u32 %v1937, 7
        %v1939 = vsub.s32 0, %v1938
        %v1940 = vrot.slane %v1607, %v1939
        %v1941 = vlaneseq
        %v1942 = vshrl.u32 %v1941, 7
        %v1943 = vsub.s32 0, %v1942
        %v1944 = vrot.slane %v1621, %v1943
        %v1945 = vlaneseq
        %v1946 = vshrl.u32 %v1945, 7
        %v1947 = vsub.s32 0, %v1946
        %v1948 = vrot.slane %v1623, %v1947
        %v1949 = vlaneseq
        %v1950 = vshrl.u32 %v1949, 7
        %v1951 = vsub.s32 0, %v1950
        %v1952 = vrot.slane %v1625, %v1951
        %v1961 = vlaneseq
        %v1962 = vshrl.u32 %v1961, 7
        %v1963 = vsub.s32 0, %v1962
        %v1964 = vrot.slane %v1649, %v1963
        %v1965 = vlaneseq
        %v1966 = vshrl.u32 %v1965, 7
        %v1967 = vsub.s32 0, %v1966
        %v1968 = vrot.slane %v1663, %v1967
        %v1969 = vlaneseq
        %v1970 = vshrl.u32 %v1969, 7
        %v1971 = vsub.s32 0, %v1970
        %v1972 = vrot.slane %v1671, %v1971
        %v1973 = vlaneseq
        %v1974 = vshrl.u32 %v1973, 7
        %v1975 = vsub.s32 0, %v1974
        %v1976 = vrot.slane %v1673, %v1975
        %v1977 = vlaneseq
        %v1978 = vshrl.u32 %v1977, 7
        %v1979 = vsub.s32 0, %v1978
        %v1980 = vrot.slane %v1656, %v1979
        %v1981 = vlaneseq
        %v1982 = vshrl.u32 %v1981, 7
        %v1983 = vsub.s32 0, %v1982
        %v1984 = vrot.slane %v1670, %v1983
        %v1985 = vlaneseq
        %v1986 = vshrl.u32 %v1985, 7
        %v1987 = vsub.s32 0, %v1986
        %v1988 = vrot.slane %v1672, %v1987
        %v1989 = vlaneseq
        %v1990 = vshrl.u32 %v1989, 7
        %v1991 = vsub.s32 0, %v1990
        %v1992 = vrot.slane %v1674, %v1991
        %v2001 = vlaneseq
        %v2002 = vshrl.u32 %v2001, 7
        %v2003 = vsub.s32 0, %v2002
        %v2004 = vrot.slane %v1698, %v2003
        %v2005 = vlaneseq
        %v2006 = vshrl.u32 %v2005, 7
        %v2007 = vsub.s32 0, %v2006
        %v2008 = vrot.slane %v1712, %v2007
        %v2009 = vlaneseq
        %v2010 = vshrl.u32 %v2009, 7
        %v2011 = vsub.s32 0, %v2010
        %v2012 = vrot.slane %v1720, %v2011
        %v2013 = vlaneseq
        %v2014 = vshrl.u32 %v2013, 7
        %v2015 = vsub.s32 0, %v2014
        %v2016 = vrot.slane %v1722, %v2015
        %v2017 = vlaneseq
        %v2018 = vshrl.u32 %v2017, 7
        %v2019 = vsub.s32 0, %v2018
        %v2020 = vrot.slane %v1705, %v2019
        %v2021 = vlaneseq
        %v2022 = vshrl.u32 %v2021, 7
        %v2023 = vsub.s32 0, %v2022
        %v2024 = vrot.slane %v1719, %v2023
        %v2025 = vlaneseq
        %v2026 = vshrl.u32 %v2025, 7
        %v2027 = vsub.s32 0, %v2026
        %v2028 = vrot.slane %v1721, %v2027
        %v2029 = vlaneseq
        %v2030 = vshrl.u32 %v2029, 7
        %v2031 = vsub.s32 0, %v2030
        %v2032 = vrot.slane %v1723, %v2031
        %v2041 = vlaneseq
        %v2042 = vshrl.u32 %v2041, 7
        %v2043 = vsub.s32 0, %v2042
        %v2044 = vrot.slane %v1747, %v2043
        %v2045 = vlaneseq
        %v2046 = vshrl.u32 %v2045, 7
        %v2047 = vsub.s32 0, %v2046
        %v2048 = vrot.slane %v1761, %v2047
        %v2049 = vlaneseq
        %v2050 = vshrl.u32 %v2049, 7
        %v2051 = vsub.s32 0, %v2050
        %v2052 = vrot.slane %v1769, %v2051
        %v2053 = vlaneseq
        %v2054 = vshrl.u32 %v2053, 7
        %v2055 = vsub.s32 0, %v2054
        %v2056 = vrot.slane %v1771, %v2055
        %v2057 = vlaneseq
        %v2058 = vshrl.u32 %v2057, 7
        %v2059 = vsub.s32 0, %v2058
        %v2060 = vrot.slane %v1754, %v2059
        %v2061 = vlaneseq
        %v2062 = vshrl.u32 %v2061, 7
        %v2063 = vsub.s32 0, %v2062
        %v2064 = vrot.slane %v1768, %v2063
        %v2065 = vlaneseq
        %v2066 = vshrl.u32 %v2065, 7
        %v2067 = vsub.s32 0, %v2066
        %v2068 = vrot.slane %v1770, %v2067
        %v2069 = vlaneseq
        %v2070 = vshrl.u32 %v2069, 7
        %v2071 = vsub.s32 0, %v2070
        %v2072 = vrot.slane %v1772, %v2071
        %v2081 = vlaneseq
        %v2082 = vshrl.u32 %v2081, 7
        %v2083 = vsub.s32 0, %v2082
        %v2084 = vrot.slane %v1796, %v2083
        %v2085 = vlaneseq
        %v2086 = vshrl.u32 %v2085, 7
        %v2087 = vsub.s32 0, %v2086
        %v2088 = vrot.slane %v1810, %v2087
        %v2089 = vlaneseq
        %v2090 = vshrl.u32 %v2089, 7
        %v2091 = vsub.s32 0, %v2090
        %v2092 = vrot.slane %v1818, %v2091
        %v2093 = vlaneseq
        %v2094 = vshrl.u32 %v2093, 7
        %v2095 = vsub.s32 0, %v2094
        %v2096 = vrot.slane %v1820, %v2095
        %v2097 = vlaneseq
        %v2098 = vshrl.u32 %v2097, 7
        %v2099 = vsub.s32 0, %v2098
        %v2100 = vrot.slane %v1803, %v2099
        %v2101 = vlaneseq
        %v2102 = vshrl.u32 %v2101, 7
        %v2103 = vsub.s32 0, %v2102
        %v2104 = vrot.slane %v1817, %v2103
        %v2105 = vlaneseq
        %v2106 = vshrl.u32 %v2105, 7
        %v2107 = vsub.s32 0, %v2106
        %v2108 = vrot.slane %v1819, %v2107
        %v2109 = vlaneseq
        %v2110 = vshrl.u32 %v2109, 7
        %v2111 = vsub.s32 0, %v2110
        %v2112 = vrot.slane %v1821, %v2111
        %v2121 = vlaneseq
        %v2122 = vshrl.u32 %v2121, 7
        %v2123 = vsub.s32 0, %v2122
        %v2124 = vrot.slane %v1845, %v2123
        %v2125 = vlaneseq
        %v2126 = vshrl.u32 %v2125, 7
        %v2127 = vsub.s32 0, %v2126
        %v2128 = vrot.slane %v1859, %v2127
        %v2129 = vlaneseq
        %v2130 = vshrl.u32 %v2129, 7
        %v2131 = vsub.s32 0, %v2130
        %v2132 = vrot.slane %v1867, %v2131
        %v2133 = vlaneseq
        %v2134 = vshrl.u32 %v2133, 7
        %v2135 = vsub.s32 0, %v2134
        %v2136 = vrot.slane %v1869, %v2135
        %v2137 = vlaneseq
        %v2138 = vshrl.u32 %v2137, 7
        %v2139 = vsub.s32 0, %v2138
        %v2140 = vrot.slane %v1852, %v2139
        %v2141 = vlaneseq
        %v2142 = vshrl.u32 %v2141, 7
        %v2143 = vsub.s32 0, %v2142
        %v2144 = vrot.slane %v1866, %v2143
        %v2145 = vlaneseq
        %v2146 = vshrl.u32 %v2145, 7
        %v2147 = vsub.s32 0, %v2146
        %v2148 = vrot.slane %v1868, %v2147
        %v2149 = vlaneseq
        %v2150 = vshrl.u32 %v2149, 7
        %v2151 = vsub.s32 0, %v2150
        %v2152 = vrot.slane %v1870, %v2151
        %v2161 = vlaneseq
        %v2162 = vshrl.u32 %v2161, 7
        %v2163 = vsub.s32 0, %v2162
        %v2164 = vrot.slane %v1895, %v2163
        %v2165 = vlaneseq
        %v2166 = vshrl.u32 %v2165, 7
        %v2167 = vsub.s32 0, %v2166
        %v2168 = vrot.slane %v1909, %v2167
        %v2169 = vlaneseq
        %v2170 = vshrl.u32 %v2169, 7
        %v2171 = vsub.s32 0, %v2170
        %v2172 = vrot.slane %v1917, %v2171
        %v2173 = vlaneseq
        %v2174 = vshrl.u32 %v2173, 7
        %v2175 = vsub.s32 0, %v2174
        %v2176 = vrot.slane %v1919, %v2175
        %v2177 = vlaneseq
        %v2178 = vshrl.u32 %v2177, 7
        %v2179 = vsub.s32 0, %v2178
        %v2180 = vrot.slane %v1902, %v2179
        %v2181 = vlaneseq
        %v2182 = vshrl.u32 %v2181, 7
        %v2183 = vsub.s32 0, %v2182
        %v2184 = vrot.slane %v1916, %v2183
        %v2185 = vlaneseq
        %v2186 = vshrl.u32 %v2185, 7
        %v2187 = vsub.s32 0, %v2186
        %v2188 = vrot.slane %v1918, %v2187
        %v2189 = vlaneseq
        %v2190 = vshrl.u32 %v2189, 7
        %v2191 = vsub.s32 0, %v2190
        %v2192 = vrot.slane %v1920, %v2191
        %vm2201 = vcmask 1040384
        %v2202 = vsel %vm2201, %v1543, %v1924
        %v2203 = vsel %vm2201, %v1557, %v1928
        %v2204 = vsel %vm2201, %v1565, %v1932
        %v2205 = vsel %vm2201, %v1567, %v1936
        %v2206 = vsel %vm2201, %v1550, %v1940
        %v2207 = vsel %vm2201, %v1564, %v1944
        %v2208 = vsel %vm2201, %v1566, %v1948
        %v2209 = vsel %vm2201, %v1568, %v1952
        %vm2210 = vcmask 1041408
        %v2211 = vsel %vm2210, %v2202, %v1964
        %v2212 = vsel %vm2210, %v2203, %v1968
        %v2213 = vsel %vm2210, %v2204, %v1972
        %v2214 = vsel %vm2210, %v2205, %v1976
        %v2215 = vsel %vm2210, %v2206, %v1980
        %v2216 = vsel %vm2210, %v2207, %v1984
        %v2217 = vsel %vm2210, %v2208, %v1988
        %v2218 = vsel %vm2210, %v2209, %v1992
        %vm2219 = vcmask 1042432
        %v2220 = vsel %vm2219, %v2211, %v2004
        %v2221 = vsel %vm2219, %v2212, %v2008
        %v2222 = vsel %vm2219, %v2213, %v2012
        %v2223 = vsel %vm2219, %v2214, %v2016
        %v2224 = vsel %vm2219, %v2215, %v2020
        %v2225 = vsel %vm2219, %v2216, %v2024
        %v2226 = vsel %vm2219, %v2217, %v2028
        %v2227 = vsel %vm2219, %v2218, %v2032
        %vm2228 = vcmask 1043456
        %v2229 = vsel %vm2228, %v2220, %v2044
        %v2230 = vsel %vm2228, %v2221, %v2048
        %v2231 = vsel %vm2228, %v2222, %v2052
        %v2232 = vsel %vm2228, %v2223, %v2056
        %v2233 = vsel %vm2228, %v2224, %v2060
        %v2234 = vsel %vm2228, %v2225, %v2064
        %v2235 = vsel %vm2228, %v2226, %v2068
        %v2236 = vsel %vm2228, %v2227, %v2072
        %vm2237 = vcmask 1044480
        %v2238 = vsel %vm2237, %v2229, %v2084
        %v2239 = vsel %vm2237, %v2230, %v2088
        %v2240 = vsel %vm2237, %v2231, %v2092
        %v2241 = vsel %vm2237, %v2232, %v2096
        %v2242 = vsel %vm2237, %v2233, %v2100
        %v2243 = vsel %vm2237, %v2234, %v2104
        %v2244 = vsel %vm2237, %v2235, %v2108
        %v2245 = vsel %vm2237, %v2236, %v2112
        %vm2246 = vcmask 1045504
        %v2247 = vsel %vm2246, %v2238, %v2124
        %v2248 = vsel %vm2246, %v2239, %v2128
        %v2249 = vsel %vm2246, %v2240, %v2132
        %v2250 = vsel %vm2246, %v2241, %v2136
        %v2251 = vsel %vm2246, %v2242, %v2140
        %v2252 = vsel %vm2246, %v2243, %v2144
        %v2253 = vsel %vm2246, %v2244, %v2148
        %v2254 = vsel %vm2246, %v2245, %v2152
        %vm2255 = vcmask 1046528
        %v2256 = vsel %vm2255, %v2247, %v2164
        %v2257 = vsel %vm2255, %v2248, %v2168
        %v2258 = vsel %vm2255, %v2249, %v2172
        %v2259 = vsel %vm2255, %v2250, %v2176
        %v2260 = vsel %vm2255, %v2251, %v2180
        %v2261 = vsel %vm2255, %v2252, %v2184
        %v2262 = vsel %vm2255, %v2253, %v2188
        %v2263 = vsel %vm2255, %v2254, %v2192
        %v2264 = vld [vmem:[#allocation2 + $0x38] sm:$0xff]
        %v2265 = vld [vmem:[#allocation2 + $0xb0] sm:$0xff]
        %v2266 = vld [vmem:[#allocation2 + $0x128] sm:$0xff]
        %v2267 = vld [vmem:[#allocation2 + $0x1a0] sm:$0xff]
        %v2268 = vld [vmem:[%s2 + $0x7] sm:$0x1]
        %v2270 = vlaneseq
        %v2271 = vshrl.u32 %v2270, 7
        %v2272 = vsub.s32 0, %v2271
        %v2273 = vrot.slane %v2268, %v2272
        %2283 = vrot.lane.b32.xlu0 %v2256, 32
        %v2284 = vpop.permute.xlu0 %2283
        %2285 = vrot.lane.b32.xlu0 %v2257, 32
        %v2286 = vpop.permute.xlu0 %2285
        %2287 = vrot.lane.b32.xlu0 %v2258, 32
        %v2288 = vpop.permute.xlu0 %2287
        %2289 = vrot.lane.b32.xlu0 %v2259, 32
        %v2290 = vpop.permute.xlu0 %2289
        %2291 = vrot.lane.b32.xlu0 %v2260, 32
        %v2292 = vpop.permute.xlu0 %2291
        %2293 = vrot.lane.b32.xlu0 %v2261, 32
        %v2294 = vpop.permute.xlu0 %2293
        %2295 = vrot.lane.b32.xlu0 %v2262, 32
        %v2296 = vpop.permute.xlu0 %2295
        %2297 = vrot.lane.b32.xlu0 %v2263, 32
        %v2298 = vpop.permute.xlu0 %2297
        %v2299 = vsel %vm275, %v2284, 0
        %v2301 = vsel %vm275, %v2286, 0
        %v2303 = vsel %vm275, %v2288, 0
        %v2305 = vsel %vm275, %v2290, 0
        %v2307 = vsel %vm275, %v2292, 0
        %v2309 = vsel %vm275, %v2294, 0
        %v2311 = vsel %vm275, %v2296, 0
        %v2313 = vsel %vm275, %v2298, 0
        %2315 = vmatprep.subr.mxu0 0.0
        %2316 = vmatpush1.msra.mxu0 0.0
        %2317 = vmatprep.subr.mxu0 0.0
        %2318 = vmatpush1.msra.mxu0 0.0
        %2319 = vmatprep.subr.mxu0 0.0
        %2320 = vmatpush1.msra.mxu0 0.0
        %2321 = vmatprep.subr.mxu0 0.0
        %2322 = vmatpush1.msra.mxu0 0.0
        %2323 = vmatprep.subr.mxu0 0.0
        %2324 = vmatpush1.msra.mxu0 0.0
        %2325 = vmatprep.subr.mxu0 0.0
        %2326 = vmatpush1.msra.mxu0 0.0
        %2327 = vmatprep.subr.mxu0 0.0
        %2328 = vmatpush1.msra.mxu0 0.0
        %2329 = vmatprep.subr.mxu0 0.0
        %2330 = vmatpush1.msra.mxu0 0.0
        %2331 = vmatprep.subr.mxu0 0.0
        %2332 = vmatpush1.msra.mxu0 0.0
        %2333 = vmatprep.subr.mxu0 0.0
        %2334 = vmatpush1.msra.mxu0 0.0
        %2335 = vmatprep.subr.mxu0 0.0
        %2336 = vmatpush1.msra.mxu0 0.0
        %2337 = vmatprep.subr.mxu0 0.0
        %2338 = vmatpush1.msra.mxu0 0.0
        %2339 = vmatprep.subr.mxu0 0.0
        %2340 = vmatpush1.msra.mxu0 %v2267
        %2341 = vmatprep.subr.mxu0 0.0
        %2342 = vmatpush1.msra.mxu0 %v2266
        %2343 = vmatprep.subr.mxu0 0.0
        %2344 = vmatpush1.msra.mxu0 %v2265
        %2345 = vmatprep.subr.mxu0 0.0
        %2346 = vmatpush1.msra.mxu0 %v2264
        %2347 = vmatprep.subr.mxu0 0.0
        %2348 = vmatpush2.msra.mxu0 0.0
        %2349 = vmatprep.subr.mxu0 0.0
        %2350 = vmatpush2.msra.mxu0 0.0
        %2351 = vmatprep.subr.mxu0 0.0
        %2352 = vmatpush2.msra.mxu0 0.0
        %2353 = vmatprep.subr.mxu0 0.0
        %2354 = vmatpush2.msra.mxu0 0.0
        %2355 = vmatprep.subr.mxu0 0.0
        %2356 = vmatpush2.msra.mxu0 0.0
        %2357 = vmatprep.subr.mxu0 0.0
        %2358 = vmatpush2.msra.mxu0 0.0
        %2359 = vmatprep.subr.mxu0 0.0
        %2360 = vmatpush2.msra.mxu0 0.0
        %2361 = vmatprep.subr.mxu0 0.0
        %2362 = vmatpush2.msra.mxu0 0.0
        %2363 = vmatprep.subr.mxu0 0.0
        %2364 = vmatpush2.msra.mxu0 0.0
        %2365 = vmatprep.subr.mxu0 0.0
        %2366 = vmatpush2.msra.mxu0 0.0
        %2367 = vmatprep.subr.mxu0 0.0
        %2368 = vmatpush2.msra.mxu0 0.0
        %2369 = vmatprep.subr.mxu0 0.0
        %2370 = vmatpush2.msra.mxu0 0.0
        %2371 = vmatprep.subr.mxu0 0.0
        %2372 = vmatpush2.msra.mxu0 0.0
        %2373 = vmatprep.subr.mxu0 0.0
        %2374 = vmatpush2.msra.mxu0 0.0
        %2375 = vmatprep.subr.mxu0 0.0
        %2376 = vmatpush2.msra.mxu0 0.0
        %2377 = vmatprep.subr.mxu0 0.0
        %2378 = vmatpush2.msra.mxu0 0.0
        %2379 = vmatprep.mubr.f32.mxu0 0.0
        %2380 = vmatmul.mubr.f32.gmra.mxu0 %v2299
        %v2381 = vpop.f32.mrf.mxu0
        %v2382 = vadd.f32 %v2273, %v2381
        %v2383 = vpop.f32.mrf.mxu0
        %2384 = vmatprep.mubr.f32.mxu0 0.0
        %2385 = vmatmul.mubr.f32.gmra.mxu0 %v2301
        %v2386 = vpop.f32.mrf.mxu0
        %v2387 = vadd.f32 %v2273, %v2386
        %v2388 = vpop.f32.mrf.mxu0
        %2389 = vmatprep.mubr.f32.mxu0 0.0
        %2390 = vmatmul.mubr.f32.gmra.mxu0 %v2303
        %v2391 = vpop.f32.mrf.mxu0
        %v2392 = vadd.f32 %v2273, %v2391
        %v2393 = vpop.f32.mrf.mxu0
        %2394 = vmatprep.mubr.f32.mxu0 0.0
        %2395 = vmatmul.mubr.f32.gmra.mxu0 %v2305
        %v2396 = vpop.f32.mrf.mxu0
        %v2397 = vadd.f32 %v2273, %v2396
        %v2398 = vpop.f32.mrf.mxu0
        %2399 = vmatprep.mubr.f32.mxu0 0.0
        %2400 = vmatmul.mubr.f32.gmra.mxu0 %v2307
        %v2401 = vpop.f32.mrf.mxu0
        %v2402 = vadd.f32 %v2273, %v2401
        %v2403 = vpop.f32.mrf.mxu0
        %2404 = vmatprep.mubr.f32.mxu0 0.0
        %2405 = vmatmul.mubr.f32.gmra.mxu0 %v2309
        %v2406 = vpop.f32.mrf.mxu0
        %v2407 = vadd.f32 %v2273, %v2406
        %v2408 = vpop.f32.mrf.mxu0
        %2409 = vmatprep.mubr.f32.mxu0 0.0
        %2410 = vmatmul.mubr.f32.gmra.mxu0 %v2311
        %v2411 = vpop.f32.mrf.mxu0
        %v2412 = vadd.f32 %v2273, %v2411
        %v2413 = vpop.f32.mrf.mxu0
        %2414 = vmatprep.mubr.f32.mxu0 0.0
        %2415 = vmatmul.mubr.f32.gmra.mxu0 %v2313
        %v2416 = vpop.f32.mrf.mxu0
        %v2417 = vadd.f32 %v2273, %v2416
        %v2418 = vpop.f32.mrf.mxu0
        %2419 = vdwg.mxu0
        %v2420 = vld [vmem:[#allocation2 + $0x40] sm:$0xff]
        %v2421 = vld [vmem:[#allocation2 + $0xb8] sm:$0xff]
        %v2422 = vld [vmem:[#allocation2 + $0x130] sm:$0xff]
        %v2423 = vld [vmem:[#allocation2 + $0x1a8] sm:$0xff]
        %v2424 = vld [vmem:[%s2 + $0x8] sm:$0x1]
        %v2426 = vlaneseq
        %v2427 = vshrl.u32 %v2426, 7
        %v2428 = vsub.s32 0, %v2427
        %v2429 = vrot.slane %v2424, %v2428
        %2431 = vmatprep.subr.mxu0 0.0
        %2432 = vmatpush1.msra.mxu0 0.0
        %2433 = vmatprep.subr.mxu0 0.0
        %2434 = vmatpush1.msra.mxu0 0.0
        %2435 = vmatprep.subr.mxu0 0.0
        %2436 = vmatpush1.msra.mxu0 0.0
        %2437 = vmatprep.subr.mxu0 0.0
        %2438 = vmatpush1.msra.mxu0 0.0
        %2439 = vmatprep.subr.mxu0 0.0
        %2440 = vmatpush1.msra.mxu0 0.0
        %2441 = vmatprep.subr.mxu0 0.0
        %2442 = vmatpush1.msra.mxu0 0.0
        %2443 = vmatprep.subr.mxu0 0.0
        %2444 = vmatpush1.msra.mxu0 0.0
        %2445 = vmatprep.subr.mxu0 0.0
        %2446 = vmatpush1.msra.mxu0 0.0
        %2447 = vmatprep.subr.mxu0 0.0
        %2448 = vmatpush1.msra.mxu0 0.0
        %2449 = vmatprep.subr.mxu0 0.0
        %2450 = vmatpush1.msra.mxu0 0.0
        %2451 = vmatprep.subr.mxu0 0.0
        %2452 = vmatpush1.msra.mxu0 0.0
        %2453 = vmatprep.subr.mxu0 0.0
        %2454 = vmatpush1.msra.mxu0 0.0
        %2455 = vmatprep.subr.mxu0 0.0
        %2456 = vmatpush1.msra.mxu0 %v2423
        %2457 = vmatprep.subr.mxu0 0.0
        %2458 = vmatpush1.msra.mxu0 %v2422
        %2459 = vmatprep.subr.mxu0 0.0
        %2460 = vmatpush1.msra.mxu0 %v2421
        %2461 = vmatprep.subr.mxu0 0.0
        %2462 = vmatpush1.msra.mxu0 %v2420
        %2463 = vmatprep.subr.mxu0 0.0
        %2464 = vmatpush2.msra.mxu0 0.0
        %2465 = vmatprep.subr.mxu0 0.0
        %2466 = vmatpush2.msra.mxu0 0.0
        %2467 = vmatprep.subr.mxu0 0.0
        %2468 = vmatpush2.msra.mxu0 0.0
        %2469 = vmatprep.subr.mxu0 0.0
        %2470 = vmatpush2.msra.mxu0 0.0
        %2471 = vmatprep.subr.mxu0 0.0
        %2472 = vmatpush2.msra.mxu0 0.0
        %2473 = vmatprep.subr.mxu0 0.0
        %2474 = vmatpush2.msra.mxu0 0.0
        %2475 = vmatprep.subr.mxu0 0.0
        %2476 = vmatpush2.msra.mxu0 0.0
        %2477 = vmatprep.subr.mxu0 0.0
        %2478 = vmatpush2.msra.mxu0 0.0
        %2479 = vmatprep.subr.mxu0 0.0
        %2480 = vmatpush2.msra.mxu0 0.0
        %2481 = vmatprep.subr.mxu0 0.0
        %2482 = vmatpush2.msra.mxu0 0.0
        %2483 = vmatprep.subr.mxu0 0.0
        %2484 = vmatpush2.msra.mxu0 0.0
        %2485 = vmatprep.subr.mxu0 0.0
        %2486 = vmatpush2.msra.mxu0 0.0
        %2487 = vmatprep.subr.mxu0 0.0
        %2488 = vmatpush2.msra.mxu0 0.0
        %2489 = vmatprep.subr.mxu0 0.0
        %2490 = vmatpush2.msra.mxu0 0.0
        %2491 = vmatprep.subr.mxu0 0.0
        %2492 = vmatpush2.msra.mxu0 0.0
        %2493 = vmatprep.subr.mxu0 0.0
        %2494 = vmatpush2.msra.mxu0 0.0
        %2495 = vmatprep.mubr.f32.mxu0 0.0
        %2496 = vmatmul.mubr.f32.gmra.mxu0 %v2299
        %v2497 = vpop.f32.mrf.mxu0
        %v2498 = vadd.f32 %v2429, %v2497
        %v2499 = vpop.f32.mrf.mxu0
        %2500 = vmatprep.mubr.f32.mxu0 0.0
        %2501 = vmatmul.mubr.f32.gmra.mxu0 %v2301
        %v2502 = vpop.f32.mrf.mxu0
        %v2503 = vadd.f32 %v2429, %v2502
        %v2504 = vpop.f32.mrf.mxu0
        %2505 = vmatprep.mubr.f32.mxu0 0.0
        %2506 = vmatmul.mubr.f32.gmra.mxu0 %v2303
        %v2507 = vpop.f32.mrf.mxu0
        %v2508 = vadd.f32 %v2429, %v2507
        %v2509 = vpop.f32.mrf.mxu0
        %2510 = vmatprep.mubr.f32.mxu0 0.0
        %2511 = vmatmul.mubr.f32.gmra.mxu0 %v2305
        %v2512 = vpop.f32.mrf.mxu0
        %v2513 = vadd.f32 %v2429, %v2512
        %v2514 = vpop.f32.mrf.mxu0
        %2515 = vmatprep.mubr.f32.mxu0 0.0
        %2516 = vmatmul.mubr.f32.gmra.mxu0 %v2307
        %v2517 = vpop.f32.mrf.mxu0
        %v2518 = vadd.f32 %v2429, %v2517
        %v2519 = vpop.f32.mrf.mxu0
        %2520 = vmatprep.mubr.f32.mxu0 0.0
        %2521 = vmatmul.mubr.f32.gmra.mxu0 %v2309
        %v2522 = vpop.f32.mrf.mxu0
        %v2523 = vadd.f32 %v2429, %v2522
        %v2524 = vpop.f32.mrf.mxu0
        %2525 = vmatprep.mubr.f32.mxu0 0.0
        %2526 = vmatmul.mubr.f32.gmra.mxu0 %v2311
        %v2527 = vpop.f32.mrf.mxu0
        %v2528 = vadd.f32 %v2429, %v2527
        %v2529 = vpop.f32.mrf.mxu0
        %2530 = vmatprep.mubr.f32.mxu0 0.0
        %2531 = vmatmul.mubr.f32.gmra.mxu0 %v2313
        %v2532 = vpop.f32.mrf.mxu0
        %v2533 = vadd.f32 %v2429, %v2532
        %v2534 = vpop.f32.mrf.mxu0
        %2535 = vdwg.mxu0
        %v2536 = vld [vmem:[#allocation2 + $0x48] sm:$0xff]
        %v2537 = vld [vmem:[#allocation2 + $0xc0] sm:$0xff]
        %v2538 = vld [vmem:[#allocation2 + $0x138] sm:$0xff]
        %v2539 = vld [vmem:[#allocation2 + $0x1b0] sm:$0xff]
        %v2540 = vld [vmem:[%s2 + $0x9] sm:$0x1]
        %v2542 = vlaneseq
        %v2543 = vshrl.u32 %v2542, 7
        %v2544 = vsub.s32 0, %v2543
        %v2545 = vrot.slane %v2540, %v2544
        %2547 = vmatprep.subr.mxu0 0.0
        %2548 = vmatpush1.msra.mxu0 0.0
        %2549 = vmatprep.subr.mxu0 0.0
        %2550 = vmatpush1.msra.mxu0 0.0
        %2551 = vmatprep.subr.mxu0 0.0
        %2552 = vmatpush1.msra.mxu0 0.0
        %2553 = vmatprep.subr.mxu0 0.0
        %2554 = vmatpush1.msra.mxu0 0.0
        %2555 = vmatprep.subr.mxu0 0.0
        %2556 = vmatpush1.msra.mxu0 0.0
        %2557 = vmatprep.subr.mxu0 0.0
        %2558 = vmatpush1.msra.mxu0 0.0
        %2559 = vmatprep.subr.mxu0 0.0
        %2560 = vmatpush1.msra.mxu0 0.0
        %2561 = vmatprep.subr.mxu0 0.0
        %2562 = vmatpush1.msra.mxu0 0.0
        %2563 = vmatprep.subr.mxu0 0.0
        %2564 = vmatpush1.msra.mxu0 0.0
        %2565 = vmatprep.subr.mxu0 0.0
        %2566 = vmatpush1.msra.mxu0 0.0
        %2567 = vmatprep.subr.mxu0 0.0
        %2568 = vmatpush1.msra.mxu0 0.0
        %2569 = vmatprep.subr.mxu0 0.0
        %2570 = vmatpush1.msra.mxu0 0.0
        %2571 = vmatprep.subr.mxu0 0.0
        %2572 = vmatpush1.msra.mxu0 %v2539
        %2573 = vmatprep.subr.mxu0 0.0
        %2574 = vmatpush1.msra.mxu0 %v2538
        %2575 = vmatprep.subr.mxu0 0.0
        %2576 = vmatpush1.msra.mxu0 %v2537
        %2577 = vmatprep.subr.mxu0 0.0
        %2578 = vmatpush1.msra.mxu0 %v2536
        %2579 = vmatprep.subr.mxu0 0.0
        %2580 = vmatpush2.msra.mxu0 0.0
        %2581 = vmatprep.subr.mxu0 0.0
        %2582 = vmatpush2.msra.mxu0 0.0
        %2583 = vmatprep.subr.mxu0 0.0
        %2584 = vmatpush2.msra.mxu0 0.0
        %2585 = vmatprep.subr.mxu0 0.0
        %2586 = vmatpush2.msra.mxu0 0.0
        %2587 = vmatprep.subr.mxu0 0.0
        %2588 = vmatpush2.msra.mxu0 0.0
        %2589 = vmatprep.subr.mxu0 0.0
        %2590 = vmatpush2.msra.mxu0 0.0
        %2591 = vmatprep.subr.mxu0 0.0
        %2592 = vmatpush2.msra.mxu0 0.0
        %2593 = vmatprep.subr.mxu0 0.0
        %2594 = vmatpush2.msra.mxu0 0.0
        %2595 = vmatprep.subr.mxu0 0.0
        %2596 = vmatpush2.msra.mxu0 0.0
        %2597 = vmatprep.subr.mxu0 0.0
        %2598 = vmatpush2.msra.mxu0 0.0
        %2599 = vmatprep.subr.mxu0 0.0
        %2600 = vmatpush2.msra.mxu0 0.0
        %2601 = vmatprep.subr.mxu0 0.0
        %2602 = vmatpush2.msra.mxu0 0.0
        %2603 = vmatprep.subr.mxu0 0.0
        %2604 = vmatpush2.msra.mxu0 0.0
        %2605 = vmatprep.subr.mxu0 0.0
        %2606 = vmatpush2.msra.mxu0 0.0
        %2607 = vmatprep.subr.mxu0 0.0
        %2608 = vmatpush2.msra.mxu0 0.0
        %2609 = vmatprep.subr.mxu0 0.0
        %2610 = vmatpush2.msra.mxu0 0.0
        %2611 = vmatprep.mubr.f32.mxu0 0.0
        %2612 = vmatmul.mubr.f32.gmra.mxu0 %v2299
        %v2613 = vpop.f32.mrf.mxu0
        %v2614 = vadd.f32 %v2545, %v2613
        %v2615 = vpop.f32.mrf.mxu0
        %2616 = vmatprep.mubr.f32.mxu0 0.0
        %2617 = vmatmul.mubr.f32.gmra.mxu0 %v2301
        %v2618 = vpop.f32.mrf.mxu0
        %v2619 = vadd.f32 %v2545, %v2618
        %v2620 = vpop.f32.mrf.mxu0
        %2621 = vmatprep.mubr.f32.mxu0 0.0
        %2622 = vmatmul.mubr.f32.gmra.mxu0 %v2303
        %v2623 = vpop.f32.mrf.mxu0
        %v2624 = vadd.f32 %v2545, %v2623
        %v2625 = vpop.f32.mrf.mxu0
        %2626 = vmatprep.mubr.f32.mxu0 0.0
        %2627 = vmatmul.mubr.f32.gmra.mxu0 %v2305
        %v2628 = vpop.f32.mrf.mxu0
        %v2629 = vadd.f32 %v2545, %v2628
        %v2630 = vpop.f32.mrf.mxu0
        %2631 = vmatprep.mubr.f32.mxu0 0.0
        %2632 = vmatmul.mubr.f32.gmra.mxu0 %v2307
        %v2633 = vpop.f32.mrf.mxu0
        %v2634 = vadd.f32 %v2545, %v2633
        %v2635 = vpop.f32.mrf.mxu0
        %2636 = vmatprep.mubr.f32.mxu0 0.0
        %2637 = vmatmul.mubr.f32.gmra.mxu0 %v2309
        %v2638 = vpop.f32.mrf.mxu0
        %v2639 = vadd.f32 %v2545, %v2638
        %v2640 = vpop.f32.mrf.mxu0
        %2641 = vmatprep.mubr.f32.mxu0 0.0
        %2642 = vmatmul.mubr.f32.gmra.mxu0 %v2311
        %v2643 = vpop.f32.mrf.mxu0
        %v2644 = vadd.f32 %v2545, %v2643
        %v2645 = vpop.f32.mrf.mxu0
        %2646 = vmatprep.mubr.f32.mxu0 0.0
        %2647 = vmatmul.mubr.f32.gmra.mxu0 %v2313
        %v2648 = vpop.f32.mrf.mxu0
        %v2649 = vadd.f32 %v2545, %v2648
        %v2650 = vpop.f32.mrf.mxu0
        %2651 = vdwg.mxu0
        %v2653 = vsel %vm190, %v2382, 0
        %v2656 = vsel %vm190, %v2498, 0
        %2658 = vmatprep.subr.mxu0 0.0
        %2659 = vmatpush1.xpose.msra.mxu0 0.0
        %2660 = vmatprep.subr.mxu0 0.0
        %2661 = vmatpush1.xpose.msra.mxu0 0.0
        %2662 = vmatprep.subr.mxu0 0.0
        %2663 = vmatpush1.xpose.msra.mxu0 0.0
        %2664 = vmatprep.subr.mxu0 0.0
        %2665 = vmatpush1.xpose.msra.mxu0 0.0
        %2666 = vmatprep.subr.mxu0 0.0
        %2667 = vmatpush1.xpose.msra.mxu0 0.0
        %2668 = vmatprep.subr.mxu0 0.0
        %2669 = vmatpush1.xpose.msra.mxu0 0.0
        %2670 = vmatprep.subr.mxu0 0.0
        %2671 = vmatpush1.xpose.msra.mxu0 0.0
        %2672 = vmatprep.subr.mxu0 0.0
        %2673 = vmatpush1.xpose.msra.mxu0 0.0
        %2674 = vmatprep.subr.mxu0 0.0
        %2675 = vmatpush1.xpose.msra.mxu0 0.0
        %2676 = vmatprep.subr.mxu0 0.0
        %2677 = vmatpush1.xpose.msra.mxu0 0.0
        %2678 = vmatprep.subr.mxu0 0.0
        %2679 = vmatpush1.xpose.msra.mxu0 0.0
        %2680 = vmatprep.subr.mxu0 0.0
        %2681 = vmatpush1.xpose.msra.mxu0 0.0
        %2682 = vmatprep.subr.mxu0 0.0
        %2683 = vmatpush1.xpose.msra.mxu0 0.0
        %2684 = vmatprep.subr.mxu0 0.0
        %2685 = vmatpush1.xpose.msra.mxu0 0.0
        %2686 = vmatprep.subr.mxu0 0.0
        %2687 = vmatpush1.xpose.msra.mxu0 0.0
        %2688 = vmatprep.subr.mxu0 0.0
        %2689 = vmatpush1.xpose.msra.mxu0 %v2656
        %2690 = vmatprep.subr.mxu0 0.0
        %2691 = vmatpush2.xpose.msra.mxu0 0.0
        %2692 = vmatprep.subr.mxu0 0.0
        %2693 = vmatpush2.xpose.msra.mxu0 0.0
        %2694 = vmatprep.subr.mxu0 0.0
        %2695 = vmatpush2.xpose.msra.mxu0 0.0
        %2696 = vmatprep.subr.mxu0 0.0
        %2697 = vmatpush2.xpose.msra.mxu0 0.0
        %2698 = vmatprep.subr.mxu0 0.0
        %2699 = vmatpush2.xpose.msra.mxu0 0.0
        %2700 = vmatprep.subr.mxu0 0.0
        %2701 = vmatpush2.xpose.msra.mxu0 0.0
        %2702 = vmatprep.subr.mxu0 0.0
        %2703 = vmatpush2.xpose.msra.mxu0 0.0
        %2704 = vmatprep.subr.mxu0 0.0
        %2705 = vmatpush2.xpose.msra.mxu0 0.0
        %2706 = vmatprep.subr.mxu0 0.0
        %2707 = vmatpush2.xpose.msra.mxu0 0.0
        %2708 = vmatprep.subr.mxu0 0.0
        %2709 = vmatpush2.xpose.msra.mxu0 0.0
        %2710 = vmatprep.subr.mxu0 0.0
        %2711 = vmatpush2.xpose.msra.mxu0 0.0
        %2712 = vmatprep.subr.mxu0 0.0
        %2713 = vmatpush2.xpose.msra.mxu0 0.0
        %2714 = vmatprep.subr.mxu0 0.0
        %2715 = vmatpush2.xpose.msra.mxu0 0.0
        %2716 = vmatprep.subr.mxu0 0.0
        %2717 = vmatpush2.xpose.msra.mxu0 0.0
        %2718 = vmatprep.subr.mxu0 0.0
        %2719 = vmatpush2.xpose.msra.mxu0 0.0
        %2720 = vmatprep.subr.mxu0 0.0
        %2721 = vmatpush2.xpose.msra.mxu0 0.0
        %2722 = vmatprep.mubr.f32.mxu0 0.0
        %2723 = vmatmul.mubr.f32.gmra.mxu0 %v2653
        %v2724 = vpop.f32.mrf.mxu0
        %v2725 = vadd.f32 0.0, %v2724
        %v2726 = vpop.f32.mrf.mxu0
        %2727 = vdwg.mxu0
        %v2729 = vsel %vm190, %v2387, 0
        %v2732 = vsel %vm190, %v2503, 0
        %2734 = vmatprep.subr.mxu0 0.0
        %2735 = vmatpush1.xpose.msra.mxu0 0.0
        %2736 = vmatprep.subr.mxu0 0.0
        %2737 = vmatpush1.xpose.msra.mxu0 0.0
        %2738 = vmatprep.subr.mxu0 0.0
        %2739 = vmatpush1.xpose.msra.mxu0 0.0
        %2740 = vmatprep.subr.mxu0 0.0
        %2741 = vmatpush1.xpose.msra.mxu0 0.0
        %2742 = vmatprep.subr.mxu0 0.0
        %2743 = vmatpush1.xpose.msra.mxu0 0.0
        %2744 = vmatprep.subr.mxu0 0.0
        %2745 = vmatpush1.xpose.msra.mxu0 0.0
        %2746 = vmatprep.subr.mxu0 0.0
        %2747 = vmatpush1.xpose.msra.mxu0 0.0
        %2748 = vmatprep.subr.mxu0 0.0
        %2749 = vmatpush1.xpose.msra.mxu0 0.0
        %2750 = vmatprep.subr.mxu0 0.0
        %2751 = vmatpush1.xpose.msra.mxu0 0.0
        %2752 = vmatprep.subr.mxu0 0.0
        %2753 = vmatpush1.xpose.msra.mxu0 0.0
        %2754 = vmatprep.subr.mxu0 0.0
        %2755 = vmatpush1.xpose.msra.mxu0 0.0
        %2756 = vmatprep.subr.mxu0 0.0
        %2757 = vmatpush1.xpose.msra.mxu0 0.0
        %2758 = vmatprep.subr.mxu0 0.0
        %2759 = vmatpush1.xpose.msra.mxu0 0.0
        %2760 = vmatprep.subr.mxu0 0.0
        %2761 = vmatpush1.xpose.msra.mxu0 0.0
        %2762 = vmatprep.subr.mxu0 0.0
        %2763 = vmatpush1.xpose.msra.mxu0 0.0
        %2764 = vmatprep.subr.mxu0 0.0
        %2765 = vmatpush1.xpose.msra.mxu0 %v2732
        %2766 = vmatprep.subr.mxu0 0.0
        %2767 = vmatpush2.xpose.msra.mxu0 0.0
        %2768 = vmatprep.subr.mxu0 0.0
        %2769 = vmatpush2.xpose.msra.mxu0 0.0
        %2770 = vmatprep.subr.mxu0 0.0
        %2771 = vmatpush2.xpose.msra.mxu0 0.0
        %2772 = vmatprep.subr.mxu0 0.0
        %2773 = vmatpush2.xpose.msra.mxu0 0.0
        %2774 = vmatprep.subr.mxu0 0.0
        %2775 = vmatpush2.xpose.msra.mxu0 0.0
        %2776 = vmatprep.subr.mxu0 0.0
        %2777 = vmatpush2.xpose.msra.mxu0 0.0
        %2778 = vmatprep.subr.mxu0 0.0
        %2779 = vmatpush2.xpose.msra.mxu0 0.0
        %2780 = vmatprep.subr.mxu0 0.0
        %2781 = vmatpush2.xpose.msra.mxu0 0.0
        %2782 = vmatprep.subr.mxu0 0.0
        %2783 = vmatpush2.xpose.msra.mxu0 0.0
        %2784 = vmatprep.subr.mxu0 0.0
        %2785 = vmatpush2.xpose.msra.mxu0 0.0
        %2786 = vmatprep.subr.mxu0 0.0
        %2787 = vmatpush2.xpose.msra.mxu0 0.0
        %2788 = vmatprep.subr.mxu0 0.0
        %2789 = vmatpush2.xpose.msra.mxu0 0.0
        %2790 = vmatprep.subr.mxu0 0.0
        %2791 = vmatpush2.xpose.msra.mxu0 0.0
        %2792 = vmatprep.subr.mxu0 0.0
        %2793 = vmatpush2.xpose.msra.mxu0 0.0
        %2794 = vmatprep.subr.mxu0 0.0
        %2795 = vmatpush2.xpose.msra.mxu0 0.0
        %2796 = vmatprep.subr.mxu0 0.0
        %2797 = vmatpush2.xpose.msra.mxu0 0.0
        %2798 = vmatprep.mubr.f32.mxu0 0.0
        %2799 = vmatmul.mubr.f32.gmra.mxu0 %v2729
        %v2800 = vpop.f32.mrf.mxu0
        %v2801 = vadd.f32 0.0, %v2800
        %v2802 = vpop.f32.mrf.mxu0
        %2803 = vdwg.mxu0
        %v2805 = vsel %vm190, %v2392, 0
        %v2808 = vsel %vm190, %v2508, 0
        %2810 = vmatprep.subr.mxu0 0.0
        %2811 = vmatpush1.xpose.msra.mxu0 0.0
        %2812 = vmatprep.subr.mxu0 0.0
        %2813 = vmatpush1.xpose.msra.mxu0 0.0
        %2814 = vmatprep.subr.mxu0 0.0
        %2815 = vmatpush1.xpose.msra.mxu0 0.0
        %2816 = vmatprep.subr.mxu0 0.0
        %2817 = vmatpush1.xpose.msra.mxu0 0.0
        %2818 = vmatprep.subr.mxu0 0.0
        %2819 = vmatpush1.xpose.msra.mxu0 0.0
        %2820 = vmatprep.subr.mxu0 0.0
        %2821 = vmatpush1.xpose.msra.mxu0 0.0
        %2822 = vmatprep.subr.mxu0 0.0
        %2823 = vmatpush1.xpose.msra.mxu0 0.0
        %2824 = vmatprep.subr.mxu0 0.0
        %2825 = vmatpush1.xpose.msra.mxu0 0.0
        %2826 = vmatprep.subr.mxu0 0.0
        %2827 = vmatpush1.xpose.msra.mxu0 0.0
        %2828 = vmatprep.subr.mxu0 0.0
        %2829 = vmatpush1.xpose.msra.mxu0 0.0
        %2830 = vmatprep.subr.mxu0 0.0
        %2831 = vmatpush1.xpose.msra.mxu0 0.0
        %2832 = vmatprep.subr.mxu0 0.0
        %2833 = vmatpush1.xpose.msra.mxu0 0.0
        %2834 = vmatprep.subr.mxu0 0.0
        %2835 = vmatpush1.xpose.msra.mxu0 0.0
        %2836 = vmatprep.subr.mxu0 0.0
        %2837 = vmatpush1.xpose.msra.mxu0 0.0
        %2838 = vmatprep.subr.mxu0 0.0
        %2839 = vmatpush1.xpose.msra.mxu0 0.0
        %2840 = vmatprep.subr.mxu0 0.0
        %2841 = vmatpush1.xpose.msra.mxu0 %v2808
        %2842 = vmatprep.subr.mxu0 0.0
        %2843 = vmatpush2.xpose.msra.mxu0 0.0
        %2844 = vmatprep.subr.mxu0 0.0
        %2845 = vmatpush2.xpose.msra.mxu0 0.0
        %2846 = vmatprep.subr.mxu0 0.0
        %2847 = vmatpush2.xpose.msra.mxu0 0.0
        %2848 = vmatprep.subr.mxu0 0.0
        %2849 = vmatpush2.xpose.msra.mxu0 0.0
        %2850 = vmatprep.subr.mxu0 0.0
        %2851 = vmatpush2.xpose.msra.mxu0 0.0
        %2852 = vmatprep.subr.mxu0 0.0
        %2853 = vmatpush2.xpose.msra.mxu0 0.0
        %2854 = vmatprep.subr.mxu0 0.0
        %2855 = vmatpush2.xpose.msra.mxu0 0.0
        %2856 = vmatprep.subr.mxu0 0.0
        %2857 = vmatpush2.xpose.msra.mxu0 0.0
        %2858 = vmatprep.subr.mxu0 0.0
        %2859 = vmatpush2.xpose.msra.mxu0 0.0
        %2860 = vmatprep.subr.mxu0 0.0
        %2861 = vmatpush2.xpose.msra.mxu0 0.0
        %2862 = vmatprep.subr.mxu0 0.0
        %2863 = vmatpush2.xpose.msra.mxu0 0.0
        %2864 = vmatprep.subr.mxu0 0.0
        %2865 = vmatpush2.xpose.msra.mxu0 0.0
        %2866 = vmatprep.subr.mxu0 0.0
        %2867 = vmatpush2.xpose.msra.mxu0 0.0
        %2868 = vmatprep.subr.mxu0 0.0
        %2869 = vmatpush2.xpose.msra.mxu0 0.0
        %2870 = vmatprep.subr.mxu0 0.0
        %2871 = vmatpush2.xpose.msra.mxu0 0.0
        %2872 = vmatprep.subr.mxu0 0.0
        %2873 = vmatpush2.xpose.msra.mxu0 0.0
        %2874 = vmatprep.mubr.f32.mxu0 0.0
        %2875 = vmatmul.mubr.f32.gmra.mxu0 %v2805
        %v2876 = vpop.f32.mrf.mxu0
        %v2877 = vadd.f32 0.0, %v2876
        %v2878 = vpop.f32.mrf.mxu0
        %2879 = vdwg.mxu0
        %v2881 = vsel %vm190, %v2397, 0
        %v2884 = vsel %vm190, %v2513, 0
        %2886 = vmatprep.subr.mxu0 0.0
        %2887 = vmatpush1.xpose.msra.mxu0 0.0
        %2888 = vmatprep.subr.mxu0 0.0
        %2889 = vmatpush1.xpose.msra.mxu0 0.0
        %2890 = vmatprep.subr.mxu0 0.0
        %2891 = vmatpush1.xpose.msra.mxu0 0.0
        %2892 = vmatprep.subr.mxu0 0.0
        %2893 = vmatpush1.xpose.msra.mxu0 0.0
        %2894 = vmatprep.subr.mxu0 0.0
        %2895 = vmatpush1.xpose.msra.mxu0 0.0
        %2896 = vmatprep.subr.mxu0 0.0
        %2897 = vmatpush1.xpose.msra.mxu0 0.0
        %2898 = vmatprep.subr.mxu0 0.0
        %2899 = vmatpush1.xpose.msra.mxu0 0.0
        %2900 = vmatprep.subr.mxu0 0.0
        %2901 = vmatpush1.xpose.msra.mxu0 0.0
        %2902 = vmatprep.subr.mxu0 0.0
        %2903 = vmatpush1.xpose.msra.mxu0 0.0
        %2904 = vmatprep.subr.mxu0 0.0
        %2905 = vmatpush1.xpose.msra.mxu0 0.0
        %2906 = vmatprep.subr.mxu0 0.0
        %2907 = vmatpush1.xpose.msra.mxu0 0.0
        %2908 = vmatprep.subr.mxu0 0.0
        %2909 = vmatpush1.xpose.msra.mxu0 0.0
        %2910 = vmatprep.subr.mxu0 0.0
        %2911 = vmatpush1.xpose.msra.mxu0 0.0
        %2912 = vmatprep.subr.mxu0 0.0
        %2913 = vmatpush1.xpose.msra.mxu0 0.0
        %2914 = vmatprep.subr.mxu0 0.0
        %2915 = vmatpush1.xpose.msra.mxu0 0.0
        %2916 = vmatprep.subr.mxu0 0.0
        %2917 = vmatpush1.xpose.msra.mxu0 %v2884
        %2918 = vmatprep.subr.mxu0 0.0
        %2919 = vmatpush2.xpose.msra.mxu0 0.0
        %2920 = vmatprep.subr.mxu0 0.0
        %2921 = vmatpush2.xpose.msra.mxu0 0.0
        %2922 = vmatprep.subr.mxu0 0.0
        %2923 = vmatpush2.xpose.msra.mxu0 0.0
        %2924 = vmatprep.subr.mxu0 0.0
        %2925 = vmatpush2.xpose.msra.mxu0 0.0
        %2926 = vmatprep.subr.mxu0 0.0
        %2927 = vmatpush2.xpose.msra.mxu0 0.0
        %2928 = vmatprep.subr.mxu0 0.0
        %2929 = vmatpush2.xpose.msra.mxu0 0.0
        %2930 = vmatprep.subr.mxu0 0.0
        %2931 = vmatpush2.xpose.msra.mxu0 0.0
        %2932 = vmatprep.subr.mxu0 0.0
        %2933 = vmatpush2.xpose.msra.mxu0 0.0
        %2934 = vmatprep.subr.mxu0 0.0
        %2935 = vmatpush2.xpose.msra.mxu0 0.0
        %2936 = vmatprep.subr.mxu0 0.0
        %2937 = vmatpush2.xpose.msra.mxu0 0.0
        %2938 = vmatprep.subr.mxu0 0.0
        %2939 = vmatpush2.xpose.msra.mxu0 0.0
        %2940 = vmatprep.subr.mxu0 0.0
        %2941 = vmatpush2.xpose.msra.mxu0 0.0
        %2942 = vmatprep.subr.mxu0 0.0
        %2943 = vmatpush2.xpose.msra.mxu0 0.0
        %2944 = vmatprep.subr.mxu0 0.0
        %2945 = vmatpush2.xpose.msra.mxu0 0.0
        %2946 = vmatprep.subr.mxu0 0.0
        %2947 = vmatpush2.xpose.msra.mxu0 0.0
        %2948 = vmatprep.subr.mxu0 0.0
        %2949 = vmatpush2.xpose.msra.mxu0 0.0
        %2950 = vmatprep.mubr.f32.mxu0 0.0
        %2951 = vmatmul.mubr.f32.gmra.mxu0 %v2881
        %v2952 = vpop.f32.mrf.mxu0
        %v2953 = vadd.f32 0.0, %v2952
        %v2954 = vpop.f32.mrf.mxu0
        %2955 = vdwg.mxu0
        %v2957 = vsel %vm190, %v2402, 0
        %v2960 = vsel %vm190, %v2518, 0
        %2962 = vmatprep.subr.mxu0 0.0
        %2963 = vmatpush1.xpose.msra.mxu0 0.0
        %2964 = vmatprep.subr.mxu0 0.0
        %2965 = vmatpush1.xpose.msra.mxu0 0.0
        %2966 = vmatprep.subr.mxu0 0.0
        %2967 = vmatpush1.xpose.msra.mxu0 0.0
        %2968 = vmatprep.subr.mxu0 0.0
        %2969 = vmatpush1.xpose.msra.mxu0 0.0
        %2970 = vmatprep.subr.mxu0 0.0
        %2971 = vmatpush1.xpose.msra.mxu0 0.0
        %2972 = vmatprep.subr.mxu0 0.0
        %2973 = vmatpush1.xpose.msra.mxu0 0.0
        %2974 = vmatprep.subr.mxu0 0.0
        %2975 = vmatpush1.xpose.msra.mxu0 0.0
        %2976 = vmatprep.subr.mxu0 0.0
        %2977 = vmatpush1.xpose.msra.mxu0 0.0
        %2978 = vmatprep.subr.mxu0 0.0
        %2979 = vmatpush1.xpose.msra.mxu0 0.0
        %2980 = vmatprep.subr.mxu0 0.0
        %2981 = vmatpush1.xpose.msra.mxu0 0.0
        %2982 = vmatprep.subr.mxu0 0.0
        %2983 = vmatpush1.xpose.msra.mxu0 0.0
        %2984 = vmatprep.subr.mxu0 0.0
        %2985 = vmatpush1.xpose.msra.mxu0 0.0
        %2986 = vmatprep.subr.mxu0 0.0
        %2987 = vmatpush1.xpose.msra.mxu0 0.0
        %2988 = vmatprep.subr.mxu0 0.0
        %2989 = vmatpush1.xpose.msra.mxu0 0.0
        %2990 = vmatprep.subr.mxu0 0.0
        %2991 = vmatpush1.xpose.msra.mxu0 0.0
        %2992 = vmatprep.subr.mxu0 0.0
        %2993 = vmatpush1.xpose.msra.mxu0 %v2960
        %2994 = vmatprep.subr.mxu0 0.0
        %2995 = vmatpush2.xpose.msra.mxu0 0.0
        %2996 = vmatprep.subr.mxu0 0.0
        %2997 = vmatpush2.xpose.msra.mxu0 0.0
        %2998 = vmatprep.subr.mxu0 0.0
        %2999 = vmatpush2.xpose.msra.mxu0 0.0
        %3000 = vmatprep.subr.mxu0 0.0
        %3001 = vmatpush2.xpose.msra.mxu0 0.0
        %3002 = vmatprep.subr.mxu0 0.0
        %3003 = vmatpush2.xpose.msra.mxu0 0.0
        %3004 = vmatprep.subr.mxu0 0.0
        %3005 = vmatpush2.xpose.msra.mxu0 0.0
        %3006 = vmatprep.subr.mxu0 0.0
        %3007 = vmatpush2.xpose.msra.mxu0 0.0
        %3008 = vmatprep.subr.mxu0 0.0
        %3009 = vmatpush2.xpose.msra.mxu0 0.0
        %3010 = vmatprep.subr.mxu0 0.0
        %3011 = vmatpush2.xpose.msra.mxu0 0.0
        %3012 = vmatprep.subr.mxu0 0.0
        %3013 = vmatpush2.xpose.msra.mxu0 0.0
        %3014 = vmatprep.subr.mxu0 0.0
        %3015 = vmatpush2.xpose.msra.mxu0 0.0
        %3016 = vmatprep.subr.mxu0 0.0
        %3017 = vmatpush2.xpose.msra.mxu0 0.0
        %3018 = vmatprep.subr.mxu0 0.0
        %3019 = vmatpush2.xpose.msra.mxu0 0.0
        %3020 = vmatprep.subr.mxu0 0.0
        %3021 = vmatpush2.xpose.msra.mxu0 0.0
        %3022 = vmatprep.subr.mxu0 0.0
        %3023 = vmatpush2.xpose.msra.mxu0 0.0
        %3024 = vmatprep.subr.mxu0 0.0
        %3025 = vmatpush2.xpose.msra.mxu0 0.0
        %3026 = vmatprep.mubr.f32.mxu0 0.0
        %3027 = vmatmul.mubr.f32.gmra.mxu0 %v2957
        %v3028 = vpop.f32.mrf.mxu0
        %v3029 = vadd.f32 0.0, %v3028
        %v3030 = vpop.f32.mrf.mxu0
        %3031 = vdwg.mxu0
        %v3033 = vsel %vm190, %v2407, 0
        %v3036 = vsel %vm190, %v2523, 0
        %3038 = vmatprep.subr.mxu0 0.0
        %3039 = vmatpush1.xpose.msra.mxu0 0.0
        %3040 = vmatprep.subr.mxu0 0.0
        %3041 = vmatpush1.xpose.msra.mxu0 0.0
        %3042 = vmatprep.subr.mxu0 0.0
        %3043 = vmatpush1.xpose.msra.mxu0 0.0
        %3044 = vmatprep.subr.mxu0 0.0
        %3045 = vmatpush1.xpose.msra.mxu0 0.0
        %3046 = vmatprep.subr.mxu0 0.0
        %3047 = vmatpush1.xpose.msra.mxu0 0.0
        %3048 = vmatprep.subr.mxu0 0.0
        %3049 = vmatpush1.xpose.msra.mxu0 0.0
        %3050 = vmatprep.subr.mxu0 0.0
        %3051 = vmatpush1.xpose.msra.mxu0 0.0
        %3052 = vmatprep.subr.mxu0 0.0
        %3053 = vmatpush1.xpose.msra.mxu0 0.0
        %3054 = vmatprep.subr.mxu0 0.0
        %3055 = vmatpush1.xpose.msra.mxu0 0.0
        %3056 = vmatprep.subr.mxu0 0.0
        %3057 = vmatpush1.xpose.msra.mxu0 0.0
        %3058 = vmatprep.subr.mxu0 0.0
        %3059 = vmatpush1.xpose.msra.mxu0 0.0
        %3060 = vmatprep.subr.mxu0 0.0
        %3061 = vmatpush1.xpose.msra.mxu0 0.0
        %3062 = vmatprep.subr.mxu0 0.0
        %3063 = vmatpush1.xpose.msra.mxu0 0.0
        %3064 = vmatprep.subr.mxu0 0.0
        %3065 = vmatpush1.xpose.msra.mxu0 0.0
        %3066 = vmatprep.subr.mxu0 0.0
        %3067 = vmatpush1.xpose.msra.mxu0 0.0
        %3068 = vmatprep.subr.mxu0 0.0
        %3069 = vmatpush1.xpose.msra.mxu0 %v3036
        %3070 = vmatprep.subr.mxu0 0.0
        %3071 = vmatpush2.xpose.msra.mxu0 0.0
        %3072 = vmatprep.subr.mxu0 0.0
        %3073 = vmatpush2.xpose.msra.mxu0 0.0
        %3074 = vmatprep.subr.mxu0 0.0
        %3075 = vmatpush2.xpose.msra.mxu0 0.0
        %3076 = vmatprep.subr.mxu0 0.0
        %3077 = vmatpush2.xpose.msra.mxu0 0.0
        %3078 = vmatprep.subr.mxu0 0.0
        %3079 = vmatpush2.xpose.msra.mxu0 0.0
        %3080 = vmatprep.subr.mxu0 0.0
        %3081 = vmatpush2.xpose.msra.mxu0 0.0
        %3082 = vmatprep.subr.mxu0 0.0
        %3083 = vmatpush2.xpose.msra.mxu0 0.0
        %3084 = vmatprep.subr.mxu0 0.0
        %3085 = vmatpush2.xpose.msra.mxu0 0.0
        %3086 = vmatprep.subr.mxu0 0.0
        %3087 = vmatpush2.xpose.msra.mxu0 0.0
        %3088 = vmatprep.subr.mxu0 0.0
        %3089 = vmatpush2.xpose.msra.mxu0 0.0
        %3090 = vmatprep.subr.mxu0 0.0
        %3091 = vmatpush2.xpose.msra.mxu0 0.0
        %3092 = vmatprep.subr.mxu0 0.0
        %3093 = vmatpush2.xpose.msra.mxu0 0.0
        %3094 = vmatprep.subr.mxu0 0.0
        %3095 = vmatpush2.xpose.msra.mxu0 0.0
        %3096 = vmatprep.subr.mxu0 0.0
        %3097 = vmatpush2.xpose.msra.mxu0 0.0
        %3098 = vmatprep.subr.mxu0 0.0
        %3099 = vmatpush2.xpose.msra.mxu0 0.0
        %3100 = vmatprep.subr.mxu0 0.0
        %3101 = vmatpush2.xpose.msra.mxu0 0.0
        %3102 = vmatprep.mubr.f32.mxu0 0.0
        %3103 = vmatmul.mubr.f32.gmra.mxu0 %v3033
        %v3104 = vpop.f32.mrf.mxu0
        %v3105 = vadd.f32 0.0, %v3104
        %v3106 = vpop.f32.mrf.mxu0
        %3107 = vdwg.mxu0
        %v3109 = vsel %vm190, %v2412, 0
        %v3112 = vsel %vm190, %v2528, 0
        %3114 = vmatprep.subr.mxu0 0.0
        %3115 = vmatpush1.xpose.msra.mxu0 0.0
        %3116 = vmatprep.subr.mxu0 0.0
        %3117 = vmatpush1.xpose.msra.mxu0 0.0
        %3118 = vmatprep.subr.mxu0 0.0
        %3119 = vmatpush1.xpose.msra.mxu0 0.0
        %3120 = vmatprep.subr.mxu0 0.0
        %3121 = vmatpush1.xpose.msra.mxu0 0.0
        %3122 = vmatprep.subr.mxu0 0.0
        %3123 = vmatpush1.xpose.msra.mxu0 0.0
        %3124 = vmatprep.subr.mxu0 0.0
        %3125 = vmatpush1.xpose.msra.mxu0 0.0
        %3126 = vmatprep.subr.mxu0 0.0
        %3127 = vmatpush1.xpose.msra.mxu0 0.0
        %3128 = vmatprep.subr.mxu0 0.0
        %3129 = vmatpush1.xpose.msra.mxu0 0.0
        %3130 = vmatprep.subr.mxu0 0.0
        %3131 = vmatpush1.xpose.msra.mxu0 0.0
        %3132 = vmatprep.subr.mxu0 0.0
        %3133 = vmatpush1.xpose.msra.mxu0 0.0
        %3134 = vmatprep.subr.mxu0 0.0
        %3135 = vmatpush1.xpose.msra.mxu0 0.0
        %3136 = vmatprep.subr.mxu0 0.0
        %3137 = vmatpush1.xpose.msra.mxu0 0.0
        %3138 = vmatprep.subr.mxu0 0.0
        %3139 = vmatpush1.xpose.msra.mxu0 0.0
        %3140 = vmatprep.subr.mxu0 0.0
        %3141 = vmatpush1.xpose.msra.mxu0 0.0
        %3142 = vmatprep.subr.mxu0 0.0
        %3143 = vmatpush1.xpose.msra.mxu0 0.0
        %3144 = vmatprep.subr.mxu0 0.0
        %3145 = vmatpush1.xpose.msra.mxu0 %v3112
        %3146 = vmatprep.subr.mxu0 0.0
        %3147 = vmatpush2.xpose.msra.mxu0 0.0
        %3148 = vmatprep.subr.mxu0 0.0
        %3149 = vmatpush2.xpose.msra.mxu0 0.0
        %3150 = vmatprep.subr.mxu0 0.0
        %3151 = vmatpush2.xpose.msra.mxu0 0.0
        %3152 = vmatprep.subr.mxu0 0.0
        %3153 = vmatpush2.xpose.msra.mxu0 0.0
        %3154 = vmatprep.subr.mxu0 0.0
        %3155 = vmatpush2.xpose.msra.mxu0 0.0
        %3156 = vmatprep.subr.mxu0 0.0
        %3157 = vmatpush2.xpose.msra.mxu0 0.0
        %3158 = vmatprep.subr.mxu0 0.0
        %3159 = vmatpush2.xpose.msra.mxu0 0.0
        %3160 = vmatprep.subr.mxu0 0.0
        %3161 = vmatpush2.xpose.msra.mxu0 0.0
        %3162 = vmatprep.subr.mxu0 0.0
        %3163 = vmatpush2.xpose.msra.mxu0 0.0
        %3164 = vmatprep.subr.mxu0 0.0
        %3165 = vmatpush2.xpose.msra.mxu0 0.0
        %3166 = vmatprep.subr.mxu0 0.0
        %3167 = vmatpush2.xpose.msra.mxu0 0.0
        %3168 = vmatprep.subr.mxu0 0.0
        %3169 = vmatpush2.xpose.msra.mxu0 0.0
        %3170 = vmatprep.subr.mxu0 0.0
        %3171 = vmatpush2.xpose.msra.mxu0 0.0
        %3172 = vmatprep.subr.mxu0 0.0
        %3173 = vmatpush2.xpose.msra.mxu0 0.0
        %3174 = vmatprep.subr.mxu0 0.0
        %3175 = vmatpush2.xpose.msra.mxu0 0.0
        %3176 = vmatprep.subr.mxu0 0.0
        %3177 = vmatpush2.xpose.msra.mxu0 0.0
        %3178 = vmatprep.mubr.f32.mxu0 0.0
        %3179 = vmatmul.mubr.f32.gmra.mxu0 %v3109
        %v3180 = vpop.f32.mrf.mxu0
        %v3181 = vadd.f32 0.0, %v3180
        %v3182 = vpop.f32.mrf.mxu0
        %3183 = vdwg.mxu0
        %v3185 = vsel %vm190, %v2417, 0
        %v3188 = vsel %vm190, %v2533, 0
        %3190 = vmatprep.subr.mxu0 0.0
        %3191 = vmatpush1.xpose.msra.mxu0 0.0
        %3192 = vmatprep.subr.mxu0 0.0
        %3193 = vmatpush1.xpose.msra.mxu0 0.0
        %3194 = vmatprep.subr.mxu0 0.0
        %3195 = vmatpush1.xpose.msra.mxu0 0.0
        %3196 = vmatprep.subr.mxu0 0.0
        %3197 = vmatpush1.xpose.msra.mxu0 0.0
        %3198 = vmatprep.subr.mxu0 0.0
        %3199 = vmatpush1.xpose.msra.mxu0 0.0
        %3200 = vmatprep.subr.mxu0 0.0
        %3201 = vmatpush1.xpose.msra.mxu0 0.0
        %3202 = vmatprep.subr.mxu0 0.0
        %3203 = vmatpush1.xpose.msra.mxu0 0.0
        %3204 = vmatprep.subr.mxu0 0.0
        %3205 = vmatpush1.xpose.msra.mxu0 0.0
        %3206 = vmatprep.subr.mxu0 0.0
        %3207 = vmatpush1.xpose.msra.mxu0 0.0
        %3208 = vmatprep.subr.mxu0 0.0
        %3209 = vmatpush1.xpose.msra.mxu0 0.0
        %3210 = vmatprep.subr.mxu0 0.0
        %3211 = vmatpush1.xpose.msra.mxu0 0.0
        %3212 = vmatprep.subr.mxu0 0.0
        %3213 = vmatpush1.xpose.msra.mxu0 0.0
        %3214 = vmatprep.subr.mxu0 0.0
        %3215 = vmatpush1.xpose.msra.mxu0 0.0
        %3216 = vmatprep.subr.mxu0 0.0
        %3217 = vmatpush1.xpose.msra.mxu0 0.0
        %3218 = vmatprep.subr.mxu0 0.0
        %3219 = vmatpush1.xpose.msra.mxu0 0.0
        %3220 = vmatprep.subr.mxu0 0.0
        %3221 = vmatpush1.xpose.msra.mxu0 %v3188
        %3222 = vmatprep.subr.mxu0 0.0
        %3223 = vmatpush2.xpose.msra.mxu0 0.0
        %3224 = vmatprep.subr.mxu0 0.0
        %3225 = vmatpush2.xpose.msra.mxu0 0.0
        %3226 = vmatprep.subr.mxu0 0.0
        %3227 = vmatpush2.xpose.msra.mxu0 0.0
        %3228 = vmatprep.subr.mxu0 0.0
        %3229 = vmatpush2.xpose.msra.mxu0 0.0
        %3230 = vmatprep.subr.mxu0 0.0
        %3231 = vmatpush2.xpose.msra.mxu0 0.0
        %3232 = vmatprep.subr.mxu0 0.0
        %3233 = vmatpush2.xpose.msra.mxu0 0.0
        %3234 = vmatprep.subr.mxu0 0.0
        %3235 = vmatpush2.xpose.msra.mxu0 0.0
        %3236 = vmatprep.subr.mxu0 0.0
        %3237 = vmatpush2.xpose.msra.mxu0 0.0
        %3238 = vmatprep.subr.mxu0 0.0
        %3239 = vmatpush2.xpose.msra.mxu0 0.0
        %3240 = vmatprep.subr.mxu0 0.0
        %3241 = vmatpush2.xpose.msra.mxu0 0.0
        %3242 = vmatprep.subr.mxu0 0.0
        %3243 = vmatpush2.xpose.msra.mxu0 0.0
        %3244 = vmatprep.subr.mxu0 0.0
        %3245 = vmatpush2.xpose.msra.mxu0 0.0
        %3246 = vmatprep.subr.mxu0 0.0
        %3247 = vmatpush2.xpose.msra.mxu0 0.0
        %3248 = vmatprep.subr.mxu0 0.0
        %3249 = vmatpush2.xpose.msra.mxu0 0.0
        %3250 = vmatprep.subr.mxu0 0.0
        %3251 = vmatpush2.xpose.msra.mxu0 0.0
        %3252 = vmatprep.subr.mxu0 0.0
        %3253 = vmatpush2.xpose.msra.mxu0 0.0
        %3254 = vmatprep.mubr.f32.mxu0 0.0
        %3255 = vmatmul.mubr.f32.gmra.mxu0 %v3185
        %v3256 = vpop.f32.mrf.mxu0
        %v3257 = vadd.f32 0.0, %v3256
        %v3258 = vpop.f32.mrf.mxu0
        %3259 = vdwg.mxu0
        %v3260 = vmul.f32 %v2725, 0.35355338
        %v3261 = vmul.f32 %v2801, 0.35355338
        %v3262 = vmul.f32 %v2877, 0.35355338
        %v3263 = vmul.f32 %v2953, 0.35355338
        %v3264 = vmul.f32 %v3029, 0.35355338
        %v3265 = vmul.f32 %v3105, 0.35355338
        %v3266 = vmul.f32 %v3181, 0.35355338
        %v3267 = vmul.f32 %v3257, 0.35355338
        %v3268 = vsel %vm190, %v3260, -inf
        %3269 = vmax.xlane.f32.xlu0 %v3268
        %v3270 = vpop.xlane.xlu0 %3269
        %v3271 = vsel %vm190, %v3261, -inf
        %3272 = vmax.xlane.f32.xlu0 %v3271
        %v3273 = vpop.xlane.xlu0 %3272
        %v3274 = vsel %vm190, %v3262, -inf
        %3275 = vmax.xlane.f32.xlu0 %v3274
        %v3276 = vpop.xlane.xlu0 %3275
        %v3277 = vsel %vm190, %v3263, -inf
        %3278 = vmax.xlane.f32.xlu0 %v3277
        %v3279 = vpop.xlane.xlu0 %3278
        %v3280 = vsel %vm190, %v3264, -inf
        %3281 = vmax.xlane.f32.xlu0 %v3280
        %v3282 = vpop.xlane.xlu0 %3281
        %v3283 = vsel %vm190, %v3265, -inf
        %3284 = vmax.xlane.f32.xlu0 %v3283
        %v3285 = vpop.xlane.xlu0 %3284
        %v3286 = vsel %vm190, %v3266, -inf
        %3287 = vmax.xlane.f32.xlu0 %v3286
        %v3288 = vpop.xlane.xlu0 %3287
        %v3289 = vsel %vm190, %v3267, -inf
        %3290 = vmax.xlane.f32.xlu0 %v3289
        %v3291 = vpop.xlane.xlu0 %3290
        %v3292 = vsub.f32 %v3260, %v3270
        %v3293 = vsub.f32 %v3261, %v3273
        %v3294 = vsub.f32 %v3262, %v3276
        %v3295 = vsub.f32 %v3263, %v3279
        %v3296 = vsub.f32 %v3264, %v3282
        %v3297 = vsub.f32 %v3265, %v3285
        %v3298 = vsub.f32 %v3266, %v3288
        %v3299 = vsub.f32 %v3267, %v3291
        %v3300 = vmul.f32 %v3292, 1.442695
        %v3301 = vpow.pop %v3300
        %v3302 = vmul.f32 %v3293, 1.442695
        %v3303 = vpow.pop %v3302
        %v3304 = vmul.f32 %v3294, 1.442695
        %v3305 = vpow.pop %v3304
        %v3306 = vmul.f32 %v3295, 1.442695
        %v3307 = vpow.pop %v3306
        %v3308 = vmul.f32 %v3296, 1.442695
        %v3309 = vpow.pop %v3308
        %v3310 = vmul.f32 %v3297, 1.442695
        %v3311 = vpow.pop %v3310
        %v3312 = vmul.f32 %v3298, 1.442695
        %v3313 = vpow.pop %v3312
        %v3314 = vmul.f32 %v3299, 1.442695
        %v3315 = vpow.pop %v3314
        %v3316 = vsel %vm190, %v3301, 0.0
        %3317 = vadd.xlane.f32.xlu0 %v3316
        %v3318 = vpop.xlane.xlu0 %3317
        %v3319 = vsel %vm190, %v3303, 0.0
        %3320 = vadd.xlane.f32.xlu0 %v3319
        %v3321 = vpop.xlane.xlu0 %3320
        %v3322 = vsel %vm190, %v3305, 0.0
        %3323 = vadd.xlane.f32.xlu0 %v3322
        %v3324 = vpop.xlane.xlu0 %3323
        %v3325 = vsel %vm190, %v3307, 0.0
        %3326 = vadd.xlane.f32.xlu0 %v3325
        %v3327 = vpop.xlane.xlu0 %3326
        %v3328 = vsel %vm190, %v3309, 0.0
        %3329 = vadd.xlane.f32.xlu0 %v3328
        %v3330 = vpop.xlane.xlu0 %3329
        %v3331 = vsel %vm190, %v3311, 0.0
        %3332 = vadd.xlane.f32.xlu0 %v3331
        %v3333 = vpop.xlane.xlu0 %3332
        %v3334 = vsel %vm190, %v3313, 0.0
        %3335 = vadd.xlane.f32.xlu0 %v3334
        %v3336 = vpop.xlane.xlu0 %3335
        %v3337 = vsel %vm190, %v3315, 0.0
        %3338 = vadd.xlane.f32.xlu0 %v3337
        %v3339 = vpop.xlane.xlu0 %3338
        %v3340 = vrcp.pop %v3318
        %v3341 = vrcp.pop %v3321
        %v3342 = vrcp.pop %v3324
        %v3343 = vrcp.pop %v3327
        %v3344 = vrcp.pop %v3330
        %v3345 = vrcp.pop %v3333
        %v3346 = vrcp.pop %v3336
        %v3347 = vrcp.pop %v3339
        %v3348 = vmul.f32 %v3301, %v3340
        %v3349 = vmul.f32 %v3303, %v3341
        %v3350 = vmul.f32 %v3305, %v3342
        %v3351 = vmul.f32 %v3307, %v3343
        %v3352 = vmul.f32 %v3309, %v3344
        %v3353 = vmul.f32 %v3311, %v3345
        %v3354 = vmul.f32 %v3313, %v3346
        %v3355 = vmul.f32 %v3315, %v3347
        %v3357 = vsel %vm190, %v3348, 0
        %3359 = vmatprep.subr.mxu0 0.0
        %3360 = vmatpush1.msra.mxu0 0.0
        %3361 = vmatprep.subr.mxu0 0.0
        %3362 = vmatpush1.msra.mxu0 0.0
        %3363 = vmatprep.subr.mxu0 0.0
        %3364 = vmatpush1.msra.mxu0 0.0
        %3365 = vmatprep.subr.mxu0 0.0
        %3366 = vmatpush1.msra.mxu0 0.0
        %3367 = vmatprep.subr.mxu0 0.0
        %3368 = vmatpush1.msra.mxu0 0.0
        %3369 = vmatprep.subr.mxu0 0.0
        %3370 = vmatpush1.msra.mxu0 0.0
        %3371 = vmatprep.subr.mxu0 0.0
        %3372 = vmatpush1.msra.mxu0 0.0
        %3373 = vmatprep.subr.mxu0 0.0
        %3374 = vmatpush1.msra.mxu0 0.0
        %3375 = vmatprep.subr.mxu0 0.0
        %3376 = vmatpush1.msra.mxu0 0.0
        %3377 = vmatprep.subr.mxu0 0.0
        %3378 = vmatpush1.msra.mxu0 0.0
        %3379 = vmatprep.subr.mxu0 0.0
        %3380 = vmatpush1.msra.mxu0 0.0
        %3381 = vmatprep.subr.mxu0 0.0
        %3382 = vmatpush1.msra.mxu0 0.0
        %3383 = vmatprep.subr.mxu0 0.0
        %3384 = vmatpush1.msra.mxu0 0.0
        %3385 = vmatprep.subr.mxu0 0.0
        %3386 = vmatpush1.msra.mxu0 0.0
        %3387 = vmatprep.subr.mxu0 0.0
        %3388 = vmatpush1.msra.mxu0 0.0
        %3389 = vmatprep.subr.mxu0 0.0
        %3390 = vmatpush1.msra.mxu0 %v2614
        %3391 = vmatprep.subr.mxu0 0.0
        %3392 = vmatpush2.msra.mxu0 0.0
        %3393 = vmatprep.subr.mxu0 0.0
        %3394 = vmatpush2.msra.mxu0 0.0
        %3395 = vmatprep.subr.mxu0 0.0
        %3396 = vmatpush2.msra.mxu0 0.0
        %3397 = vmatprep.subr.mxu0 0.0
        %3398 = vmatpush2.msra.mxu0 0.0
        %3399 = vmatprep.subr.mxu0 0.0
        %3400 = vmatpush2.msra.mxu0 0.0
        %3401 = vmatprep.subr.mxu0 0.0
        %3402 = vmatpush2.msra.mxu0 0.0
        %3403 = vmatprep.subr.mxu0 0.0
        %3404 = vmatpush2.msra.mxu0 0.0
        %3405 = vmatprep.subr.mxu0 0.0
        %3406 = vmatpush2.msra.mxu0 0.0
        %3407 = vmatprep.subr.mxu0 0.0
        %3408 = vmatpush2.msra.mxu0 0.0
        %3409 = vmatprep.subr.mxu0 0.0
        %3410 = vmatpush2.msra.mxu0 0.0
        %3411 = vmatprep.subr.mxu0 0.0
        %3412 = vmatpush2.msra.mxu0 0.0
        %3413 = vmatprep.subr.mxu0 0.0
        %3414 = vmatpush2.msra.mxu0 0.0
        %3415 = vmatprep.subr.mxu0 0.0
        %3416 = vmatpush2.msra.mxu0 0.0
        %3417 = vmatprep.subr.mxu0 0.0
        %3418 = vmatpush2.msra.mxu0 0.0
        %3419 = vmatprep.subr.mxu0 0.0
        %3420 = vmatpush2.msra.mxu0 0.0
        %3421 = vmatprep.subr.mxu0 0.0
        %3422 = vmatpush2.msra.mxu0 0.0
        %3423 = vmatprep.mubr.f32.mxu0 0.0
        %3424 = vmatmul.mubr.f32.gmra.mxu0 %v3357
        %v3425 = vpop.f32.mrf.mxu0
        %v3426 = vadd.f32 0.0, %v3425
        %v3427 = vpop.f32.mrf.mxu0
        %3428 = vdwg.mxu0
        %v3430 = vsel %vm190, %v3349, 0
        %3432 = vmatprep.subr.mxu0 0.0
        %3433 = vmatpush1.msra.mxu0 0.0
        %3434 = vmatprep.subr.mxu0 0.0
        %3435 = vmatpush1.msra.mxu0 0.0
        %3436 = vmatprep.subr.mxu0 0.0
        %3437 = vmatpush1.msra.mxu0 0.0
        %3438 = vmatprep.subr.mxu0 0.0
        %3439 = vmatpush1.msra.mxu0 0.0
        %3440 = vmatprep.subr.mxu0 0.0
        %3441 = vmatpush1.msra.mxu0 0.0
        %3442 = vmatprep.subr.mxu0 0.0
        %3443 = vmatpush1.msra.mxu0 0.0
        %3444 = vmatprep.subr.mxu0 0.0
        %3445 = vmatpush1.msra.mxu0 0.0
        %3446 = vmatprep.subr.mxu0 0.0
        %3447 = vmatpush1.msra.mxu0 0.0
        %3448 = vmatprep.subr.mxu0 0.0
        %3449 = vmatpush1.msra.mxu0 0.0
        %3450 = vmatprep.subr.mxu0 0.0
        %3451 = vmatpush1.msra.mxu0 0.0
        %3452 = vmatprep.subr.mxu0 0.0
        %3453 = vmatpush1.msra.mxu0 0.0
        %3454 = vmatprep.subr.mxu0 0.0
        %3455 = vmatpush1.msra.mxu0 0.0
        %3456 = vmatprep.subr.mxu0 0.0
        %3457 = vmatpush1.msra.mxu0 0.0
        %3458 = vmatprep.subr.mxu0 0.0
        %3459 = vmatpush1.msra.mxu0 0.0
        %3460 = vmatprep.subr.mxu0 0.0
        %3461 = vmatpush1.msra.mxu0 0.0
        %3462 = vmatprep.subr.mxu0 0.0
        %3463 = vmatpush1.msra.mxu0 %v2619
        %3464 = vmatprep.subr.mxu0 0.0
        %3465 = vmatpush2.msra.mxu0 0.0
        %3466 = vmatprep.subr.mxu0 0.0
        %3467 = vmatpush2.msra.mxu0 0.0
        %3468 = vmatprep.subr.mxu0 0.0
        %3469 = vmatpush2.msra.mxu0 0.0
        %3470 = vmatprep.subr.mxu0 0.0
        %3471 = vmatpush2.msra.mxu0 0.0
        %3472 = vmatprep.subr.mxu0 0.0
        %3473 = vmatpush2.msra.mxu0 0.0
        %3474 = vmatprep.subr.mxu0 0.0
        %3475 = vmatpush2.msra.mxu0 0.0
        %3476 = vmatprep.subr.mxu0 0.0
        %3477 = vmatpush2.msra.mxu0 0.0
        %3478 = vmatprep.subr.mxu0 0.0
        %3479 = vmatpush2.msra.mxu0 0.0
        %3480 = vmatprep.subr.mxu0 0.0
        %3481 = vmatpush2.msra.mxu0 0.0
        %3482 = vmatprep.subr.mxu0 0.0
        %3483 = vmatpush2.msra.mxu0 0.0
        %3484 = vmatprep.subr.mxu0 0.0
        %3485 = vmatpush2.msra.mxu0 0.0
        %3486 = vmatprep.subr.mxu0 0.0
        %3487 = vmatpush2.msra.mxu0 0.0
        %3488 = vmatprep.subr.mxu0 0.0
        %3489 = vmatpush2.msra.mxu0 0.0
        %3490 = vmatprep.subr.mxu0 0.0
        %3491 = vmatpush2.msra.mxu0 0.0
        %3492 = vmatprep.subr.mxu0 0.0
        %3493 = vmatpush2.msra.mxu0 0.0
        %3494 = vmatprep.subr.mxu0 0.0
        %3495 = vmatpush2.msra.mxu0 0.0
        %3496 = vmatprep.mubr.f32.mxu0 0.0
        %3497 = vmatmul.mubr.f32.gmra.mxu0 %v3430
        %v3498 = vpop.f32.mrf.mxu0
        %v3499 = vadd.f32 0.0, %v3498
        %v3500 = vpop.f32.mrf.mxu0
        %3501 = vdwg.mxu0
        %v3503 = vsel %vm190, %v3350, 0
        %3505 = vmatprep.subr.mxu0 0.0
        %3506 = vmatpush1.msra.mxu0 0.0
        %3507 = vmatprep.subr.mxu0 0.0
        %3508 = vmatpush1.msra.mxu0 0.0
        %3509 = vmatprep.subr.mxu0 0.0
        %3510 = vmatpush1.msra.mxu0 0.0
        %3511 = vmatprep.subr.mxu0 0.0
        %3512 = vmatpush1.msra.mxu0 0.0
        %3513 = vmatprep.subr.mxu0 0.0
        %3514 = vmatpush1.msra.mxu0 0.0
        %3515 = vmatprep.subr.mxu0 0.0
        %3516 = vmatpush1.msra.mxu0 0.0
        %3517 = vmatprep.subr.mxu0 0.0
        %3518 = vmatpush1.msra.mxu0 0.0
        %3519 = vmatprep.subr.mxu0 0.0
        %3520 = vmatpush1.msra.mxu0 0.0
        %3521 = vmatprep.subr.mxu0 0.0
        %3522 = vmatpush1.msra.mxu0 0.0
        %3523 = vmatprep.subr.mxu0 0.0
        %3524 = vmatpush1.msra.mxu0 0.0
        %3525 = vmatprep.subr.mxu0 0.0
        %3526 = vmatpush1.msra.mxu0 0.0
        %3527 = vmatprep.subr.mxu0 0.0
        %3528 = vmatpush1.msra.mxu0 0.0
        %3529 = vmatprep.subr.mxu0 0.0
        %3530 = vmatpush1.msra.mxu0 0.0
        %3531 = vmatprep.subr.mxu0 0.0
        %3532 = vmatpush1.msra.mxu0 0.0
        %3533 = vmatprep.subr.mxu0 0.0
        %3534 = vmatpush1.msra.mxu0 0.0
        %3535 = vmatprep.subr.mxu0 0.0
        %3536 = vmatpush1.msra.mxu0 %v2624
        %3537 = vmatprep.subr.mxu0 0.0
        %3538 = vmatpush2.msra.mxu0 0.0
        %3539 = vmatprep.subr.mxu0 0.0
        %3540 = vmatpush2.msra.mxu0 0.0
        %3541 = vmatprep.subr.mxu0 0.0
        %3542 = vmatpush2.msra.mxu0 0.0
        %3543 = vmatprep.subr.mxu0 0.0
        %3544 = vmatpush2.msra.mxu0 0.0
        %3545 = vmatprep.subr.mxu0 0.0
        %3546 = vmatpush2.msra.mxu0 0.0
        %3547 = vmatprep.subr.mxu0 0.0
        %3548 = vmatpush2.msra.mxu0 0.0
        %3549 = vmatprep.subr.mxu0 0.0
        %3550 = vmatpush2.msra.mxu0 0.0
        %3551 = vmatprep.subr.mxu0 0.0
        %3552 = vmatpush2.msra.mxu0 0.0
        %3553 = vmatprep.subr.mxu0 0.0
        %3554 = vmatpush2.msra.mxu0 0.0
        %3555 = vmatprep.subr.mxu0 0.0
        %3556 = vmatpush2.msra.mxu0 0.0
        %3557 = vmatprep.subr.mxu0 0.0
        %3558 = vmatpush2.msra.mxu0 0.0
        %3559 = vmatprep.subr.mxu0 0.0
        %3560 = vmatpush2.msra.mxu0 0.0
        %3561 = vmatprep.subr.mxu0 0.0
        %3562 = vmatpush2.msra.mxu0 0.0
        %3563 = vmatprep.subr.mxu0 0.0
        %3564 = vmatpush2.msra.mxu0 0.0
        %3565 = vmatprep.subr.mxu0 0.0
        %3566 = vmatpush2.msra.mxu0 0.0
        %3567 = vmatprep.subr.mxu0 0.0
        %3568 = vmatpush2.msra.mxu0 0.0
        %3569 = vmatprep.mubr.f32.mxu0 0.0
        %3570 = vmatmul.mubr.f32.gmra.mxu0 %v3503
        %v3571 = vpop.f32.mrf.mxu0
        %v3572 = vadd.f32 0.0, %v3571
        %v3573 = vpop.f32.mrf.mxu0
        %3574 = vdwg.mxu0
        %v3576 = vsel %vm190, %v3351, 0
        %3578 = vmatprep.subr.mxu0 0.0
        %3579 = vmatpush1.msra.mxu0 0.0
        %3580 = vmatprep.subr.mxu0 0.0
        %3581 = vmatpush1.msra.mxu0 0.0
        %3582 = vmatprep.subr.mxu0 0.0
        %3583 = vmatpush1.msra.mxu0 0.0
        %3584 = vmatprep.subr.mxu0 0.0
        %3585 = vmatpush1.msra.mxu0 0.0
        %3586 = vmatprep.subr.mxu0 0.0
        %3587 = vmatpush1.msra.mxu0 0.0
        %3588 = vmatprep.subr.mxu0 0.0
        %3589 = vmatpush1.msra.mxu0 0.0
        %3590 = vmatprep.subr.mxu0 0.0
        %3591 = vmatpush1.msra.mxu0 0.0
        %3592 = vmatprep.subr.mxu0 0.0
        %3593 = vmatpush1.msra.mxu0 0.0
        %3594 = vmatprep.subr.mxu0 0.0
        %3595 = vmatpush1.msra.mxu0 0.0
        %3596 = vmatprep.subr.mxu0 0.0
        %3597 = vmatpush1.msra.mxu0 0.0
        %3598 = vmatprep.subr.mxu0 0.0
        %3599 = vmatpush1.msra.mxu0 0.0
        %3600 = vmatprep.subr.mxu0 0.0
        %3601 = vmatpush1.msra.mxu0 0.0
        %3602 = vmatprep.subr.mxu0 0.0
        %3603 = vmatpush1.msra.mxu0 0.0
        %3604 = vmatprep.subr.mxu0 0.0
        %3605 = vmatpush1.msra.mxu0 0.0
        %3606 = vmatprep.subr.mxu0 0.0
        %3607 = vmatpush1.msra.mxu0 0.0
        %3608 = vmatprep.subr.mxu0 0.0
        %3609 = vmatpush1.msra.mxu0 %v2629
        %3610 = vmatprep.subr.mxu0 0.0
        %3611 = vmatpush2.msra.mxu0 0.0
        %3612 = vmatprep.subr.mxu0 0.0
        %3613 = vmatpush2.msra.mxu0 0.0
        %3614 = vmatprep.subr.mxu0 0.0
        %3615 = vmatpush2.msra.mxu0 0.0
        %3616 = vmatprep.subr.mxu0 0.0
        %3617 = vmatpush2.msra.mxu0 0.0
        %3618 = vmatprep.subr.mxu0 0.0
        %3619 = vmatpush2.msra.mxu0 0.0
        %3620 = vmatprep.subr.mxu0 0.0
        %3621 = vmatpush2.msra.mxu0 0.0
        %3622 = vmatprep.subr.mxu0 0.0
        %3623 = vmatpush2.msra.mxu0 0.0
        %3624 = vmatprep.subr.mxu0 0.0
        %3625 = vmatpush2.msra.mxu0 0.0
        %3626 = vmatprep.subr.mxu0 0.0
        %3627 = vmatpush2.msra.mxu0 0.0
        %3628 = vmatprep.subr.mxu0 0.0
        %3629 = vmatpush2.msra.mxu0 0.0
        %3630 = vmatprep.subr.mxu0 0.0
        %3631 = vmatpush2.msra.mxu0 0.0
        %3632 = vmatprep.subr.mxu0 0.0
        %3633 = vmatpush2.msra.mxu0 0.0
        %3634 = vmatprep.subr.mxu0 0.0
        %3635 = vmatpush2.msra.mxu0 0.0
        %3636 = vmatprep.subr.mxu0 0.0
        %3637 = vmatpush2.msra.mxu0 0.0
        %3638 = vmatprep.subr.mxu0 0.0
        %3639 = vmatpush2.msra.mxu0 0.0
        %3640 = vmatprep.subr.mxu0 0.0
        %3641 = vmatpush2.msra.mxu0 0.0
        %3642 = vmatprep.mubr.f32.mxu0 0.0
        %3643 = vmatmul.mubr.f32.gmra.mxu0 %v3576
        %v3644 = vpop.f32.mrf.mxu0
        %v3645 = vadd.f32 0.0, %v3644
        %v3646 = vpop.f32.mrf.mxu0
        %3647 = vdwg.mxu0
        %v3649 = vsel %vm190, %v3352, 0
        %3651 = vmatprep.subr.mxu0 0.0
        %3652 = vmatpush1.msra.mxu0 0.0
        %3653 = vmatprep.subr.mxu0 0.0
        %3654 = vmatpush1.msra.mxu0 0.0
        %3655 = vmatprep.subr.mxu0 0.0
        %3656 = vmatpush1.msra.mxu0 0.0
        %3657 = vmatprep.subr.mxu0 0.0
        %3658 = vmatpush1.msra.mxu0 0.0
        %3659 = vmatprep.subr.mxu0 0.0
        %3660 = vmatpush1.msra.mxu0 0.0
        %3661 = vmatprep.subr.mxu0 0.0
        %3662 = vmatpush1.msra.mxu0 0.0
        %3663 = vmatprep.subr.mxu0 0.0
        %3664 = vmatpush1.msra.mxu0 0.0
        %3665 = vmatprep.subr.mxu0 0.0
        %3666 = vmatpush1.msra.mxu0 0.0
        %3667 = vmatprep.subr.mxu0 0.0
        %3668 = vmatpush1.msra.mxu0 0.0
        %3669 = vmatprep.subr.mxu0 0.0
        %3670 = vmatpush1.msra.mxu0 0.0
        %3671 = vmatprep.subr.mxu0 0.0
        %3672 = vmatpush1.msra.mxu0 0.0
        %3673 = vmatprep.subr.mxu0 0.0
        %3674 = vmatpush1.msra.mxu0 0.0
        %3675 = vmatprep.subr.mxu0 0.0
        %3676 = vmatpush1.msra.mxu0 0.0
        %3677 = vmatprep.subr.mxu0 0.0
        %3678 = vmatpush1.msra.mxu0 0.0
        %3679 = vmatprep.subr.mxu0 0.0
        %3680 = vmatpush1.msra.mxu0 0.0
        %3681 = vmatprep.subr.mxu0 0.0
        %3682 = vmatpush1.msra.mxu0 %v2634
        %3683 = vmatprep.subr.mxu0 0.0
        %3684 = vmatpush2.msra.mxu0 0.0
        %3685 = vmatprep.subr.mxu0 0.0
        %3686 = vmatpush2.msra.mxu0 0.0
        %3687 = vmatprep.subr.mxu0 0.0
        %3688 = vmatpush2.msra.mxu0 0.0
        %3689 = vmatprep.subr.mxu0 0.0
        %3690 = vmatpush2.msra.mxu0 0.0
        %3691 = vmatprep.subr.mxu0 0.0
        %3692 = vmatpush2.msra.mxu0 0.0
        %3693 = vmatprep.subr.mxu0 0.0
        %3694 = vmatpush2.msra.mxu0 0.0
        %3695 = vmatprep.subr.mxu0 0.0
        %3696 = vmatpush2.msra.mxu0 0.0
        %3697 = vmatprep.subr.mxu0 0.0
        %3698 = vmatpush2.msra.mxu0 0.0
        %3699 = vmatprep.subr.mxu0 0.0
        %3700 = vmatpush2.msra.mxu0 0.0
        %3701 = vmatprep.subr.mxu0 0.0
        %3702 = vmatpush2.msra.mxu0 0.0
        %3703 = vmatprep.subr.mxu0 0.0
        %3704 = vmatpush2.msra.mxu0 0.0
        %3705 = vmatprep.subr.mxu0 0.0
        %3706 = vmatpush2.msra.mxu0 0.0
        %3707 = vmatprep.subr.mxu0 0.0
        %3708 = vmatpush2.msra.mxu0 0.0
        %3709 = vmatprep.subr.mxu0 0.0
        %3710 = vmatpush2.msra.mxu0 0.0
        %3711 = vmatprep.subr.mxu0 0.0
        %3712 = vmatpush2.msra.mxu0 0.0
        %3713 = vmatprep.subr.mxu0 0.0
        %3714 = vmatpush2.msra.mxu0 0.0
        %3715 = vmatprep.mubr.f32.mxu0 0.0
        %3716 = vmatmul.mubr.f32.gmra.mxu0 %v3649
        %v3717 = vpop.f32.mrf.mxu0
        %v3718 = vadd.f32 0.0, %v3717
        %v3719 = vpop.f32.mrf.mxu0
        %3720 = vdwg.mxu0
        %v3722 = vsel %vm190, %v3353, 0
        %3724 = vmatprep.subr.mxu0 0.0
        %3725 = vmatpush1.msra.mxu0 0.0
        %3726 = vmatprep.subr.mxu0 0.0
        %3727 = vmatpush1.msra.mxu0 0.0
        %3728 = vmatprep.subr.mxu0 0.0
        %3729 = vmatpush1.msra.mxu0 0.0
        %3730 = vmatprep.subr.mxu0 0.0
        %3731 = vmatpush1.msra.mxu0 0.0
        %3732 = vmatprep.subr.mxu0 0.0
        %3733 = vmatpush1.msra.mxu0 0.0
        %3734 = vmatprep.subr.mxu0 0.0
        %3735 = vmatpush1.msra.mxu0 0.0
        %3736 = vmatprep.subr.mxu0 0.0
        %3737 = vmatpush1.msra.mxu0 0.0
        %3738 = vmatprep.subr.mxu0 0.0
        %3739 = vmatpush1.msra.mxu0 0.0
        %3740 = vmatprep.subr.mxu0 0.0
        %3741 = vmatpush1.msra.mxu0 0.0
        %3742 = vmatprep.subr.mxu0 0.0
        %3743 = vmatpush1.msra.mxu0 0.0
        %3744 = vmatprep.subr.mxu0 0.0
        %3745 = vmatpush1.msra.mxu0 0.0
        %3746 = vmatprep.subr.mxu0 0.0
        %3747 = vmatpush1.msra.mxu0 0.0
        %3748 = vmatprep.subr.mxu0 0.0
        %3749 = vmatpush1.msra.mxu0 0.0
        %3750 = vmatprep.subr.mxu0 0.0
        %3751 = vmatpush1.msra.mxu0 0.0
        %3752 = vmatprep.subr.mxu0 0.0
        %3753 = vmatpush1.msra.mxu0 0.0
        %3754 = vmatprep.subr.mxu0 0.0
        %3755 = vmatpush1.msra.mxu0 %v2639
        %3756 = vmatprep.subr.mxu0 0.0
        %3757 = vmatpush2.msra.mxu0 0.0
        %3758 = vmatprep.subr.mxu0 0.0
        %3759 = vmatpush2.msra.mxu0 0.0
        %3760 = vmatprep.subr.mxu0 0.0
        %3761 = vmatpush2.msra.mxu0 0.0
        %3762 = vmatprep.subr.mxu0 0.0
        %3763 = vmatpush2.msra.mxu0 0.0
        %3764 = vmatprep.subr.mxu0 0.0
        %3765 = vmatpush2.msra.mxu0 0.0
        %3766 = vmatprep.subr.mxu0 0.0
        %3767 = vmatpush2.msra.mxu0 0.0
        %3768 = vmatprep.subr.mxu0 0.0
        %3769 = vmatpush2.msra.mxu0 0.0
        %3770 = vmatprep.subr.mxu0 0.0
        %3771 = vmatpush2.msra.mxu0 0.0
        %3772 = vmatprep.subr.mxu0 0.0
        %3773 = vmatpush2.msra.mxu0 0.0
        %3774 = vmatprep.subr.mxu0 0.0
        %3775 = vmatpush2.msra.mxu0 0.0
        %3776 = vmatprep.subr.mxu0 0.0
        %3777 = vmatpush2.msra.mxu0 0.0
        %3778 = vmatprep.subr.mxu0 0.0
        %3779 = vmatpush2.msra.mxu0 0.0
        %3780 = vmatprep.subr.mxu0 0.0
        %3781 = vmatpush2.msra.mxu0 0.0
        %3782 = vmatprep.subr.mxu0 0.0
        %3783 = vmatpush2.msra.mxu0 0.0
        %3784 = vmatprep.subr.mxu0 0.0
        %3785 = vmatpush2.msra.mxu0 0.0
        %3786 = vmatprep.subr.mxu0 0.0
        %3787 = vmatpush2.msra.mxu0 0.0
        %3788 = vmatprep.mubr.f32.mxu0 0.0
        %3789 = vmatmul.mubr.f32.gmra.mxu0 %v3722
        %v3790 = vpop.f32.mrf.mxu0
        %v3791 = vadd.f32 0.0, %v3790
        %v3792 = vpop.f32.mrf.mxu0
        %3793 = vdwg.mxu0
        %v3795 = vsel %vm190, %v3354, 0
        %3797 = vmatprep.subr.mxu0 0.0
        %3798 = vmatpush1.msra.mxu0 0.0
        %3799 = vmatprep.subr.mxu0 0.0
        %3800 = vmatpush1.msra.mxu0 0.0
        %3801 = vmatprep.subr.mxu0 0.0
        %3802 = vmatpush1.msra.mxu0 0.0
        %3803 = vmatprep.subr.mxu0 0.0
        %3804 = vmatpush1.msra.mxu0 0.0
        %3805 = vmatprep.subr.mxu0 0.0
        %3806 = vmatpush1.msra.mxu0 0.0
        %3807 = vmatprep.subr.mxu0 0.0
        %3808 = vmatpush1.msra.mxu0 0.0
        %3809 = vmatprep.subr.mxu0 0.0
        %3810 = vmatpush1.msra.mxu0 0.0
        %3811 = vmatprep.subr.mxu0 0.0
        %3812 = vmatpush1.msra.mxu0 0.0
        %3813 = vmatprep.subr.mxu0 0.0
        %3814 = vmatpush1.msra.mxu0 0.0
        %3815 = vmatprep.subr.mxu0 0.0
        %3816 = vmatpush1.msra.mxu0 0.0
        %3817 = vmatprep.subr.mxu0 0.0
        %3818 = vmatpush1.msra.mxu0 0.0
        %3819 = vmatprep.subr.mxu0 0.0
        %3820 = vmatpush1.msra.mxu0 0.0
        %3821 = vmatprep.subr.mxu0 0.0
        %3822 = vmatpush1.msra.mxu0 0.0
        %3823 = vmatprep.subr.mxu0 0.0
        %3824 = vmatpush1.msra.mxu0 0.0
        %3825 = vmatprep.subr.mxu0 0.0
        %3826 = vmatpush1.msra.mxu0 0.0
        %3827 = vmatprep.subr.mxu0 0.0
        %3828 = vmatpush1.msra.mxu0 %v2644
        %3829 = vmatprep.subr.mxu0 0.0
        %3830 = vmatpush2.msra.mxu0 0.0
        %3831 = vmatprep.subr.mxu0 0.0
        %3832 = vmatpush2.msra.mxu0 0.0
        %3833 = vmatprep.subr.mxu0 0.0
        %3834 = vmatpush2.msra.mxu0 0.0
        %3835 = vmatprep.subr.mxu0 0.0
        %3836 = vmatpush2.msra.mxu0 0.0
        %3837 = vmatprep.subr.mxu0 0.0
        %3838 = vmatpush2.msra.mxu0 0.0
        %3839 = vmatprep.subr.mxu0 0.0
        %3840 = vmatpush2.msra.mxu0 0.0
        %3841 = vmatprep.subr.mxu0 0.0
        %3842 = vmatpush2.msra.mxu0 0.0
        %3843 = vmatprep.subr.mxu0 0.0
        %3844 = vmatpush2.msra.mxu0 0.0
        %3845 = vmatprep.subr.mxu0 0.0
        %3846 = vmatpush2.msra.mxu0 0.0
        %3847 = vmatprep.subr.mxu0 0.0
        %3848 = vmatpush2.msra.mxu0 0.0
        %3849 = vmatprep.subr.mxu0 0.0
        %3850 = vmatpush2.msra.mxu0 0.0
        %3851 = vmatprep.subr.mxu0 0.0
        %3852 = vmatpush2.msra.mxu0 0.0
        %3853 = vmatprep.subr.mxu0 0.0
        %3854 = vmatpush2.msra.mxu0 0.0
        %3855 = vmatprep.subr.mxu0 0.0
        %3856 = vmatpush2.msra.mxu0 0.0
        %3857 = vmatprep.subr.mxu0 0.0
        %3858 = vmatpush2.msra.mxu0 0.0
        %3859 = vmatprep.subr.mxu0 0.0
        %3860 = vmatpush2.msra.mxu0 0.0
        %3861 = vmatprep.mubr.f32.mxu0 0.0
        %3862 = vmatmul.mubr.f32.gmra.mxu0 %v3795
        %v3863 = vpop.f32.mrf.mxu0
        %v3864 = vadd.f32 0.0, %v3863
        %v3865 = vpop.f32.mrf.mxu0
        %3866 = vdwg.mxu0
        %v3868 = vsel %vm190, %v3355, 0
        %3870 = vmatprep.subr.mxu0 0.0
        %3871 = vmatpush1.msra.mxu0 0.0
        %3872 = vmatprep.subr.mxu0 0.0
        %3873 = vmatpush1.msra.mxu0 0.0
        %3874 = vmatprep.subr.mxu0 0.0
        %3875 = vmatpush1.msra.mxu0 0.0
        %3876 = vmatprep.subr.mxu0 0.0
        %3877 = vmatpush1.msra.mxu0 0.0
        %3878 = vmatprep.subr.mxu0 0.0
        %3879 = vmatpush1.msra.mxu0 0.0
        %3880 = vmatprep.subr.mxu0 0.0
        %3881 = vmatpush1.msra.mxu0 0.0
        %3882 = vmatprep.subr.mxu0 0.0
        %3883 = vmatpush1.msra.mxu0 0.0
        %3884 = vmatprep.subr.mxu0 0.0
        %3885 = vmatpush1.msra.mxu0 0.0
        %3886 = vmatprep.subr.mxu0 0.0
        %3887 = vmatpush1.msra.mxu0 0.0
        %3888 = vmatprep.subr.mxu0 0.0
        %3889 = vmatpush1.msra.mxu0 0.0
        %3890 = vmatprep.subr.mxu0 0.0
        %3891 = vmatpush1.msra.mxu0 0.0
        %3892 = vmatprep.subr.mxu0 0.0
        %3893 = vmatpush1.msra.mxu0 0.0
        %3894 = vmatprep.subr.mxu0 0.0
        %3895 = vmatpush1.msra.mxu0 0.0
        %3896 = vmatprep.subr.mxu0 0.0
        %3897 = vmatpush1.msra.mxu0 0.0
        %3898 = vmatprep.subr.mxu0 0.0
        %3899 = vmatpush1.msra.mxu0 0.0
        %3900 = vmatprep.subr.mxu0 0.0
        %3901 = vmatpush1.msra.mxu0 %v2649
        %3902 = vmatprep.subr.mxu0 0.0
        %3903 = vmatpush2.msra.mxu0 0.0
        %3904 = vmatprep.subr.mxu0 0.0
        %3905 = vmatpush2.msra.mxu0 0.0
        %3906 = vmatprep.subr.mxu0 0.0
        %3907 = vmatpush2.msra.mxu0 0.0
        %3908 = vmatprep.subr.mxu0 0.0
        %3909 = vmatpush2.msra.mxu0 0.0
        %3910 = vmatprep.subr.mxu0 0.0
        %3911 = vmatpush2.msra.mxu0 0.0
        %3912 = vmatprep.subr.mxu0 0.0
        %3913 = vmatpush2.msra.mxu0 0.0
        %3914 = vmatprep.subr.mxu0 0.0
        %3915 = vmatpush2.msra.mxu0 0.0
        %3916 = vmatprep.subr.mxu0 0.0
        %3917 = vmatpush2.msra.mxu0 0.0
        %3918 = vmatprep.subr.mxu0 0.0
        %3919 = vmatpush2.msra.mxu0 0.0
        %3920 = vmatprep.subr.mxu0 0.0
        %3921 = vmatpush2.msra.mxu0 0.0
        %3922 = vmatprep.subr.mxu0 0.0
        %3923 = vmatpush2.msra.mxu0 0.0
        %3924 = vmatprep.subr.mxu0 0.0
        %3925 = vmatpush2.msra.mxu0 0.0
        %3926 = vmatprep.subr.mxu0 0.0
        %3927 = vmatpush2.msra.mxu0 0.0
        %3928 = vmatprep.subr.mxu0 0.0
        %3929 = vmatpush2.msra.mxu0 0.0
        %3930 = vmatprep.subr.mxu0 0.0
        %3931 = vmatpush2.msra.mxu0 0.0
        %3932 = vmatprep.subr.mxu0 0.0
        %3933 = vmatpush2.msra.mxu0 0.0
        %3934 = vmatprep.mubr.f32.mxu0 0.0
        %3935 = vmatmul.mubr.f32.gmra.mxu0 %v3868
        %v3936 = vpop.f32.mrf.mxu0
        %v3937 = vadd.f32 0.0, %v3936
        %v3938 = vpop.f32.mrf.mxu0
        %3939 = vdwg.mxu0
        %3940 = vrot.lane.b32.xlu0 %v2382, 120
        %v3941 = vpop.permute.xlu0 %3940
        %3942 = vrot.lane.b32.xlu0 %v2498, 120
        %v3943 = vpop.permute.xlu0 %3942
        %v3944 = vsel %vm190, %v3941, 0
        %v3946 = vsel %vm190, %v3943, 0
        %3948 = vmatprep.subr.mxu0 0.0
        %3949 = vmatpush1.xpose.msra.mxu0 0.0
        %3950 = vmatprep.subr.mxu0 0.0
        %3951 = vmatpush1.xpose.msra.mxu0 0.0
        %3952 = vmatprep.subr.mxu0 0.0
        %3953 = vmatpush1.xpose.msra.mxu0 0.0
        %3954 = vmatprep.subr.mxu0 0.0
        %3955 = vmatpush1.xpose.msra.mxu0 0.0
        %3956 = vmatprep.subr.mxu0 0.0
        %3957 = vmatpush1.xpose.msra.mxu0 0.0
        %3958 = vmatprep.subr.mxu0 0.0
        %3959 = vmatpush1.xpose.msra.mxu0 0.0
        %3960 = vmatprep.subr.mxu0 0.0
        %3961 = vmatpush1.xpose.msra.mxu0 0.0
        %3962 = vmatprep.subr.mxu0 0.0
        %3963 = vmatpush1.xpose.msra.mxu0 0.0
        %3964 = vmatprep.subr.mxu0 0.0
        %3965 = vmatpush1.xpose.msra.mxu0 0.0
        %3966 = vmatprep.subr.mxu0 0.0
        %3967 = vmatpush1.xpose.msra.mxu0 0.0
        %3968 = vmatprep.subr.mxu0 0.0
        %3969 = vmatpush1.xpose.msra.mxu0 0.0
        %3970 = vmatprep.subr.mxu0 0.0
        %3971 = vmatpush1.xpose.msra.mxu0 0.0
        %3972 = vmatprep.subr.mxu0 0.0
        %3973 = vmatpush1.xpose.msra.mxu0 0.0
        %3974 = vmatprep.subr.mxu0 0.0
        %3975 = vmatpush1.xpose.msra.mxu0 0.0
        %3976 = vmatprep.subr.mxu0 0.0
        %3977 = vmatpush1.xpose.msra.mxu0 0.0
        %3978 = vmatprep.subr.mxu0 0.0
        %3979 = vmatpush1.xpose.msra.mxu0 %v3946
        %3980 = vmatprep.subr.mxu0 0.0
        %3981 = vmatpush2.xpose.msra.mxu0 0.0
        %3982 = vmatprep.subr.mxu0 0.0
        %3983 = vmatpush2.xpose.msra.mxu0 0.0
        %3984 = vmatprep.subr.mxu0 0.0
        %3985 = vmatpush2.xpose.msra.mxu0 0.0
        %3986 = vmatprep.subr.mxu0 0.0
        %3987 = vmatpush2.xpose.msra.mxu0 0.0
        %3988 = vmatprep.subr.mxu0 0.0
        %3989 = vmatpush2.xpose.msra.mxu0 0.0
        %3990 = vmatprep.subr.mxu0 0.0
        %3991 = vmatpush2.xpose.msra.mxu0 0.0
        %3992 = vmatprep.subr.mxu0 0.0
        %3993 = vmatpush2.xpose.msra.mxu0 0.0
        %3994 = vmatprep.subr.mxu0 0.0
        %3995 = vmatpush2.xpose.msra.mxu0 0.0
        %3996 = vmatprep.subr.mxu0 0.0
        %3997 = vmatpush2.xpose.msra.mxu0 0.0
        %3998 = vmatprep.subr.mxu0 0.0
        %3999 = vmatpush2.xpose.msra.mxu0 0.0
        %4000 = vmatprep.subr.mxu0 0.0
        %4001 = vmatpush2.xpose.msra.mxu0 0.0
        %4002 = vmatprep.subr.mxu0 0.0
        %4003 = vmatpush2.xpose.msra.mxu0 0.0
        %4004 = vmatprep.subr.mxu0 0.0
        %4005 = vmatpush2.xpose.msra.mxu0 0.0
        %4006 = vmatprep.subr.mxu0 0.0
        %4007 = vmatpush2.xpose.msra.mxu0 0.0
        %4008 = vmatprep.subr.mxu0 0.0
        %4009 = vmatpush2.xpose.msra.mxu0 0.0
        %4010 = vmatprep.subr.mxu0 0.0
        %4011 = vmatpush2.xpose.msra.mxu0 0.0
        %4012 = vmatprep.mubr.f32.mxu0 0.0
        %4013 = vmatmul.mubr.f32.gmra.mxu0 %v3944
        %v4014 = vpop.f32.mrf.mxu0
        %v4015 = vadd.f32 0.0, %v4014
        %v4016 = vpop.f32.mrf.mxu0
        %4017 = vdwg.mxu0
        %4018 = vrot.lane.b32.xlu0 %v2387, 120
        %v4019 = vpop.permute.xlu0 %4018
        %4020 = vrot.lane.b32.xlu0 %v2503, 120
        %v4021 = vpop.permute.xlu0 %4020
        %v4022 = vsel %vm190, %v4019, 0
        %v4024 = vsel %vm190, %v4021, 0
        %4026 = vmatprep.subr.mxu0 0.0
        %4027 = vmatpush1.xpose.msra.mxu0 0.0
        %4028 = vmatprep.subr.mxu0 0.0
        %4029 = vmatpush1.xpose.msra.mxu0 0.0
        %4030 = vmatprep.subr.mxu0 0.0
        %4031 = vmatpush1.xpose.msra.mxu0 0.0
        %4032 = vmatprep.subr.mxu0 0.0
        %4033 = vmatpush1.xpose.msra.mxu0 0.0
        %4034 = vmatprep.subr.mxu0 0.0
        %4035 = vmatpush1.xpose.msra.mxu0 0.0
        %4036 = vmatprep.subr.mxu0 0.0
        %4037 = vmatpush1.xpose.msra.mxu0 0.0
        %4038 = vmatprep.subr.mxu0 0.0
        %4039 = vmatpush1.xpose.msra.mxu0 0.0
        %4040 = vmatprep.subr.mxu0 0.0
        %4041 = vmatpush1.xpose.msra.mxu0 0.0
        %4042 = vmatprep.subr.mxu0 0.0
        %4043 = vmatpush1.xpose.msra.mxu0 0.0
        %4044 = vmatprep.subr.mxu0 0.0
        %4045 = vmatpush1.xpose.msra.mxu0 0.0
        %4046 = vmatprep.subr.mxu0 0.0
        %4047 = vmatpush1.xpose.msra.mxu0 0.0
        %4048 = vmatprep.subr.mxu0 0.0
        %4049 = vmatpush1.xpose.msra.mxu0 0.0
        %4050 = vmatprep.subr.mxu0 0.0
        %4051 = vmatpush1.xpose.msra.mxu0 0.0
        %4052 = vmatprep.subr.mxu0 0.0
        %4053 = vmatpush1.xpose.msra.mxu0 0.0
        %4054 = vmatprep.subr.mxu0 0.0
        %4055 = vmatpush1.xpose.msra.mxu0 0.0
        %4056 = vmatprep.subr.mxu0 0.0
        %4057 = vmatpush1.xpose.msra.mxu0 %v4024
        %4058 = vmatprep.subr.mxu0 0.0
        %4059 = vmatpush2.xpose.msra.mxu0 0.0
        %4060 = vmatprep.subr.mxu0 0.0
        %4061 = vmatpush2.xpose.msra.mxu0 0.0
        %4062 = vmatprep.subr.mxu0 0.0
        %4063 = vmatpush2.xpose.msra.mxu0 0.0
        %4064 = vmatprep.subr.mxu0 0.0
        %4065 = vmatpush2.xpose.msra.mxu0 0.0
        %4066 = vmatprep.subr.mxu0 0.0
        %4067 = vmatpush2.xpose.msra.mxu0 0.0
        %4068 = vmatprep.subr.mxu0 0.0
        %4069 = vmatpush2.xpose.msra.mxu0 0.0
        %4070 = vmatprep.subr.mxu0 0.0
        %4071 = vmatpush2.xpose.msra.mxu0 0.0
        %4072 = vmatprep.subr.mxu0 0.0
        %4073 = vmatpush2.xpose.msra.mxu0 0.0
        %4074 = vmatprep.subr.mxu0 0.0
        %4075 = vmatpush2.xpose.msra.mxu0 0.0
        %4076 = vmatprep.subr.mxu0 0.0
        %4077 = vmatpush2.xpose.msra.mxu0 0.0
        %4078 = vmatprep.subr.mxu0 0.0
        %4079 = vmatpush2.xpose.msra.mxu0 0.0
        %4080 = vmatprep.subr.mxu0 0.0
        %4081 = vmatpush2.xpose.msra.mxu0 0.0
        %4082 = vmatprep.subr.mxu0 0.0
        %4083 = vmatpush2.xpose.msra.mxu0 0.0
        %4084 = vmatprep.subr.mxu0 0.0
        %4085 = vmatpush2.xpose.msra.mxu0 0.0
        %4086 = vmatprep.subr.mxu0 0.0
        %4087 = vmatpush2.xpose.msra.mxu0 0.0
        %4088 = vmatprep.subr.mxu0 0.0
        %4089 = vmatpush2.xpose.msra.mxu0 0.0
        %4090 = vmatprep.mubr.f32.mxu0 0.0
        %4091 = vmatmul.mubr.f32.gmra.mxu0 %v4022
        %v4092 = vpop.f32.mrf.mxu0
        %v4093 = vadd.f32 0.0, %v4092
        %v4094 = vpop.f32.mrf.mxu0
        %4095 = vdwg.mxu0
        %4096 = vrot.lane.b32.xlu0 %v2392, 120
        %v4097 = vpop.permute.xlu0 %4096
        %4098 = vrot.lane.b32.xlu0 %v2508, 120
        %v4099 = vpop.permute.xlu0 %4098
        %v4100 = vsel %vm190, %v4097, 0
        %v4102 = vsel %vm190, %v4099, 0
        %4104 = vmatprep.subr.mxu0 0.0
        %4105 = vmatpush1.xpose.msra.mxu0 0.0
        %4106 = vmatprep.subr.mxu0 0.0
        %4107 = vmatpush1.xpose.msra.mxu0 0.0
        %4108 = vmatprep.subr.mxu0 0.0
        %4109 = vmatpush1.xpose.msra.mxu0 0.0
        %4110 = vmatprep.subr.mxu0 0.0
        %4111 = vmatpush1.xpose.msra.mxu0 0.0
        %4112 = vmatprep.subr.mxu0 0.0
        %4113 = vmatpush1.xpose.msra.mxu0 0.0
        %4114 = vmatprep.subr.mxu0 0.0
        %4115 = vmatpush1.xpose.msra.mxu0 0.0
        %4116 = vmatprep.subr.mxu0 0.0
        %4117 = vmatpush1.xpose.msra.mxu0 0.0
        %4118 = vmatprep.subr.mxu0 0.0
        %4119 = vmatpush1.xpose.msra.mxu0 0.0
        %4120 = vmatprep.subr.mxu0 0.0
        %4121 = vmatpush1.xpose.msra.mxu0 0.0
        %4122 = vmatprep.subr.mxu0 0.0
        %4123 = vmatpush1.xpose.msra.mxu0 0.0
        %4124 = vmatprep.subr.mxu0 0.0
        %4125 = vmatpush1.xpose.msra.mxu0 0.0
        %4126 = vmatprep.subr.mxu0 0.0
        %4127 = vmatpush1.xpose.msra.mxu0 0.0
        %4128 = vmatprep.subr.mxu0 0.0
        %4129 = vmatpush1.xpose.msra.mxu0 0.0
        %4130 = vmatprep.subr.mxu0 0.0
        %4131 = vmatpush1.xpose.msra.mxu0 0.0
        %4132 = vmatprep.subr.mxu0 0.0
        %4133 = vmatpush1.xpose.msra.mxu0 0.0
        %4134 = vmatprep.subr.mxu0 0.0
        %4135 = vmatpush1.xpose.msra.mxu0 %v4102
        %4136 = vmatprep.subr.mxu0 0.0
        %4137 = vmatpush2.xpose.msra.mxu0 0.0
        %4138 = vmatprep.subr.mxu0 0.0
        %4139 = vmatpush2.xpose.msra.mxu0 0.0
        %4140 = vmatprep.subr.mxu0 0.0
        %4141 = vmatpush2.xpose.msra.mxu0 0.0
        %4142 = vmatprep.subr.mxu0 0.0
        %4143 = vmatpush2.xpose.msra.mxu0 0.0
        %4144 = vmatprep.subr.mxu0 0.0
        %4145 = vmatpush2.xpose.msra.mxu0 0.0
        %4146 = vmatprep.subr.mxu0 0.0
        %4147 = vmatpush2.xpose.msra.mxu0 0.0
        %4148 = vmatprep.subr.mxu0 0.0
        %4149 = vmatpush2.xpose.msra.mxu0 0.0
        %4150 = vmatprep.subr.mxu0 0.0
        %4151 = vmatpush2.xpose.msra.mxu0 0.0
        %4152 = vmatprep.subr.mxu0 0.0
        %4153 = vmatpush2.xpose.msra.mxu0 0.0
        %4154 = vmatprep.subr.mxu0 0.0
        %4155 = vmatpush2.xpose.msra.mxu0 0.0
        %4156 = vmatprep.subr.mxu0 0.0
        %4157 = vmatpush2.xpose.msra.mxu0 0.0
        %4158 = vmatprep.subr.mxu0 0.0
        %4159 = vmatpush2.xpose.msra.mxu0 0.0
        %4160 = vmatprep.subr.mxu0 0.0
        %4161 = vmatpush2.xpose.msra.mxu0 0.0
        %4162 = vmatprep.subr.mxu0 0.0
        %4163 = vmatpush2.xpose.msra.mxu0 0.0
        %4164 = vmatprep.subr.mxu0 0.0
        %4165 = vmatpush2.xpose.msra.mxu0 0.0
        %4166 = vmatprep.subr.mxu0 0.0
        %4167 = vmatpush2.xpose.msra.mxu0 0.0
        %4168 = vmatprep.mubr.f32.mxu0 0.0
        %4169 = vmatmul.mubr.f32.gmra.mxu0 %v4100
        %v4170 = vpop.f32.mrf.mxu0
        %v4171 = vadd.f32 0.0, %v4170
        %v4172 = vpop.f32.mrf.mxu0
        %4173 = vdwg.mxu0
        %4174 = vrot.lane.b32.xlu0 %v2397, 120
        %v4175 = vpop.permute.xlu0 %4174
        %4176 = vrot.lane.b32.xlu0 %v2513, 120
        %v4177 = vpop.permute.xlu0 %4176
        %v4178 = vsel %vm190, %v4175, 0
        %v4180 = vsel %vm190, %v4177, 0
        %4182 = vmatprep.subr.mxu0 0.0
        %4183 = vmatpush1.xpose.msra.mxu0 0.0
        %4184 = vmatprep.subr.mxu0 0.0
        %4185 = vmatpush1.xpose.msra.mxu0 0.0
        %4186 = vmatprep.subr.mxu0 0.0
        %4187 = vmatpush1.xpose.msra.mxu0 0.0
        %4188 = vmatprep.subr.mxu0 0.0
        %4189 = vmatpush1.xpose.msra.mxu0 0.0
        %4190 = vmatprep.subr.mxu0 0.0
        %4191 = vmatpush1.xpose.msra.mxu0 0.0
        %4192 = vmatprep.subr.mxu0 0.0
        %4193 = vmatpush1.xpose.msra.mxu0 0.0
        %4194 = vmatprep.subr.mxu0 0.0
        %4195 = vmatpush1.xpose.msra.mxu0 0.0
        %4196 = vmatprep.subr.mxu0 0.0
        %4197 = vmatpush1.xpose.msra.mxu0 0.0
        %4198 = vmatprep.subr.mxu0 0.0
        %4199 = vmatpush1.xpose.msra.mxu0 0.0
        %4200 = vmatprep.subr.mxu0 0.0
        %4201 = vmatpush1.xpose.msra.mxu0 0.0
        %4202 = vmatprep.subr.mxu0 0.0
        %4203 = vmatpush1.xpose.msra.mxu0 0.0
        %4204 = vmatprep.subr.mxu0 0.0
        %4205 = vmatpush1.xpose.msra.mxu0 0.0
        %4206 = vmatprep.subr.mxu0 0.0
        %4207 = vmatpush1.xpose.msra.mxu0 0.0
        %4208 = vmatprep.subr.mxu0 0.0
        %4209 = vmatpush1.xpose.msra.mxu0 0.0
        %4210 = vmatprep.subr.mxu0 0.0
        %4211 = vmatpush1.xpose.msra.mxu0 0.0
        %4212 = vmatprep.subr.mxu0 0.0
        %4213 = vmatpush1.xpose.msra.mxu0 %v4180
        %4214 = vmatprep.subr.mxu0 0.0
        %4215 = vmatpush2.xpose.msra.mxu0 0.0
        %4216 = vmatprep.subr.mxu0 0.0
        %4217 = vmatpush2.xpose.msra.mxu0 0.0
        %4218 = vmatprep.subr.mxu0 0.0
        %4219 = vmatpush2.xpose.msra.mxu0 0.0
        %4220 = vmatprep.subr.mxu0 0.0
        %4221 = vmatpush2.xpose.msra.mxu0 0.0
        %4222 = vmatprep.subr.mxu0 0.0
        %4223 = vmatpush2.xpose.msra.mxu0 0.0
        %4224 = vmatprep.subr.mxu0 0.0
        %4225 = vmatpush2.xpose.msra.mxu0 0.0
        %4226 = vmatprep.subr.mxu0 0.0
        %4227 = vmatpush2.xpose.msra.mxu0 0.0
        %4228 = vmatprep.subr.mxu0 0.0
        %4229 = vmatpush2.xpose.msra.mxu0 0.0
        %4230 = vmatprep.subr.mxu0 0.0
        %4231 = vmatpush2.xpose.msra.mxu0 0.0
        %4232 = vmatprep.subr.mxu0 0.0
        %4233 = vmatpush2.xpose.msra.mxu0 0.0
        %4234 = vmatprep.subr.mxu0 0.0
        %4235 = vmatpush2.xpose.msra.mxu0 0.0
        %4236 = vmatprep.subr.mxu0 0.0
        %4237 = vmatpush2.xpose.msra.mxu0 0.0
        %4238 = vmatprep.subr.mxu0 0.0
        %4239 = vmatpush2.xpose.msra.mxu0 0.0
        %4240 = vmatprep.subr.mxu0 0.0
        %4241 = vmatpush2.xpose.msra.mxu0 0.0
        %4242 = vmatprep.subr.mxu0 0.0
        %4243 = vmatpush2.xpose.msra.mxu0 0.0
        %4244 = vmatprep.subr.mxu0 0.0
        %4245 = vmatpush2.xpose.msra.mxu0 0.0
        %4246 = vmatprep.mubr.f32.mxu0 0.0
        %4247 = vmatmul.mubr.f32.gmra.mxu0 %v4178
        %v4248 = vpop.f32.mrf.mxu0
        %v4249 = vadd.f32 0.0, %v4248
        %v4250 = vpop.f32.mrf.mxu0
        %4251 = vdwg.mxu0
        %4252 = vrot.lane.b32.xlu0 %v2402, 120
        %v4253 = vpop.permute.xlu0 %4252
        %4254 = vrot.lane.b32.xlu0 %v2518, 120
        %v4255 = vpop.permute.xlu0 %4254
        %v4256 = vsel %vm190, %v4253, 0
        %v4258 = vsel %vm190, %v4255, 0
        %4260 = vmatprep.subr.mxu0 0.0
        %4261 = vmatpush1.xpose.msra.mxu0 0.0
        %4262 = vmatprep.subr.mxu0 0.0
        %4263 = vmatpush1.xpose.msra.mxu0 0.0
        %4264 = vmatprep.subr.mxu0 0.0
        %4265 = vmatpush1.xpose.msra.mxu0 0.0
        %4266 = vmatprep.subr.mxu0 0.0
        %4267 = vmatpush1.xpose.msra.mxu0 0.0
        %4268 = vmatprep.subr.mxu0 0.0
        %4269 = vmatpush1.xpose.msra.mxu0 0.0
        %4270 = vmatprep.subr.mxu0 0.0
        %4271 = vmatpush1.xpose.msra.mxu0 0.0
        %4272 = vmatprep.subr.mxu0 0.0
        %4273 = vmatpush1.xpose.msra.mxu0 0.0
        %4274 = vmatprep.subr.mxu0 0.0
        %4275 = vmatpush1.xpose.msra.mxu0 0.0
        %4276 = vmatprep.subr.mxu0 0.0
        %4277 = vmatpush1.xpose.msra.mxu0 0.0
        %4278 = vmatprep.subr.mxu0 0.0
        %4279 = vmatpush1.xpose.msra.mxu0 0.0
        %4280 = vmatprep.subr.mxu0 0.0
        %4281 = vmatpush1.xpose.msra.mxu0 0.0
        %4282 = vmatprep.subr.mxu0 0.0
        %4283 = vmatpush1.xpose.msra.mxu0 0.0
        %4284 = vmatprep.subr.mxu0 0.0
        %4285 = vmatpush1.xpose.msra.mxu0 0.0
        %4286 = vmatprep.subr.mxu0 0.0
        %4287 = vmatpush1.xpose.msra.mxu0 0.0
        %4288 = vmatprep.subr.mxu0 0.0
        %4289 = vmatpush1.xpose.msra.mxu0 0.0
        %4290 = vmatprep.subr.mxu0 0.0
        %4291 = vmatpush1.xpose.msra.mxu0 %v4258
        %4292 = vmatprep.subr.mxu0 0.0
        %4293 = vmatpush2.xpose.msra.mxu0 0.0
        %4294 = vmatprep.subr.mxu0 0.0
        %4295 = vmatpush2.xpose.msra.mxu0 0.0
        %4296 = vmatprep.subr.mxu0 0.0
        %4297 = vmatpush2.xpose.msra.mxu0 0.0
        %4298 = vmatprep.subr.mxu0 0.0
        %4299 = vmatpush2.xpose.msra.mxu0 0.0
        %4300 = vmatprep.subr.mxu0 0.0
        %4301 = vmatpush2.xpose.msra.mxu0 0.0
        %4302 = vmatprep.subr.mxu0 0.0
        %4303 = vmatpush2.xpose.msra.mxu0 0.0
        %4304 = vmatprep.subr.mxu0 0.0
        %4305 = vmatpush2.xpose.msra.mxu0 0.0
        %4306 = vmatprep.subr.mxu0 0.0
        %4307 = vmatpush2.xpose.msra.mxu0 0.0
        %4308 = vmatprep.subr.mxu0 0.0
        %4309 = vmatpush2.xpose.msra.mxu0 0.0
        %4310 = vmatprep.subr.mxu0 0.0
        %4311 = vmatpush2.xpose.msra.mxu0 0.0
        %4312 = vmatprep.subr.mxu0 0.0
        %4313 = vmatpush2.xpose.msra.mxu0 0.0
        %4314 = vmatprep.subr.mxu0 0.0
        %4315 = vmatpush2.xpose.msra.mxu0 0.0
        %4316 = vmatprep.subr.mxu0 0.0
        %4317 = vmatpush2.xpose.msra.mxu0 0.0
        %4318 = vmatprep.subr.mxu0 0.0
        %4319 = vmatpush2.xpose.msra.mxu0 0.0
        %4320 = vmatprep.subr.mxu0 0.0
        %4321 = vmatpush2.xpose.msra.mxu0 0.0
        %4322 = vmatprep.subr.mxu0 0.0
        %4323 = vmatpush2.xpose.msra.mxu0 0.0
        %4324 = vmatprep.mubr.f32.mxu0 0.0
        %4325 = vmatmul.mubr.f32.gmra.mxu0 %v4256
        %v4326 = vpop.f32.mrf.mxu0
        %v4327 = vadd.f32 0.0, %v4326
        %v4328 = vpop.f32.mrf.mxu0
        %4329 = vdwg.mxu0
        %4330 = vrot.lane.b32.xlu0 %v2407, 120
        %v4331 = vpop.permute.xlu0 %4330
        %4332 = vrot.lane.b32.xlu0 %v2523, 120
        %v4333 = vpop.permute.xlu0 %4332
        %v4334 = vsel %vm190, %v4331, 0
        %v4336 = vsel %vm190, %v4333, 0
        %4338 = vmatprep.subr.mxu0 0.0
        %4339 = vmatpush1.xpose.msra.mxu0 0.0
        %4340 = vmatprep.subr.mxu0 0.0
        %4341 = vmatpush1.xpose.msra.mxu0 0.0
        %4342 = vmatprep.subr.mxu0 0.0
        %4343 = vmatpush1.xpose.msra.mxu0 0.0
        %4344 = vmatprep.subr.mxu0 0.0
        %4345 = vmatpush1.xpose.msra.mxu0 0.0
        %4346 = vmatprep.subr.mxu0 0.0
        %4347 = vmatpush1.xpose.msra.mxu0 0.0
        %4348 = vmatprep.subr.mxu0 0.0
        %4349 = vmatpush1.xpose.msra.mxu0 0.0
        %4350 = vmatprep.subr.mxu0 0.0
        %4351 = vmatpush1.xpose.msra.mxu0 0.0
        %4352 = vmatprep.subr.mxu0 0.0
        %4353 = vmatpush1.xpose.msra.mxu0 0.0
        %4354 = vmatprep.subr.mxu0 0.0
        %4355 = vmatpush1.xpose.msra.mxu0 0.0
        %4356 = vmatprep.subr.mxu0 0.0
        %4357 = vmatpush1.xpose.msra.mxu0 0.0
        %4358 = vmatprep.subr.mxu0 0.0
        %4359 = vmatpush1.xpose.msra.mxu0 0.0
        %4360 = vmatprep.subr.mxu0 0.0
        %4361 = vmatpush1.xpose.msra.mxu0 0.0
        %4362 = vmatprep.subr.mxu0 0.0
        %4363 = vmatpush1.xpose.msra.mxu0 0.0
        %4364 = vmatprep.subr.mxu0 0.0
        %4365 = vmatpush1.xpose.msra.mxu0 0.0
        %4366 = vmatprep.subr.mxu0 0.0
        %4367 = vmatpush1.xpose.msra.mxu0 0.0
        %4368 = vmatprep.subr.mxu0 0.0
        %4369 = vmatpush1.xpose.msra.mxu0 %v4336
        %4370 = vmatprep.subr.mxu0 0.0
        %4371 = vmatpush2.xpose.msra.mxu0 0.0
        %4372 = vmatprep.subr.mxu0 0.0
        %4373 = vmatpush2.xpose.msra.mxu0 0.0
        %4374 = vmatprep.subr.mxu0 0.0
        %4375 = vmatpush2.xpose.msra.mxu0 0.0
        %4376 = vmatprep.subr.mxu0 0.0
        %4377 = vmatpush2.xpose.msra.mxu0 0.0
        %4378 = vmatprep.subr.mxu0 0.0
        %4379 = vmatpush2.xpose.msra.mxu0 0.0
        %4380 = vmatprep.subr.mxu0 0.0
        %4381 = vmatpush2.xpose.msra.mxu0 0.0
        %4382 = vmatprep.subr.mxu0 0.0
        %4383 = vmatpush2.xpose.msra.mxu0 0.0
        %4384 = vmatprep.subr.mxu0 0.0
        %4385 = vmatpush2.xpose.msra.mxu0 0.0
        %4386 = vmatprep.subr.mxu0 0.0
        %4387 = vmatpush2.xpose.msra.mxu0 0.0
        %4388 = vmatprep.subr.mxu0 0.0
        %4389 = vmatpush2.xpose.msra.mxu0 0.0
        %4390 = vmatprep.subr.mxu0 0.0
        %4391 = vmatpush2.xpose.msra.mxu0 0.0
        %4392 = vmatprep.subr.mxu0 0.0
        %4393 = vmatpush2.xpose.msra.mxu0 0.0
        %4394 = vmatprep.subr.mxu0 0.0
        %4395 = vmatpush2.xpose.msra.mxu0 0.0
        %4396 = vmatprep.subr.mxu0 0.0
        %4397 = vmatpush2.xpose.msra.mxu0 0.0
        %4398 = vmatprep.subr.mxu0 0.0
        %4399 = vmatpush2.xpose.msra.mxu0 0.0
        %4400 = vmatprep.subr.mxu0 0.0
        %4401 = vmatpush2.xpose.msra.mxu0 0.0
        %4402 = vmatprep.mubr.f32.mxu0 0.0
        %4403 = vmatmul.mubr.f32.gmra.mxu0 %v4334
        %v4404 = vpop.f32.mrf.mxu0
        %v4405 = vadd.f32 0.0, %v4404
        %v4406 = vpop.f32.mrf.mxu0
        %4407 = vdwg.mxu0
        %4408 = vrot.lane.b32.xlu0 %v2412, 120
        %v4409 = vpop.permute.xlu0 %4408
        %4410 = vrot.lane.b32.xlu0 %v2528, 120
        %v4411 = vpop.permute.xlu0 %4410
        %v4412 = vsel %vm190, %v4409, 0
        %v4414 = vsel %vm190, %v4411, 0
        %4416 = vmatprep.subr.mxu0 0.0
        %4417 = vmatpush1.xpose.msra.mxu0 0.0
        %4418 = vmatprep.subr.mxu0 0.0
        %4419 = vmatpush1.xpose.msra.mxu0 0.0
        %4420 = vmatprep.subr.mxu0 0.0
        %4421 = vmatpush1.xpose.msra.mxu0 0.0
        %4422 = vmatprep.subr.mxu0 0.0
        %4423 = vmatpush1.xpose.msra.mxu0 0.0
        %4424 = vmatprep.subr.mxu0 0.0
        %4425 = vmatpush1.xpose.msra.mxu0 0.0
        %4426 = vmatprep.subr.mxu0 0.0
        %4427 = vmatpush1.xpose.msra.mxu0 0.0
        %4428 = vmatprep.subr.mxu0 0.0
        %4429 = vmatpush1.xpose.msra.mxu0 0.0
        %4430 = vmatprep.subr.mxu0 0.0
        %4431 = vmatpush1.xpose.msra.mxu0 0.0
        %4432 = vmatprep.subr.mxu0 0.0
        %4433 = vmatpush1.xpose.msra.mxu0 0.0
        %4434 = vmatprep.subr.mxu0 0.0
        %4435 = vmatpush1.xpose.msra.mxu0 0.0
        %4436 = vmatprep.subr.mxu0 0.0
        %4437 = vmatpush1.xpose.msra.mxu0 0.0
        %4438 = vmatprep.subr.mxu0 0.0
        %4439 = vmatpush1.xpose.msra.mxu0 0.0
        %4440 = vmatprep.subr.mxu0 0.0
        %4441 = vmatpush1.xpose.msra.mxu0 0.0
        %4442 = vmatprep.subr.mxu0 0.0
        %4443 = vmatpush1.xpose.msra.mxu0 0.0
        %4444 = vmatprep.subr.mxu0 0.0
        %4445 = vmatpush1.xpose.msra.mxu0 0.0
        %4446 = vmatprep.subr.mxu0 0.0
        %4447 = vmatpush1.xpose.msra.mxu0 %v4414
        %4448 = vmatprep.subr.mxu0 0.0
        %4449 = vmatpush2.xpose.msra.mxu0 0.0
        %4450 = vmatprep.subr.mxu0 0.0
        %4451 = vmatpush2.xpose.msra.mxu0 0.0
        %4452 = vmatprep.subr.mxu0 0.0
        %4453 = vmatpush2.xpose.msra.mxu0 0.0
        %4454 = vmatprep.subr.mxu0 0.0
        %4455 = vmatpush2.xpose.msra.mxu0 0.0
        %4456 = vmatprep.subr.mxu0 0.0
        %4457 = vmatpush2.xpose.msra.mxu0 0.0
        %4458 = vmatprep.subr.mxu0 0.0
        %4459 = vmatpush2.xpose.msra.mxu0 0.0
        %4460 = vmatprep.subr.mxu0 0.0
        %4461 = vmatpush2.xpose.msra.mxu0 0.0
        %4462 = vmatprep.subr.mxu0 0.0
        %4463 = vmatpush2.xpose.msra.mxu0 0.0
        %4464 = vmatprep.subr.mxu0 0.0
        %4465 = vmatpush2.xpose.msra.mxu0 0.0
        %4466 = vmatprep.subr.mxu0 0.0
        %4467 = vmatpush2.xpose.msra.mxu0 0.0
        %4468 = vmatprep.subr.mxu0 0.0
        %4469 = vmatpush2.xpose.msra.mxu0 0.0
        %4470 = vmatprep.subr.mxu0 0.0
        %4471 = vmatpush2.xpose.msra.mxu0 0.0
        %4472 = vmatprep.subr.mxu0 0.0
        %4473 = vmatpush2.xpose.msra.mxu0 0.0
        %4474 = vmatprep.subr.mxu0 0.0
        %4475 = vmatpush2.xpose.msra.mxu0 0.0
        %4476 = vmatprep.subr.mxu0 0.0
        %4477 = vmatpush2.xpose.msra.mxu0 0.0
        %4478 = vmatprep.subr.mxu0 0.0
        %4479 = vmatpush2.xpose.msra.mxu0 0.0
        %4480 = vmatprep.mubr.f32.mxu0 0.0
        %4481 = vmatmul.mubr.f32.gmra.mxu0 %v4412
        %v4482 = vpop.f32.mrf.mxu0
        %v4483 = vadd.f32 0.0, %v4482
        %v4484 = vpop.f32.mrf.mxu0
        %4485 = vdwg.mxu0
        %4486 = vrot.lane.b32.xlu0 %v2417, 120
        %v4487 = vpop.permute.xlu0 %4486
        %4488 = vrot.lane.b32.xlu0 %v2533, 120
        %v4489 = vpop.permute.xlu0 %4488
        %v4490 = vsel %vm190, %v4487, 0
        %v4492 = vsel %vm190, %v4489, 0
        %4494 = vmatprep.subr.mxu0 0.0
        %4495 = vmatpush1.xpose.msra.mxu0 0.0
        %4496 = vmatprep.subr.mxu0 0.0
        %4497 = vmatpush1.xpose.msra.mxu0 0.0
        %4498 = vmatprep.subr.mxu0 0.0
        %4499 = vmatpush1.xpose.msra.mxu0 0.0
        %4500 = vmatprep.subr.mxu0 0.0
        %4501 = vmatpush1.xpose.msra.mxu0 0.0
        %4502 = vmatprep.subr.mxu0 0.0
        %4503 = vmatpush1.xpose.msra.mxu0 0.0
        %4504 = vmatprep.subr.mxu0 0.0
        %4505 = vmatpush1.xpose.msra.mxu0 0.0
        %4506 = vmatprep.subr.mxu0 0.0
        %4507 = vmatpush1.xpose.msra.mxu0 0.0
        %4508 = vmatprep.subr.mxu0 0.0
        %4509 = vmatpush1.xpose.msra.mxu0 0.0
        %4510 = vmatprep.subr.mxu0 0.0
        %4511 = vmatpush1.xpose.msra.mxu0 0.0
        %4512 = vmatprep.subr.mxu0 0.0
        %4513 = vmatpush1.xpose.msra.mxu0 0.0
        %4514 = vmatprep.subr.mxu0 0.0
        %4515 = vmatpush1.xpose.msra.mxu0 0.0
        %4516 = vmatprep.subr.mxu0 0.0
        %4517 = vmatpush1.xpose.msra.mxu0 0.0
        %4518 = vmatprep.subr.mxu0 0.0
        %4519 = vmatpush1.xpose.msra.mxu0 0.0
        %4520 = vmatprep.subr.mxu0 0.0
        %4521 = vmatpush1.xpose.msra.mxu0 0.0
        %4522 = vmatprep.subr.mxu0 0.0
        %4523 = vmatpush1.xpose.msra.mxu0 0.0
        %4524 = vmatprep.subr.mxu0 0.0
        %4525 = vmatpush1.xpose.msra.mxu0 %v4492
        %4526 = vmatprep.subr.mxu0 0.0
        %4527 = vmatpush2.xpose.msra.mxu0 0.0
        %4528 = vmatprep.subr.mxu0 0.0
        %4529 = vmatpush2.xpose.msra.mxu0 0.0
        %4530 = vmatprep.subr.mxu0 0.0
        %4531 = vmatpush2.xpose.msra.mxu0 0.0
        %4532 = vmatprep.subr.mxu0 0.0
        %4533 = vmatpush2.xpose.msra.mxu0 0.0
        %4534 = vmatprep.subr.mxu0 0.0
        %4535 = vmatpush2.xpose.msra.mxu0 0.0
        %4536 = vmatprep.subr.mxu0 0.0
        %4537 = vmatpush2.xpose.msra.mxu0 0.0
        %4538 = vmatprep.subr.mxu0 0.0
        %4539 = vmatpush2.xpose.msra.mxu0 0.0
        %4540 = vmatprep.subr.mxu0 0.0
        %4541 = vmatpush2.xpose.msra.mxu0 0.0
        %4542 = vmatprep.subr.mxu0 0.0
        %4543 = vmatpush2.xpose.msra.mxu0 0.0
        %4544 = vmatprep.subr.mxu0 0.0
        %4545 = vmatpush2.xpose.msra.mxu0 0.0
        %4546 = vmatprep.subr.mxu0 0.0
        %4547 = vmatpush2.xpose.msra.mxu0 0.0
        %4548 = vmatprep.subr.mxu0 0.0
        %4549 = vmatpush2.xpose.msra.mxu0 0.0
        %4550 = vmatprep.subr.mxu0 0.0
        %4551 = vmatpush2.xpose.msra.mxu0 0.0
        %4552 = vmatprep.subr.mxu0 0.0
        %4553 = vmatpush2.xpose.msra.mxu0 0.0
        %4554 = vmatprep.subr.mxu0 0.0
        %4555 = vmatpush2.xpose.msra.mxu0 0.0
        %4556 = vmatprep.subr.mxu0 0.0
        %4557 = vmatpush2.xpose.msra.mxu0 0.0
        %4558 = vmatprep.mubr.f32.mxu0 0.0
        %4559 = vmatmul.mubr.f32.gmra.mxu0 %v4490
        %v4560 = vpop.f32.mrf.mxu0
        %v4561 = vadd.f32 0.0, %v4560
        %v4562 = vpop.f32.mrf.mxu0
        %4563 = vdwg.mxu0
        %v4564 = vmul.f32 %v4015, 0.35355338
        %v4565 = vmul.f32 %v4093, 0.35355338
        %v4566 = vmul.f32 %v4171, 0.35355338
        %v4567 = vmul.f32 %v4249, 0.35355338
        %v4568 = vmul.f32 %v4327, 0.35355338
        %v4569 = vmul.f32 %v4405, 0.35355338
        %v4570 = vmul.f32 %v4483, 0.35355338
        %v4571 = vmul.f32 %v4561, 0.35355338
        %v4572 = vsel %vm190, %v4564, -inf
        %4573 = vmax.xlane.f32.xlu0 %v4572
        %v4574 = vpop.xlane.xlu0 %4573
        %v4575 = vsel %vm190, %v4565, -inf
        %4576 = vmax.xlane.f32.xlu0 %v4575
        %v4577 = vpop.xlane.xlu0 %4576
        %v4578 = vsel %vm190, %v4566, -inf
        %4579 = vmax.xlane.f32.xlu0 %v4578
        %v4580 = vpop.xlane.xlu0 %4579
        %v4581 = vsel %vm190, %v4567, -inf
        %4582 = vmax.xlane.f32.xlu0 %v4581
        %v4583 = vpop.xlane.xlu0 %4582
        %v4584 = vsel %vm190, %v4568, -inf
        %4585 = vmax.xlane.f32.xlu0 %v4584
        %v4586 = vpop.xlane.xlu0 %4585
        %v4587 = vsel %vm190, %v4569, -inf
        %4588 = vmax.xlane.f32.xlu0 %v4587
        %v4589 = vpop.xlane.xlu0 %4588
        %v4590 = vsel %vm190, %v4570, -inf
        %4591 = vmax.xlane.f32.xlu0 %v4590
        %v4592 = vpop.xlane.xlu0 %4591
        %v4593 = vsel %vm190, %v4571, -inf
        %4594 = vmax.xlane.f32.xlu0 %v4593
        %v4595 = vpop.xlane.xlu0 %4594
        %v4596 = vsub.f32 %v4564, %v4574
        %v4597 = vsub.f32 %v4565, %v4577
        %v4598 = vsub.f32 %v4566, %v4580
        %v4599 = vsub.f32 %v4567, %v4583
        %v4600 = vsub.f32 %v4568, %v4586
        %v4601 = vsub.f32 %v4569, %v4589
        %v4602 = vsub.f32 %v4570, %v4592
        %v4603 = vsub.f32 %v4571, %v4595
        %v4604 = vmul.f32 %v4596, 1.442695
        %v4605 = vpow.pop %v4604
        %v4606 = vmul.f32 %v4597, 1.442695
        %v4607 = vpow.pop %v4606
        %v4608 = vmul.f32 %v4598, 1.442695
        %v4609 = vpow.pop %v4608
        %v4610 = vmul.f32 %v4599, 1.442695
        %v4611 = vpow.pop %v4610
        %v4612 = vmul.f32 %v4600, 1.442695
        %v4613 = vpow.pop %v4612
        %v4614 = vmul.f32 %v4601, 1.442695
        %v4615 = vpow.pop %v4614
        %v4616 = vmul.f32 %v4602, 1.442695
        %v4617 = vpow.pop %v4616
        %v4618 = vmul.f32 %v4603, 1.442695
        %v4619 = vpow.pop %v4618
        %v4620 = vsel %vm190, %v4605, 0.0
        %4621 = vadd.xlane.f32.xlu0 %v4620
        %v4622 = vpop.xlane.xlu0 %4621
        %v4623 = vsel %vm190, %v4607, 0.0
        %4624 = vadd.xlane.f32.xlu0 %v4623
        %v4625 = vpop.xlane.xlu0 %4624
        %v4626 = vsel %vm190, %v4609, 0.0
        %4627 = vadd.xlane.f32.xlu0 %v4626
        %v4628 = vpop.xlane.xlu0 %4627
        %v4629 = vsel %vm190, %v4611, 0.0
        %4630 = vadd.xlane.f32.xlu0 %v4629
        %v4631 = vpop.xlane.xlu0 %4630
        %v4632 = vsel %vm190, %v4613, 0.0
        %4633 = vadd.xlane.f32.xlu0 %v4632
        %v4634 = vpop.xlane.xlu0 %4633
        %v4635 = vsel %vm190, %v4615, 0.0
        %4636 = vadd.xlane.f32.xlu0 %v4635
        %v4637 = vpop.xlane.xlu0 %4636
        %v4638 = vsel %vm190, %v4617, 0.0
        %4639 = vadd.xlane.f32.xlu0 %v4638
        %v4640 = vpop.xlane.xlu0 %4639
        %v4641 = vsel %vm190, %v4619, 0.0
        %4642 = vadd.xlane.f32.xlu0 %v4641
        %v4643 = vpop.xlane.xlu0 %4642
        %v4644 = vrcp.pop %v4622
        %v4645 = vrcp.pop %v4625
        %v4646 = vrcp.pop %v4628
        %v4647 = vrcp.pop %v4631
        %v4648 = vrcp.pop %v4634
        %v4649 = vrcp.pop %v4637
        %v4650 = vrcp.pop %v4640
        %v4651 = vrcp.pop %v4643
        %v4652 = vmul.f32 %v4605, %v4644
        %v4653 = vmul.f32 %v4607, %v4645
        %v4654 = vmul.f32 %v4609, %v4646
        %v4655 = vmul.f32 %v4611, %v4647
        %v4656 = vmul.f32 %v4613, %v4648
        %v4657 = vmul.f32 %v4615, %v4649
        %v4658 = vmul.f32 %v4617, %v4650
        %v4659 = vmul.f32 %v4619, %v4651
        %4661 = vrot.lane.b32.xlu0 %v2614, 120
        %v4662 = vpop.permute.xlu0 %4661
        %v4665 = vsel %vm190, %v4652, 0
        %4667 = vmatprep.subr.mxu0 0.0
        %4668 = vmatpush1.msra.mxu0 0.0
        %4669 = vmatprep.subr.mxu0 0.0
        %4670 = vmatpush1.msra.mxu0 0.0
        %4671 = vmatprep.subr.mxu0 0.0
        %4672 = vmatpush1.msra.mxu0 0.0
        %4673 = vmatprep.subr.mxu0 0.0
        %4674 = vmatpush1.msra.mxu0 0.0
        %4675 = vmatprep.subr.mxu0 0.0
        %4676 = vmatpush1.msra.mxu0 0.0
        %4677 = vmatprep.subr.mxu0 0.0
        %4678 = vmatpush1.msra.mxu0 0.0
        %4679 = vmatprep.subr.mxu0 0.0
        %4680 = vmatpush1.msra.mxu0 0.0
        %4681 = vmatprep.subr.mxu0 0.0
        %4682 = vmatpush1.msra.mxu0 0.0
        %4683 = vmatprep.subr.mxu0 0.0
        %4684 = vmatpush1.msra.mxu0 0.0
        %4685 = vmatprep.subr.mxu0 0.0
        %4686 = vmatpush1.msra.mxu0 0.0
        %4687 = vmatprep.subr.mxu0 0.0
        %4688 = vmatpush1.msra.mxu0 0.0
        %4689 = vmatprep.subr.mxu0 0.0
        %4690 = vmatpush1.msra.mxu0 0.0
        %4691 = vmatprep.subr.mxu0 0.0
        %4692 = vmatpush1.msra.mxu0 0.0
        %4693 = vmatprep.subr.mxu0 0.0
        %4694 = vmatpush1.msra.mxu0 0.0
        %4695 = vmatprep.subr.mxu0 0.0
        %4696 = vmatpush1.msra.mxu0 0.0
        %4697 = vmatprep.subr.mxu0 0.0
        %4698 = vmatpush1.msra.mxu0 %v4662
        %4699 = vmatprep.subr.mxu0 0.0
        %4700 = vmatpush2.msra.mxu0 0.0
        %4701 = vmatprep.subr.mxu0 0.0
        %4702 = vmatpush2.msra.mxu0 0.0
        %4703 = vmatprep.subr.mxu0 0.0
        %4704 = vmatpush2.msra.mxu0 0.0
        %4705 = vmatprep.subr.mxu0 0.0
        %4706 = vmatpush2.msra.mxu0 0.0
        %4707 = vmatprep.subr.mxu0 0.0
        %4708 = vmatpush2.msra.mxu0 0.0
        %4709 = vmatprep.subr.mxu0 0.0
        %4710 = vmatpush2.msra.mxu0 0.0
        %4711 = vmatprep.subr.mxu0 0.0
        %4712 = vmatpush2.msra.mxu0 0.0
        %4713 = vmatprep.subr.mxu0 0.0
        %4714 = vmatpush2.msra.mxu0 0.0
        %4715 = vmatprep.subr.mxu0 0.0
        %4716 = vmatpush2.msra.mxu0 0.0
        %4717 = vmatprep.subr.mxu0 0.0
        %4718 = vmatpush2.msra.mxu0 0.0
        %4719 = vmatprep.subr.mxu0 0.0
        %4720 = vmatpush2.msra.mxu0 0.0
        %4721 = vmatprep.subr.mxu0 0.0
        %4722 = vmatpush2.msra.mxu0 0.0
        %4723 = vmatprep.subr.mxu0 0.0
        %4724 = vmatpush2.msra.mxu0 0.0
        %4725 = vmatprep.subr.mxu0 0.0
        %4726 = vmatpush2.msra.mxu0 0.0
        %4727 = vmatprep.subr.mxu0 0.0
        %4728 = vmatpush2.msra.mxu0 0.0
        %4729 = vmatprep.subr.mxu0 0.0
        %4730 = vmatpush2.msra.mxu0 0.0
        %4731 = vmatprep.mubr.f32.mxu0 0.0
        %4732 = vmatmul.mubr.f32.gmra.mxu0 %v4665
        %v4733 = vpop.f32.mrf.mxu0
        %v4734 = vadd.f32 0.0, %v4733
        %v4735 = vpop.f32.mrf.mxu0
        %4736 = vdwg.mxu0
        %4738 = vrot.lane.b32.xlu0 %v2619, 120
        %v4739 = vpop.permute.xlu0 %4738
        %v4742 = vsel %vm190, %v4653, 0
        %4744 = vmatprep.subr.mxu0 0.0
        %4745 = vmatpush1.msra.mxu0 0.0
        %4746 = vmatprep.subr.mxu0 0.0
        %4747 = vmatpush1.msra.mxu0 0.0
        %4748 = vmatprep.subr.mxu0 0.0
        %4749 = vmatpush1.msra.mxu0 0.0
        %4750 = vmatprep.subr.mxu0 0.0
        %4751 = vmatpush1.msra.mxu0 0.0
        %4752 = vmatprep.subr.mxu0 0.0
        %4753 = vmatpush1.msra.mxu0 0.0
        %4754 = vmatprep.subr.mxu0 0.0
        %4755 = vmatpush1.msra.mxu0 0.0
        %4756 = vmatprep.subr.mxu0 0.0
        %4757 = vmatpush1.msra.mxu0 0.0
        %4758 = vmatprep.subr.mxu0 0.0
        %4759 = vmatpush1.msra.mxu0 0.0
        %4760 = vmatprep.subr.mxu0 0.0
        %4761 = vmatpush1.msra.mxu0 0.0
        %4762 = vmatprep.subr.mxu0 0.0
        %4763 = vmatpush1.msra.mxu0 0.0
        %4764 = vmatprep.subr.mxu0 0.0
        %4765 = vmatpush1.msra.mxu0 0.0
        %4766 = vmatprep.subr.mxu0 0.0
        %4767 = vmatpush1.msra.mxu0 0.0
        %4768 = vmatprep.subr.mxu0 0.0
        %4769 = vmatpush1.msra.mxu0 0.0
        %4770 = vmatprep.subr.mxu0 0.0
        %4771 = vmatpush1.msra.mxu0 0.0
        %4772 = vmatprep.subr.mxu0 0.0
        %4773 = vmatpush1.msra.mxu0 0.0
        %4774 = vmatprep.subr.mxu0 0.0
        %4775 = vmatpush1.msra.mxu0 %v4739
        %4776 = vmatprep.subr.mxu0 0.0
        %4777 = vmatpush2.msra.mxu0 0.0
        %4778 = vmatprep.subr.mxu0 0.0
        %4779 = vmatpush2.msra.mxu0 0.0
        %4780 = vmatprep.subr.mxu0 0.0
        %4781 = vmatpush2.msra.mxu0 0.0
        %4782 = vmatprep.subr.mxu0 0.0
        %4783 = vmatpush2.msra.mxu0 0.0
        %4784 = vmatprep.subr.mxu0 0.0
        %4785 = vmatpush2.msra.mxu0 0.0
        %4786 = vmatprep.subr.mxu0 0.0
        %4787 = vmatpush2.msra.mxu0 0.0
        %4788 = vmatprep.subr.mxu0 0.0
        %4789 = vmatpush2.msra.mxu0 0.0
        %4790 = vmatprep.subr.mxu0 0.0
        %4791 = vmatpush2.msra.mxu0 0.0
        %4792 = vmatprep.subr.mxu0 0.0
        %4793 = vmatpush2.msra.mxu0 0.0
        %4794 = vmatprep.subr.mxu0 0.0
        %4795 = vmatpush2.msra.mxu0 0.0
        %4796 = vmatprep.subr.mxu0 0.0
        %4797 = vmatpush2.msra.mxu0 0.0
        %4798 = vmatprep.subr.mxu0 0.0
        %4799 = vmatpush2.msra.mxu0 0.0
        %4800 = vmatprep.subr.mxu0 0.0
        %4801 = vmatpush2.msra.mxu0 0.0
        %4802 = vmatprep.subr.mxu0 0.0
        %4803 = vmatpush2.msra.mxu0 0.0
        %4804 = vmatprep.subr.mxu0 0.0
        %4805 = vmatpush2.msra.mxu0 0.0
        %4806 = vmatprep.subr.mxu0 0.0
        %4807 = vmatpush2.msra.mxu0 0.0
        %4808 = vmatprep.mubr.f32.mxu0 0.0
        %4809 = vmatmul.mubr.f32.gmra.mxu0 %v4742
        %v4810 = vpop.f32.mrf.mxu0
        %v4811 = vadd.f32 0.0, %v4810
        %v4812 = vpop.f32.mrf.mxu0
        %4813 = vdwg.mxu0
        %4815 = vrot.lane.b32.xlu0 %v2624, 120
        %v4816 = vpop.permute.xlu0 %4815
        %v4819 = vsel %vm190, %v4654, 0
        %4821 = vmatprep.subr.mxu0 0.0
        %4822 = vmatpush1.msra.mxu0 0.0
        %4823 = vmatprep.subr.mxu0 0.0
        %4824 = vmatpush1.msra.mxu0 0.0
        %4825 = vmatprep.subr.mxu0 0.0
        %4826 = vmatpush1.msra.mxu0 0.0
        %4827 = vmatprep.subr.mxu0 0.0
        %4828 = vmatpush1.msra.mxu0 0.0
        %4829 = vmatprep.subr.mxu0 0.0
        %4830 = vmatpush1.msra.mxu0 0.0
        %4831 = vmatprep.subr.mxu0 0.0
        %4832 = vmatpush1.msra.mxu0 0.0
        %4833 = vmatprep.subr.mxu0 0.0
        %4834 = vmatpush1.msra.mxu0 0.0
        %4835 = vmatprep.subr.mxu0 0.0
        %4836 = vmatpush1.msra.mxu0 0.0
        %4837 = vmatprep.subr.mxu0 0.0
        %4838 = vmatpush1.msra.mxu0 0.0
        %4839 = vmatprep.subr.mxu0 0.0
        %4840 = vmatpush1.msra.mxu0 0.0
        %4841 = vmatprep.subr.mxu0 0.0
        %4842 = vmatpush1.msra.mxu0 0.0
        %4843 = vmatprep.subr.mxu0 0.0
        %4844 = vmatpush1.msra.mxu0 0.0
        %4845 = vmatprep.subr.mxu0 0.0
        %4846 = vmatpush1.msra.mxu0 0.0
        %4847 = vmatprep.subr.mxu0 0.0
        %4848 = vmatpush1.msra.mxu0 0.0
        %4849 = vmatprep.subr.mxu0 0.0
        %4850 = vmatpush1.msra.mxu0 0.0
        %4851 = vmatprep.subr.mxu0 0.0
        %4852 = vmatpush1.msra.mxu0 %v4816
        %4853 = vmatprep.subr.mxu0 0.0
        %4854 = vmatpush2.msra.mxu0 0.0
        %4855 = vmatprep.subr.mxu0 0.0
        %4856 = vmatpush2.msra.mxu0 0.0
        %4857 = vmatprep.subr.mxu0 0.0
        %4858 = vmatpush2.msra.mxu0 0.0
        %4859 = vmatprep.subr.mxu0 0.0
        %4860 = vmatpush2.msra.mxu0 0.0
        %4861 = vmatprep.subr.mxu0 0.0
        %4862 = vmatpush2.msra.mxu0 0.0
        %4863 = vmatprep.subr.mxu0 0.0
        %4864 = vmatpush2.msra.mxu0 0.0
        %4865 = vmatprep.subr.mxu0 0.0
        %4866 = vmatpush2.msra.mxu0 0.0
        %4867 = vmatprep.subr.mxu0 0.0
        %4868 = vmatpush2.msra.mxu0 0.0
        %4869 = vmatprep.subr.mxu0 0.0
        %4870 = vmatpush2.msra.mxu0 0.0
        %4871 = vmatprep.subr.mxu0 0.0
        %4872 = vmatpush2.msra.mxu0 0.0
        %4873 = vmatprep.subr.mxu0 0.0
        %4874 = vmatpush2.msra.mxu0 0.0
        %4875 = vmatprep.subr.mxu0 0.0
        %4876 = vmatpush2.msra.mxu0 0.0
        %4877 = vmatprep.subr.mxu0 0.0
        %4878 = vmatpush2.msra.mxu0 0.0
        %4879 = vmatprep.subr.mxu0 0.0
        %4880 = vmatpush2.msra.mxu0 0.0
        %4881 = vmatprep.subr.mxu0 0.0
        %4882 = vmatpush2.msra.mxu0 0.0
        %4883 = vmatprep.subr.mxu0 0.0
        %4884 = vmatpush2.msra.mxu0 0.0
        %4885 = vmatprep.mubr.f32.mxu0 0.0
        %4886 = vmatmul.mubr.f32.gmra.mxu0 %v4819
        %v4887 = vpop.f32.mrf.mxu0
        %v4888 = vadd.f32 0.0, %v4887
        %v4889 = vpop.f32.mrf.mxu0
        %4890 = vdwg.mxu0
        %4892 = vrot.lane.b32.xlu0 %v2629, 120
        %v4893 = vpop.permute.xlu0 %4892
        %v4896 = vsel %vm190, %v4655, 0
        %4898 = vmatprep.subr.mxu0 0.0
        %4899 = vmatpush1.msra.mxu0 0.0
        %4900 = vmatprep.subr.mxu0 0.0
        %4901 = vmatpush1.msra.mxu0 0.0
        %4902 = vmatprep.subr.mxu0 0.0
        %4903 = vmatpush1.msra.mxu0 0.0
        %4904 = vmatprep.subr.mxu0 0.0
        %4905 = vmatpush1.msra.mxu0 0.0
        %4906 = vmatprep.subr.mxu0 0.0
        %4907 = vmatpush1.msra.mxu0 0.0
        %4908 = vmatprep.subr.mxu0 0.0
        %4909 = vmatpush1.msra.mxu0 0.0
        %4910 = vmatprep.subr.mxu0 0.0
        %4911 = vmatpush1.msra.mxu0 0.0
        %4912 = vmatprep.subr.mxu0 0.0
        %4913 = vmatpush1.msra.mxu0 0.0
        %4914 = vmatprep.subr.mxu0 0.0
        %4915 = vmatpush1.msra.mxu0 0.0
        %4916 = vmatprep.subr.mxu0 0.0
        %4917 = vmatpush1.msra.mxu0 0.0
        %4918 = vmatprep.subr.mxu0 0.0
        %4919 = vmatpush1.msra.mxu0 0.0
        %4920 = vmatprep.subr.mxu0 0.0
        %4921 = vmatpush1.msra.mxu0 0.0
        %4922 = vmatprep.subr.mxu0 0.0
        %4923 = vmatpush1.msra.mxu0 0.0
        %4924 = vmatprep.subr.mxu0 0.0
        %4925 = vmatpush1.msra.mxu0 0.0
        %4926 = vmatprep.subr.mxu0 0.0
        %4927 = vmatpush1.msra.mxu0 0.0
        %4928 = vmatprep.subr.mxu0 0.0
        %4929 = vmatpush1.msra.mxu0 %v4893
        %4930 = vmatprep.subr.mxu0 0.0
        %4931 = vmatpush2.msra.mxu0 0.0
        %4932 = vmatprep.subr.mxu0 0.0
        %4933 = vmatpush2.msra.mxu0 0.0
        %4934 = vmatprep.subr.mxu0 0.0
        %4935 = vmatpush2.msra.mxu0 0.0
        %4936 = vmatprep.subr.mxu0 0.0
        %4937 = vmatpush2.msra.mxu0 0.0
        %4938 = vmatprep.subr.mxu0 0.0
        %4939 = vmatpush2.msra.mxu0 0.0
        %4940 = vmatprep.subr.mxu0 0.0
        %4941 = vmatpush2.msra.mxu0 0.0
        %4942 = vmatprep.subr.mxu0 0.0
        %4943 = vmatpush2.msra.mxu0 0.0
        %4944 = vmatprep.subr.mxu0 0.0
        %4945 = vmatpush2.msra.mxu0 0.0
        %4946 = vmatprep.subr.mxu0 0.0
        %4947 = vmatpush2.msra.mxu0 0.0
        %4948 = vmatprep.subr.mxu0 0.0
        %4949 = vmatpush2.msra.mxu0 0.0
        %4950 = vmatprep.subr.mxu0 0.0
        %4951 = vmatpush2.msra.mxu0 0.0
        %4952 = vmatprep.subr.mxu0 0.0
        %4953 = vmatpush2.msra.mxu0 0.0
        %4954 = vmatprep.subr.mxu0 0.0
        %4955 = vmatpush2.msra.mxu0 0.0
        %4956 = vmatprep.subr.mxu0 0.0
        %4957 = vmatpush2.msra.mxu0 0.0
        %4958 = vmatprep.subr.mxu0 0.0
        %4959 = vmatpush2.msra.mxu0 0.0
        %4960 = vmatprep.subr.mxu0 0.0
        %4961 = vmatpush2.msra.mxu0 0.0
        %4962 = vmatprep.mubr.f32.mxu0 0.0
        %4963 = vmatmul.mubr.f32.gmra.mxu0 %v4896
        %v4964 = vpop.f32.mrf.mxu0
        %v4965 = vadd.f32 0.0, %v4964
        %v4966 = vpop.f32.mrf.mxu0
        %4967 = vdwg.mxu0
        %4969 = vrot.lane.b32.xlu0 %v2634, 120
        %v4970 = vpop.permute.xlu0 %4969
        %v4973 = vsel %vm190, %v4656, 0
        %4975 = vmatprep.subr.mxu0 0.0
        %4976 = vmatpush1.msra.mxu0 0.0
        %4977 = vmatprep.subr.mxu0 0.0
        %4978 = vmatpush1.msra.mxu0 0.0
        %4979 = vmatprep.subr.mxu0 0.0
        %4980 = vmatpush1.msra.mxu0 0.0
        %4981 = vmatprep.subr.mxu0 0.0
        %4982 = vmatpush1.msra.mxu0 0.0
        %4983 = vmatprep.subr.mxu0 0.0
        %4984 = vmatpush1.msra.mxu0 0.0
        %4985 = vmatprep.subr.mxu0 0.0
        %4986 = vmatpush1.msra.mxu0 0.0
        %4987 = vmatprep.subr.mxu0 0.0
        %4988 = vmatpush1.msra.mxu0 0.0
        %4989 = vmatprep.subr.mxu0 0.0
        %4990 = vmatpush1.msra.mxu0 0.0
        %4991 = vmatprep.subr.mxu0 0.0
        %4992 = vmatpush1.msra.mxu0 0.0
        %4993 = vmatprep.subr.mxu0 0.0
        %4994 = vmatpush1.msra.mxu0 0.0
        %4995 = vmatprep.subr.mxu0 0.0
        %4996 = vmatpush1.msra.mxu0 0.0
        %4997 = vmatprep.subr.mxu0 0.0
        %4998 = vmatpush1.msra.mxu0 0.0
        %4999 = vmatprep.subr.mxu0 0.0
        %5000 = vmatpush1.msra.mxu0 0.0
        %5001 = vmatprep.subr.mxu0 0.0
        %5002 = vmatpush1.msra.mxu0 0.0
        %5003 = vmatprep.subr.mxu0 0.0
        %5004 = vmatpush1.msra.mxu0 0.0
        %5005 = vmatprep.subr.mxu0 0.0
        %5006 = vmatpush1.msra.mxu0 %v4970
        %5007 = vmatprep.subr.mxu0 0.0
        %5008 = vmatpush2.msra.mxu0 0.0
        %5009 = vmatprep.subr.mxu0 0.0
        %5010 = vmatpush2.msra.mxu0 0.0
        %5011 = vmatprep.subr.mxu0 0.0
        %5012 = vmatpush2.msra.mxu0 0.0
        %5013 = vmatprep.subr.mxu0 0.0
        %5014 = vmatpush2.msra.mxu0 0.0
        %5015 = vmatprep.subr.mxu0 0.0
        %5016 = vmatpush2.msra.mxu0 0.0
        %5017 = vmatprep.subr.mxu0 0.0
        %5018 = vmatpush2.msra.mxu0 0.0
        %5019 = vmatprep.subr.mxu0 0.0
        %5020 = vmatpush2.msra.mxu0 0.0
        %5021 = vmatprep.subr.mxu0 0.0
        %5022 = vmatpush2.msra.mxu0 0.0
        %5023 = vmatprep.subr.mxu0 0.0
        %5024 = vmatpush2.msra.mxu0 0.0
        %5025 = vmatprep.subr.mxu0 0.0
        %5026 = vmatpush2.msra.mxu0 0.0
        %5027 = vmatprep.subr.mxu0 0.0
        %5028 = vmatpush2.msra.mxu0 0.0
        %5029 = vmatprep.subr.mxu0 0.0
        %5030 = vmatpush2.msra.mxu0 0.0
        %5031 = vmatprep.subr.mxu0 0.0
        %5032 = vmatpush2.msra.mxu0 0.0
        %5033 = vmatprep.subr.mxu0 0.0
        %5034 = vmatpush2.msra.mxu0 0.0
        %5035 = vmatprep.subr.mxu0 0.0
        %5036 = vmatpush2.msra.mxu0 0.0
        %5037 = vmatprep.subr.mxu0 0.0
        %5038 = vmatpush2.msra.mxu0 0.0
        %5039 = vmatprep.mubr.f32.mxu0 0.0
        %5040 = vmatmul.mubr.f32.gmra.mxu0 %v4973
        %v5041 = vpop.f32.mrf.mxu0
        %v5042 = vadd.f32 0.0, %v5041
        %v5043 = vpop.f32.mrf.mxu0
        %5044 = vdwg.mxu0
        %5046 = vrot.lane.b32.xlu0 %v2639, 120
        %v5047 = vpop.permute.xlu0 %5046
        %v5050 = vsel %vm190, %v4657, 0
        %5052 = vmatprep.subr.mxu0 0.0
        %5053 = vmatpush1.msra.mxu0 0.0
        %5054 = vmatprep.subr.mxu0 0.0
        %5055 = vmatpush1.msra.mxu0 0.0
        %5056 = vmatprep.subr.mxu0 0.0
        %5057 = vmatpush1.msra.mxu0 0.0
        %5058 = vmatprep.subr.mxu0 0.0
        %5059 = vmatpush1.msra.mxu0 0.0
        %5060 = vmatprep.subr.mxu0 0.0
        %5061 = vmatpush1.msra.mxu0 0.0
        %5062 = vmatprep.subr.mxu0 0.0
        %5063 = vmatpush1.msra.mxu0 0.0
        %5064 = vmatprep.subr.mxu0 0.0
        %5065 = vmatpush1.msra.mxu0 0.0
        %5066 = vmatprep.subr.mxu0 0.0
        %5067 = vmatpush1.msra.mxu0 0.0
        %5068 = vmatprep.subr.mxu0 0.0
        %5069 = vmatpush1.msra.mxu0 0.0
        %5070 = vmatprep.subr.mxu0 0.0
        %5071 = vmatpush1.msra.mxu0 0.0
        %5072 = vmatprep.subr.mxu0 0.0
        %5073 = vmatpush1.msra.mxu0 0.0
        %5074 = vmatprep.subr.mxu0 0.0
        %5075 = vmatpush1.msra.mxu0 0.0
        %5076 = vmatprep.subr.mxu0 0.0
        %5077 = vmatpush1.msra.mxu0 0.0
        %5078 = vmatprep.subr.mxu0 0.0
        %5079 = vmatpush1.msra.mxu0 0.0
        %5080 = vmatprep.subr.mxu0 0.0
        %5081 = vmatpush1.msra.mxu0 0.0
        %5082 = vmatprep.subr.mxu0 0.0
        %5083 = vmatpush1.msra.mxu0 %v5047
        %5084 = vmatprep.subr.mxu0 0.0
        %5085 = vmatpush2.msra.mxu0 0.0
        %5086 = vmatprep.subr.mxu0 0.0
        %5087 = vmatpush2.msra.mxu0 0.0
        %5088 = vmatprep.subr.mxu0 0.0
        %5089 = vmatpush2.msra.mxu0 0.0
        %5090 = vmatprep.subr.mxu0 0.0
        %5091 = vmatpush2.msra.mxu0 0.0
        %5092 = vmatprep.subr.mxu0 0.0
        %5093 = vmatpush2.msra.mxu0 0.0
        %5094 = vmatprep.subr.mxu0 0.0
        %5095 = vmatpush2.msra.mxu0 0.0
        %5096 = vmatprep.subr.mxu0 0.0
        %5097 = vmatpush2.msra.mxu0 0.0
        %5098 = vmatprep.subr.mxu0 0.0
        %5099 = vmatpush2.msra.mxu0 0.0
        %5100 = vmatprep.subr.mxu0 0.0
        %5101 = vmatpush2.msra.mxu0 0.0
        %5102 = vmatprep.subr.mxu0 0.0
        %5103 = vmatpush2.msra.mxu0 0.0
        %5104 = vmatprep.subr.mxu0 0.0
        %5105 = vmatpush2.msra.mxu0 0.0
        %5106 = vmatprep.subr.mxu0 0.0
        %5107 = vmatpush2.msra.mxu0 0.0
        %5108 = vmatprep.subr.mxu0 0.0
        %5109 = vmatpush2.msra.mxu0 0.0
        %5110 = vmatprep.subr.mxu0 0.0
        %5111 = vmatpush2.msra.mxu0 0.0
        %5112 = vmatprep.subr.mxu0 0.0
        %5113 = vmatpush2.msra.mxu0 0.0
        %5114 = vmatprep.subr.mxu0 0.0
        %5115 = vmatpush2.msra.mxu0 0.0
        %5116 = vmatprep.mubr.f32.mxu0 0.0
        %5117 = vmatmul.mubr.f32.gmra.mxu0 %v5050
        %v5118 = vpop.f32.mrf.mxu0
        %v5119 = vadd.f32 0.0, %v5118
        %v5120 = vpop.f32.mrf.mxu0
        %5121 = vdwg.mxu0
        %5123 = vrot.lane.b32.xlu0 %v2644, 120
        %v5124 = vpop.permute.xlu0 %5123
        %v5127 = vsel %vm190, %v4658, 0
        %5129 = vmatprep.subr.mxu0 0.0
        %5130 = vmatpush1.msra.mxu0 0.0
        %5131 = vmatprep.subr.mxu0 0.0
        %5132 = vmatpush1.msra.mxu0 0.0
        %5133 = vmatprep.subr.mxu0 0.0
        %5134 = vmatpush1.msra.mxu0 0.0
        %5135 = vmatprep.subr.mxu0 0.0
        %5136 = vmatpush1.msra.mxu0 0.0
        %5137 = vmatprep.subr.mxu0 0.0
        %5138 = vmatpush1.msra.mxu0 0.0
        %5139 = vmatprep.subr.mxu0 0.0
        %5140 = vmatpush1.msra.mxu0 0.0
        %5141 = vmatprep.subr.mxu0 0.0
        %5142 = vmatpush1.msra.mxu0 0.0
        %5143 = vmatprep.subr.mxu0 0.0
        %5144 = vmatpush1.msra.mxu0 0.0
        %5145 = vmatprep.subr.mxu0 0.0
        %5146 = vmatpush1.msra.mxu0 0.0
        %5147 = vmatprep.subr.mxu0 0.0
        %5148 = vmatpush1.msra.mxu0 0.0
        %5149 = vmatprep.subr.mxu0 0.0
        %5150 = vmatpush1.msra.mxu0 0.0
        %5151 = vmatprep.subr.mxu0 0.0
        %5152 = vmatpush1.msra.mxu0 0.0
        %5153 = vmatprep.subr.mxu0 0.0
        %5154 = vmatpush1.msra.mxu0 0.0
        %5155 = vmatprep.subr.mxu0 0.0
        %5156 = vmatpush1.msra.mxu0 0.0
        %5157 = vmatprep.subr.mxu0 0.0
        %5158 = vmatpush1.msra.mxu0 0.0
        %5159 = vmatprep.subr.mxu0 0.0
        %5160 = vmatpush1.msra.mxu0 %v5124
        %5161 = vmatprep.subr.mxu0 0.0
        %5162 = vmatpush2.msra.mxu0 0.0
        %5163 = vmatprep.subr.mxu0 0.0
        %5164 = vmatpush2.msra.mxu0 0.0
        %5165 = vmatprep.subr.mxu0 0.0
        %5166 = vmatpush2.msra.mxu0 0.0
        %5167 = vmatprep.subr.mxu0 0.0
        %5168 = vmatpush2.msra.mxu0 0.0
        %5169 = vmatprep.subr.mxu0 0.0
        %5170 = vmatpush2.msra.mxu0 0.0
        %5171 = vmatprep.subr.mxu0 0.0
        %5172 = vmatpush2.msra.mxu0 0.0
        %5173 = vmatprep.subr.mxu0 0.0
        %5174 = vmatpush2.msra.mxu0 0.0
        %5175 = vmatprep.subr.mxu0 0.0
        %5176 = vmatpush2.msra.mxu0 0.0
        %5177 = vmatprep.subr.mxu0 0.0
        %5178 = vmatpush2.msra.mxu0 0.0
        %5179 = vmatprep.subr.mxu0 0.0
        %5180 = vmatpush2.msra.mxu0 0.0
        %5181 = vmatprep.subr.mxu0 0.0
        %5182 = vmatpush2.msra.mxu0 0.0
        %5183 = vmatprep.subr.mxu0 0.0
        %5184 = vmatpush2.msra.mxu0 0.0
        %5185 = vmatprep.subr.mxu0 0.0
        %5186 = vmatpush2.msra.mxu0 0.0
        %5187 = vmatprep.subr.mxu0 0.0
        %5188 = vmatpush2.msra.mxu0 0.0
        %5189 = vmatprep.subr.mxu0 0.0
        %5190 = vmatpush2.msra.mxu0 0.0
        %5191 = vmatprep.subr.mxu0 0.0
        %5192 = vmatpush2.msra.mxu0 0.0
        %5193 = vmatprep.mubr.f32.mxu0 0.0
        %5194 = vmatmul.mubr.f32.gmra.mxu0 %v5127
        %v5195 = vpop.f32.mrf.mxu0
        %v5196 = vadd.f32 0.0, %v5195
        %v5197 = vpop.f32.mrf.mxu0
        %5198 = vdwg.mxu0
        %5200 = vrot.lane.b32.xlu0 %v2649, 120
        %v5201 = vpop.permute.xlu0 %5200
        %v5204 = vsel %vm190, %v4659, 0
        %5206 = vmatprep.subr.mxu0 0.0
        %5207 = vmatpush1.msra.mxu0 0.0
        %5208 = vmatprep.subr.mxu0 0.0
        %5209 = vmatpush1.msra.mxu0 0.0
        %5210 = vmatprep.subr.mxu0 0.0
        %5211 = vmatpush1.msra.mxu0 0.0
        %5212 = vmatprep.subr.mxu0 0.0
        %5213 = vmatpush1.msra.mxu0 0.0
        %5214 = vmatprep.subr.mxu0 0.0
        %5215 = vmatpush1.msra.mxu0 0.0
        %5216 = vmatprep.subr.mxu0 0.0
        %5217 = vmatpush1.msra.mxu0 0.0
        %5218 = vmatprep.subr.mxu0 0.0
        %5219 = vmatpush1.msra.mxu0 0.0
        %5220 = vmatprep.subr.mxu0 0.0
        %5221 = vmatpush1.msra.mxu0 0.0
        %5222 = vmatprep.subr.mxu0 0.0
        %5223 = vmatpush1.msra.mxu0 0.0
        %5224 = vmatprep.subr.mxu0 0.0
        %5225 = vmatpush1.msra.mxu0 0.0
        %5226 = vmatprep.subr.mxu0 0.0
        %5227 = vmatpush1.msra.mxu0 0.0
        %5228 = vmatprep.subr.mxu0 0.0
        %5229 = vmatpush1.msra.mxu0 0.0
        %5230 = vmatprep.subr.mxu0 0.0
        %5231 = vmatpush1.msra.mxu0 0.0
        %5232 = vmatprep.subr.mxu0 0.0
        %5233 = vmatpush1.msra.mxu0 0.0
        %5234 = vmatprep.subr.mxu0 0.0
        %5235 = vmatpush1.msra.mxu0 0.0
        %5236 = vmatprep.subr.mxu0 0.0
        %5237 = vmatpush1.msra.mxu0 %v5201
        %5238 = vmatprep.subr.mxu0 0.0
        %5239 = vmatpush2.msra.mxu0 0.0
        %5240 = vmatprep.subr.mxu0 0.0
        %5241 = vmatpush2.msra.mxu0 0.0
        %5242 = vmatprep.subr.mxu0 0.0
        %5243 = vmatpush2.msra.mxu0 0.0
        %5244 = vmatprep.subr.mxu0 0.0
        %5245 = vmatpush2.msra.mxu0 0.0
        %5246 = vmatprep.subr.mxu0 0.0
        %5247 = vmatpush2.msra.mxu0 0.0
        %5248 = vmatprep.subr.mxu0 0.0
        %5249 = vmatpush2.msra.mxu0 0.0
        %5250 = vmatprep.subr.mxu0 0.0
        %5251 = vmatpush2.msra.mxu0 0.0
        %5252 = vmatprep.subr.mxu0 0.0
        %5253 = vmatpush2.msra.mxu0 0.0
        %5254 = vmatprep.subr.mxu0 0.0
        %5255 = vmatpush2.msra.mxu0 0.0
        %5256 = vmatprep.subr.mxu0 0.0
        %5257 = vmatpush2.msra.mxu0 0.0
        %5258 = vmatprep.subr.mxu0 0.0
        %5259 = vmatpush2.msra.mxu0 0.0
        %5260 = vmatprep.subr.mxu0 0.0
        %5261 = vmatpush2.msra.mxu0 0.0
        %5262 = vmatprep.subr.mxu0 0.0
        %5263 = vmatpush2.msra.mxu0 0.0
        %5264 = vmatprep.subr.mxu0 0.0
        %5265 = vmatpush2.msra.mxu0 0.0
        %5266 = vmatprep.subr.mxu0 0.0
        %5267 = vmatpush2.msra.mxu0 0.0
        %5268 = vmatprep.subr.mxu0 0.0
        %5269 = vmatpush2.msra.mxu0 0.0
        %5270 = vmatprep.mubr.f32.mxu0 0.0
        %5271 = vmatmul.mubr.f32.gmra.mxu0 %v5204
        %v5272 = vpop.f32.mrf.mxu0
        %v5273 = vadd.f32 0.0, %v5272
        %v5274 = vpop.f32.mrf.mxu0
        %5275 = vdwg.mxu0
        %5276 = vrot.lane.b32.xlu0 %v2382, 112
        %v5277 = vpop.permute.xlu0 %5276
        %5278 = vrot.lane.b32.xlu0 %v2498, 112
        %v5279 = vpop.permute.xlu0 %5278
        %v5280 = vsel %vm190, %v5277, 0
        %v5282 = vsel %vm190, %v5279, 0
        %5284 = vmatprep.subr.mxu0 0.0
        %5285 = vmatpush1.xpose.msra.mxu0 0.0
        %5286 = vmatprep.subr.mxu0 0.0
        %5287 = vmatpush1.xpose.msra.mxu0 0.0
        %5288 = vmatprep.subr.mxu0 0.0
        %5289 = vmatpush1.xpose.msra.mxu0 0.0
        %5290 = vmatprep.subr.mxu0 0.0
        %5291 = vmatpush1.xpose.msra.mxu0 0.0
        %5292 = vmatprep.subr.mxu0 0.0
        %5293 = vmatpush1.xpose.msra.mxu0 0.0
        %5294 = vmatprep.subr.mxu0 0.0
        %5295 = vmatpush1.xpose.msra.mxu0 0.0
        %5296 = vmatprep.subr.mxu0 0.0
        %5297 = vmatpush1.xpose.msra.mxu0 0.0
        %5298 = vmatprep.subr.mxu0 0.0
        %5299 = vmatpush1.xpose.msra.mxu0 0.0
        %5300 = vmatprep.subr.mxu0 0.0
        %5301 = vmatpush1.xpose.msra.mxu0 0.0
        %5302 = vmatprep.subr.mxu0 0.0
        %5303 = vmatpush1.xpose.msra.mxu0 0.0
        %5304 = vmatprep.subr.mxu0 0.0
        %5305 = vmatpush1.xpose.msra.mxu0 0.0
        %5306 = vmatprep.subr.mxu0 0.0
        %5307 = vmatpush1.xpose.msra.mxu0 0.0
        %5308 = vmatprep.subr.mxu0 0.0
        %5309 = vmatpush1.xpose.msra.mxu0 0.0
        %5310 = vmatprep.subr.mxu0 0.0
        %5311 = vmatpush1.xpose.msra.mxu0 0.0
        %5312 = vmatprep.subr.mxu0 0.0
        %5313 = vmatpush1.xpose.msra.mxu0 0.0
        %5314 = vmatprep.subr.mxu0 0.0
        %5315 = vmatpush1.xpose.msra.mxu0 %v5282
        %5316 = vmatprep.subr.mxu0 0.0
        %5317 = vmatpush2.xpose.msra.mxu0 0.0
        %5318 = vmatprep.subr.mxu0 0.0
        %5319 = vmatpush2.xpose.msra.mxu0 0.0
        %5320 = vmatprep.subr.mxu0 0.0
        %5321 = vmatpush2.xpose.msra.mxu0 0.0
        %5322 = vmatprep.subr.mxu0 0.0
        %5323 = vmatpush2.xpose.msra.mxu0 0.0
        %5324 = vmatprep.subr.mxu0 0.0
        %5325 = vmatpush2.xpose.msra.mxu0 0.0
        %5326 = vmatprep.subr.mxu0 0.0
        %5327 = vmatpush2.xpose.msra.mxu0 0.0
        %5328 = vmatprep.subr.mxu0 0.0
        %5329 = vmatpush2.xpose.msra.mxu0 0.0
        %5330 = vmatprep.subr.mxu0 0.0
        %5331 = vmatpush2.xpose.msra.mxu0 0.0
        %5332 = vmatprep.subr.mxu0 0.0
        %5333 = vmatpush2.xpose.msra.mxu0 0.0
        %5334 = vmatprep.subr.mxu0 0.0
        %5335 = vmatpush2.xpose.msra.mxu0 0.0
        %5336 = vmatprep.subr.mxu0 0.0
        %5337 = vmatpush2.xpose.msra.mxu0 0.0
        %5338 = vmatprep.subr.mxu0 0.0
        %5339 = vmatpush2.xpose.msra.mxu0 0.0
        %5340 = vmatprep.subr.mxu0 0.0
        %5341 = vmatpush2.xpose.msra.mxu0 0.0
        %5342 = vmatprep.subr.mxu0 0.0
        %5343 = vmatpush2.xpose.msra.mxu0 0.0
        %5344 = vmatprep.subr.mxu0 0.0
        %5345 = vmatpush2.xpose.msra.mxu0 0.0
        %5346 = vmatprep.subr.mxu0 0.0
        %5347 = vmatpush2.xpose.msra.mxu0 0.0
        %5348 = vmatprep.mubr.f32.mxu0 0.0
        %5349 = vmatmul.mubr.f32.gmra.mxu0 %v5280
        %v5350 = vpop.f32.mrf.mxu0
        %v5351 = vadd.f32 0.0, %v5350
        %v5352 = vpop.f32.mrf.mxu0
        %5353 = vdwg.mxu0
        %5354 = vrot.lane.b32.xlu0 %v2387, 112
        %v5355 = vpop.permute.xlu0 %5354
        %5356 = vrot.lane.b32.xlu0 %v2503, 112
        %v5357 = vpop.permute.xlu0 %5356
        %v5358 = vsel %vm190, %v5355, 0
        %v5360 = vsel %vm190, %v5357, 0
        %5362 = vmatprep.subr.mxu0 0.0
        %5363 = vmatpush1.xpose.msra.mxu0 0.0
        %5364 = vmatprep.subr.mxu0 0.0
        %5365 = vmatpush1.xpose.msra.mxu0 0.0
        %5366 = vmatprep.subr.mxu0 0.0
        %5367 = vmatpush1.xpose.msra.mxu0 0.0
        %5368 = vmatprep.subr.mxu0 0.0
        %5369 = vmatpush1.xpose.msra.mxu0 0.0
        %5370 = vmatprep.subr.mxu0 0.0
        %5371 = vmatpush1.xpose.msra.mxu0 0.0
        %5372 = vmatprep.subr.mxu0 0.0
        %5373 = vmatpush1.xpose.msra.mxu0 0.0
        %5374 = vmatprep.subr.mxu0 0.0
        %5375 = vmatpush1.xpose.msra.mxu0 0.0
        %5376 = vmatprep.subr.mxu0 0.0
        %5377 = vmatpush1.xpose.msra.mxu0 0.0
        %5378 = vmatprep.subr.mxu0 0.0
        %5379 = vmatpush1.xpose.msra.mxu0 0.0
        %5380 = vmatprep.subr.mxu0 0.0
        %5381 = vmatpush1.xpose.msra.mxu0 0.0
        %5382 = vmatprep.subr.mxu0 0.0
        %5383 = vmatpush1.xpose.msra.mxu0 0.0
        %5384 = vmatprep.subr.mxu0 0.0
        %5385 = vmatpush1.xpose.msra.mxu0 0.0
        %5386 = vmatprep.subr.mxu0 0.0
        %5387 = vmatpush1.xpose.msra.mxu0 0.0
        %5388 = vmatprep.subr.mxu0 0.0
        %5389 = vmatpush1.xpose.msra.mxu0 0.0
        %5390 = vmatprep.subr.mxu0 0.0
        %5391 = vmatpush1.xpose.msra.mxu0 0.0
        %5392 = vmatprep.subr.mxu0 0.0
        %5393 = vmatpush1.xpose.msra.mxu0 %v5360
        %5394 = vmatprep.subr.mxu0 0.0
        %5395 = vmatpush2.xpose.msra.mxu0 0.0
        %5396 = vmatprep.subr.mxu0 0.0
        %5397 = vmatpush2.xpose.msra.mxu0 0.0
        %5398 = vmatprep.subr.mxu0 0.0
        %5399 = vmatpush2.xpose.msra.mxu0 0.0
        %5400 = vmatprep.subr.mxu0 0.0
        %5401 = vmatpush2.xpose.msra.mxu0 0.0
        %5402 = vmatprep.subr.mxu0 0.0
        %5403 = vmatpush2.xpose.msra.mxu0 0.0
        %5404 = vmatprep.subr.mxu0 0.0
        %5405 = vmatpush2.xpose.msra.mxu0 0.0
        %5406 = vmatprep.subr.mxu0 0.0
        %5407 = vmatpush2.xpose.msra.mxu0 0.0
        %5408 = vmatprep.subr.mxu0 0.0
        %5409 = vmatpush2.xpose.msra.mxu0 0.0
        %5410 = vmatprep.subr.mxu0 0.0
        %5411 = vmatpush2.xpose.msra.mxu0 0.0
        %5412 = vmatprep.subr.mxu0 0.0
        %5413 = vmatpush2.xpose.msra.mxu0 0.0
        %5414 = vmatprep.subr.mxu0 0.0
        %5415 = vmatpush2.xpose.msra.mxu0 0.0
        %5416 = vmatprep.subr.mxu0 0.0
        %5417 = vmatpush2.xpose.msra.mxu0 0.0
        %5418 = vmatprep.subr.mxu0 0.0
        %5419 = vmatpush2.xpose.msra.mxu0 0.0
        %5420 = vmatprep.subr.mxu0 0.0
        %5421 = vmatpush2.xpose.msra.mxu0 0.0
        %5422 = vmatprep.subr.mxu0 0.0
        %5423 = vmatpush2.xpose.msra.mxu0 0.0
        %5424 = vmatprep.subr.mxu0 0.0
        %5425 = vmatpush2.xpose.msra.mxu0 0.0
        %5426 = vmatprep.mubr.f32.mxu0 0.0
        %5427 = vmatmul.mubr.f32.gmra.mxu0 %v5358
        %v5428 = vpop.f32.mrf.mxu0
        %v5429 = vadd.f32 0.0, %v5428
        %v5430 = vpop.f32.mrf.mxu0
        %5431 = vdwg.mxu0
        %5432 = vrot.lane.b32.xlu0 %v2392, 112
        %v5433 = vpop.permute.xlu0 %5432
        %5434 = vrot.lane.b32.xlu0 %v2508, 112
        %v5435 = vpop.permute.xlu0 %5434
        %v5436 = vsel %vm190, %v5433, 0
        %v5438 = vsel %vm190, %v5435, 0
        %5440 = vmatprep.subr.mxu0 0.0
        %5441 = vmatpush1.xpose.msra.mxu0 0.0
        %5442 = vmatprep.subr.mxu0 0.0
        %5443 = vmatpush1.xpose.msra.mxu0 0.0
        %5444 = vmatprep.subr.mxu0 0.0
        %5445 = vmatpush1.xpose.msra.mxu0 0.0
        %5446 = vmatprep.subr.mxu0 0.0
        %5447 = vmatpush1.xpose.msra.mxu0 0.0
        %5448 = vmatprep.subr.mxu0 0.0
        %5449 = vmatpush1.xpose.msra.mxu0 0.0
        %5450 = vmatprep.subr.mxu0 0.0
        %5451 = vmatpush1.xpose.msra.mxu0 0.0
        %5452 = vmatprep.subr.mxu0 0.0
        %5453 = vmatpush1.xpose.msra.mxu0 0.0
        %5454 = vmatprep.subr.mxu0 0.0
        %5455 = vmatpush1.xpose.msra.mxu0 0.0
        %5456 = vmatprep.subr.mxu0 0.0
        %5457 = vmatpush1.xpose.msra.mxu0 0.0
        %5458 = vmatprep.subr.mxu0 0.0
        %5459 = vmatpush1.xpose.msra.mxu0 0.0
        %5460 = vmatprep.subr.mxu0 0.0
        %5461 = vmatpush1.xpose.msra.mxu0 0.0
        %5462 = vmatprep.subr.mxu0 0.0
        %5463 = vmatpush1.xpose.msra.mxu0 0.0
        %5464 = vmatprep.subr.mxu0 0.0
        %5465 = vmatpush1.xpose.msra.mxu0 0.0
        %5466 = vmatprep.subr.mxu0 0.0
        %5467 = vmatpush1.xpose.msra.mxu0 0.0
        %5468 = vmatprep.subr.mxu0 0.0
        %5469 = vmatpush1.xpose.msra.mxu0 0.0
        %5470 = vmatprep.subr.mxu0 0.0
        %5471 = vmatpush1.xpose.msra.mxu0 %v5438
        %5472 = vmatprep.subr.mxu0 0.0
        %5473 = vmatpush2.xpose.msra.mxu0 0.0
        %5474 = vmatprep.subr.mxu0 0.0
        %5475 = vmatpush2.xpose.msra.mxu0 0.0
        %5476 = vmatprep.subr.mxu0 0.0
        %5477 = vmatpush2.xpose.msra.mxu0 0.0
        %5478 = vmatprep.subr.mxu0 0.0
        %5479 = vmatpush2.xpose.msra.mxu0 0.0
        %5480 = vmatprep.subr.mxu0 0.0
        %5481 = vmatpush2.xpose.msra.mxu0 0.0
        %5482 = vmatprep.subr.mxu0 0.0
        %5483 = vmatpush2.xpose.msra.mxu0 0.0
        %5484 = vmatprep.subr.mxu0 0.0
        %5485 = vmatpush2.xpose.msra.mxu0 0.0
        %5486 = vmatprep.subr.mxu0 0.0
        %5487 = vmatpush2.xpose.msra.mxu0 0.0
        %5488 = vmatprep.subr.mxu0 0.0
        %5489 = vmatpush2.xpose.msra.mxu0 0.0
        %5490 = vmatprep.subr.mxu0 0.0
        %5491 = vmatpush2.xpose.msra.mxu0 0.0
        %5492 = vmatprep.subr.mxu0 0.0
        %5493 = vmatpush2.xpose.msra.mxu0 0.0
        %5494 = vmatprep.subr.mxu0 0.0
        %5495 = vmatpush2.xpose.msra.mxu0 0.0
        %5496 = vmatprep.subr.mxu0 0.0
        %5497 = vmatpush2.xpose.msra.mxu0 0.0
        %5498 = vmatprep.subr.mxu0 0.0
        %5499 = vmatpush2.xpose.msra.mxu0 0.0
        %5500 = vmatprep.subr.mxu0 0.0
        %5501 = vmatpush2.xpose.msra.mxu0 0.0
        %5502 = vmatprep.subr.mxu0 0.0
        %5503 = vmatpush2.xpose.msra.mxu0 0.0
        %5504 = vmatprep.mubr.f32.mxu0 0.0
        %5505 = vmatmul.mubr.f32.gmra.mxu0 %v5436
        %v5506 = vpop.f32.mrf.mxu0
        %v5507 = vadd.f32 0.0, %v5506
        %v5508 = vpop.f32.mrf.mxu0
        %5509 = vdwg.mxu0
        %5510 = vrot.lane.b32.xlu0 %v2397, 112
        %v5511 = vpop.permute.xlu0 %5510
        %5512 = vrot.lane.b32.xlu0 %v2513, 112
        %v5513 = vpop.permute.xlu0 %5512
        %v5514 = vsel %vm190, %v5511, 0
        %v5516 = vsel %vm190, %v5513, 0
        %5518 = vmatprep.subr.mxu0 0.0
        %5519 = vmatpush1.xpose.msra.mxu0 0.0
        %5520 = vmatprep.subr.mxu0 0.0
        %5521 = vmatpush1.xpose.msra.mxu0 0.0
        %5522 = vmatprep.subr.mxu0 0.0
        %5523 = vmatpush1.xpose.msra.mxu0 0.0
        %5524 = vmatprep.subr.mxu0 0.0
        %5525 = vmatpush1.xpose.msra.mxu0 0.0
        %5526 = vmatprep.subr.mxu0 0.0
        %5527 = vmatpush1.xpose.msra.mxu0 0.0
        %5528 = vmatprep.subr.mxu0 0.0
        %5529 = vmatpush1.xpose.msra.mxu0 0.0
        %5530 = vmatprep.subr.mxu0 0.0
        %5531 = vmatpush1.xpose.msra.mxu0 0.0
        %5532 = vmatprep.subr.mxu0 0.0
        %5533 = vmatpush1.xpose.msra.mxu0 0.0
        %5534 = vmatprep.subr.mxu0 0.0
        %5535 = vmatpush1.xpose.msra.mxu0 0.0
        %5536 = vmatprep.subr.mxu0 0.0
        %5537 = vmatpush1.xpose.msra.mxu0 0.0
        %5538 = vmatprep.subr.mxu0 0.0
        %5539 = vmatpush1.xpose.msra.mxu0 0.0
        %5540 = vmatprep.subr.mxu0 0.0
        %5541 = vmatpush1.xpose.msra.mxu0 0.0
        %5542 = vmatprep.subr.mxu0 0.0
        %5543 = vmatpush1.xpose.msra.mxu0 0.0
        %5544 = vmatprep.subr.mxu0 0.0
        %5545 = vmatpush1.xpose.msra.mxu0 0.0
        %5546 = vmatprep.subr.mxu0 0.0
        %5547 = vmatpush1.xpose.msra.mxu0 0.0
        %5548 = vmatprep.subr.mxu0 0.0
        %5549 = vmatpush1.xpose.msra.mxu0 %v5516
        %5550 = vmatprep.subr.mxu0 0.0
        %5551 = vmatpush2.xpose.msra.mxu0 0.0
        %5552 = vmatprep.subr.mxu0 0.0
        %5553 = vmatpush2.xpose.msra.mxu0 0.0
        %5554 = vmatprep.subr.mxu0 0.0
        %5555 = vmatpush2.xpose.msra.mxu0 0.0
        %5556 = vmatprep.subr.mxu0 0.0
        %5557 = vmatpush2.xpose.msra.mxu0 0.0
        %5558 = vmatprep.subr.mxu0 0.0
        %5559 = vmatpush2.xpose.msra.mxu0 0.0
        %5560 = vmatprep.subr.mxu0 0.0
        %5561 = vmatpush2.xpose.msra.mxu0 0.0
        %5562 = vmatprep.subr.mxu0 0.0
        %5563 = vmatpush2.xpose.msra.mxu0 0.0
        %5564 = vmatprep.subr.mxu0 0.0
        %5565 = vmatpush2.xpose.msra.mxu0 0.0
        %5566 = vmatprep.subr.mxu0 0.0
        %5567 = vmatpush2.xpose.msra.mxu0 0.0
        %5568 = vmatprep.subr.mxu0 0.0
        %5569 = vmatpush2.xpose.msra.mxu0 0.0
        %5570 = vmatprep.subr.mxu0 0.0
        %5571 = vmatpush2.xpose.msra.mxu0 0.0
        %5572 = vmatprep.subr.mxu0 0.0
        %5573 = vmatpush2.xpose.msra.mxu0 0.0
        %5574 = vmatprep.subr.mxu0 0.0
        %5575 = vmatpush2.xpose.msra.mxu0 0.0
        %5576 = vmatprep.subr.mxu0 0.0
        %5577 = vmatpush2.xpose.msra.mxu0 0.0
        %5578 = vmatprep.subr.mxu0 0.0
        %5579 = vmatpush2.xpose.msra.mxu0 0.0
        %5580 = vmatprep.subr.mxu0 0.0
        %5581 = vmatpush2.xpose.msra.mxu0 0.0
        %5582 = vmatprep.mubr.f32.mxu0 0.0
        %5583 = vmatmul.mubr.f32.gmra.mxu0 %v5514
        %v5584 = vpop.f32.mrf.mxu0
        %v5585 = vadd.f32 0.0, %v5584
        %v5586 = vpop.f32.mrf.mxu0
        %5587 = vdwg.mxu0
        %5588 = vrot.lane.b32.xlu0 %v2402, 112
        %v5589 = vpop.permute.xlu0 %5588
        %5590 = vrot.lane.b32.xlu0 %v2518, 112
        %v5591 = vpop.permute.xlu0 %5590
        %v5592 = vsel %vm190, %v5589, 0
        %v5594 = vsel %vm190, %v5591, 0
        %5596 = vmatprep.subr.mxu0 0.0
        %5597 = vmatpush1.xpose.msra.mxu0 0.0
        %5598 = vmatprep.subr.mxu0 0.0
        %5599 = vmatpush1.xpose.msra.mxu0 0.0
        %5600 = vmatprep.subr.mxu0 0.0
        %5601 = vmatpush1.xpose.msra.mxu0 0.0
        %5602 = vmatprep.subr.mxu0 0.0
        %5603 = vmatpush1.xpose.msra.mxu0 0.0
        %5604 = vmatprep.subr.mxu0 0.0
        %5605 = vmatpush1.xpose.msra.mxu0 0.0
        %5606 = vmatprep.subr.mxu0 0.0
        %5607 = vmatpush1.xpose.msra.mxu0 0.0
        %5608 = vmatprep.subr.mxu0 0.0
        %5609 = vmatpush1.xpose.msra.mxu0 0.0
        %5610 = vmatprep.subr.mxu0 0.0
        %5611 = vmatpush1.xpose.msra.mxu0 0.0
        %5612 = vmatprep.subr.mxu0 0.0
        %5613 = vmatpush1.xpose.msra.mxu0 0.0
        %5614 = vmatprep.subr.mxu0 0.0
        %5615 = vmatpush1.xpose.msra.mxu0 0.0
        %5616 = vmatprep.subr.mxu0 0.0
        %5617 = vmatpush1.xpose.msra.mxu0 0.0
        %5618 = vmatprep.subr.mxu0 0.0
        %5619 = vmatpush1.xpose.msra.mxu0 0.0
        %5620 = vmatprep.subr.mxu0 0.0
        %5621 = vmatpush1.xpose.msra.mxu0 0.0
        %5622 = vmatprep.subr.mxu0 0.0
        %5623 = vmatpush1.xpose.msra.mxu0 0.0
        %5624 = vmatprep.subr.mxu0 0.0
        %5625 = vmatpush1.xpose.msra.mxu0 0.0
        %5626 = vmatprep.subr.mxu0 0.0
        %5627 = vmatpush1.xpose.msra.mxu0 %v5594
        %5628 = vmatprep.subr.mxu0 0.0
        %5629 = vmatpush2.xpose.msra.mxu0 0.0
        %5630 = vmatprep.subr.mxu0 0.0
        %5631 = vmatpush2.xpose.msra.mxu0 0.0
        %5632 = vmatprep.subr.mxu0 0.0
        %5633 = vmatpush2.xpose.msra.mxu0 0.0
        %5634 = vmatprep.subr.mxu0 0.0
        %5635 = vmatpush2.xpose.msra.mxu0 0.0
        %5636 = vmatprep.subr.mxu0 0.0
        %5637 = vmatpush2.xpose.msra.mxu0 0.0
        %5638 = vmatprep.subr.mxu0 0.0
        %5639 = vmatpush2.xpose.msra.mxu0 0.0
        %5640 = vmatprep.subr.mxu0 0.0
        %5641 = vmatpush2.xpose.msra.mxu0 0.0
        %5642 = vmatprep.subr.mxu0 0.0
        %5643 = vmatpush2.xpose.msra.mxu0 0.0
        %5644 = vmatprep.subr.mxu0 0.0
        %5645 = vmatpush2.xpose.msra.mxu0 0.0
        %5646 = vmatprep.subr.mxu0 0.0
        %5647 = vmatpush2.xpose.msra.mxu0 0.0
        %5648 = vmatprep.subr.mxu0 0.0
        %5649 = vmatpush2.xpose.msra.mxu0 0.0
        %5650 = vmatprep.subr.mxu0 0.0
        %5651 = vmatpush2.xpose.msra.mxu0 0.0
        %5652 = vmatprep.subr.mxu0 0.0
        %5653 = vmatpush2.xpose.msra.mxu0 0.0
        %5654 = vmatprep.subr.mxu0 0.0
        %5655 = vmatpush2.xpose.msra.mxu0 0.0
        %5656 = vmatprep.subr.mxu0 0.0
        %5657 = vmatpush2.xpose.msra.mxu0 0.0
        %5658 = vmatprep.subr.mxu0 0.0
        %5659 = vmatpush2.xpose.msra.mxu0 0.0
        %5660 = vmatprep.mubr.f32.mxu0 0.0
        %5661 = vmatmul.mubr.f32.gmra.mxu0 %v5592
        %v5662 = vpop.f32.mrf.mxu0
        %v5663 = vadd.f32 0.0, %v5662
        %v5664 = vpop.f32.mrf.mxu0
        %5665 = vdwg.mxu0
        %5666 = vrot.lane.b32.xlu0 %v2407, 112
        %v5667 = vpop.permute.xlu0 %5666
        %5668 = vrot.lane.b32.xlu0 %v2523, 112
        %v5669 = vpop.permute.xlu0 %5668
        %v5670 = vsel %vm190, %v5667, 0
        %v5672 = vsel %vm190, %v5669, 0
        %5674 = vmatprep.subr.mxu0 0.0
        %5675 = vmatpush1.xpose.msra.mxu0 0.0
        %5676 = vmatprep.subr.mxu0 0.0
        %5677 = vmatpush1.xpose.msra.mxu0 0.0
        %5678 = vmatprep.subr.mxu0 0.0
        %5679 = vmatpush1.xpose.msra.mxu0 0.0
        %5680 = vmatprep.subr.mxu0 0.0
        %5681 = vmatpush1.xpose.msra.mxu0 0.0
        %5682 = vmatprep.subr.mxu0 0.0
        %5683 = vmatpush1.xpose.msra.mxu0 0.0
        %5684 = vmatprep.subr.mxu0 0.0
        %5685 = vmatpush1.xpose.msra.mxu0 0.0
        %5686 = vmatprep.subr.mxu0 0.0
        %5687 = vmatpush1.xpose.msra.mxu0 0.0
        %5688 = vmatprep.subr.mxu0 0.0
        %5689 = vmatpush1.xpose.msra.mxu0 0.0
        %5690 = vmatprep.subr.mxu0 0.0
        %5691 = vmatpush1.xpose.msra.mxu0 0.0
        %5692 = vmatprep.subr.mxu0 0.0
        %5693 = vmatpush1.xpose.msra.mxu0 0.0
        %5694 = vmatprep.subr.mxu0 0.0
        %5695 = vmatpush1.xpose.msra.mxu0 0.0
        %5696 = vmatprep.subr.mxu0 0.0
        %5697 = vmatpush1.xpose.msra.mxu0 0.0
        %5698 = vmatprep.subr.mxu0 0.0
        %5699 = vmatpush1.xpose.msra.mxu0 0.0
        %5700 = vmatprep.subr.mxu0 0.0
        %5701 = vmatpush1.xpose.msra.mxu0 0.0
        %5702 = vmatprep.subr.mxu0 0.0
        %5703 = vmatpush1.xpose.msra.mxu0 0.0
        %5704 = vmatprep.subr.mxu0 0.0
        %5705 = vmatpush1.xpose.msra.mxu0 %v5672
        %5706 = vmatprep.subr.mxu0 0.0
        %5707 = vmatpush2.xpose.msra.mxu0 0.0
        %5708 = vmatprep.subr.mxu0 0.0
        %5709 = vmatpush2.xpose.msra.mxu0 0.0
        %5710 = vmatprep.subr.mxu0 0.0
        %5711 = vmatpush2.xpose.msra.mxu0 0.0
        %5712 = vmatprep.subr.mxu0 0.0
        %5713 = vmatpush2.xpose.msra.mxu0 0.0
        %5714 = vmatprep.subr.mxu0 0.0
        %5715 = vmatpush2.xpose.msra.mxu0 0.0
        %5716 = vmatprep.subr.mxu0 0.0
        %5717 = vmatpush2.xpose.msra.mxu0 0.0
        %5718 = vmatprep.subr.mxu0 0.0
        %5719 = vmatpush2.xpose.msra.mxu0 0.0
        %5720 = vmatprep.subr.mxu0 0.0
        %5721 = vmatpush2.xpose.msra.mxu0 0.0
        %5722 = vmatprep.subr.mxu0 0.0
        %5723 = vmatpush2.xpose.msra.mxu0 0.0
        %5724 = vmatprep.subr.mxu0 0.0
        %5725 = vmatpush2.xpose.msra.mxu0 0.0
        %5726 = vmatprep.subr.mxu0 0.0
        %5727 = vmatpush2.xpose.msra.mxu0 0.0
        %5728 = vmatprep.subr.mxu0 0.0
        %5729 = vmatpush2.xpose.msra.mxu0 0.0
        %5730 = vmatprep.subr.mxu0 0.0
        %5731 = vmatpush2.xpose.msra.mxu0 0.0
        %5732 = vmatprep.subr.mxu0 0.0
        %5733 = vmatpush2.xpose.msra.mxu0 0.0
        %5734 = vmatprep.subr.mxu0 0.0
        %5735 = vmatpush2.xpose.msra.mxu0 0.0
        %5736 = vmatprep.subr.mxu0 0.0
        %5737 = vmatpush2.xpose.msra.mxu0 0.0
        %5738 = vmatprep.mubr.f32.mxu0 0.0
        %5739 = vmatmul.mubr.f32.gmra.mxu0 %v5670
        %v5740 = vpop.f32.mrf.mxu0
        %v5741 = vadd.f32 0.0, %v5740
        %v5742 = vpop.f32.mrf.mxu0
        %5743 = vdwg.mxu0
        %5744 = vrot.lane.b32.xlu0 %v2412, 112
        %v5745 = vpop.permute.xlu0 %5744
        %5746 = vrot.lane.b32.xlu0 %v2528, 112
        %v5747 = vpop.permute.xlu0 %5746
        %v5748 = vsel %vm190, %v5745, 0
        %v5750 = vsel %vm190, %v5747, 0
        %5752 = vmatprep.subr.mxu0 0.0
        %5753 = vmatpush1.xpose.msra.mxu0 0.0
        %5754 = vmatprep.subr.mxu0 0.0
        %5755 = vmatpush1.xpose.msra.mxu0 0.0
        %5756 = vmatprep.subr.mxu0 0.0
        %5757 = vmatpush1.xpose.msra.mxu0 0.0
        %5758 = vmatprep.subr.mxu0 0.0
        %5759 = vmatpush1.xpose.msra.mxu0 0.0
        %5760 = vmatprep.subr.mxu0 0.0
        %5761 = vmatpush1.xpose.msra.mxu0 0.0
        %5762 = vmatprep.subr.mxu0 0.0
        %5763 = vmatpush1.xpose.msra.mxu0 0.0
        %5764 = vmatprep.subr.mxu0 0.0
        %5765 = vmatpush1.xpose.msra.mxu0 0.0
        %5766 = vmatprep.subr.mxu0 0.0
        %5767 = vmatpush1.xpose.msra.mxu0 0.0
        %5768 = vmatprep.subr.mxu0 0.0
        %5769 = vmatpush1.xpose.msra.mxu0 0.0
        %5770 = vmatprep.subr.mxu0 0.0
        %5771 = vmatpush1.xpose.msra.mxu0 0.0
        %5772 = vmatprep.subr.mxu0 0.0
        %5773 = vmatpush1.xpose.msra.mxu0 0.0
        %5774 = vmatprep.subr.mxu0 0.0
        %5775 = vmatpush1.xpose.msra.mxu0 0.0
        %5776 = vmatprep.subr.mxu0 0.0
        %5777 = vmatpush1.xpose.msra.mxu0 0.0
        %5778 = vmatprep.subr.mxu0 0.0
        %5779 = vmatpush1.xpose.msra.mxu0 0.0
        %5780 = vmatprep.subr.mxu0 0.0
        %5781 = vmatpush1.xpose.msra.mxu0 0.0
        %5782 = vmatprep.subr.mxu0 0.0
        %5783 = vmatpush1.xpose.msra.mxu0 %v5750
        %5784 = vmatprep.subr.mxu0 0.0
        %5785 = vmatpush2.xpose.msra.mxu0 0.0
        %5786 = vmatprep.subr.mxu0 0.0
        %5787 = vmatpush2.xpose.msra.mxu0 0.0
        %5788 = vmatprep.subr.mxu0 0.0
        %5789 = vmatpush2.xpose.msra.mxu0 0.0
        %5790 = vmatprep.subr.mxu0 0.0
        %5791 = vmatpush2.xpose.msra.mxu0 0.0
        %5792 = vmatprep.subr.mxu0 0.0
        %5793 = vmatpush2.xpose.msra.mxu0 0.0
        %5794 = vmatprep.subr.mxu0 0.0
        %5795 = vmatpush2.xpose.msra.mxu0 0.0
        %5796 = vmatprep.subr.mxu0 0.0
        %5797 = vmatpush2.xpose.msra.mxu0 0.0
        %5798 = vmatprep.subr.mxu0 0.0
        %5799 = vmatpush2.xpose.msra.mxu0 0.0
        %5800 = vmatprep.subr.mxu0 0.0
        %5801 = vmatpush2.xpose.msra.mxu0 0.0
        %5802 = vmatprep.subr.mxu0 0.0
        %5803 = vmatpush2.xpose.msra.mxu0 0.0
        %5804 = vmatprep.subr.mxu0 0.0
        %5805 = vmatpush2.xpose.msra.mxu0 0.0
        %5806 = vmatprep.subr.mxu0 0.0
        %5807 = vmatpush2.xpose.msra.mxu0 0.0
        %5808 = vmatprep.subr.mxu0 0.0
        %5809 = vmatpush2.xpose.msra.mxu0 0.0
        %5810 = vmatprep.subr.mxu0 0.0
        %5811 = vmatpush2.xpose.msra.mxu0 0.0
        %5812 = vmatprep.subr.mxu0 0.0
        %5813 = vmatpush2.xpose.msra.mxu0 0.0
        %5814 = vmatprep.subr.mxu0 0.0
        %5815 = vmatpush2.xpose.msra.mxu0 0.0
        %5816 = vmatprep.mubr.f32.mxu0 0.0
        %5817 = vmatmul.mubr.f32.gmra.mxu0 %v5748
        %v5818 = vpop.f32.mrf.mxu0
        %v5819 = vadd.f32 0.0, %v5818
        %v5820 = vpop.f32.mrf.mxu0
        %5821 = vdwg.mxu0
        %5822 = vrot.lane.b32.xlu0 %v2417, 112
        %v5823 = vpop.permute.xlu0 %5822
        %5824 = vrot.lane.b32.xlu0 %v2533, 112
        %v5825 = vpop.permute.xlu0 %5824
        %v5826 = vsel %vm190, %v5823, 0
        %v5828 = vsel %vm190, %v5825, 0
        %5830 = vmatprep.subr.mxu0 0.0
        %5831 = vmatpush1.xpose.msra.mxu0 0.0
        %5832 = vmatprep.subr.mxu0 0.0
        %5833 = vmatpush1.xpose.msra.mxu0 0.0
        %5834 = vmatprep.subr.mxu0 0.0
        %5835 = vmatpush1.xpose.msra.mxu0 0.0
        %5836 = vmatprep.subr.mxu0 0.0
        %5837 = vmatpush1.xpose.msra.mxu0 0.0
        %5838 = vmatprep.subr.mxu0 0.0
        %5839 = vmatpush1.xpose.msra.mxu0 0.0
        %5840 = vmatprep.subr.mxu0 0.0
        %5841 = vmatpush1.xpose.msra.mxu0 0.0
        %5842 = vmatprep.subr.mxu0 0.0
        %5843 = vmatpush1.xpose.msra.mxu0 0.0
        %5844 = vmatprep.subr.mxu0 0.0
        %5845 = vmatpush1.xpose.msra.mxu0 0.0
        %5846 = vmatprep.subr.mxu0 0.0
        %5847 = vmatpush1.xpose.msra.mxu0 0.0
        %5848 = vmatprep.subr.mxu0 0.0
        %5849 = vmatpush1.xpose.msra.mxu0 0.0
        %5850 = vmatprep.subr.mxu0 0.0
        %5851 = vmatpush1.xpose.msra.mxu0 0.0
        %5852 = vmatprep.subr.mxu0 0.0
        %5853 = vmatpush1.xpose.msra.mxu0 0.0
        %5854 = vmatprep.subr.mxu0 0.0
        %5855 = vmatpush1.xpose.msra.mxu0 0.0
        %5856 = vmatprep.subr.mxu0 0.0
        %5857 = vmatpush1.xpose.msra.mxu0 0.0
        %5858 = vmatprep.subr.mxu0 0.0
        %5859 = vmatpush1.xpose.msra.mxu0 0.0
        %5860 = vmatprep.subr.mxu0 0.0
        %5861 = vmatpush1.xpose.msra.mxu0 %v5828
        %5862 = vmatprep.subr.mxu0 0.0
        %5863 = vmatpush2.xpose.msra.mxu0 0.0
        %5864 = vmatprep.subr.mxu0 0.0
        %5865 = vmatpush2.xpose.msra.mxu0 0.0
        %5866 = vmatprep.subr.mxu0 0.0
        %5867 = vmatpush2.xpose.msra.mxu0 0.0
        %5868 = vmatprep.subr.mxu0 0.0
        %5869 = vmatpush2.xpose.msra.mxu0 0.0
        %5870 = vmatprep.subr.mxu0 0.0
        %5871 = vmatpush2.xpose.msra.mxu0 0.0
        %5872 = vmatprep.subr.mxu0 0.0
        %5873 = vmatpush2.xpose.msra.mxu0 0.0
        %5874 = vmatprep.subr.mxu0 0.0
        %5875 = vmatpush2.xpose.msra.mxu0 0.0
        %5876 = vmatprep.subr.mxu0 0.0
        %5877 = vmatpush2.xpose.msra.mxu0 0.0
        %5878 = vmatprep.subr.mxu0 0.0
        %5879 = vmatpush2.xpose.msra.mxu0 0.0
        %5880 = vmatprep.subr.mxu0 0.0
        %5881 = vmatpush2.xpose.msra.mxu0 0.0
        %5882 = vmatprep.subr.mxu0 0.0
        %5883 = vmatpush2.xpose.msra.mxu0 0.0
        %5884 = vmatprep.subr.mxu0 0.0
        %5885 = vmatpush2.xpose.msra.mxu0 0.0
        %5886 = vmatprep.subr.mxu0 0.0
        %5887 = vmatpush2.xpose.msra.mxu0 0.0
        %5888 = vmatprep.subr.mxu0 0.0
        %5889 = vmatpush2.xpose.msra.mxu0 0.0
        %5890 = vmatprep.subr.mxu0 0.0
        %5891 = vmatpush2.xpose.msra.mxu0 0.0
        %5892 = vmatprep.subr.mxu0 0.0
        %5893 = vmatpush2.xpose.msra.mxu0 0.0
        %5894 = vmatprep.mubr.f32.mxu0 0.0
        %5895 = vmatmul.mubr.f32.gmra.mxu0 %v5826
        %v5896 = vpop.f32.mrf.mxu0
        %v5897 = vadd.f32 0.0, %v5896
        %v5898 = vpop.f32.mrf.mxu0
        %5899 = vdwg.mxu0
        %v5900 = vmul.f32 %v5351, 0.35355338
        %v5901 = vmul.f32 %v5429, 0.35355338
        %v5902 = vmul.f32 %v5507, 0.35355338
        %v5903 = vmul.f32 %v5585, 0.35355338
        %v5904 = vmul.f32 %v5663, 0.35355338
        %v5905 = vmul.f32 %v5741, 0.35355338
        %v5906 = vmul.f32 %v5819, 0.35355338
        %v5907 = vmul.f32 %v5897, 0.35355338
        %v5908 = vsel %vm190, %v5900, -inf
        %5909 = vmax.xlane.f32.xlu0 %v5908
        %v5910 = vpop.xlane.xlu0 %5909
        %v5911 = vsel %vm190, %v5901, -inf
        %5912 = vmax.xlane.f32.xlu0 %v5911
        %v5913 = vpop.xlane.xlu0 %5912
        %v5914 = vsel %vm190, %v5902, -inf
        %5915 = vmax.xlane.f32.xlu0 %v5914
        %v5916 = vpop.xlane.xlu0 %5915
        %v5917 = vsel %vm190, %v5903, -inf
        %5918 = vmax.xlane.f32.xlu0 %v5917
        %v5919 = vpop.xlane.xlu0 %5918
        %v5920 = vsel %vm190, %v5904, -inf
        %5921 = vmax.xlane.f32.xlu0 %v5920
        %v5922 = vpop.xlane.xlu0 %5921
        %v5923 = vsel %vm190, %v5905, -inf
        %5924 = vmax.xlane.f32.xlu0 %v5923
        %v5925 = vpop.xlane.xlu0 %5924
        %v5926 = vsel %vm190, %v5906, -inf
        %5927 = vmax.xlane.f32.xlu0 %v5926
        %v5928 = vpop.xlane.xlu0 %5927
        %v5929 = vsel %vm190, %v5907, -inf
        %5930 = vmax.xlane.f32.xlu0 %v5929
        %v5931 = vpop.xlane.xlu0 %5930
        %v5932 = vsub.f32 %v5900, %v5910
        %v5933 = vsub.f32 %v5901, %v5913
        %v5934 = vsub.f32 %v5902, %v5916
        %v5935 = vsub.f32 %v5903, %v5919
        %v5936 = vsub.f32 %v5904, %v5922
        %v5937 = vsub.f32 %v5905, %v5925
        %v5938 = vsub.f32 %v5906, %v5928
        %v5939 = vsub.f32 %v5907, %v5931
        %v5940 = vmul.f32 %v5932, 1.442695
        %v5941 = vpow.pop %v5940
        %v5942 = vmul.f32 %v5933, 1.442695
        %v5943 = vpow.pop %v5942
        %v5944 = vmul.f32 %v5934, 1.442695
        %v5945 = vpow.pop %v5944
        %v5946 = vmul.f32 %v5935, 1.442695
        %v5947 = vpow.pop %v5946
        %v5948 = vmul.f32 %v5936, 1.442695
        %v5949 = vpow.pop %v5948
        %v5950 = vmul.f32 %v5937, 1.442695
        %v5951 = vpow.pop %v5950
        %v5952 = vmul.f32 %v5938, 1.442695
        %v5953 = vpow.pop %v5952
        %v5954 = vmul.f32 %v5939, 1.442695
        %v5955 = vpow.pop %v5954
        %v5956 = vsel %vm190, %v5941, 0.0
        %5957 = vadd.xlane.f32.xlu0 %v5956
        %v5958 = vpop.xlane.xlu0 %5957
        %v5959 = vsel %vm190, %v5943, 0.0
        %5960 = vadd.xlane.f32.xlu0 %v5959
        %v5961 = vpop.xlane.xlu0 %5960
        %v5962 = vsel %vm190, %v5945, 0.0
        %5963 = vadd.xlane.f32.xlu0 %v5962
        %v5964 = vpop.xlane.xlu0 %5963
        %v5965 = vsel %vm190, %v5947, 0.0
        %5966 = vadd.xlane.f32.xlu0 %v5965
        %v5967 = vpop.xlane.xlu0 %5966
        %v5968 = vsel %vm190, %v5949, 0.0
        %5969 = vadd.xlane.f32.xlu0 %v5968
        %v5970 = vpop.xlane.xlu0 %5969
        %v5971 = vsel %vm190, %v5951, 0.0
        %5972 = vadd.xlane.f32.xlu0 %v5971
        %v5973 = vpop.xlane.xlu0 %5972
        %v5974 = vsel %vm190, %v5953, 0.0
        %5975 = vadd.xlane.f32.xlu0 %v5974
        %v5976 = vpop.xlane.xlu0 %5975
        %v5977 = vsel %vm190, %v5955, 0.0
        %5978 = vadd.xlane.f32.xlu0 %v5977
        %v5979 = vpop.xlane.xlu0 %5978
        %v5980 = vrcp.pop %v5958
        %v5981 = vrcp.pop %v5961
        %v5982 = vrcp.pop %v5964
        %v5983 = vrcp.pop %v5967
        %v5984 = vrcp.pop %v5970
        %v5985 = vrcp.pop %v5973
        %v5986 = vrcp.pop %v5976
        %v5987 = vrcp.pop %v5979
        %v5988 = vmul.f32 %v5941, %v5980
        %v5989 = vmul.f32 %v5943, %v5981
        %v5990 = vmul.f32 %v5945, %v5982
        %v5991 = vmul.f32 %v5947, %v5983
        %v5992 = vmul.f32 %v5949, %v5984
        %v5993 = vmul.f32 %v5951, %v5985
        %v5994 = vmul.f32 %v5953, %v5986
        %v5995 = vmul.f32 %v5955, %v5987
        %5996 = vrot.lane.b32.xlu0 %v2614, 112
        %v5997 = vpop.permute.xlu0 %5996
        %v6000 = vsel %vm190, %v5988, 0
        %6002 = vmatprep.subr.mxu0 0.0
        %6003 = vmatpush1.msra.mxu0 0.0
        %6004 = vmatprep.subr.mxu0 0.0
        %6005 = vmatpush1.msra.mxu0 0.0
        %6006 = vmatprep.subr.mxu0 0.0
        %6007 = vmatpush1.msra.mxu0 0.0
        %6008 = vmatprep.subr.mxu0 0.0
        %6009 = vmatpush1.msra.mxu0 0.0
        %6010 = vmatprep.subr.mxu0 0.0
        %6011 = vmatpush1.msra.mxu0 0.0
        %6012 = vmatprep.subr.mxu0 0.0
        %6013 = vmatpush1.msra.mxu0 0.0
        %6014 = vmatprep.subr.mxu0 0.0
        %6015 = vmatpush1.msra.mxu0 0.0
        %6016 = vmatprep.subr.mxu0 0.0
        %6017 = vmatpush1.msra.mxu0 0.0
        %6018 = vmatprep.subr.mxu0 0.0
        %6019 = vmatpush1.msra.mxu0 0.0
        %6020 = vmatprep.subr.mxu0 0.0
        %6021 = vmatpush1.msra.mxu0 0.0
        %6022 = vmatprep.subr.mxu0 0.0
        %6023 = vmatpush1.msra.mxu0 0.0
        %6024 = vmatprep.subr.mxu0 0.0
        %6025 = vmatpush1.msra.mxu0 0.0
        %6026 = vmatprep.subr.mxu0 0.0
        %6027 = vmatpush1.msra.mxu0 0.0
        %6028 = vmatprep.subr.mxu0 0.0
        %6029 = vmatpush1.msra.mxu0 0.0
        %6030 = vmatprep.subr.mxu0 0.0
        %6031 = vmatpush1.msra.mxu0 0.0
        %6032 = vmatprep.subr.mxu0 0.0
        %6033 = vmatpush1.msra.mxu0 %v5997
        %6034 = vmatprep.subr.mxu0 0.0
        %6035 = vmatpush2.msra.mxu0 0.0
        %6036 = vmatprep.subr.mxu0 0.0
        %6037 = vmatpush2.msra.mxu0 0.0
        %6038 = vmatprep.subr.mxu0 0.0
        %6039 = vmatpush2.msra.mxu0 0.0
        %6040 = vmatprep.subr.mxu0 0.0
        %6041 = vmatpush2.msra.mxu0 0.0
        %6042 = vmatprep.subr.mxu0 0.0
        %6043 = vmatpush2.msra.mxu0 0.0
        %6044 = vmatprep.subr.mxu0 0.0
        %6045 = vmatpush2.msra.mxu0 0.0
        %6046 = vmatprep.subr.mxu0 0.0
        %6047 = vmatpush2.msra.mxu0 0.0
        %6048 = vmatprep.subr.mxu0 0.0
        %6049 = vmatpush2.msra.mxu0 0.0
        %6050 = vmatprep.subr.mxu0 0.0
        %6051 = vmatpush2.msra.mxu0 0.0
        %6052 = vmatprep.subr.mxu0 0.0
        %6053 = vmatpush2.msra.mxu0 0.0
        %6054 = vmatprep.subr.mxu0 0.0
        %6055 = vmatpush2.msra.mxu0 0.0
        %6056 = vmatprep.subr.mxu0 0.0
        %6057 = vmatpush2.msra.mxu0 0.0
        %6058 = vmatprep.subr.mxu0 0.0
        %6059 = vmatpush2.msra.mxu0 0.0
        %6060 = vmatprep.subr.mxu0 0.0
        %6061 = vmatpush2.msra.mxu0 0.0
        %6062 = vmatprep.subr.mxu0 0.0
        %6063 = vmatpush2.msra.mxu0 0.0
        %6064 = vmatprep.subr.mxu0 0.0
        %6065 = vmatpush2.msra.mxu0 0.0
        %6066 = vmatprep.mubr.f32.mxu0 0.0
        %6067 = vmatmul.mubr.f32.gmra.mxu0 %v6000
        %v6068 = vpop.f32.mrf.mxu0
        %v6069 = vadd.f32 0.0, %v6068
        %v6070 = vpop.f32.mrf.mxu0
        %6071 = vdwg.mxu0
        %6072 = vrot.lane.b32.xlu0 %v2619, 112
        %v6073 = vpop.permute.xlu0 %6072
        %v6076 = vsel %vm190, %v5989, 0
        %6078 = vmatprep.subr.mxu0 0.0
        %6079 = vmatpush1.msra.mxu0 0.0
        %6080 = vmatprep.subr.mxu0 0.0
        %6081 = vmatpush1.msra.mxu0 0.0
        %6082 = vmatprep.subr.mxu0 0.0
        %6083 = vmatpush1.msra.mxu0 0.0
        %6084 = vmatprep.subr.mxu0 0.0
        %6085 = vmatpush1.msra.mxu0 0.0
        %6086 = vmatprep.subr.mxu0 0.0
        %6087 = vmatpush1.msra.mxu0 0.0
        %6088 = vmatprep.subr.mxu0 0.0
        %6089 = vmatpush1.msra.mxu0 0.0
        %6090 = vmatprep.subr.mxu0 0.0
        %6091 = vmatpush1.msra.mxu0 0.0
        %6092 = vmatprep.subr.mxu0 0.0
        %6093 = vmatpush1.msra.mxu0 0.0
        %6094 = vmatprep.subr.mxu0 0.0
        %6095 = vmatpush1.msra.mxu0 0.0
        %6096 = vmatprep.subr.mxu0 0.0
        %6097 = vmatpush1.msra.mxu0 0.0
        %6098 = vmatprep.subr.mxu0 0.0
        %6099 = vmatpush1.msra.mxu0 0.0
        %6100 = vmatprep.subr.mxu0 0.0
        %6101 = vmatpush1.msra.mxu0 0.0
        %6102 = vmatprep.subr.mxu0 0.0
        %6103 = vmatpush1.msra.mxu0 0.0
        %6104 = vmatprep.subr.mxu0 0.0
        %6105 = vmatpush1.msra.mxu0 0.0
        %6106 = vmatprep.subr.mxu0 0.0
        %6107 = vmatpush1.msra.mxu0 0.0
        %6108 = vmatprep.subr.mxu0 0.0
        %6109 = vmatpush1.msra.mxu0 %v6073
        %6110 = vmatprep.subr.mxu0 0.0
        %6111 = vmatpush2.msra.mxu0 0.0
        %6112 = vmatprep.subr.mxu0 0.0
        %6113 = vmatpush2.msra.mxu0 0.0
        %6114 = vmatprep.subr.mxu0 0.0
        %6115 = vmatpush2.msra.mxu0 0.0
        %6116 = vmatprep.subr.mxu0 0.0
        %6117 = vmatpush2.msra.mxu0 0.0
        %6118 = vmatprep.subr.mxu0 0.0
        %6119 = vmatpush2.msra.mxu0 0.0
        %6120 = vmatprep.subr.mxu0 0.0
        %6121 = vmatpush2.msra.mxu0 0.0
        %6122 = vmatprep.subr.mxu0 0.0
        %6123 = vmatpush2.msra.mxu0 0.0
        %6124 = vmatprep.subr.mxu0 0.0
        %6125 = vmatpush2.msra.mxu0 0.0
        %6126 = vmatprep.subr.mxu0 0.0
        %6127 = vmatpush2.msra.mxu0 0.0
        %6128 = vmatprep.subr.mxu0 0.0
        %6129 = vmatpush2.msra.mxu0 0.0
        %6130 = vmatprep.subr.mxu0 0.0
        %6131 = vmatpush2.msra.mxu0 0.0
        %6132 = vmatprep.subr.mxu0 0.0
        %6133 = vmatpush2.msra.mxu0 0.0
        %6134 = vmatprep.subr.mxu0 0.0
        %6135 = vmatpush2.msra.mxu0 0.0
        %6136 = vmatprep.subr.mxu0 0.0
        %6137 = vmatpush2.msra.mxu0 0.0
        %6138 = vmatprep.subr.mxu0 0.0
        %6139 = vmatpush2.msra.mxu0 0.0
        %6140 = vmatprep.subr.mxu0 0.0
        %6141 = vmatpush2.msra.mxu0 0.0
        %6142 = vmatprep.mubr.f32.mxu0 0.0
        %6143 = vmatmul.mubr.f32.gmra.mxu0 %v6076
        %v6144 = vpop.f32.mrf.mxu0
        %v6145 = vadd.f32 0.0, %v6144
        %v6146 = vpop.f32.mrf.mxu0
        %6147 = vdwg.mxu0
        %6148 = vrot.lane.b32.xlu0 %v2624, 112
        %v6149 = vpop.permute.xlu0 %6148
        %v6152 = vsel %vm190, %v5990, 0
        %6154 = vmatprep.subr.mxu0 0.0
        %6155 = vmatpush1.msra.mxu0 0.0
        %6156 = vmatprep.subr.mxu0 0.0
        %6157 = vmatpush1.msra.mxu0 0.0
        %6158 = vmatprep.subr.mxu0 0.0
        %6159 = vmatpush1.msra.mxu0 0.0
        %6160 = vmatprep.subr.mxu0 0.0
        %6161 = vmatpush1.msra.mxu0 0.0
        %6162 = vmatprep.subr.mxu0 0.0
        %6163 = vmatpush1.msra.mxu0 0.0
        %6164 = vmatprep.subr.mxu0 0.0
        %6165 = vmatpush1.msra.mxu0 0.0
        %6166 = vmatprep.subr.mxu0 0.0
        %6167 = vmatpush1.msra.mxu0 0.0
        %6168 = vmatprep.subr.mxu0 0.0
        %6169 = vmatpush1.msra.mxu0 0.0
        %6170 = vmatprep.subr.mxu0 0.0
        %6171 = vmatpush1.msra.mxu0 0.0
        %6172 = vmatprep.subr.mxu0 0.0
        %6173 = vmatpush1.msra.mxu0 0.0
        %6174 = vmatprep.subr.mxu0 0.0
        %6175 = vmatpush1.msra.mxu0 0.0
        %6176 = vmatprep.subr.mxu0 0.0
        %6177 = vmatpush1.msra.mxu0 0.0
        %6178 = vmatprep.subr.mxu0 0.0
        %6179 = vmatpush1.msra.mxu0 0.0
        %6180 = vmatprep.subr.mxu0 0.0
        %6181 = vmatpush1.msra.mxu0 0.0
        %6182 = vmatprep.subr.mxu0 0.0
        %6183 = vmatpush1.msra.mxu0 0.0
        %6184 = vmatprep.subr.mxu0 0.0
        %6185 = vmatpush1.msra.mxu0 %v6149
        %6186 = vmatprep.subr.mxu0 0.0
        %6187 = vmatpush2.msra.mxu0 0.0
        %6188 = vmatprep.subr.mxu0 0.0
        %6189 = vmatpush2.msra.mxu0 0.0
        %6190 = vmatprep.subr.mxu0 0.0
        %6191 = vmatpush2.msra.mxu0 0.0
        %6192 = vmatprep.subr.mxu0 0.0
        %6193 = vmatpush2.msra.mxu0 0.0
        %6194 = vmatprep.subr.mxu0 0.0
        %6195 = vmatpush2.msra.mxu0 0.0
        %6196 = vmatprep.subr.mxu0 0.0
        %6197 = vmatpush2.msra.mxu0 0.0
        %6198 = vmatprep.subr.mxu0 0.0
        %6199 = vmatpush2.msra.mxu0 0.0
        %6200 = vmatprep.subr.mxu0 0.0
        %6201 = vmatpush2.msra.mxu0 0.0
        %6202 = vmatprep.subr.mxu0 0.0
        %6203 = vmatpush2.msra.mxu0 0.0
        %6204 = vmatprep.subr.mxu0 0.0
        %6205 = vmatpush2.msra.mxu0 0.0
        %6206 = vmatprep.subr.mxu0 0.0
        %6207 = vmatpush2.msra.mxu0 0.0
        %6208 = vmatprep.subr.mxu0 0.0
        %6209 = vmatpush2.msra.mxu0 0.0
        %6210 = vmatprep.subr.mxu0 0.0
        %6211 = vmatpush2.msra.mxu0 0.0
        %6212 = vmatprep.subr.mxu0 0.0
        %6213 = vmatpush2.msra.mxu0 0.0
        %6214 = vmatprep.subr.mxu0 0.0
        %6215 = vmatpush2.msra.mxu0 0.0
        %6216 = vmatprep.subr.mxu0 0.0
        %6217 = vmatpush2.msra.mxu0 0.0
        %6218 = vmatprep.mubr.f32.mxu0 0.0
        %6219 = vmatmul.mubr.f32.gmra.mxu0 %v6152
        %v6220 = vpop.f32.mrf.mxu0
        %v6221 = vadd.f32 0.0, %v6220
        %v6222 = vpop.f32.mrf.mxu0
        %6223 = vdwg.mxu0
        %6224 = vrot.lane.b32.xlu0 %v2629, 112
        %v6225 = vpop.permute.xlu0 %6224
        %v6228 = vsel %vm190, %v5991, 0
        %6230 = vmatprep.subr.mxu0 0.0
        %6231 = vmatpush1.msra.mxu0 0.0
        %6232 = vmatprep.subr.mxu0 0.0
        %6233 = vmatpush1.msra.mxu0 0.0
        %6234 = vmatprep.subr.mxu0 0.0
        %6235 = vmatpush1.msra.mxu0 0.0
        %6236 = vmatprep.subr.mxu0 0.0
        %6237 = vmatpush1.msra.mxu0 0.0
        %6238 = vmatprep.subr.mxu0 0.0
        %6239 = vmatpush1.msra.mxu0 0.0
        %6240 = vmatprep.subr.mxu0 0.0
        %6241 = vmatpush1.msra.mxu0 0.0
        %6242 = vmatprep.subr.mxu0 0.0
        %6243 = vmatpush1.msra.mxu0 0.0
        %6244 = vmatprep.subr.mxu0 0.0
        %6245 = vmatpush1.msra.mxu0 0.0
        %6246 = vmatprep.subr.mxu0 0.0
        %6247 = vmatpush1.msra.mxu0 0.0
        %6248 = vmatprep.subr.mxu0 0.0
        %6249 = vmatpush1.msra.mxu0 0.0
        %6250 = vmatprep.subr.mxu0 0.0
        %6251 = vmatpush1.msra.mxu0 0.0
        %6252 = vmatprep.subr.mxu0 0.0
        %6253 = vmatpush1.msra.mxu0 0.0
        %6254 = vmatprep.subr.mxu0 0.0
        %6255 = vmatpush1.msra.mxu0 0.0
        %6256 = vmatprep.subr.mxu0 0.0
        %6257 = vmatpush1.msra.mxu0 0.0
        %6258 = vmatprep.subr.mxu0 0.0
        %6259 = vmatpush1.msra.mxu0 0.0
        %6260 = vmatprep.subr.mxu0 0.0
        %6261 = vmatpush1.msra.mxu0 %v6225
        %6262 = vmatprep.subr.mxu0 0.0
        %6263 = vmatpush2.msra.mxu0 0.0
        %6264 = vmatprep.subr.mxu0 0.0
        %6265 = vmatpush2.msra.mxu0 0.0
        %6266 = vmatprep.subr.mxu0 0.0
        %6267 = vmatpush2.msra.mxu0 0.0
        %6268 = vmatprep.subr.mxu0 0.0
        %6269 = vmatpush2.msra.mxu0 0.0
        %6270 = vmatprep.subr.mxu0 0.0
        %6271 = vmatpush2.msra.mxu0 0.0
        %6272 = vmatprep.subr.mxu0 0.0
        %6273 = vmatpush2.msra.mxu0 0.0
        %6274 = vmatprep.subr.mxu0 0.0
        %6275 = vmatpush2.msra.mxu0 0.0
        %6276 = vmatprep.subr.mxu0 0.0
        %6277 = vmatpush2.msra.mxu0 0.0
        %6278 = vmatprep.subr.mxu0 0.0
        %6279 = vmatpush2.msra.mxu0 0.0
        %6280 = vmatprep.subr.mxu0 0.0
        %6281 = vmatpush2.msra.mxu0 0.0
        %6282 = vmatprep.subr.mxu0 0.0
        %6283 = vmatpush2.msra.mxu0 0.0
        %6284 = vmatprep.subr.mxu0 0.0
        %6285 = vmatpush2.msra.mxu0 0.0
        %6286 = vmatprep.subr.mxu0 0.0
        %6287 = vmatpush2.msra.mxu0 0.0
        %6288 = vmatprep.subr.mxu0 0.0
        %6289 = vmatpush2.msra.mxu0 0.0
        %6290 = vmatprep.subr.mxu0 0.0
        %6291 = vmatpush2.msra.mxu0 0.0
        %6292 = vmatprep.subr.mxu0 0.0
        %6293 = vmatpush2.msra.mxu0 0.0
        %6294 = vmatprep.mubr.f32.mxu0 0.0
        %6295 = vmatmul.mubr.f32.gmra.mxu0 %v6228
        %v6296 = vpop.f32.mrf.mxu0
        %v6297 = vadd.f32 0.0, %v6296
        %v6298 = vpop.f32.mrf.mxu0
        %6299 = vdwg.mxu0
        %6300 = vrot.lane.b32.xlu0 %v2634, 112
        %v6301 = vpop.permute.xlu0 %6300
        %v6304 = vsel %vm190, %v5992, 0
        %6306 = vmatprep.subr.mxu0 0.0
        %6307 = vmatpush1.msra.mxu0 0.0
        %6308 = vmatprep.subr.mxu0 0.0
        %6309 = vmatpush1.msra.mxu0 0.0
        %6310 = vmatprep.subr.mxu0 0.0
        %6311 = vmatpush1.msra.mxu0 0.0
        %6312 = vmatprep.subr.mxu0 0.0
        %6313 = vmatpush1.msra.mxu0 0.0
        %6314 = vmatprep.subr.mxu0 0.0
        %6315 = vmatpush1.msra.mxu0 0.0
        %6316 = vmatprep.subr.mxu0 0.0
        %6317 = vmatpush1.msra.mxu0 0.0
        %6318 = vmatprep.subr.mxu0 0.0
        %6319 = vmatpush1.msra.mxu0 0.0
        %6320 = vmatprep.subr.mxu0 0.0
        %6321 = vmatpush1.msra.mxu0 0.0
        %6322 = vmatprep.subr.mxu0 0.0
        %6323 = vmatpush1.msra.mxu0 0.0
        %6324 = vmatprep.subr.mxu0 0.0
        %6325 = vmatpush1.msra.mxu0 0.0
        %6326 = vmatprep.subr.mxu0 0.0
        %6327 = vmatpush1.msra.mxu0 0.0
        %6328 = vmatprep.subr.mxu0 0.0
        %6329 = vmatpush1.msra.mxu0 0.0
        %6330 = vmatprep.subr.mxu0 0.0
        %6331 = vmatpush1.msra.mxu0 0.0
        %6332 = vmatprep.subr.mxu0 0.0
        %6333 = vmatpush1.msra.mxu0 0.0
        %6334 = vmatprep.subr.mxu0 0.0
        %6335 = vmatpush1.msra.mxu0 0.0
        %6336 = vmatprep.subr.mxu0 0.0
        %6337 = vmatpush1.msra.mxu0 %v6301
        %6338 = vmatprep.subr.mxu0 0.0
        %6339 = vmatpush2.msra.mxu0 0.0
        %6340 = vmatprep.subr.mxu0 0.0
        %6341 = vmatpush2.msra.mxu0 0.0
        %6342 = vmatprep.subr.mxu0 0.0
        %6343 = vmatpush2.msra.mxu0 0.0
        %6344 = vmatprep.subr.mxu0 0.0
        %6345 = vmatpush2.msra.mxu0 0.0
        %6346 = vmatprep.subr.mxu0 0.0
        %6347 = vmatpush2.msra.mxu0 0.0
        %6348 = vmatprep.subr.mxu0 0.0
        %6349 = vmatpush2.msra.mxu0 0.0
        %6350 = vmatprep.subr.mxu0 0.0
        %6351 = vmatpush2.msra.mxu0 0.0
        %6352 = vmatprep.subr.mxu0 0.0
        %6353 = vmatpush2.msra.mxu0 0.0
        %6354 = vmatprep.subr.mxu0 0.0
        %6355 = vmatpush2.msra.mxu0 0.0
        %6356 = vmatprep.subr.mxu0 0.0
        %6357 = vmatpush2.msra.mxu0 0.0
        %6358 = vmatprep.subr.mxu0 0.0
        %6359 = vmatpush2.msra.mxu0 0.0
        %6360 = vmatprep.subr.mxu0 0.0
        %6361 = vmatpush2.msra.mxu0 0.0
        %6362 = vmatprep.subr.mxu0 0.0
        %6363 = vmatpush2.msra.mxu0 0.0
        %6364 = vmatprep.subr.mxu0 0.0
        %6365 = vmatpush2.msra.mxu0 0.0
        %6366 = vmatprep.subr.mxu0 0.0
        %6367 = vmatpush2.msra.mxu0 0.0
        %6368 = vmatprep.subr.mxu0 0.0
        %6369 = vmatpush2.msra.mxu0 0.0
        %6370 = vmatprep.mubr.f32.mxu0 0.0
        %6371 = vmatmul.mubr.f32.gmra.mxu0 %v6304
        %v6372 = vpop.f32.mrf.mxu0
        %v6373 = vadd.f32 0.0, %v6372
        %v6374 = vpop.f32.mrf.mxu0
        %6375 = vdwg.mxu0
        %6376 = vrot.lane.b32.xlu0 %v2639, 112
        %v6377 = vpop.permute.xlu0 %6376
        %v6380 = vsel %vm190, %v5993, 0
        %6382 = vmatprep.subr.mxu0 0.0
        %6383 = vmatpush1.msra.mxu0 0.0
        %6384 = vmatprep.subr.mxu0 0.0
        %6385 = vmatpush1.msra.mxu0 0.0
        %6386 = vmatprep.subr.mxu0 0.0
        %6387 = vmatpush1.msra.mxu0 0.0
        %6388 = vmatprep.subr.mxu0 0.0
        %6389 = vmatpush1.msra.mxu0 0.0
        %6390 = vmatprep.subr.mxu0 0.0
        %6391 = vmatpush1.msra.mxu0 0.0
        %6392 = vmatprep.subr.mxu0 0.0
        %6393 = vmatpush1.msra.mxu0 0.0
        %6394 = vmatprep.subr.mxu0 0.0
        %6395 = vmatpush1.msra.mxu0 0.0
        %6396 = vmatprep.subr.mxu0 0.0
        %6397 = vmatpush1.msra.mxu0 0.0
        %6398 = vmatprep.subr.mxu0 0.0
        %6399 = vmatpush1.msra.mxu0 0.0
        %6400 = vmatprep.subr.mxu0 0.0
        %6401 = vmatpush1.msra.mxu0 0.0
        %6402 = vmatprep.subr.mxu0 0.0
        %6403 = vmatpush1.msra.mxu0 0.0
        %6404 = vmatprep.subr.mxu0 0.0
        %6405 = vmatpush1.msra.mxu0 0.0
        %6406 = vmatprep.subr.mxu0 0.0
        %6407 = vmatpush1.msra.mxu0 0.0
        %6408 = vmatprep.subr.mxu0 0.0
        %6409 = vmatpush1.msra.mxu0 0.0
        %6410 = vmatprep.subr.mxu0 0.0
        %6411 = vmatpush1.msra.mxu0 0.0
        %6412 = vmatprep.subr.mxu0 0.0
        %6413 = vmatpush1.msra.mxu0 %v6377
        %6414 = vmatprep.subr.mxu0 0.0
        %6415 = vmatpush2.msra.mxu0 0.0
        %6416 = vmatprep.subr.mxu0 0.0
        %6417 = vmatpush2.msra.mxu0 0.0
        %6418 = vmatprep.subr.mxu0 0.0
        %6419 = vmatpush2.msra.mxu0 0.0
        %6420 = vmatprep.subr.mxu0 0.0
        %6421 = vmatpush2.msra.mxu0 0.0
        %6422 = vmatprep.subr.mxu0 0.0
        %6423 = vmatpush2.msra.mxu0 0.0
        %6424 = vmatprep.subr.mxu0 0.0
        %6425 = vmatpush2.msra.mxu0 0.0
        %6426 = vmatprep.subr.mxu0 0.0
        %6427 = vmatpush2.msra.mxu0 0.0
        %6428 = vmatprep.subr.mxu0 0.0
        %6429 = vmatpush2.msra.mxu0 0.0
        %6430 = vmatprep.subr.mxu0 0.0
        %6431 = vmatpush2.msra.mxu0 0.0
        %6432 = vmatprep.subr.mxu0 0.0
        %6433 = vmatpush2.msra.mxu0 0.0
        %6434 = vmatprep.subr.mxu0 0.0
        %6435 = vmatpush2.msra.mxu0 0.0
        %6436 = vmatprep.subr.mxu0 0.0
        %6437 = vmatpush2.msra.mxu0 0.0
        %6438 = vmatprep.subr.mxu0 0.0
        %6439 = vmatpush2.msra.mxu0 0.0
        %6440 = vmatprep.subr.mxu0 0.0
        %6441 = vmatpush2.msra.mxu0 0.0
        %6442 = vmatprep.subr.mxu0 0.0
        %6443 = vmatpush2.msra.mxu0 0.0
        %6444 = vmatprep.subr.mxu0 0.0
        %6445 = vmatpush2.msra.mxu0 0.0
        %6446 = vmatprep.mubr.f32.mxu0 0.0
        %6447 = vmatmul.mubr.f32.gmra.mxu0 %v6380
        %v6448 = vpop.f32.mrf.mxu0
        %v6449 = vadd.f32 0.0, %v6448
        %v6450 = vpop.f32.mrf.mxu0
        %6451 = vdwg.mxu0
        %6452 = vrot.lane.b32.xlu0 %v2644, 112
        %v6453 = vpop.permute.xlu0 %6452
        %v6456 = vsel %vm190, %v5994, 0
        %6458 = vmatprep.subr.mxu0 0.0
        %6459 = vmatpush1.msra.mxu0 0.0
        %6460 = vmatprep.subr.mxu0 0.0
        %6461 = vmatpush1.msra.mxu0 0.0
        %6462 = vmatprep.subr.mxu0 0.0
        %6463 = vmatpush1.msra.mxu0 0.0
        %6464 = vmatprep.subr.mxu0 0.0
        %6465 = vmatpush1.msra.mxu0 0.0
        %6466 = vmatprep.subr.mxu0 0.0
        %6467 = vmatpush1.msra.mxu0 0.0
        %6468 = vmatprep.subr.mxu0 0.0
        %6469 = vmatpush1.msra.mxu0 0.0
        %6470 = vmatprep.subr.mxu0 0.0
        %6471 = vmatpush1.msra.mxu0 0.0
        %6472 = vmatprep.subr.mxu0 0.0
        %6473 = vmatpush1.msra.mxu0 0.0
        %6474 = vmatprep.subr.mxu0 0.0
        %6475 = vmatpush1.msra.mxu0 0.0
        %6476 = vmatprep.subr.mxu0 0.0
        %6477 = vmatpush1.msra.mxu0 0.0
        %6478 = vmatprep.subr.mxu0 0.0
        %6479 = vmatpush1.msra.mxu0 0.0
        %6480 = vmatprep.subr.mxu0 0.0
        %6481 = vmatpush1.msra.mxu0 0.0
        %6482 = vmatprep.subr.mxu0 0.0
        %6483 = vmatpush1.msra.mxu0 0.0
        %6484 = vmatprep.subr.mxu0 0.0
        %6485 = vmatpush1.msra.mxu0 0.0
        %6486 = vmatprep.subr.mxu0 0.0
        %6487 = vmatpush1.msra.mxu0 0.0
        %6488 = vmatprep.subr.mxu0 0.0
        %6489 = vmatpush1.msra.mxu0 %v6453
        %6490 = vmatprep.subr.mxu0 0.0
        %6491 = vmatpush2.msra.mxu0 0.0
        %6492 = vmatprep.subr.mxu0 0.0
        %6493 = vmatpush2.msra.mxu0 0.0
        %6494 = vmatprep.subr.mxu0 0.0
        %6495 = vmatpush2.msra.mxu0 0.0
        %6496 = vmatprep.subr.mxu0 0.0
        %6497 = vmatpush2.msra.mxu0 0.0
        %6498 = vmatprep.subr.mxu0 0.0
        %6499 = vmatpush2.msra.mxu0 0.0
        %6500 = vmatprep.subr.mxu0 0.0
        %6501 = vmatpush2.msra.mxu0 0.0
        %6502 = vmatprep.subr.mxu0 0.0
        %6503 = vmatpush2.msra.mxu0 0.0
        %6504 = vmatprep.subr.mxu0 0.0
        %6505 = vmatpush2.msra.mxu0 0.0
        %6506 = vmatprep.subr.mxu0 0.0
        %6507 = vmatpush2.msra.mxu0 0.0
        %6508 = vmatprep.subr.mxu0 0.0
        %6509 = vmatpush2.msra.mxu0 0.0
        %6510 = vmatprep.subr.mxu0 0.0
        %6511 = vmatpush2.msra.mxu0 0.0
        %6512 = vmatprep.subr.mxu0 0.0
        %6513 = vmatpush2.msra.mxu0 0.0
        %6514 = vmatprep.subr.mxu0 0.0
        %6515 = vmatpush2.msra.mxu0 0.0
        %6516 = vmatprep.subr.mxu0 0.0
        %6517 = vmatpush2.msra.mxu0 0.0
        %6518 = vmatprep.subr.mxu0 0.0
        %6519 = vmatpush2.msra.mxu0 0.0
        %6520 = vmatprep.subr.mxu0 0.0
        %6521 = vmatpush2.msra.mxu0 0.0
        %6522 = vmatprep.mubr.f32.mxu0 0.0
        %6523 = vmatmul.mubr.f32.gmra.mxu0 %v6456
        %v6524 = vpop.f32.mrf.mxu0
        %v6525 = vadd.f32 0.0, %v6524
        %v6526 = vpop.f32.mrf.mxu0
        %6527 = vdwg.mxu0
        %6528 = vrot.lane.b32.xlu0 %v2649, 112
        %v6529 = vpop.permute.xlu0 %6528
        %v6532 = vsel %vm190, %v5995, 0
        %6534 = vmatprep.subr.mxu0 0.0
        %6535 = vmatpush1.msra.mxu0 0.0
        %6536 = vmatprep.subr.mxu0 0.0
        %6537 = vmatpush1.msra.mxu0 0.0
        %6538 = vmatprep.subr.mxu0 0.0
        %6539 = vmatpush1.msra.mxu0 0.0
        %6540 = vmatprep.subr.mxu0 0.0
        %6541 = vmatpush1.msra.mxu0 0.0
        %6542 = vmatprep.subr.mxu0 0.0
        %6543 = vmatpush1.msra.mxu0 0.0
        %6544 = vmatprep.subr.mxu0 0.0
        %6545 = vmatpush1.msra.mxu0 0.0
        %6546 = vmatprep.subr.mxu0 0.0
        %6547 = vmatpush1.msra.mxu0 0.0
        %6548 = vmatprep.subr.mxu0 0.0
        %6549 = vmatpush1.msra.mxu0 0.0
        %6550 = vmatprep.subr.mxu0 0.0
        %6551 = vmatpush1.msra.mxu0 0.0
        %6552 = vmatprep.subr.mxu0 0.0
        %6553 = vmatpush1.msra.mxu0 0.0
        %6554 = vmatprep.subr.mxu0 0.0
        %6555 = vmatpush1.msra.mxu0 0.0
        %6556 = vmatprep.subr.mxu0 0.0
        %6557 = vmatpush1.msra.mxu0 0.0
        %6558 = vmatprep.subr.mxu0 0.0
        %6559 = vmatpush1.msra.mxu0 0.0
        %6560 = vmatprep.subr.mxu0 0.0
        %6561 = vmatpush1.msra.mxu0 0.0
        %6562 = vmatprep.subr.mxu0 0.0
        %6563 = vmatpush1.msra.mxu0 0.0
        %6564 = vmatprep.subr.mxu0 0.0
        %6565 = vmatpush1.msra.mxu0 %v6529
        %6566 = vmatprep.subr.mxu0 0.0
        %6567 = vmatpush2.msra.mxu0 0.0
        %6568 = vmatprep.subr.mxu0 0.0
        %6569 = vmatpush2.msra.mxu0 0.0
        %6570 = vmatprep.subr.mxu0 0.0
        %6571 = vmatpush2.msra.mxu0 0.0
        %6572 = vmatprep.subr.mxu0 0.0
        %6573 = vmatpush2.msra.mxu0 0.0
        %6574 = vmatprep.subr.mxu0 0.0
        %6575 = vmatpush2.msra.mxu0 0.0
        %6576 = vmatprep.subr.mxu0 0.0
        %6577 = vmatpush2.msra.mxu0 0.0
        %6578 = vmatprep.subr.mxu0 0.0
        %6579 = vmatpush2.msra.mxu0 0.0
        %6580 = vmatprep.subr.mxu0 0.0
        %6581 = vmatpush2.msra.mxu0 0.0
        %6582 = vmatprep.subr.mxu0 0.0
        %6583 = vmatpush2.msra.mxu0 0.0
        %6584 = vmatprep.subr.mxu0 0.0
        %6585 = vmatpush2.msra.mxu0 0.0
        %6586 = vmatprep.subr.mxu0 0.0
        %6587 = vmatpush2.msra.mxu0 0.0
        %6588 = vmatprep.subr.mxu0 0.0
        %6589 = vmatpush2.msra.mxu0 0.0
        %6590 = vmatprep.subr.mxu0 0.0
        %6591 = vmatpush2.msra.mxu0 0.0
        %6592 = vmatprep.subr.mxu0 0.0
        %6593 = vmatpush2.msra.mxu0 0.0
        %6594 = vmatprep.subr.mxu0 0.0
        %6595 = vmatpush2.msra.mxu0 0.0
        %6596 = vmatprep.subr.mxu0 0.0
        %6597 = vmatpush2.msra.mxu0 0.0
        %6598 = vmatprep.mubr.f32.mxu0 0.0
        %6599 = vmatmul.mubr.f32.gmra.mxu0 %v6532
        %v6600 = vpop.f32.mrf.mxu0
        %v6601 = vadd.f32 0.0, %v6600
        %v6602 = vpop.f32.mrf.mxu0
        %6603 = vdwg.mxu0
        %6604 = vrot.lane.b32.xlu0 %v2382, 104
        %v6605 = vpop.permute.xlu0 %6604
        %6606 = vrot.lane.b32.xlu0 %v2498, 104
        %v6607 = vpop.permute.xlu0 %6606
        %v6608 = vsel %vm190, %v6605, 0
        %v6610 = vsel %vm190, %v6607, 0
        %6612 = vmatprep.subr.mxu0 0.0
        %6613 = vmatpush1.xpose.msra.mxu0 0.0
        %6614 = vmatprep.subr.mxu0 0.0
        %6615 = vmatpush1.xpose.msra.mxu0 0.0
        %6616 = vmatprep.subr.mxu0 0.0
        %6617 = vmatpush1.xpose.msra.mxu0 0.0
        %6618 = vmatprep.subr.mxu0 0.0
        %6619 = vmatpush1.xpose.msra.mxu0 0.0
        %6620 = vmatprep.subr.mxu0 0.0
        %6621 = vmatpush1.xpose.msra.mxu0 0.0
        %6622 = vmatprep.subr.mxu0 0.0
        %6623 = vmatpush1.xpose.msra.mxu0 0.0
        %6624 = vmatprep.subr.mxu0 0.0
        %6625 = vmatpush1.xpose.msra.mxu0 0.0
        %6626 = vmatprep.subr.mxu0 0.0
        %6627 = vmatpush1.xpose.msra.mxu0 0.0
        %6628 = vmatprep.subr.mxu0 0.0
        %6629 = vmatpush1.xpose.msra.mxu0 0.0
        %6630 = vmatprep.subr.mxu0 0.0
        %6631 = vmatpush1.xpose.msra.mxu0 0.0
        %6632 = vmatprep.subr.mxu0 0.0
        %6633 = vmatpush1.xpose.msra.mxu0 0.0
        %6634 = vmatprep.subr.mxu0 0.0
        %6635 = vmatpush1.xpose.msra.mxu0 0.0
        %6636 = vmatprep.subr.mxu0 0.0
        %6637 = vmatpush1.xpose.msra.mxu0 0.0
        %6638 = vmatprep.subr.mxu0 0.0
        %6639 = vmatpush1.xpose.msra.mxu0 0.0
        %6640 = vmatprep.subr.mxu0 0.0
        %6641 = vmatpush1.xpose.msra.mxu0 0.0
        %6642 = vmatprep.subr.mxu0 0.0
        %6643 = vmatpush1.xpose.msra.mxu0 %v6610
        %6644 = vmatprep.subr.mxu0 0.0
        %6645 = vmatpush2.xpose.msra.mxu0 0.0
        %6646 = vmatprep.subr.mxu0 0.0
        %6647 = vmatpush2.xpose.msra.mxu0 0.0
        %6648 = vmatprep.subr.mxu0 0.0
        %6649 = vmatpush2.xpose.msra.mxu0 0.0
        %6650 = vmatprep.subr.mxu0 0.0
        %6651 = vmatpush2.xpose.msra.mxu0 0.0
        %6652 = vmatprep.subr.mxu0 0.0
        %6653 = vmatpush2.xpose.msra.mxu0 0.0
        %6654 = vmatprep.subr.mxu0 0.0
        %6655 = vmatpush2.xpose.msra.mxu0 0.0
        %6656 = vmatprep.subr.mxu0 0.0
        %6657 = vmatpush2.xpose.msra.mxu0 0.0
        %6658 = vmatprep.subr.mxu0 0.0
        %6659 = vmatpush2.xpose.msra.mxu0 0.0
        %6660 = vmatprep.subr.mxu0 0.0
        %6661 = vmatpush2.xpose.msra.mxu0 0.0
        %6662 = vmatprep.subr.mxu0 0.0
        %6663 = vmatpush2.xpose.msra.mxu0 0.0
        %6664 = vmatprep.subr.mxu0 0.0
        %6665 = vmatpush2.xpose.msra.mxu0 0.0
        %6666 = vmatprep.subr.mxu0 0.0
        %6667 = vmatpush2.xpose.msra.mxu0 0.0
        %6668 = vmatprep.subr.mxu0 0.0
        %6669 = vmatpush2.xpose.msra.mxu0 0.0
        %6670 = vmatprep.subr.mxu0 0.0
        %6671 = vmatpush2.xpose.msra.mxu0 0.0
        %6672 = vmatprep.subr.mxu0 0.0
        %6673 = vmatpush2.xpose.msra.mxu0 0.0
        %6674 = vmatprep.subr.mxu0 0.0
        %6675 = vmatpush2.xpose.msra.mxu0 0.0
        %6676 = vmatprep.mubr.f32.mxu0 0.0
        %6677 = vmatmul.mubr.f32.gmra.mxu0 %v6608
        %v6678 = vpop.f32.mrf.mxu0
        %v6679 = vadd.f32 0.0, %v6678
        %v6680 = vpop.f32.mrf.mxu0
        %6681 = vdwg.mxu0
        %6682 = vrot.lane.b32.xlu0 %v2387, 104
        %v6683 = vpop.permute.xlu0 %6682
        %6684 = vrot.lane.b32.xlu0 %v2503, 104
        %v6685 = vpop.permute.xlu0 %6684
        %v6686 = vsel %vm190, %v6683, 0
        %v6688 = vsel %vm190, %v6685, 0
        %6690 = vmatprep.subr.mxu0 0.0
        %6691 = vmatpush1.xpose.msra.mxu0 0.0
        %6692 = vmatprep.subr.mxu0 0.0
        %6693 = vmatpush1.xpose.msra.mxu0 0.0
        %6694 = vmatprep.subr.mxu0 0.0
        %6695 = vmatpush1.xpose.msra.mxu0 0.0
        %6696 = vmatprep.subr.mxu0 0.0
        %6697 = vmatpush1.xpose.msra.mxu0 0.0
        %6698 = vmatprep.subr.mxu0 0.0
        %6699 = vmatpush1.xpose.msra.mxu0 0.0
        %6700 = vmatprep.subr.mxu0 0.0
        %6701 = vmatpush1.xpose.msra.mxu0 0.0
        %6702 = vmatprep.subr.mxu0 0.0
        %6703 = vmatpush1.xpose.msra.mxu0 0.0
        %6704 = vmatprep.subr.mxu0 0.0
        %6705 = vmatpush1.xpose.msra.mxu0 0.0
        %6706 = vmatprep.subr.mxu0 0.0
        %6707 = vmatpush1.xpose.msra.mxu0 0.0
        %6708 = vmatprep.subr.mxu0 0.0
        %6709 = vmatpush1.xpose.msra.mxu0 0.0
        %6710 = vmatprep.subr.mxu0 0.0
        %6711 = vmatpush1.xpose.msra.mxu0 0.0
        %6712 = vmatprep.subr.mxu0 0.0
        %6713 = vmatpush1.xpose.msra.mxu0 0.0
        %6714 = vmatprep.subr.mxu0 0.0
        %6715 = vmatpush1.xpose.msra.mxu0 0.0
        %6716 = vmatprep.subr.mxu0 0.0
        %6717 = vmatpush1.xpose.msra.mxu0 0.0
        %6718 = vmatprep.subr.mxu0 0.0
        %6719 = vmatpush1.xpose.msra.mxu0 0.0
        %6720 = vmatprep.subr.mxu0 0.0
        %6721 = vmatpush1.xpose.msra.mxu0 %v6688
        %6722 = vmatprep.subr.mxu0 0.0
        %6723 = vmatpush2.xpose.msra.mxu0 0.0
        %6724 = vmatprep.subr.mxu0 0.0
        %6725 = vmatpush2.xpose.msra.mxu0 0.0
        %6726 = vmatprep.subr.mxu0 0.0
        %6727 = vmatpush2.xpose.msra.mxu0 0.0
        %6728 = vmatprep.subr.mxu0 0.0
        %6729 = vmatpush2.xpose.msra.mxu0 0.0
        %6730 = vmatprep.subr.mxu0 0.0
        %6731 = vmatpush2.xpose.msra.mxu0 0.0
        %6732 = vmatprep.subr.mxu0 0.0
        %6733 = vmatpush2.xpose.msra.mxu0 0.0
        %6734 = vmatprep.subr.mxu0 0.0
        %6735 = vmatpush2.xpose.msra.mxu0 0.0
        %6736 = vmatprep.subr.mxu0 0.0
        %6737 = vmatpush2.xpose.msra.mxu0 0.0
        %6738 = vmatprep.subr.mxu0 0.0
        %6739 = vmatpush2.xpose.msra.mxu0 0.0
        %6740 = vmatprep.subr.mxu0 0.0
        %6741 = vmatpush2.xpose.msra.mxu0 0.0
        %6742 = vmatprep.subr.mxu0 0.0
        %6743 = vmatpush2.xpose.msra.mxu0 0.0
        %6744 = vmatprep.subr.mxu0 0.0
        %6745 = vmatpush2.xpose.msra.mxu0 0.0
        %6746 = vmatprep.subr.mxu0 0.0
        %6747 = vmatpush2.xpose.msra.mxu0 0.0
        %6748 = vmatprep.subr.mxu0 0.0
        %6749 = vmatpush2.xpose.msra.mxu0 0.0
        %6750 = vmatprep.subr.mxu0 0.0
        %6751 = vmatpush2.xpose.msra.mxu0 0.0
        %6752 = vmatprep.subr.mxu0 0.0
        %6753 = vmatpush2.xpose.msra.mxu0 0.0
        %6754 = vmatprep.mubr.f32.mxu0 0.0
        %6755 = vmatmul.mubr.f32.gmra.mxu0 %v6686
        %v6756 = vpop.f32.mrf.mxu0
        %v6757 = vadd.f32 0.0, %v6756
        %v6758 = vpop.f32.mrf.mxu0
        %6759 = vdwg.mxu0
        %6760 = vrot.lane.b32.xlu0 %v2392, 104
        %v6761 = vpop.permute.xlu0 %6760
        %6762 = vrot.lane.b32.xlu0 %v2508, 104
        %v6763 = vpop.permute.xlu0 %6762
        %v6764 = vsel %vm190, %v6761, 0
        %v6766 = vsel %vm190, %v6763, 0
        %6768 = vmatprep.subr.mxu0 0.0
        %6769 = vmatpush1.xpose.msra.mxu0 0.0
        %6770 = vmatprep.subr.mxu0 0.0
        %6771 = vmatpush1.xpose.msra.mxu0 0.0
        %6772 = vmatprep.subr.mxu0 0.0
        %6773 = vmatpush1.xpose.msra.mxu0 0.0
        %6774 = vmatprep.subr.mxu0 0.0
        %6775 = vmatpush1.xpose.msra.mxu0 0.0
        %6776 = vmatprep.subr.mxu0 0.0
        %6777 = vmatpush1.xpose.msra.mxu0 0.0
        %6778 = vmatprep.subr.mxu0 0.0
        %6779 = vmatpush1.xpose.msra.mxu0 0.0
        %6780 = vmatprep.subr.mxu0 0.0
        %6781 = vmatpush1.xpose.msra.mxu0 0.0
        %6782 = vmatprep.subr.mxu0 0.0
        %6783 = vmatpush1.xpose.msra.mxu0 0.0
        %6784 = vmatprep.subr.mxu0 0.0
        %6785 = vmatpush1.xpose.msra.mxu0 0.0
        %6786 = vmatprep.subr.mxu0 0.0
        %6787 = vmatpush1.xpose.msra.mxu0 0.0
        %6788 = vmatprep.subr.mxu0 0.0
        %6789 = vmatpush1.xpose.msra.mxu0 0.0
        %6790 = vmatprep.subr.mxu0 0.0
        %6791 = vmatpush1.xpose.msra.mxu0 0.0
        %6792 = vmatprep.subr.mxu0 0.0
        %6793 = vmatpush1.xpose.msra.mxu0 0.0
        %6794 = vmatprep.subr.mxu0 0.0
        %6795 = vmatpush1.xpose.msra.mxu0 0.0
        %6796 = vmatprep.subr.mxu0 0.0
        %6797 = vmatpush1.xpose.msra.mxu0 0.0
        %6798 = vmatprep.subr.mxu0 0.0
        %6799 = vmatpush1.xpose.msra.mxu0 %v6766
        %6800 = vmatprep.subr.mxu0 0.0
        %6801 = vmatpush2.xpose.msra.mxu0 0.0
        %6802 = vmatprep.subr.mxu0 0.0
        %6803 = vmatpush2.xpose.msra.mxu0 0.0
        %6804 = vmatprep.subr.mxu0 0.0
        %6805 = vmatpush2.xpose.msra.mxu0 0.0
        %6806 = vmatprep.subr.mxu0 0.0
        %6807 = vmatpush2.xpose.msra.mxu0 0.0
        %6808 = vmatprep.subr.mxu0 0.0
        %6809 = vmatpush2.xpose.msra.mxu0 0.0
        %6810 = vmatprep.subr.mxu0 0.0
        %6811 = vmatpush2.xpose.msra.mxu0 0.0
        %6812 = vmatprep.subr.mxu0 0.0
        %6813 = vmatpush2.xpose.msra.mxu0 0.0
        %6814 = vmatprep.subr.mxu0 0.0
        %6815 = vmatpush2.xpose.msra.mxu0 0.0
        %6816 = vmatprep.subr.mxu0 0.0
        %6817 = vmatpush2.xpose.msra.mxu0 0.0
        %6818 = vmatprep.subr.mxu0 0.0
        %6819 = vmatpush2.xpose.msra.mxu0 0.0
        %6820 = vmatprep.subr.mxu0 0.0
        %6821 = vmatpush2.xpose.msra.mxu0 0.0
        %6822 = vmatprep.subr.mxu0 0.0
        %6823 = vmatpush2.xpose.msra.mxu0 0.0
        %6824 = vmatprep.subr.mxu0 0.0
        %6825 = vmatpush2.xpose.msra.mxu0 0.0
        %6826 = vmatprep.subr.mxu0 0.0
        %6827 = vmatpush2.xpose.msra.mxu0 0.0
        %6828 = vmatprep.subr.mxu0 0.0
        %6829 = vmatpush2.xpose.msra.mxu0 0.0
        %6830 = vmatprep.subr.mxu0 0.0
        %6831 = vmatpush2.xpose.msra.mxu0 0.0
        %6832 = vmatprep.mubr.f32.mxu0 0.0
        %6833 = vmatmul.mubr.f32.gmra.mxu0 %v6764
        %v6834 = vpop.f32.mrf.mxu0
        %v6835 = vadd.f32 0.0, %v6834
        %v6836 = vpop.f32.mrf.mxu0
        %6837 = vdwg.mxu0
        %6838 = vrot.lane.b32.xlu0 %v2397, 104
        %v6839 = vpop.permute.xlu0 %6838
        %6840 = vrot.lane.b32.xlu0 %v2513, 104
        %v6841 = vpop.permute.xlu0 %6840
        %v6842 = vsel %vm190, %v6839, 0
        %v6844 = vsel %vm190, %v6841, 0
        %6846 = vmatprep.subr.mxu0 0.0
        %6847 = vmatpush1.xpose.msra.mxu0 0.0
        %6848 = vmatprep.subr.mxu0 0.0
        %6849 = vmatpush1.xpose.msra.mxu0 0.0
        %6850 = vmatprep.subr.mxu0 0.0
        %6851 = vmatpush1.xpose.msra.mxu0 0.0
        %6852 = vmatprep.subr.mxu0 0.0
        %6853 = vmatpush1.xpose.msra.mxu0 0.0
        %6854 = vmatprep.subr.mxu0 0.0
        %6855 = vmatpush1.xpose.msra.mxu0 0.0
        %6856 = vmatprep.subr.mxu0 0.0
        %6857 = vmatpush1.xpose.msra.mxu0 0.0
        %6858 = vmatprep.subr.mxu0 0.0
        %6859 = vmatpush1.xpose.msra.mxu0 0.0
        %6860 = vmatprep.subr.mxu0 0.0
        %6861 = vmatpush1.xpose.msra.mxu0 0.0
        %6862 = vmatprep.subr.mxu0 0.0
        %6863 = vmatpush1.xpose.msra.mxu0 0.0
        %6864 = vmatprep.subr.mxu0 0.0
        %6865 = vmatpush1.xpose.msra.mxu0 0.0
        %6866 = vmatprep.subr.mxu0 0.0
        %6867 = vmatpush1.xpose.msra.mxu0 0.0
        %6868 = vmatprep.subr.mxu0 0.0
        %6869 = vmatpush1.xpose.msra.mxu0 0.0
        %6870 = vmatprep.subr.mxu0 0.0
        %6871 = vmatpush1.xpose.msra.mxu0 0.0
        %6872 = vmatprep.subr.mxu0 0.0
        %6873 = vmatpush1.xpose.msra.mxu0 0.0
        %6874 = vmatprep.subr.mxu0 0.0
        %6875 = vmatpush1.xpose.msra.mxu0 0.0
        %6876 = vmatprep.subr.mxu0 0.0
        %6877 = vmatpush1.xpose.msra.mxu0 %v6844
        %6878 = vmatprep.subr.mxu0 0.0
        %6879 = vmatpush2.xpose.msra.mxu0 0.0
        %6880 = vmatprep.subr.mxu0 0.0
        %6881 = vmatpush2.xpose.msra.mxu0 0.0
        %6882 = vmatprep.subr.mxu0 0.0
        %6883 = vmatpush2.xpose.msra.mxu0 0.0
        %6884 = vmatprep.subr.mxu0 0.0
        %6885 = vmatpush2.xpose.msra.mxu0 0.0
        %6886 = vmatprep.subr.mxu0 0.0
        %6887 = vmatpush2.xpose.msra.mxu0 0.0
        %6888 = vmatprep.subr.mxu0 0.0
        %6889 = vmatpush2.xpose.msra.mxu0 0.0
        %6890 = vmatprep.subr.mxu0 0.0
        %6891 = vmatpush2.xpose.msra.mxu0 0.0
        %6892 = vmatprep.subr.mxu0 0.0
        %6893 = vmatpush2.xpose.msra.mxu0 0.0
        %6894 = vmatprep.subr.mxu0 0.0
        %6895 = vmatpush2.xpose.msra.mxu0 0.0
        %6896 = vmatprep.subr.mxu0 0.0
        %6897 = vmatpush2.xpose.msra.mxu0 0.0
        %6898 = vmatprep.subr.mxu0 0.0
        %6899 = vmatpush2.xpose.msra.mxu0 0.0
        %6900 = vmatprep.subr.mxu0 0.0
        %6901 = vmatpush2.xpose.msra.mxu0 0.0
        %6902 = vmatprep.subr.mxu0 0.0
        %6903 = vmatpush2.xpose.msra.mxu0 0.0
        %6904 = vmatprep.subr.mxu0 0.0
        %6905 = vmatpush2.xpose.msra.mxu0 0.0
        %6906 = vmatprep.subr.mxu0 0.0
        %6907 = vmatpush2.xpose.msra.mxu0 0.0
        %6908 = vmatprep.subr.mxu0 0.0
        %6909 = vmatpush2.xpose.msra.mxu0 0.0
        %6910 = vmatprep.mubr.f32.mxu0 0.0
        %6911 = vmatmul.mubr.f32.gmra.mxu0 %v6842
        %v6912 = vpop.f32.mrf.mxu0
        %v6913 = vadd.f32 0.0, %v6912
        %v6914 = vpop.f32.mrf.mxu0
        %6915 = vdwg.mxu0
        %6916 = vrot.lane.b32.xlu0 %v2402, 104
        %v6917 = vpop.permute.xlu0 %6916
        %6918 = vrot.lane.b32.xlu0 %v2518, 104
        %v6919 = vpop.permute.xlu0 %6918
        %v6920 = vsel %vm190, %v6917, 0
        %v6922 = vsel %vm190, %v6919, 0
        %6924 = vmatprep.subr.mxu0 0.0
        %6925 = vmatpush1.xpose.msra.mxu0 0.0
        %6926 = vmatprep.subr.mxu0 0.0
        %6927 = vmatpush1.xpose.msra.mxu0 0.0
        %6928 = vmatprep.subr.mxu0 0.0
        %6929 = vmatpush1.xpose.msra.mxu0 0.0
        %6930 = vmatprep.subr.mxu0 0.0
        %6931 = vmatpush1.xpose.msra.mxu0 0.0
        %6932 = vmatprep.subr.mxu0 0.0
        %6933 = vmatpush1.xpose.msra.mxu0 0.0
        %6934 = vmatprep.subr.mxu0 0.0
        %6935 = vmatpush1.xpose.msra.mxu0 0.0
        %6936 = vmatprep.subr.mxu0 0.0
        %6937 = vmatpush1.xpose.msra.mxu0 0.0
        %6938 = vmatprep.subr.mxu0 0.0
        %6939 = vmatpush1.xpose.msra.mxu0 0.0
        %6940 = vmatprep.subr.mxu0 0.0
        %6941 = vmatpush1.xpose.msra.mxu0 0.0
        %6942 = vmatprep.subr.mxu0 0.0
        %6943 = vmatpush1.xpose.msra.mxu0 0.0
        %6944 = vmatprep.subr.mxu0 0.0
        %6945 = vmatpush1.xpose.msra.mxu0 0.0
        %6946 = vmatprep.subr.mxu0 0.0
        %6947 = vmatpush1.xpose.msra.mxu0 0.0
        %6948 = vmatprep.subr.mxu0 0.0
        %6949 = vmatpush1.xpose.msra.mxu0 0.0
        %6950 = vmatprep.subr.mxu0 0.0
        %6951 = vmatpush1.xpose.msra.mxu0 0.0
        %6952 = vmatprep.subr.mxu0 0.0
        %6953 = vmatpush1.xpose.msra.mxu0 0.0
        %6954 = vmatprep.subr.mxu0 0.0
        %6955 = vmatpush1.xpose.msra.mxu0 %v6922
        %6956 = vmatprep.subr.mxu0 0.0
        %6957 = vmatpush2.xpose.msra.mxu0 0.0
        %6958 = vmatprep.subr.mxu0 0.0
        %6959 = vmatpush2.xpose.msra.mxu0 0.0
        %6960 = vmatprep.subr.mxu0 0.0
        %6961 = vmatpush2.xpose.msra.mxu0 0.0
        %6962 = vmatprep.subr.mxu0 0.0
        %6963 = vmatpush2.xpose.msra.mxu0 0.0
        %6964 = vmatprep.subr.mxu0 0.0
        %6965 = vmatpush2.xpose.msra.mxu0 0.0
        %6966 = vmatprep.subr.mxu0 0.0
        %6967 = vmatpush2.xpose.msra.mxu0 0.0
        %6968 = vmatprep.subr.mxu0 0.0
        %6969 = vmatpush2.xpose.msra.mxu0 0.0
        %6970 = vmatprep.subr.mxu0 0.0
        %6971 = vmatpush2.xpose.msra.mxu0 0.0
        %6972 = vmatprep.subr.mxu0 0.0
        %6973 = vmatpush2.xpose.msra.mxu0 0.0
        %6974 = vmatprep.subr.mxu0 0.0
        %6975 = vmatpush2.xpose.msra.mxu0 0.0
        %6976 = vmatprep.subr.mxu0 0.0
        %6977 = vmatpush2.xpose.msra.mxu0 0.0
        %6978 = vmatprep.subr.mxu0 0.0
        %6979 = vmatpush2.xpose.msra.mxu0 0.0
        %6980 = vmatprep.subr.mxu0 0.0
        %6981 = vmatpush2.xpose.msra.mxu0 0.0
        %6982 = vmatprep.subr.mxu0 0.0
        %6983 = vmatpush2.xpose.msra.mxu0 0.0
        %6984 = vmatprep.subr.mxu0 0.0
        %6985 = vmatpush2.xpose.msra.mxu0 0.0
        %6986 = vmatprep.subr.mxu0 0.0
        %6987 = vmatpush2.xpose.msra.mxu0 0.0
        %6988 = vmatprep.mubr.f32.mxu0 0.0
        %6989 = vmatmul.mubr.f32.gmra.mxu0 %v6920
        %v6990 = vpop.f32.mrf.mxu0
        %v6991 = vadd.f32 0.0, %v6990
        %v6992 = vpop.f32.mrf.mxu0
        %6993 = vdwg.mxu0
        %6994 = vrot.lane.b32.xlu0 %v2407, 104
        %v6995 = vpop.permute.xlu0 %6994
        %6996 = vrot.lane.b32.xlu0 %v2523, 104
        %v6997 = vpop.permute.xlu0 %6996
        %v6998 = vsel %vm190, %v6995, 0
        %v7000 = vsel %vm190, %v6997, 0
        %7002 = vmatprep.subr.mxu0 0.0
        %7003 = vmatpush1.xpose.msra.mxu0 0.0
        %7004 = vmatprep.subr.mxu0 0.0
        %7005 = vmatpush1.xpose.msra.mxu0 0.0
        %7006 = vmatprep.subr.mxu0 0.0
        %7007 = vmatpush1.xpose.msra.mxu0 0.0
        %7008 = vmatprep.subr.mxu0 0.0
        %7009 = vmatpush1.xpose.msra.mxu0 0.0
        %7010 = vmatprep.subr.mxu0 0.0
        %7011 = vmatpush1.xpose.msra.mxu0 0.0
        %7012 = vmatprep.subr.mxu0 0.0
        %7013 = vmatpush1.xpose.msra.mxu0 0.0
        %7014 = vmatprep.subr.mxu0 0.0
        %7015 = vmatpush1.xpose.msra.mxu0 0.0
        %7016 = vmatprep.subr.mxu0 0.0
        %7017 = vmatpush1.xpose.msra.mxu0 0.0
        %7018 = vmatprep.subr.mxu0 0.0
        %7019 = vmatpush1.xpose.msra.mxu0 0.0
        %7020 = vmatprep.subr.mxu0 0.0
        %7021 = vmatpush1.xpose.msra.mxu0 0.0
        %7022 = vmatprep.subr.mxu0 0.0
        %7023 = vmatpush1.xpose.msra.mxu0 0.0
        %7024 = vmatprep.subr.mxu0 0.0
        %7025 = vmatpush1.xpose.msra.mxu0 0.0
        %7026 = vmatprep.subr.mxu0 0.0
        %7027 = vmatpush1.xpose.msra.mxu0 0.0
        %7028 = vmatprep.subr.mxu0 0.0
        %7029 = vmatpush1.xpose.msra.mxu0 0.0
        %7030 = vmatprep.subr.mxu0 0.0
        %7031 = vmatpush1.xpose.msra.mxu0 0.0
        %7032 = vmatprep.subr.mxu0 0.0
        %7033 = vmatpush1.xpose.msra.mxu0 %v7000
        %7034 = vmatprep.subr.mxu0 0.0
        %7035 = vmatpush2.xpose.msra.mxu0 0.0
        %7036 = vmatprep.subr.mxu0 0.0
        %7037 = vmatpush2.xpose.msra.mxu0 0.0
        %7038 = vmatprep.subr.mxu0 0.0
        %7039 = vmatpush2.xpose.msra.mxu0 0.0
        %7040 = vmatprep.subr.mxu0 0.0
        %7041 = vmatpush2.xpose.msra.mxu0 0.0
        %7042 = vmatprep.subr.mxu0 0.0
        %7043 = vmatpush2.xpose.msra.mxu0 0.0
        %7044 = vmatprep.subr.mxu0 0.0
        %7045 = vmatpush2.xpose.msra.mxu0 0.0
        %7046 = vmatprep.subr.mxu0 0.0
        %7047 = vmatpush2.xpose.msra.mxu0 0.0
        %7048 = vmatprep.subr.mxu0 0.0
        %7049 = vmatpush2.xpose.msra.mxu0 0.0
        %7050 = vmatprep.subr.mxu0 0.0
        %7051 = vmatpush2.xpose.msra.mxu0 0.0
        %7052 = vmatprep.subr.mxu0 0.0
        %7053 = vmatpush2.xpose.msra.mxu0 0.0
        %7054 = vmatprep.subr.mxu0 0.0
        %7055 = vmatpush2.xpose.msra.mxu0 0.0
        %7056 = vmatprep.subr.mxu0 0.0
        %7057 = vmatpush2.xpose.msra.mxu0 0.0
        %7058 = vmatprep.subr.mxu0 0.0
        %7059 = vmatpush2.xpose.msra.mxu0 0.0
        %7060 = vmatprep.subr.mxu0 0.0
        %7061 = vmatpush2.xpose.msra.mxu0 0.0
        %7062 = vmatprep.subr.mxu0 0.0
        %7063 = vmatpush2.xpose.msra.mxu0 0.0
        %7064 = vmatprep.subr.mxu0 0.0
        %7065 = vmatpush2.xpose.msra.mxu0 0.0
        %7066 = vmatprep.mubr.f32.mxu0 0.0
        %7067 = vmatmul.mubr.f32.gmra.mxu0 %v6998
        %v7068 = vpop.f32.mrf.mxu0
        %v7069 = vadd.f32 0.0, %v7068
        %v7070 = vpop.f32.mrf.mxu0
        %7071 = vdwg.mxu0
        %7072 = vrot.lane.b32.xlu0 %v2412, 104
        %v7073 = vpop.permute.xlu0 %7072
        %7074 = vrot.lane.b32.xlu0 %v2528, 104
        %v7075 = vpop.permute.xlu0 %7074
        %v7076 = vsel %vm190, %v7073, 0
        %v7078 = vsel %vm190, %v7075, 0
        %7080 = vmatprep.subr.mxu0 0.0
        %7081 = vmatpush1.xpose.msra.mxu0 0.0
        %7082 = vmatprep.subr.mxu0 0.0
        %7083 = vmatpush1.xpose.msra.mxu0 0.0
        %7084 = vmatprep.subr.mxu0 0.0
        %7085 = vmatpush1.xpose.msra.mxu0 0.0
        %7086 = vmatprep.subr.mxu0 0.0
        %7087 = vmatpush1.xpose.msra.mxu0 0.0
        %7088 = vmatprep.subr.mxu0 0.0
        %7089 = vmatpush1.xpose.msra.mxu0 0.0
        %7090 = vmatprep.subr.mxu0 0.0
        %7091 = vmatpush1.xpose.msra.mxu0 0.0
        %7092 = vmatprep.subr.mxu0 0.0
        %7093 = vmatpush1.xpose.msra.mxu0 0.0
        %7094 = vmatprep.subr.mxu0 0.0
        %7095 = vmatpush1.xpose.msra.mxu0 0.0
        %7096 = vmatprep.subr.mxu0 0.0
        %7097 = vmatpush1.xpose.msra.mxu0 0.0
        %7098 = vmatprep.subr.mxu0 0.0
        %7099 = vmatpush1.xpose.msra.mxu0 0.0
        %7100 = vmatprep.subr.mxu0 0.0
        %7101 = vmatpush1.xpose.msra.mxu0 0.0
        %7102 = vmatprep.subr.mxu0 0.0
        %7103 = vmatpush1.xpose.msra.mxu0 0.0
        %7104 = vmatprep.subr.mxu0 0.0
        %7105 = vmatpush1.xpose.msra.mxu0 0.0
        %7106 = vmatprep.subr.mxu0 0.0
        %7107 = vmatpush1.xpose.msra.mxu0 0.0
        %7108 = vmatprep.subr.mxu0 0.0
        %7109 = vmatpush1.xpose.msra.mxu0 0.0
        %7110 = vmatprep.subr.mxu0 0.0
        %7111 = vmatpush1.xpose.msra.mxu0 %v7078
        %7112 = vmatprep.subr.mxu0 0.0
        %7113 = vmatpush2.xpose.msra.mxu0 0.0
        %7114 = vmatprep.subr.mxu0 0.0
        %7115 = vmatpush2.xpose.msra.mxu0 0.0
        %7116 = vmatprep.subr.mxu0 0.0
        %7117 = vmatpush2.xpose.msra.mxu0 0.0
        %7118 = vmatprep.subr.mxu0 0.0
        %7119 = vmatpush2.xpose.msra.mxu0 0.0
        %7120 = vmatprep.subr.mxu0 0.0
        %7121 = vmatpush2.xpose.msra.mxu0 0.0
        %7122 = vmatprep.subr.mxu0 0.0
        %7123 = vmatpush2.xpose.msra.mxu0 0.0
        %7124 = vmatprep.subr.mxu0 0.0
        %7125 = vmatpush2.xpose.msra.mxu0 0.0
        %7126 = vmatprep.subr.mxu0 0.0
        %7127 = vmatpush2.xpose.msra.mxu0 0.0
        %7128 = vmatprep.subr.mxu0 0.0
        %7129 = vmatpush2.xpose.msra.mxu0 0.0
        %7130 = vmatprep.subr.mxu0 0.0
        %7131 = vmatpush2.xpose.msra.mxu0 0.0
        %7132 = vmatprep.subr.mxu0 0.0
        %7133 = vmatpush2.xpose.msra.mxu0 0.0
        %7134 = vmatprep.subr.mxu0 0.0
        %7135 = vmatpush2.xpose.msra.mxu0 0.0
        %7136 = vmatprep.subr.mxu0 0.0
        %7137 = vmatpush2.xpose.msra.mxu0 0.0
        %7138 = vmatprep.subr.mxu0 0.0
        %7139 = vmatpush2.xpose.msra.mxu0 0.0
        %7140 = vmatprep.subr.mxu0 0.0
        %7141 = vmatpush2.xpose.msra.mxu0 0.0
        %7142 = vmatprep.subr.mxu0 0.0
        %7143 = vmatpush2.xpose.msra.mxu0 0.0
        %7144 = vmatprep.mubr.f32.mxu0 0.0
        %7145 = vmatmul.mubr.f32.gmra.mxu0 %v7076
        %v7146 = vpop.f32.mrf.mxu0
        %v7147 = vadd.f32 0.0, %v7146
        %v7148 = vpop.f32.mrf.mxu0
        %7149 = vdwg.mxu0
        %7150 = vrot.lane.b32.xlu0 %v2417, 104
        %v7151 = vpop.permute.xlu0 %7150
        %7152 = vrot.lane.b32.xlu0 %v2533, 104
        %v7153 = vpop.permute.xlu0 %7152
        %v7154 = vsel %vm190, %v7151, 0
        %v7156 = vsel %vm190, %v7153, 0
        %7158 = vmatprep.subr.mxu0 0.0
        %7159 = vmatpush1.xpose.msra.mxu0 0.0
        %7160 = vmatprep.subr.mxu0 0.0
        %7161 = vmatpush1.xpose.msra.mxu0 0.0
        %7162 = vmatprep.subr.mxu0 0.0
        %7163 = vmatpush1.xpose.msra.mxu0 0.0
        %7164 = vmatprep.subr.mxu0 0.0
        %7165 = vmatpush1.xpose.msra.mxu0 0.0
        %7166 = vmatprep.subr.mxu0 0.0
        %7167 = vmatpush1.xpose.msra.mxu0 0.0
        %7168 = vmatprep.subr.mxu0 0.0
        %7169 = vmatpush1.xpose.msra.mxu0 0.0
        %7170 = vmatprep.subr.mxu0 0.0
        %7171 = vmatpush1.xpose.msra.mxu0 0.0
        %7172 = vmatprep.subr.mxu0 0.0
        %7173 = vmatpush1.xpose.msra.mxu0 0.0
        %7174 = vmatprep.subr.mxu0 0.0
        %7175 = vmatpush1.xpose.msra.mxu0 0.0
        %7176 = vmatprep.subr.mxu0 0.0
        %7177 = vmatpush1.xpose.msra.mxu0 0.0
        %7178 = vmatprep.subr.mxu0 0.0
        %7179 = vmatpush1.xpose.msra.mxu0 0.0
        %7180 = vmatprep.subr.mxu0 0.0
        %7181 = vmatpush1.xpose.msra.mxu0 0.0
        %7182 = vmatprep.subr.mxu0 0.0
        %7183 = vmatpush1.xpose.msra.mxu0 0.0
        %7184 = vmatprep.subr.mxu0 0.0
        %7185 = vmatpush1.xpose.msra.mxu0 0.0
        %7186 = vmatprep.subr.mxu0 0.0
        %7187 = vmatpush1.xpose.msra.mxu0 0.0
        %7188 = vmatprep.subr.mxu0 0.0
        %7189 = vmatpush1.xpose.msra.mxu0 %v7156
        %7190 = vmatprep.subr.mxu0 0.0
        %7191 = vmatpush2.xpose.msra.mxu0 0.0
        %7192 = vmatprep.subr.mxu0 0.0
        %7193 = vmatpush2.xpose.msra.mxu0 0.0
        %7194 = vmatprep.subr.mxu0 0.0
        %7195 = vmatpush2.xpose.msra.mxu0 0.0
        %7196 = vmatprep.subr.mxu0 0.0
        %7197 = vmatpush2.xpose.msra.mxu0 0.0
        %7198 = vmatprep.subr.mxu0 0.0
        %7199 = vmatpush2.xpose.msra.mxu0 0.0
        %7200 = vmatprep.subr.mxu0 0.0
        %7201 = vmatpush2.xpose.msra.mxu0 0.0
        %7202 = vmatprep.subr.mxu0 0.0
        %7203 = vmatpush2.xpose.msra.mxu0 0.0
        %7204 = vmatprep.subr.mxu0 0.0
        %7205 = vmatpush2.xpose.msra.mxu0 0.0
        %7206 = vmatprep.subr.mxu0 0.0
        %7207 = vmatpush2.xpose.msra.mxu0 0.0
        %7208 = vmatprep.subr.mxu0 0.0
        %7209 = vmatpush2.xpose.msra.mxu0 0.0
        %7210 = vmatprep.subr.mxu0 0.0
        %7211 = vmatpush2.xpose.msra.mxu0 0.0
        %7212 = vmatprep.subr.mxu0 0.0
        %7213 = vmatpush2.xpose.msra.mxu0 0.0
        %7214 = vmatprep.subr.mxu0 0.0
        %7215 = vmatpush2.xpose.msra.mxu0 0.0
        %7216 = vmatprep.subr.mxu0 0.0
        %7217 = vmatpush2.xpose.msra.mxu0 0.0
        %7218 = vmatprep.subr.mxu0 0.0
        %7219 = vmatpush2.xpose.msra.mxu0 0.0
        %7220 = vmatprep.subr.mxu0 0.0
        %7221 = vmatpush2.xpose.msra.mxu0 0.0
        %7222 = vmatprep.mubr.f32.mxu0 0.0
        %7223 = vmatmul.mubr.f32.gmra.mxu0 %v7154
        %v7224 = vpop.f32.mrf.mxu0
        %v7225 = vadd.f32 0.0, %v7224
        %v7226 = vpop.f32.mrf.mxu0
        %7227 = vdwg.mxu0
        %v7228 = vmul.f32 %v6679, 0.35355338
        %v7229 = vmul.f32 %v6757, 0.35355338
        %v7230 = vmul.f32 %v6835, 0.35355338
        %v7231 = vmul.f32 %v6913, 0.35355338
        %v7232 = vmul.f32 %v6991, 0.35355338
        %v7233 = vmul.f32 %v7069, 0.35355338
        %v7234 = vmul.f32 %v7147, 0.35355338
        %v7235 = vmul.f32 %v7225, 0.35355338
        %v7236 = vsel %vm190, %v7228, -inf
        %7237 = vmax.xlane.f32.xlu0 %v7236
        %v7238 = vpop.xlane.xlu0 %7237
        %v7239 = vsel %vm190, %v7229, -inf
        %7240 = vmax.xlane.f32.xlu0 %v7239
        %v7241 = vpop.xlane.xlu0 %7240
        %v7242 = vsel %vm190, %v7230, -inf
        %7243 = vmax.xlane.f32.xlu0 %v7242
        %v7244 = vpop.xlane.xlu0 %7243
        %v7245 = vsel %vm190, %v7231, -inf
        %7246 = vmax.xlane.f32.xlu0 %v7245
        %v7247 = vpop.xlane.xlu0 %7246
        %v7248 = vsel %vm190, %v7232, -inf
        %7249 = vmax.xlane.f32.xlu0 %v7248
        %v7250 = vpop.xlane.xlu0 %7249
        %v7251 = vsel %vm190, %v7233, -inf
        %7252 = vmax.xlane.f32.xlu0 %v7251
        %v7253 = vpop.xlane.xlu0 %7252
        %v7254 = vsel %vm190, %v7234, -inf
        %7255 = vmax.xlane.f32.xlu0 %v7254
        %v7256 = vpop.xlane.xlu0 %7255
        %v7257 = vsel %vm190, %v7235, -inf
        %7258 = vmax.xlane.f32.xlu0 %v7257
        %v7259 = vpop.xlane.xlu0 %7258
        %v7260 = vsub.f32 %v7228, %v7238
        %v7261 = vsub.f32 %v7229, %v7241
        %v7262 = vsub.f32 %v7230, %v7244
        %v7263 = vsub.f32 %v7231, %v7247
        %v7264 = vsub.f32 %v7232, %v7250
        %v7265 = vsub.f32 %v7233, %v7253
        %v7266 = vsub.f32 %v7234, %v7256
        %v7267 = vsub.f32 %v7235, %v7259
        %v7268 = vmul.f32 %v7260, 1.442695
        %v7269 = vpow.pop %v7268
        %v7270 = vmul.f32 %v7261, 1.442695
        %v7271 = vpow.pop %v7270
        %v7272 = vmul.f32 %v7262, 1.442695
        %v7273 = vpow.pop %v7272
        %v7274 = vmul.f32 %v7263, 1.442695
        %v7275 = vpow.pop %v7274
        %v7276 = vmul.f32 %v7264, 1.442695
        %v7277 = vpow.pop %v7276
        %v7278 = vmul.f32 %v7265, 1.442695
        %v7279 = vpow.pop %v7278
        %v7280 = vmul.f32 %v7266, 1.442695
        %v7281 = vpow.pop %v7280
        %v7282 = vmul.f32 %v7267, 1.442695
        %v7283 = vpow.pop %v7282
        %v7284 = vsel %vm190, %v7269, 0.0
        %7285 = vadd.xlane.f32.xlu0 %v7284
        %v7286 = vpop.xlane.xlu0 %7285
        %v7287 = vsel %vm190, %v7271, 0.0
        %7288 = vadd.xlane.f32.xlu0 %v7287
        %v7289 = vpop.xlane.xlu0 %7288
        %v7290 = vsel %vm190, %v7273, 0.0
        %7291 = vadd.xlane.f32.xlu0 %v7290
        %v7292 = vpop.xlane.xlu0 %7291
        %v7293 = vsel %vm190, %v7275, 0.0
        %7294 = vadd.xlane.f32.xlu0 %v7293
        %v7295 = vpop.xlane.xlu0 %7294
        %v7296 = vsel %vm190, %v7277, 0.0
        %7297 = vadd.xlane.f32.xlu0 %v7296
        %v7298 = vpop.xlane.xlu0 %7297
        %v7299 = vsel %vm190, %v7279, 0.0
        %7300 = vadd.xlane.f32.xlu0 %v7299
        %v7301 = vpop.xlane.xlu0 %7300
        %v7302 = vsel %vm190, %v7281, 0.0
        %7303 = vadd.xlane.f32.xlu0 %v7302
        %v7304 = vpop.xlane.xlu0 %7303
        %v7305 = vsel %vm190, %v7283, 0.0
        %7306 = vadd.xlane.f32.xlu0 %v7305
        %v7307 = vpop.xlane.xlu0 %7306
        %v7308 = vrcp.pop %v7286
        %v7309 = vrcp.pop %v7289
        %v7310 = vrcp.pop %v7292
        %v7311 = vrcp.pop %v7295
        %v7312 = vrcp.pop %v7298
        %v7313 = vrcp.pop %v7301
        %v7314 = vrcp.pop %v7304
        %v7315 = vrcp.pop %v7307
        %v7316 = vmul.f32 %v7269, %v7308
        %v7317 = vmul.f32 %v7271, %v7309
        %v7318 = vmul.f32 %v7273, %v7310
        %v7319 = vmul.f32 %v7275, %v7311
        %v7320 = vmul.f32 %v7277, %v7312
        %v7321 = vmul.f32 %v7279, %v7313
        %v7322 = vmul.f32 %v7281, %v7314
        %v7323 = vmul.f32 %v7283, %v7315
        %7324 = vrot.lane.b32.xlu0 %v2614, 104
        %v7325 = vpop.permute.xlu0 %7324
        %v7328 = vsel %vm190, %v7316, 0
        %7330 = vmatprep.subr.mxu0 0.0
        %7331 = vmatpush1.msra.mxu0 0.0
        %7332 = vmatprep.subr.mxu0 0.0
        %7333 = vmatpush1.msra.mxu0 0.0
        %7334 = vmatprep.subr.mxu0 0.0
        %7335 = vmatpush1.msra.mxu0 0.0
        %7336 = vmatprep.subr.mxu0 0.0
        %7337 = vmatpush1.msra.mxu0 0.0
        %7338 = vmatprep.subr.mxu0 0.0
        %7339 = vmatpush1.msra.mxu0 0.0
        %7340 = vmatprep.subr.mxu0 0.0
        %7341 = vmatpush1.msra.mxu0 0.0
        %7342 = vmatprep.subr.mxu0 0.0
        %7343 = vmatpush1.msra.mxu0 0.0
        %7344 = vmatprep.subr.mxu0 0.0
        %7345 = vmatpush1.msra.mxu0 0.0
        %7346 = vmatprep.subr.mxu0 0.0
        %7347 = vmatpush1.msra.mxu0 0.0
        %7348 = vmatprep.subr.mxu0 0.0
        %7349 = vmatpush1.msra.mxu0 0.0
        %7350 = vmatprep.subr.mxu0 0.0
        %7351 = vmatpush1.msra.mxu0 0.0
        %7352 = vmatprep.subr.mxu0 0.0
        %7353 = vmatpush1.msra.mxu0 0.0
        %7354 = vmatprep.subr.mxu0 0.0
        %7355 = vmatpush1.msra.mxu0 0.0
        %7356 = vmatprep.subr.mxu0 0.0
        %7357 = vmatpush1.msra.mxu0 0.0
        %7358 = vmatprep.subr.mxu0 0.0
        %7359 = vmatpush1.msra.mxu0 0.0
        %7360 = vmatprep.subr.mxu0 0.0
        %7361 = vmatpush1.msra.mxu0 %v7325
        %7362 = vmatprep.subr.mxu0 0.0
        %7363 = vmatpush2.msra.mxu0 0.0
        %7364 = vmatprep.subr.mxu0 0.0
        %7365 = vmatpush2.msra.mxu0 0.0
        %7366 = vmatprep.subr.mxu0 0.0
        %7367 = vmatpush2.msra.mxu0 0.0
        %7368 = vmatprep.subr.mxu0 0.0
        %7369 = vmatpush2.msra.mxu0 0.0
        %7370 = vmatprep.subr.mxu0 0.0
        %7371 = vmatpush2.msra.mxu0 0.0
        %7372 = vmatprep.subr.mxu0 0.0
        %7373 = vmatpush2.msra.mxu0 0.0
        %7374 = vmatprep.subr.mxu0 0.0
        %7375 = vmatpush2.msra.mxu0 0.0
        %7376 = vmatprep.subr.mxu0 0.0
        %7377 = vmatpush2.msra.mxu0 0.0
        %7378 = vmatprep.subr.mxu0 0.0
        %7379 = vmatpush2.msra.mxu0 0.0
        %7380 = vmatprep.subr.mxu0 0.0
        %7381 = vmatpush2.msra.mxu0 0.0
        %7382 = vmatprep.subr.mxu0 0.0
        %7383 = vmatpush2.msra.mxu0 0.0
        %7384 = vmatprep.subr.mxu0 0.0
        %7385 = vmatpush2.msra.mxu0 0.0
        %7386 = vmatprep.subr.mxu0 0.0
        %7387 = vmatpush2.msra.mxu0 0.0
        %7388 = vmatprep.subr.mxu0 0.0
        %7389 = vmatpush2.msra.mxu0 0.0
        %7390 = vmatprep.subr.mxu0 0.0
        %7391 = vmatpush2.msra.mxu0 0.0
        %7392 = vmatprep.subr.mxu0 0.0
        %7393 = vmatpush2.msra.mxu0 0.0
        %7394 = vmatprep.mubr.f32.mxu0 0.0
        %7395 = vmatmul.mubr.f32.gmra.mxu0 %v7328
        %v7396 = vpop.f32.mrf.mxu0
        %v7397 = vadd.f32 0.0, %v7396
        %v7398 = vpop.f32.mrf.mxu0
        %7399 = vdwg.mxu0
        %7400 = vrot.lane.b32.xlu0 %v2619, 104
        %v7401 = vpop.permute.xlu0 %7400
        %v7404 = vsel %vm190, %v7317, 0
        %7406 = vmatprep.subr.mxu0 0.0
        %7407 = vmatpush1.msra.mxu0 0.0
        %7408 = vmatprep.subr.mxu0 0.0
        %7409 = vmatpush1.msra.mxu0 0.0
        %7410 = vmatprep.subr.mxu0 0.0
        %7411 = vmatpush1.msra.mxu0 0.0
        %7412 = vmatprep.subr.mxu0 0.0
        %7413 = vmatpush1.msra.mxu0 0.0
        %7414 = vmatprep.subr.mxu0 0.0
        %7415 = vmatpush1.msra.mxu0 0.0
        %7416 = vmatprep.subr.mxu0 0.0
        %7417 = vmatpush1.msra.mxu0 0.0
        %7418 = vmatprep.subr.mxu0 0.0
        %7419 = vmatpush1.msra.mxu0 0.0
        %7420 = vmatprep.subr.mxu0 0.0
        %7421 = vmatpush1.msra.mxu0 0.0
        %7422 = vmatprep.subr.mxu0 0.0
        %7423 = vmatpush1.msra.mxu0 0.0
        %7424 = vmatprep.subr.mxu0 0.0
        %7425 = vmatpush1.msra.mxu0 0.0
        %7426 = vmatprep.subr.mxu0 0.0
        %7427 = vmatpush1.msra.mxu0 0.0
        %7428 = vmatprep.subr.mxu0 0.0
        %7429 = vmatpush1.msra.mxu0 0.0
        %7430 = vmatprep.subr.mxu0 0.0
        %7431 = vmatpush1.msra.mxu0 0.0
        %7432 = vmatprep.subr.mxu0 0.0
        %7433 = vmatpush1.msra.mxu0 0.0
        %7434 = vmatprep.subr.mxu0 0.0
        %7435 = vmatpush1.msra.mxu0 0.0
        %7436 = vmatprep.subr.mxu0 0.0
        %7437 = vmatpush1.msra.mxu0 %v7401
        %7438 = vmatprep.subr.mxu0 0.0
        %7439 = vmatpush2.msra.mxu0 0.0
        %7440 = vmatprep.subr.mxu0 0.0
        %7441 = vmatpush2.msra.mxu0 0.0
        %7442 = vmatprep.subr.mxu0 0.0
        %7443 = vmatpush2.msra.mxu0 0.0
        %7444 = vmatprep.subr.mxu0 0.0
        %7445 = vmatpush2.msra.mxu0 0.0
        %7446 = vmatprep.subr.mxu0 0.0
        %7447 = vmatpush2.msra.mxu0 0.0
        %7448 = vmatprep.subr.mxu0 0.0
        %7449 = vmatpush2.msra.mxu0 0.0
        %7450 = vmatprep.subr.mxu0 0.0
        %7451 = vmatpush2.msra.mxu0 0.0
        %7452 = vmatprep.subr.mxu0 0.0
        %7453 = vmatpush2.msra.mxu0 0.0
        %7454 = vmatprep.subr.mxu0 0.0
        %7455 = vmatpush2.msra.mxu0 0.0
        %7456 = vmatprep.subr.mxu0 0.0
        %7457 = vmatpush2.msra.mxu0 0.0
        %7458 = vmatprep.subr.mxu0 0.0
        %7459 = vmatpush2.msra.mxu0 0.0
        %7460 = vmatprep.subr.mxu0 0.0
        %7461 = vmatpush2.msra.mxu0 0.0
        %7462 = vmatprep.subr.mxu0 0.0
        %7463 = vmatpush2.msra.mxu0 0.0
        %7464 = vmatprep.subr.mxu0 0.0
        %7465 = vmatpush2.msra.mxu0 0.0
        %7466 = vmatprep.subr.mxu0 0.0
        %7467 = vmatpush2.msra.mxu0 0.0
        %7468 = vmatprep.subr.mxu0 0.0
        %7469 = vmatpush2.msra.mxu0 0.0
        %7470 = vmatprep.mubr.f32.mxu0 0.0
        %7471 = vmatmul.mubr.f32.gmra.mxu0 %v7404
        %v7472 = vpop.f32.mrf.mxu0
        %v7473 = vadd.f32 0.0, %v7472
        %v7474 = vpop.f32.mrf.mxu0
        %7475 = vdwg.mxu0
        %7476 = vrot.lane.b32.xlu0 %v2624, 104
        %v7477 = vpop.permute.xlu0 %7476
        %v7480 = vsel %vm190, %v7318, 0
        %7482 = vmatprep.subr.mxu0 0.0
        %7483 = vmatpush1.msra.mxu0 0.0
        %7484 = vmatprep.subr.mxu0 0.0
        %7485 = vmatpush1.msra.mxu0 0.0
        %7486 = vmatprep.subr.mxu0 0.0
        %7487 = vmatpush1.msra.mxu0 0.0
        %7488 = vmatprep.subr.mxu0 0.0
        %7489 = vmatpush1.msra.mxu0 0.0
        %7490 = vmatprep.subr.mxu0 0.0
        %7491 = vmatpush1.msra.mxu0 0.0
        %7492 = vmatprep.subr.mxu0 0.0
        %7493 = vmatpush1.msra.mxu0 0.0
        %7494 = vmatprep.subr.mxu0 0.0
        %7495 = vmatpush1.msra.mxu0 0.0
        %7496 = vmatprep.subr.mxu0 0.0
        %7497 = vmatpush1.msra.mxu0 0.0
        %7498 = vmatprep.subr.mxu0 0.0
        %7499 = vmatpush1.msra.mxu0 0.0
        %7500 = vmatprep.subr.mxu0 0.0
        %7501 = vmatpush1.msra.mxu0 0.0
        %7502 = vmatprep.subr.mxu0 0.0
        %7503 = vmatpush1.msra.mxu0 0.0
        %7504 = vmatprep.subr.mxu0 0.0
        %7505 = vmatpush1.msra.mxu0 0.0
        %7506 = vmatprep.subr.mxu0 0.0
        %7507 = vmatpush1.msra.mxu0 0.0
        %7508 = vmatprep.subr.mxu0 0.0
        %7509 = vmatpush1.msra.mxu0 0.0
        %7510 = vmatprep.subr.mxu0 0.0
        %7511 = vmatpush1.msra.mxu0 0.0
        %7512 = vmatprep.subr.mxu0 0.0
        %7513 = vmatpush1.msra.mxu0 %v7477
        %7514 = vmatprep.subr.mxu0 0.0
        %7515 = vmatpush2.msra.mxu0 0.0
        %7516 = vmatprep.subr.mxu0 0.0
        %7517 = vmatpush2.msra.mxu0 0.0
        %7518 = vmatprep.subr.mxu0 0.0
        %7519 = vmatpush2.msra.mxu0 0.0
        %7520 = vmatprep.subr.mxu0 0.0
        %7521 = vmatpush2.msra.mxu0 0.0
        %7522 = vmatprep.subr.mxu0 0.0
        %7523 = vmatpush2.msra.mxu0 0.0
        %7524 = vmatprep.subr.mxu0 0.0
        %7525 = vmatpush2.msra.mxu0 0.0
        %7526 = vmatprep.subr.mxu0 0.0
        %7527 = vmatpush2.msra.mxu0 0.0
        %7528 = vmatprep.subr.mxu0 0.0
        %7529 = vmatpush2.msra.mxu0 0.0
        %7530 = vmatprep.subr.mxu0 0.0
        %7531 = vmatpush2.msra.mxu0 0.0
        %7532 = vmatprep.subr.mxu0 0.0
        %7533 = vmatpush2.msra.mxu0 0.0
        %7534 = vmatprep.subr.mxu0 0.0
        %7535 = vmatpush2.msra.mxu0 0.0
        %7536 = vmatprep.subr.mxu0 0.0
        %7537 = vmatpush2.msra.mxu0 0.0
        %7538 = vmatprep.subr.mxu0 0.0
        %7539 = vmatpush2.msra.mxu0 0.0
        %7540 = vmatprep.subr.mxu0 0.0
        %7541 = vmatpush2.msra.mxu0 0.0
        %7542 = vmatprep.subr.mxu0 0.0
        %7543 = vmatpush2.msra.mxu0 0.0
        %7544 = vmatprep.subr.mxu0 0.0
        %7545 = vmatpush2.msra.mxu0 0.0
        %7546 = vmatprep.mubr.f32.mxu0 0.0
        %7547 = vmatmul.mubr.f32.gmra.mxu0 %v7480
        %v7548 = vpop.f32.mrf.mxu0
        %v7549 = vadd.f32 0.0, %v7548
        %v7550 = vpop.f32.mrf.mxu0
        %7551 = vdwg.mxu0
        %7552 = vrot.lane.b32.xlu0 %v2629, 104
        %v7553 = vpop.permute.xlu0 %7552
        %v7556 = vsel %vm190, %v7319, 0
        %7558 = vmatprep.subr.mxu0 0.0
        %7559 = vmatpush1.msra.mxu0 0.0
        %7560 = vmatprep.subr.mxu0 0.0
        %7561 = vmatpush1.msra.mxu0 0.0
        %7562 = vmatprep.subr.mxu0 0.0
        %7563 = vmatpush1.msra.mxu0 0.0
        %7564 = vmatprep.subr.mxu0 0.0
        %7565 = vmatpush1.msra.mxu0 0.0
        %7566 = vmatprep.subr.mxu0 0.0
        %7567 = vmatpush1.msra.mxu0 0.0
        %7568 = vmatprep.subr.mxu0 0.0
        %7569 = vmatpush1.msra.mxu0 0.0
        %7570 = vmatprep.subr.mxu0 0.0
        %7571 = vmatpush1.msra.mxu0 0.0
        %7572 = vmatprep.subr.mxu0 0.0
        %7573 = vmatpush1.msra.mxu0 0.0
        %7574 = vmatprep.subr.mxu0 0.0
        %7575 = vmatpush1.msra.mxu0 0.0
        %7576 = vmatprep.subr.mxu0 0.0
        %7577 = vmatpush1.msra.mxu0 0.0
        %7578 = vmatprep.subr.mxu0 0.0
        %7579 = vmatpush1.msra.mxu0 0.0
        %7580 = vmatprep.subr.mxu0 0.0
        %7581 = vmatpush1.msra.mxu0 0.0
        %7582 = vmatprep.subr.mxu0 0.0
        %7583 = vmatpush1.msra.mxu0 0.0
        %7584 = vmatprep.subr.mxu0 0.0
        %7585 = vmatpush1.msra.mxu0 0.0
        %7586 = vmatprep.subr.mxu0 0.0
        %7587 = vmatpush1.msra.mxu0 0.0
        %7588 = vmatprep.subr.mxu0 0.0
        %7589 = vmatpush1.msra.mxu0 %v7553
        %7590 = vmatprep.subr.mxu0 0.0
        %7591 = vmatpush2.msra.mxu0 0.0
        %7592 = vmatprep.subr.mxu0 0.0
        %7593 = vmatpush2.msra.mxu0 0.0
        %7594 = vmatprep.subr.mxu0 0.0
        %7595 = vmatpush2.msra.mxu0 0.0
        %7596 = vmatprep.subr.mxu0 0.0
        %7597 = vmatpush2.msra.mxu0 0.0
        %7598 = vmatprep.subr.mxu0 0.0
        %7599 = vmatpush2.msra.mxu0 0.0
        %7600 = vmatprep.subr.mxu0 0.0
        %7601 = vmatpush2.msra.mxu0 0.0
        %7602 = vmatprep.subr.mxu0 0.0
        %7603 = vmatpush2.msra.mxu0 0.0
        %7604 = vmatprep.subr.mxu0 0.0
        %7605 = vmatpush2.msra.mxu0 0.0
        %7606 = vmatprep.subr.mxu0 0.0
        %7607 = vmatpush2.msra.mxu0 0.0
        %7608 = vmatprep.subr.mxu0 0.0
        %7609 = vmatpush2.msra.mxu0 0.0
        %7610 = vmatprep.subr.mxu0 0.0
        %7611 = vmatpush2.msra.mxu0 0.0
        %7612 = vmatprep.subr.mxu0 0.0
        %7613 = vmatpush2.msra.mxu0 0.0
        %7614 = vmatprep.subr.mxu0 0.0
        %7615 = vmatpush2.msra.mxu0 0.0
        %7616 = vmatprep.subr.mxu0 0.0
        %7617 = vmatpush2.msra.mxu0 0.0
        %7618 = vmatprep.subr.mxu0 0.0
        %7619 = vmatpush2.msra.mxu0 0.0
        %7620 = vmatprep.subr.mxu0 0.0
        %7621 = vmatpush2.msra.mxu0 0.0
        %7622 = vmatprep.mubr.f32.mxu0 0.0
        %7623 = vmatmul.mubr.f32.gmra.mxu0 %v7556
        %v7624 = vpop.f32.mrf.mxu0
        %v7625 = vadd.f32 0.0, %v7624
        %v7626 = vpop.f32.mrf.mxu0
        %7627 = vdwg.mxu0
        %7628 = vrot.lane.b32.xlu0 %v2634, 104
        %v7629 = vpop.permute.xlu0 %7628
        %v7632 = vsel %vm190, %v7320, 0
        %7634 = vmatprep.subr.mxu0 0.0
        %7635 = vmatpush1.msra.mxu0 0.0
        %7636 = vmatprep.subr.mxu0 0.0
        %7637 = vmatpush1.msra.mxu0 0.0
        %7638 = vmatprep.subr.mxu0 0.0
        %7639 = vmatpush1.msra.mxu0 0.0
        %7640 = vmatprep.subr.mxu0 0.0
        %7641 = vmatpush1.msra.mxu0 0.0
        %7642 = vmatprep.subr.mxu0 0.0
        %7643 = vmatpush1.msra.mxu0 0.0
        %7644 = vmatprep.subr.mxu0 0.0
        %7645 = vmatpush1.msra.mxu0 0.0
        %7646 = vmatprep.subr.mxu0 0.0
        %7647 = vmatpush1.msra.mxu0 0.0
        %7648 = vmatprep.subr.mxu0 0.0
        %7649 = vmatpush1.msra.mxu0 0.0
        %7650 = vmatprep.subr.mxu0 0.0
        %7651 = vmatpush1.msra.mxu0 0.0
        %7652 = vmatprep.subr.mxu0 0.0
        %7653 = vmatpush1.msra.mxu0 0.0
        %7654 = vmatprep.subr.mxu0 0.0
        %7655 = vmatpush1.msra.mxu0 0.0
        %7656 = vmatprep.subr.mxu0 0.0
        %7657 = vmatpush1.msra.mxu0 0.0
        %7658 = vmatprep.subr.mxu0 0.0
        %7659 = vmatpush1.msra.mxu0 0.0
        %7660 = vmatprep.subr.mxu0 0.0
        %7661 = vmatpush1.msra.mxu0 0.0
        %7662 = vmatprep.subr.mxu0 0.0
        %7663 = vmatpush1.msra.mxu0 0.0
        %7664 = vmatprep.subr.mxu0 0.0
        %7665 = vmatpush1.msra.mxu0 %v7629
        %7666 = vmatprep.subr.mxu0 0.0
        %7667 = vmatpush2.msra.mxu0 0.0
        %7668 = vmatprep.subr.mxu0 0.0
        %7669 = vmatpush2.msra.mxu0 0.0
        %7670 = vmatprep.subr.mxu0 0.0
        %7671 = vmatpush2.msra.mxu0 0.0
        %7672 = vmatprep.subr.mxu0 0.0
        %7673 = vmatpush2.msra.mxu0 0.0
        %7674 = vmatprep.subr.mxu0 0.0
        %7675 = vmatpush2.msra.mxu0 0.0
        %7676 = vmatprep.subr.mxu0 0.0
        %7677 = vmatpush2.msra.mxu0 0.0
        %7678 = vmatprep.subr.mxu0 0.0
        %7679 = vmatpush2.msra.mxu0 0.0
        %7680 = vmatprep.subr.mxu0 0.0
        %7681 = vmatpush2.msra.mxu0 0.0
        %7682 = vmatprep.subr.mxu0 0.0
        %7683 = vmatpush2.msra.mxu0 0.0
        %7684 = vmatprep.subr.mxu0 0.0
        %7685 = vmatpush2.msra.mxu0 0.0
        %7686 = vmatprep.subr.mxu0 0.0
        %7687 = vmatpush2.msra.mxu0 0.0
        %7688 = vmatprep.subr.mxu0 0.0
        %7689 = vmatpush2.msra.mxu0 0.0
        %7690 = vmatprep.subr.mxu0 0.0
        %7691 = vmatpush2.msra.mxu0 0.0
        %7692 = vmatprep.subr.mxu0 0.0
        %7693 = vmatpush2.msra.mxu0 0.0
        %7694 = vmatprep.subr.mxu0 0.0
        %7695 = vmatpush2.msra.mxu0 0.0
        %7696 = vmatprep.subr.mxu0 0.0
        %7697 = vmatpush2.msra.mxu0 0.0
        %7698 = vmatprep.mubr.f32.mxu0 0.0
        %7699 = vmatmul.mubr.f32.gmra.mxu0 %v7632
        %v7700 = vpop.f32.mrf.mxu0
        %v7701 = vadd.f32 0.0, %v7700
        %v7702 = vpop.f32.mrf.mxu0
        %7703 = vdwg.mxu0
        %7704 = vrot.lane.b32.xlu0 %v2639, 104
        %v7705 = vpop.permute.xlu0 %7704
        %v7708 = vsel %vm190, %v7321, 0
        %7710 = vmatprep.subr.mxu0 0.0
        %7711 = vmatpush1.msra.mxu0 0.0
        %7712 = vmatprep.subr.mxu0 0.0
        %7713 = vmatpush1.msra.mxu0 0.0
        %7714 = vmatprep.subr.mxu0 0.0
        %7715 = vmatpush1.msra.mxu0 0.0
        %7716 = vmatprep.subr.mxu0 0.0
        %7717 = vmatpush1.msra.mxu0 0.0
        %7718 = vmatprep.subr.mxu0 0.0
        %7719 = vmatpush1.msra.mxu0 0.0
        %7720 = vmatprep.subr.mxu0 0.0
        %7721 = vmatpush1.msra.mxu0 0.0
        %7722 = vmatprep.subr.mxu0 0.0
        %7723 = vmatpush1.msra.mxu0 0.0
        %7724 = vmatprep.subr.mxu0 0.0
        %7725 = vmatpush1.msra.mxu0 0.0
        %7726 = vmatprep.subr.mxu0 0.0
        %7727 = vmatpush1.msra.mxu0 0.0
        %7728 = vmatprep.subr.mxu0 0.0
        %7729 = vmatpush1.msra.mxu0 0.0
        %7730 = vmatprep.subr.mxu0 0.0
        %7731 = vmatpush1.msra.mxu0 0.0
        %7732 = vmatprep.subr.mxu0 0.0
        %7733 = vmatpush1.msra.mxu0 0.0
        %7734 = vmatprep.subr.mxu0 0.0
        %7735 = vmatpush1.msra.mxu0 0.0
        %7736 = vmatprep.subr.mxu0 0.0
        %7737 = vmatpush1.msra.mxu0 0.0
        %7738 = vmatprep.subr.mxu0 0.0
        %7739 = vmatpush1.msra.mxu0 0.0
        %7740 = vmatprep.subr.mxu0 0.0
        %7741 = vmatpush1.msra.mxu0 %v7705
        %7742 = vmatprep.subr.mxu0 0.0
        %7743 = vmatpush2.msra.mxu0 0.0
        %7744 = vmatprep.subr.mxu0 0.0
        %7745 = vmatpush2.msra.mxu0 0.0
        %7746 = vmatprep.subr.mxu0 0.0
        %7747 = vmatpush2.msra.mxu0 0.0
        %7748 = vmatprep.subr.mxu0 0.0
        %7749 = vmatpush2.msra.mxu0 0.0
        %7750 = vmatprep.subr.mxu0 0.0
        %7751 = vmatpush2.msra.mxu0 0.0
        %7752 = vmatprep.subr.mxu0 0.0
        %7753 = vmatpush2.msra.mxu0 0.0
        %7754 = vmatprep.subr.mxu0 0.0
        %7755 = vmatpush2.msra.mxu0 0.0
        %7756 = vmatprep.subr.mxu0 0.0
        %7757 = vmatpush2.msra.mxu0 0.0
        %7758 = vmatprep.subr.mxu0 0.0
        %7759 = vmatpush2.msra.mxu0 0.0
        %7760 = vmatprep.subr.mxu0 0.0
        %7761 = vmatpush2.msra.mxu0 0.0
        %7762 = vmatprep.subr.mxu0 0.0
        %7763 = vmatpush2.msra.mxu0 0.0
        %7764 = vmatprep.subr.mxu0 0.0
        %7765 = vmatpush2.msra.mxu0 0.0
        %7766 = vmatprep.subr.mxu0 0.0
        %7767 = vmatpush2.msra.mxu0 0.0
        %7768 = vmatprep.subr.mxu0 0.0
        %7769 = vmatpush2.msra.mxu0 0.0
        %7770 = vmatprep.subr.mxu0 0.0
        %7771 = vmatpush2.msra.mxu0 0.0
        %7772 = vmatprep.subr.mxu0 0.0
        %7773 = vmatpush2.msra.mxu0 0.0
        %7774 = vmatprep.mubr.f32.mxu0 0.0
        %7775 = vmatmul.mubr.f32.gmra.mxu0 %v7708
        %v7776 = vpop.f32.mrf.mxu0
        %v7777 = vadd.f32 0.0, %v7776
        %v7778 = vpop.f32.mrf.mxu0
        %7779 = vdwg.mxu0
        %7780 = vrot.lane.b32.xlu0 %v2644, 104
        %v7781 = vpop.permute.xlu0 %7780
        %v7784 = vsel %vm190, %v7322, 0
        %7786 = vmatprep.subr.mxu0 0.0
        %7787 = vmatpush1.msra.mxu0 0.0
        %7788 = vmatprep.subr.mxu0 0.0
        %7789 = vmatpush1.msra.mxu0 0.0
        %7790 = vmatprep.subr.mxu0 0.0
        %7791 = vmatpush1.msra.mxu0 0.0
        %7792 = vmatprep.subr.mxu0 0.0
        %7793 = vmatpush1.msra.mxu0 0.0
        %7794 = vmatprep.subr.mxu0 0.0
        %7795 = vmatpush1.msra.mxu0 0.0
        %7796 = vmatprep.subr.mxu0 0.0
        %7797 = vmatpush1.msra.mxu0 0.0
        %7798 = vmatprep.subr.mxu0 0.0
        %7799 = vmatpush1.msra.mxu0 0.0
        %7800 = vmatprep.subr.mxu0 0.0
        %7801 = vmatpush1.msra.mxu0 0.0
        %7802 = vmatprep.subr.mxu0 0.0
        %7803 = vmatpush1.msra.mxu0 0.0
        %7804 = vmatprep.subr.mxu0 0.0
        %7805 = vmatpush1.msra.mxu0 0.0
        %7806 = vmatprep.subr.mxu0 0.0
        %7807 = vmatpush1.msra.mxu0 0.0
        %7808 = vmatprep.subr.mxu0 0.0
        %7809 = vmatpush1.msra.mxu0 0.0
        %7810 = vmatprep.subr.mxu0 0.0
        %7811 = vmatpush1.msra.mxu0 0.0
        %7812 = vmatprep.subr.mxu0 0.0
        %7813 = vmatpush1.msra.mxu0 0.0
        %7814 = vmatprep.subr.mxu0 0.0
        %7815 = vmatpush1.msra.mxu0 0.0
        %7816 = vmatprep.subr.mxu0 0.0
        %7817 = vmatpush1.msra.mxu0 %v7781
        %7818 = vmatprep.subr.mxu0 0.0
        %7819 = vmatpush2.msra.mxu0 0.0
        %7820 = vmatprep.subr.mxu0 0.0
        %7821 = vmatpush2.msra.mxu0 0.0
        %7822 = vmatprep.subr.mxu0 0.0
        %7823 = vmatpush2.msra.mxu0 0.0
        %7824 = vmatprep.subr.mxu0 0.0
        %7825 = vmatpush2.msra.mxu0 0.0
        %7826 = vmatprep.subr.mxu0 0.0
        %7827 = vmatpush2.msra.mxu0 0.0
        %7828 = vmatprep.subr.mxu0 0.0
        %7829 = vmatpush2.msra.mxu0 0.0
        %7830 = vmatprep.subr.mxu0 0.0
        %7831 = vmatpush2.msra.mxu0 0.0
        %7832 = vmatprep.subr.mxu0 0.0
        %7833 = vmatpush2.msra.mxu0 0.0
        %7834 = vmatprep.subr.mxu0 0.0
        %7835 = vmatpush2.msra.mxu0 0.0
        %7836 = vmatprep.subr.mxu0 0.0
        %7837 = vmatpush2.msra.mxu0 0.0
        %7838 = vmatprep.subr.mxu0 0.0
        %7839 = vmatpush2.msra.mxu0 0.0
        %7840 = vmatprep.subr.mxu0 0.0
        %7841 = vmatpush2.msra.mxu0 0.0
        %7842 = vmatprep.subr.mxu0 0.0
        %7843 = vmatpush2.msra.mxu0 0.0
        %7844 = vmatprep.subr.mxu0 0.0
        %7845 = vmatpush2.msra.mxu0 0.0
        %7846 = vmatprep.subr.mxu0 0.0
        %7847 = vmatpush2.msra.mxu0 0.0
        %7848 = vmatprep.subr.mxu0 0.0
        %7849 = vmatpush2.msra.mxu0 0.0
        %7850 = vmatprep.mubr.f32.mxu0 0.0
        %7851 = vmatmul.mubr.f32.gmra.mxu0 %v7784
        %v7852 = vpop.f32.mrf.mxu0
        %v7853 = vadd.f32 0.0, %v7852
        %v7854 = vpop.f32.mrf.mxu0
        %7855 = vdwg.mxu0
        %7856 = vrot.lane.b32.xlu0 %v2649, 104
        %v7857 = vpop.permute.xlu0 %7856
        %v7860 = vsel %vm190, %v7323, 0
        %7862 = vmatprep.subr.mxu0 0.0
        %7863 = vmatpush1.msra.mxu0 0.0
        %7864 = vmatprep.subr.mxu0 0.0
        %7865 = vmatpush1.msra.mxu0 0.0
        %7866 = vmatprep.subr.mxu0 0.0
        %7867 = vmatpush1.msra.mxu0 0.0
        %7868 = vmatprep.subr.mxu0 0.0
        %7869 = vmatpush1.msra.mxu0 0.0
        %7870 = vmatprep.subr.mxu0 0.0
        %7871 = vmatpush1.msra.mxu0 0.0
        %7872 = vmatprep.subr.mxu0 0.0
        %7873 = vmatpush1.msra.mxu0 0.0
        %7874 = vmatprep.subr.mxu0 0.0
        %7875 = vmatpush1.msra.mxu0 0.0
        %7876 = vmatprep.subr.mxu0 0.0
        %7877 = vmatpush1.msra.mxu0 0.0
        %7878 = vmatprep.subr.mxu0 0.0
        %7879 = vmatpush1.msra.mxu0 0.0
        %7880 = vmatprep.subr.mxu0 0.0
        %7881 = vmatpush1.msra.mxu0 0.0
        %7882 = vmatprep.subr.mxu0 0.0
        %7883 = vmatpush1.msra.mxu0 0.0
        %7884 = vmatprep.subr.mxu0 0.0
        %7885 = vmatpush1.msra.mxu0 0.0
        %7886 = vmatprep.subr.mxu0 0.0
        %7887 = vmatpush1.msra.mxu0 0.0
        %7888 = vmatprep.subr.mxu0 0.0
        %7889 = vmatpush1.msra.mxu0 0.0
        %7890 = vmatprep.subr.mxu0 0.0
        %7891 = vmatpush1.msra.mxu0 0.0
        %7892 = vmatprep.subr.mxu0 0.0
        %7893 = vmatpush1.msra.mxu0 %v7857
        %7894 = vmatprep.subr.mxu0 0.0
        %7895 = vmatpush2.msra.mxu0 0.0
        %7896 = vmatprep.subr.mxu0 0.0
        %7897 = vmatpush2.msra.mxu0 0.0
        %7898 = vmatprep.subr.mxu0 0.0
        %7899 = vmatpush2.msra.mxu0 0.0
        %7900 = vmatprep.subr.mxu0 0.0
        %7901 = vmatpush2.msra.mxu0 0.0
        %7902 = vmatprep.subr.mxu0 0.0
        %7903 = vmatpush2.msra.mxu0 0.0
        %7904 = vmatprep.subr.mxu0 0.0
        %7905 = vmatpush2.msra.mxu0 0.0
        %7906 = vmatprep.subr.mxu0 0.0
        %7907 = vmatpush2.msra.mxu0 0.0
        %7908 = vmatprep.subr.mxu0 0.0
        %7909 = vmatpush2.msra.mxu0 0.0
        %7910 = vmatprep.subr.mxu0 0.0
        %7911 = vmatpush2.msra.mxu0 0.0
        %7912 = vmatprep.subr.mxu0 0.0
        %7913 = vmatpush2.msra.mxu0 0.0
        %7914 = vmatprep.subr.mxu0 0.0
        %7915 = vmatpush2.msra.mxu0 0.0
        %7916 = vmatprep.subr.mxu0 0.0
        %7917 = vmatpush2.msra.mxu0 0.0
        %7918 = vmatprep.subr.mxu0 0.0
        %7919 = vmatpush2.msra.mxu0 0.0
        %7920 = vmatprep.subr.mxu0 0.0
        %7921 = vmatpush2.msra.mxu0 0.0
        %7922 = vmatprep.subr.mxu0 0.0
        %7923 = vmatpush2.msra.mxu0 0.0
        %7924 = vmatprep.subr.mxu0 0.0
        %7925 = vmatpush2.msra.mxu0 0.0
        %7926 = vmatprep.mubr.f32.mxu0 0.0
        %7927 = vmatmul.mubr.f32.gmra.mxu0 %v7860
        %v7928 = vpop.f32.mrf.mxu0
        %v7929 = vadd.f32 0.0, %v7928
        %v7930 = vpop.f32.mrf.mxu0
        %7931 = vdwg.mxu0
        %7940 = vrot.lane.b32.xlu0 %v4734, 8
        %v7941 = vpop.permute.xlu0 %7940
        %7942 = vrot.lane.b32.xlu0 %v4811, 8
        %v7943 = vpop.permute.xlu0 %7942
        %7944 = vrot.lane.b32.xlu0 %v4888, 8
        %v7945 = vpop.permute.xlu0 %7944
        %7946 = vrot.lane.b32.xlu0 %v4965, 8
        %v7947 = vpop.permute.xlu0 %7946
        %7948 = vrot.lane.b32.xlu0 %v5042, 8
        %v7949 = vpop.permute.xlu0 %7948
        %7950 = vrot.lane.b32.xlu0 %v5119, 8
        %v7951 = vpop.permute.xlu0 %7950
        %7952 = vrot.lane.b32.xlu0 %v5196, 8
        %v7953 = vpop.permute.xlu0 %7952
        %7954 = vrot.lane.b32.xlu0 %v5273, 8
        %v7955 = vpop.permute.xlu0 %7954
        %7972 = vrot.lane.b32.xlu0 %v6069, 16
        %v7973 = vpop.permute.xlu0 %7972
        %7974 = vrot.lane.b32.xlu0 %v6145, 16
        %v7975 = vpop.permute.xlu0 %7974
        %7976 = vrot.lane.b32.xlu0 %v6221, 16
        %v7977 = vpop.permute.xlu0 %7976
        %7978 = vrot.lane.b32.xlu0 %v6297, 16
        %v7979 = vpop.permute.xlu0 %7978
        %7980 = vrot.lane.b32.xlu0 %v6373, 16
        %v7981 = vpop.permute.xlu0 %7980
        %7982 = vrot.lane.b32.xlu0 %v6449, 16
        %v7983 = vpop.permute.xlu0 %7982
        %7984 = vrot.lane.b32.xlu0 %v6525, 16
        %v7985 = vpop.permute.xlu0 %7984
        %7986 = vrot.lane.b32.xlu0 %v6601, 16
        %v7987 = vpop.permute.xlu0 %7986
        %8004 = vrot.lane.b32.xlu0 %v7397, 24
        %v8005 = vpop.permute.xlu0 %8004
        %8006 = vrot.lane.b32.xlu0 %v7473, 24
        %v8007 = vpop.permute.xlu0 %8006
        %8008 = vrot.lane.b32.xlu0 %v7549, 24
        %v8009 = vpop.permute.xlu0 %8008
        %8010 = vrot.lane.b32.xlu0 %v7625, 24
        %v8011 = vpop.permute.xlu0 %8010
        %8012 = vrot.lane.b32.xlu0 %v7701, 24
        %v8013 = vpop.permute.xlu0 %8012
        %8014 = vrot.lane.b32.xlu0 %v7777, 24
        %v8015 = vpop.permute.xlu0 %8014
        %8016 = vrot.lane.b32.xlu0 %v7853, 24
        %v8017 = vpop.permute.xlu0 %8016
        %8018 = vrot.lane.b32.xlu0 %v7929, 24
        %v8019 = vpop.permute.xlu0 %8018
        %v8028 = vsel %vm190, %v3426, %v7941
        %v8029 = vsel %vm190, %v3499, %v7943
        %v8030 = vsel %vm190, %v3572, %v7945
        %v8031 = vsel %vm190, %v3645, %v7947
        %v8032 = vsel %vm190, %v3718, %v7949
        %v8033 = vsel %vm190, %v3791, %v7951
        %v8034 = vsel %vm190, %v3864, %v7953
        %v8035 = vsel %vm190, %v3937, %v7955
        %vm8036 = vcmask 130048
        %v8037 = vsel %vm8036, %v8028, %v7973
        %v8038 = vsel %vm8036, %v8029, %v7975
        %v8039 = vsel %vm8036, %v8030, %v7977
        %v8040 = vsel %vm8036, %v8031, %v7979
        %v8041 = vsel %vm8036, %v8032, %v7981
        %v8042 = vsel %vm8036, %v8033, %v7983
        %v8043 = vsel %vm8036, %v8034, %v7985
        %v8044 = vsel %vm8036, %v8035, %v7987
        %vm8045 = vcmask 195584
        %v8046 = vsel %vm8045, %v8037, %v8005
        %v8047 = vsel %vm8045, %v8038, %v8007
        %v8048 = vsel %vm8045, %v8039, %v8009
        %v8049 = vsel %vm8045, %v8040, %v8011
        %v8050 = vsel %vm8045, %v8041, %v8013
        %v8051 = vsel %vm8045, %v8042, %v8015
        %v8052 = vsel %vm8045, %v8043, %v8017
        %v8053 = vsel %vm8045, %v8044, %v8019
        %v8054 = vld [vmem:[#allocation2 + $0x50] sm:$0xff]
        %v8055 = vld [vmem:[#allocation2 + $0xc8] sm:$0xff]
        %v8056 = vld [vmem:[#allocation2 + $0x140] sm:$0xff]
        %v8057 = vld [vmem:[#allocation2 + $0x1b8] sm:$0xff]
        %v8058 = vld [vmem:[%s2 + $0xa] sm:$0x1]
        %v8060 = vlaneseq
        %v8061 = vshrl.u32 %v8060, 7
        %v8062 = vsub.s32 0, %v8061
        %v8063 = vrot.slane %v8058, %v8062
        %v8073 = vrot.slane %v8046, 7
        %v8074 = vrot.slane %v8047, 6
        %vm8075 = vcmask 1041409
        %v8076 = vsel %vm8075, %v8074, %v8073
        %v8077 = vrot.slane %v8048, 5
        %vm8078 = vcmask 1042434
        %v8079 = vsel %vm8078, %v8077, %v8076
        %v8080 = vrot.slane %v8049, 4
        %vm8081 = vcmask 1043459
        %v8082 = vsel %vm8081, %v8080, %v8079
        %v8083 = vrot.slane %v8050, 3
        %vm8084 = vcmask 1044484
        %v8085 = vsel %vm8084, %v8083, %v8082
        %v8086 = vrot.slane %v8051, 2
        %vm8087 = vcmask 1045509
        %v8088 = vsel %vm8087, %v8086, %v8085
        %v8089 = vrot.slane %v8052, 1
        %vm8090 = vcmask 1046534
        %v8091 = vsel %vm8090, %v8089, %v8088
        %vm8092 = vcmask 1047559
        %v8093 = vsel %vm8092, %v8053, %v8091
        %v8094 = vsel %vm275, %v8093, 0
        %8096 = vmatprep.subr.mxu0 0.0
        %8097 = vmatpush1.msra.mxu0 0.0
        %8098 = vmatprep.subr.mxu0 0.0
        %8099 = vmatpush1.msra.mxu0 0.0
        %8100 = vmatprep.subr.mxu0 0.0
        %8101 = vmatpush1.msra.mxu0 0.0
        %8102 = vmatprep.subr.mxu0 0.0
        %8103 = vmatpush1.msra.mxu0 0.0
        %8104 = vmatprep.subr.mxu0 0.0
        %8105 = vmatpush1.msra.mxu0 0.0
        %8106 = vmatprep.subr.mxu0 0.0
        %8107 = vmatpush1.msra.mxu0 0.0
        %8108 = vmatprep.subr.mxu0 0.0
        %8109 = vmatpush1.msra.mxu0 0.0
        %8110 = vmatprep.subr.mxu0 0.0
        %8111 = vmatpush1.msra.mxu0 0.0
        %8112 = vmatprep.subr.mxu0 0.0
        %8113 = vmatpush1.msra.mxu0 0.0
        %8114 = vmatprep.subr.mxu0 0.0
        %8115 = vmatpush1.msra.mxu0 0.0
        %8116 = vmatprep.subr.mxu0 0.0
        %8117 = vmatpush1.msra.mxu0 0.0
        %8118 = vmatprep.subr.mxu0 0.0
        %8119 = vmatpush1.msra.mxu0 0.0
        %8120 = vmatprep.subr.mxu0 0.0
        %8121 = vmatpush1.msra.mxu0 %v8057
        %8122 = vmatprep.subr.mxu0 0.0
        %8123 = vmatpush1.msra.mxu0 %v8056
        %8124 = vmatprep.subr.mxu0 0.0
        %8125 = vmatpush1.msra.mxu0 %v8055
        %8126 = vmatprep.subr.mxu0 0.0
        %8127 = vmatpush1.msra.mxu0 %v8054
        %8128 = vmatprep.subr.mxu0 0.0
        %8129 = vmatpush2.msra.mxu0 0.0
        %8130 = vmatprep.subr.mxu0 0.0
        %8131 = vmatpush2.msra.mxu0 0.0
        %8132 = vmatprep.subr.mxu0 0.0
        %8133 = vmatpush2.msra.mxu0 0.0
        %8134 = vmatprep.subr.mxu0 0.0
        %8135 = vmatpush2.msra.mxu0 0.0
        %8136 = vmatprep.subr.mxu0 0.0
        %8137 = vmatpush2.msra.mxu0 0.0
        %8138 = vmatprep.subr.mxu0 0.0
        %8139 = vmatpush2.msra.mxu0 0.0
        %8140 = vmatprep.subr.mxu0 0.0
        %8141 = vmatpush2.msra.mxu0 0.0
        %8142 = vmatprep.subr.mxu0 0.0
        %8143 = vmatpush2.msra.mxu0 0.0
        %8144 = vmatprep.subr.mxu0 0.0
        %8145 = vmatpush2.msra.mxu0 0.0
        %8146 = vmatprep.subr.mxu0 0.0
        %8147 = vmatpush2.msra.mxu0 0.0
        %8148 = vmatprep.subr.mxu0 0.0
        %8149 = vmatpush2.msra.mxu0 0.0
        %8150 = vmatprep.subr.mxu0 0.0
        %8151 = vmatpush2.msra.mxu0 0.0
        %8152 = vmatprep.subr.mxu0 0.0
        %8153 = vmatpush2.msra.mxu0 0.0
        %8154 = vmatprep.subr.mxu0 0.0
        %8155 = vmatpush2.msra.mxu0 0.0
        %8156 = vmatprep.subr.mxu0 0.0
        %8157 = vmatpush2.msra.mxu0 0.0
        %8158 = vmatprep.subr.mxu0 0.0
        %8159 = vmatpush2.msra.mxu0 0.0
        %8160 = vmatprep.mubr.f32.mxu0 0.0
        %8161 = vmatmul.mubr.f32.gmra.mxu0 %v8094
        %v8162 = vpop.f32.mrf.mxu0
        %v8163 = vadd.f32 %v8063, %v8162
        %v8164 = vpop.f32.mrf.mxu0
        %8165 = vdwg.mxu0
        %8166 = vrot.lane.b32.xlu0 %v1519, 32
        %v8167 = vpop.permute.xlu0 %8166
        %v8169 = vadd.f32 %v8163, %v8167
        %v8170 = vld [vmem:[%s2 + $0xd] sm:$0x1]
        %v8171 = vld [vmem:[%s2 + $0xe] sm:$0x1]
        %v8172 = vsel %vm275, %v8169, 0.0
        %8173 = vadd.xlane.f32.xlu0 %v8172
        %v8174 = vpop.xlane.xlu0 %8173
        %v8175 = vrcp.pop 32.0
        %v8176 = vmul.f32 %v8174, %v8175
        %v8177 = vsub.f32 %v8169, %v8176
        %v8178 = vmul.f32 %v8177, %v8177
        %v8179 = vsel %vm275, %v8178, 0.0
        %8180 = vadd.xlane.f32.xlu0 %v8179
        %v8181 = vpop.xlane.xlu0 %8180
        %v8182 = vmul.f32 %v8181, %v8175
        %v8183 = vadd.f32 %v8182, 1e-05
        %v8184 = vrsqrt.pop %v8183
        %v8185 = vmul.f32 %v8177, %v8184
        %v8187 = vlaneseq
        %v8188 = vshrl.u32 %v8187, 7
        %v8189 = vsub.s32 0, %v8188
        %v8190 = vrot.slane %v8170, %v8189
        %v8192 = vmul.f32 %v8185, %v8190
        %v8194 = vlaneseq
        %v8195 = vshrl.u32 %v8194, 7
        %v8196 = vsub.s32 0, %v8195
        %v8197 = vrot.slane %v8171, %v8196
        %v8199 = vadd.f32 %v8192, %v8197
        %v8200 = vld [vmem:[#allocation2 + $0x58] sm:$0xff]
        %v8201 = vld [vmem:[#allocation2 + $0xd0] sm:$0xff]
        %v8202 = vld [vmem:[#allocation2 + $0x148] sm:$0xff]
        %v8203 = vld [vmem:[#allocation2 + $0x1c0] sm:$0xff]
        %v8204 = vld [vmem:[%s2 + $0xb] sm:$0x1]
        %v8206 = vlaneseq
        %v8207 = vshrl.u32 %v8206, 7
        %v8208 = vsub.s32 0, %v8207
        %v8209 = vrot.slane %v8204, %v8208
        %v8212 = vsel %vm275, %v8199, 0
        %8214 = vmatprep.subr.mxu0 0.0
        %8215 = vmatpush1.msra.mxu0 0.0
        %8216 = vmatprep.subr.mxu0 0.0
        %8217 = vmatpush1.msra.mxu0 0.0
        %8218 = vmatprep.subr.mxu0 0.0
        %8219 = vmatpush1.msra.mxu0 0.0
        %8220 = vmatprep.subr.mxu0 0.0
        %8221 = vmatpush1.msra.mxu0 0.0
        %8222 = vmatprep.subr.mxu0 0.0
        %8223 = vmatpush1.msra.mxu0 0.0
        %8224 = vmatprep.subr.mxu0 0.0
        %8225 = vmatpush1.msra.mxu0 0.0
        %8226 = vmatprep.subr.mxu0 0.0
        %8227 = vmatpush1.msra.mxu0 0.0
        %8228 = vmatprep.subr.mxu0 0.0
        %8229 = vmatpush1.msra.mxu0 0.0
        %8230 = vmatprep.subr.mxu0 0.0
        %8231 = vmatpush1.msra.mxu0 0.0
        %8232 = vmatprep.subr.mxu0 0.0
        %8233 = vmatpush1.msra.mxu0 0.0
        %8234 = vmatprep.subr.mxu0 0.0
        %8235 = vmatpush1.msra.mxu0 0.0
        %8236 = vmatprep.subr.mxu0 0.0
        %8237 = vmatpush1.msra.mxu0 0.0
        %8238 = vmatprep.subr.mxu0 0.0
        %8239 = vmatpush1.msra.mxu0 %v8203
        %8240 = vmatprep.subr.mxu0 0.0
        %8241 = vmatpush1.msra.mxu0 %v8202
        %8242 = vmatprep.subr.mxu0 0.0
        %8243 = vmatpush1.msra.mxu0 %v8201
        %8244 = vmatprep.subr.mxu0 0.0
        %8245 = vmatpush1.msra.mxu0 %v8200
        %8246 = vmatprep.subr.mxu0 0.0
        %8247 = vmatpush2.msra.mxu0 0.0
        %8248 = vmatprep.subr.mxu0 0.0
        %8249 = vmatpush2.msra.mxu0 0.0
        %8250 = vmatprep.subr.mxu0 0.0
        %8251 = vmatpush2.msra.mxu0 0.0
        %8252 = vmatprep.subr.mxu0 0.0
        %8253 = vmatpush2.msra.mxu0 0.0
        %8254 = vmatprep.subr.mxu0 0.0
        %8255 = vmatpush2.msra.mxu0 0.0
        %8256 = vmatprep.subr.mxu0 0.0
        %8257 = vmatpush2.msra.mxu0 0.0
        %8258 = vmatprep.subr.mxu0 0.0
        %8259 = vmatpush2.msra.mxu0 0.0
        %8260 = vmatprep.subr.mxu0 0.0
        %8261 = vmatpush2.msra.mxu0 0.0
        %8262 = vmatprep.subr.mxu0 0.0
        %8263 = vmatpush2.msra.mxu0 0.0
        %8264 = vmatprep.subr.mxu0 0.0
        %8265 = vmatpush2.msra.mxu0 0.0
        %8266 = vmatprep.subr.mxu0 0.0
        %8267 = vmatpush2.msra.mxu0 0.0
        %8268 = vmatprep.subr.mxu0 0.0
        %8269 = vmatpush2.msra.mxu0 0.0
        %8270 = vmatprep.subr.mxu0 0.0
        %8271 = vmatpush2.msra.mxu0 0.0
        %8272 = vmatprep.subr.mxu0 0.0
        %8273 = vmatpush2.msra.mxu0 0.0
        %8274 = vmatprep.subr.mxu0 0.0
        %8275 = vmatpush2.msra.mxu0 0.0
        %8276 = vmatprep.subr.mxu0 0.0
        %8277 = vmatpush2.msra.mxu0 0.0
        %8278 = vmatprep.mubr.f32.mxu0 0.0
        %8279 = vmatmul.mubr.f32.gmra.mxu0 %v8212
        %v8280 = vpop.f32.mrf.mxu0
        %v8281 = vadd.f32 %v8209, %v8280
        %v8282 = vpop.f32.mrf.mxu0
        %8283 = vdwg.mxu0
        %v8284 = vmax.f32 %v8281, 0.0
        %v8285 = vld [vmem:[#allocation2 + $0x60] sm:$0xff]
        %v8286 = vld [vmem:[#allocation2 + $0xd8] sm:$0xff]
        %v8287 = vld [vmem:[#allocation2 + $0x150] sm:$0xff]
        %v8288 = vld [vmem:[#allocation2 + $0x1c8] sm:$0xff]
        %v8289 = vld [vmem:[#allocation2 + $0x240] sm:$0xff]
        %v8290 = vld [vmem:[#allocation2 + $0x2b8] sm:$0xff]
        %v8291 = vld [vmem:[#allocation2 + $0x330] sm:$0xff]
        %v8292 = vld [vmem:[#allocation2 + $0x3a8] sm:$0xff]
        %v8293 = vld [vmem:[#allocation2 + $0x420] sm:$0xff]
        %v8294 = vld [vmem:[#allocation2 + $0x498] sm:$0xff]
        %v8295 = vld [vmem:[#allocation2 + $0x510] sm:$0xff]
        %v8296 = vld [vmem:[#allocation2 + $0x588] sm:$0xff]
        %v8297 = vld [vmem:[#allocation2 + $0x600] sm:$0xff]
        %v8298 = vld [vmem:[#allocation2 + $0x678] sm:$0xff]
        %v8299 = vld [vmem:[#allocation2 + $0x6f0] sm:$0xff]
        %v8300 = vld [vmem:[#allocation2 + $0x768] sm:$0xff]
        %v8301 = vld [vmem:[%s2 + $0xc] sm:$0x1]
        %v8303 = vlaneseq
        %v8304 = vshrl.u32 %v8303, 7
        %v8305 = vsub.s32 0, %v8304
        %v8306 = vrot.slane %v8301, %v8305
        %8308 = vmatprep.subr.mxu0 0.0
        %8309 = vmatpush1.msra.mxu0 %v8300
        %8310 = vmatprep.subr.mxu0 0.0
        %8311 = vmatpush1.msra.mxu0 %v8299
        %8312 = vmatprep.subr.mxu0 0.0
        %8313 = vmatpush1.msra.mxu0 %v8298
        %8314 = vmatprep.subr.mxu0 0.0
        %8315 = vmatpush1.msra.mxu0 %v8297
        %8316 = vmatprep.subr.mxu0 0.0
        %8317 = vmatpush1.msra.mxu0 %v8296
        %8318 = vmatprep.subr.mxu0 0.0
        %8319 = vmatpush1.msra.mxu0 %v8295
        %8320 = vmatprep.subr.mxu0 0.0
        %8321 = vmatpush1.msra.mxu0 %v8294
        %8322 = vmatprep.subr.mxu0 0.0
        %8323 = vmatpush1.msra.mxu0 %v8293
        %8324 = vmatprep.subr.mxu0 0.0
        %8325 = vmatpush1.msra.mxu0 %v8292
        %8326 = vmatprep.subr.mxu0 0.0
        %8327 = vmatpush1.msra.mxu0 %v8291
        %8328 = vmatprep.subr.mxu0 0.0
        %8329 = vmatpush1.msra.mxu0 %v8290
        %8330 = vmatprep.subr.mxu0 0.0
        %8331 = vmatpush1.msra.mxu0 %v8289
        %8332 = vmatprep.subr.mxu0 0.0
        %8333 = vmatpush1.msra.mxu0 %v8288
        %8334 = vmatprep.subr.mxu0 0.0
        %8335 = vmatpush1.msra.mxu0 %v8287
        %8336 = vmatprep.subr.mxu0 0.0
        %8337 = vmatpush1.msra.mxu0 %v8286
        %8338 = vmatprep.subr.mxu0 0.0
        %8339 = vmatpush1.msra.mxu0 %v8285
        %8340 = vmatprep.subr.mxu0 0.0
        %8341 = vmatpush2.msra.mxu0 0.0
        %8342 = vmatprep.subr.mxu0 0.0
        %8343 = vmatpush2.msra.mxu0 0.0
        %8344 = vmatprep.subr.mxu0 0.0
        %8345 = vmatpush2.msra.mxu0 0.0
        %8346 = vmatprep.subr.mxu0 0.0
        %8347 = vmatpush2.msra.mxu0 0.0
        %8348 = vmatprep.subr.mxu0 0.0
        %8349 = vmatpush2.msra.mxu0 0.0
        %8350 = vmatprep.subr.mxu0 0.0
        %8351 = vmatpush2.msra.mxu0 0.0
        %8352 = vmatprep.subr.mxu0 0.0
        %8353 = vmatpush2.msra.mxu0 0.0
        %8354 = vmatprep.subr.mxu0 0.0
        %8355 = vmatpush2.msra.mxu0 0.0
        %8356 = vmatprep.subr.mxu0 0.0
        %8357 = vmatpush2.msra.mxu0 0.0
        %8358 = vmatprep.subr.mxu0 0.0
        %8359 = vmatpush2.msra.mxu0 0.0
        %8360 = vmatprep.subr.mxu0 0.0
        %8361 = vmatpush2.msra.mxu0 0.0
        %8362 = vmatprep.subr.mxu0 0.0
        %8363 = vmatpush2.msra.mxu0 0.0
        %8364 = vmatprep.subr.mxu0 0.0
        %8365 = vmatpush2.msra.mxu0 0.0
        %8366 = vmatprep.subr.mxu0 0.0
        %8367 = vmatpush2.msra.mxu0 0.0
        %8368 = vmatprep.subr.mxu0 0.0
        %8369 = vmatpush2.msra.mxu0 0.0
        %8370 = vmatprep.subr.mxu0 0.0
        %8371 = vmatpush2.msra.mxu0 0.0
        %8372 = vmatprep.mubr.f32.mxu0 0.0
        %8373 = vmatmul.mubr.f32.gmra.mxu0 %v8284
        %v8374 = vpop.f32.mrf.mxu0
        %v8375 = vadd.f32 %v8306, %v8374
        %v8376 = vpop.f32.mrf.mxu0
        %8377 = vdwg.mxu0
        %v8378 = vadd.f32 %v8375, %v8199
        %v8379 = vld [vmem:[%s2 + $0xf] sm:$0x1]
        %v8380 = vld [vmem:[%s2 + $0x10] sm:$0x1]
        %v8381 = vsel %vm275, %v8378, 0.0
        %8382 = vadd.xlane.f32.xlu0 %v8381
        %v8383 = vpop.xlane.xlu0 %8382
        %v8384 = vmul.f32 %v8383, %v8175
        %v8385 = vsub.f32 %v8378, %v8384
        %v8386 = vmul.f32 %v8385, %v8385
        %v8387 = vsel %vm275, %v8386, 0.0
        %8388 = vadd.xlane.f32.xlu0 %v8387
        %v8389 = vpop.xlane.xlu0 %8388
        %v8390 = vmul.f32 %v8389, %v8175
        %v8391 = vadd.f32 %v8390, 1e-05
        %v8392 = vrsqrt.pop %v8391
        %v8393 = vmul.f32 %v8385, %v8392
        %v8395 = vlaneseq
        %v8396 = vshrl.u32 %v8395, 7
        %v8397 = vsub.s32 0, %v8396
        %v8398 = vrot.slane %v8379, %v8397
        %v8400 = vmul.f32 %v8393, %v8398
        %v8402 = vlaneseq
        %v8403 = vshrl.u32 %v8402, 7
        %v8404 = vsub.s32 0, %v8403
        %v8405 = vrot.slane %v8380, %v8404
        %v8407 = vadd.f32 %v8400, %v8405
        %v8408 = vld [vmem:[#allocation2 + $0x68] sm:$0xff]
        %v8409 = vld [vmem:[#allocation2 + $0xe0] sm:$0xff]
        %v8410 = vld [vmem:[#allocation2 + $0x158] sm:$0xff]
        %v8411 = vld [vmem:[#allocation2 + $0x1d0] sm:$0xff]
        %v8412 = vld [vmem:[%s2 + $0x11] sm:$0x1]
        %v8414 = vlaneseq
        %v8415 = vshrl.u32 %v8414, 7
        %v8416 = vsub.s32 0, %v8415
        %v8417 = vrot.slane %v8412, %v8416
        %v8420 = vsel %vm275, %v8407, 0
        %8422 = vmatprep.subr.mxu0 0.0
        %8423 = vmatpush1.msra.mxu0 0.0
        %8424 = vmatprep.subr.mxu0 0.0
        %8425 = vmatpush1.msra.mxu0 0.0
        %8426 = vmatprep.subr.mxu0 0.0
        %8427 = vmatpush1.msra.mxu0 0.0
        %8428 = vmatprep.subr.mxu0 0.0
        %8429 = vmatpush1.msra.mxu0 0.0
        %8430 = vmatprep.subr.mxu0 0.0
        %8431 = vmatpush1.msra.mxu0 0.0
        %8432 = vmatprep.subr.mxu0 0.0
        %8433 = vmatpush1.msra.mxu0 0.0
        %8434 = vmatprep.subr.mxu0 0.0
        %8435 = vmatpush1.msra.mxu0 0.0
        %8436 = vmatprep.subr.mxu0 0.0
        %8437 = vmatpush1.msra.mxu0 0.0
        %8438 = vmatprep.subr.mxu0 0.0
        %8439 = vmatpush1.msra.mxu0 0.0
        %8440 = vmatprep.subr.mxu0 0.0
        %8441 = vmatpush1.msra.mxu0 0.0
        %8442 = vmatprep.subr.mxu0 0.0
        %8443 = vmatpush1.msra.mxu0 0.0
        %8444 = vmatprep.subr.mxu0 0.0
        %8445 = vmatpush1.msra.mxu0 0.0
        %8446 = vmatprep.subr.mxu0 0.0
        %8447 = vmatpush1.msra.mxu0 %v8411
        %8448 = vmatprep.subr.mxu0 0.0
        %8449 = vmatpush1.msra.mxu0 %v8410
        %8450 = vmatprep.subr.mxu0 0.0
        %8451 = vmatpush1.msra.mxu0 %v8409
        %8452 = vmatprep.subr.mxu0 0.0
        %8453 = vmatpush1.msra.mxu0 %v8408
        %8454 = vmatprep.subr.mxu0 0.0
        %8455 = vmatpush2.msra.mxu0 0.0
        %8456 = vmatprep.subr.mxu0 0.0
        %8457 = vmatpush2.msra.mxu0 0.0
        %8458 = vmatprep.subr.mxu0 0.0
        %8459 = vmatpush2.msra.mxu0 0.0
        %8460 = vmatprep.subr.mxu0 0.0
        %8461 = vmatpush2.msra.mxu0 0.0
        %8462 = vmatprep.subr.mxu0 0.0
        %8463 = vmatpush2.msra.mxu0 0.0
        %8464 = vmatprep.subr.mxu0 0.0
        %8465 = vmatpush2.msra.mxu0 0.0
        %8466 = vmatprep.subr.mxu0 0.0
        %8467 = vmatpush2.msra.mxu0 0.0
        %8468 = vmatprep.subr.mxu0 0.0
        %8469 = vmatpush2.msra.mxu0 0.0
        %8470 = vmatprep.subr.mxu0 0.0
        %8471 = vmatpush2.msra.mxu0 0.0
        %8472 = vmatprep.subr.mxu0 0.0
        %8473 = vmatpush2.msra.mxu0 0.0
        %8474 = vmatprep.subr.mxu0 0.0
        %8475 = vmatpush2.msra.mxu0 0.0
        %8476 = vmatprep.subr.mxu0 0.0
        %8477 = vmatpush2.msra.mxu0 0.0
        %8478 = vmatprep.subr.mxu0 0.0
        %8479 = vmatpush2.msra.mxu0 0.0
        %8480 = vmatprep.subr.mxu0 0.0
        %8481 = vmatpush2.msra.mxu0 0.0
        %8482 = vmatprep.subr.mxu0 0.0
        %8483 = vmatpush2.msra.mxu0 0.0
        %8484 = vmatprep.subr.mxu0 0.0
        %8485 = vmatpush2.msra.mxu0 0.0
        %8486 = vmatprep.mubr.f32.mxu0 0.0
        %8487 = vmatmul.mubr.f32.gmra.mxu0 %v8420
        %v8488 = vpop.f32.mrf.mxu0
        %v8489 = vadd.f32 %v8417, %v8488
        %v8490 = vpop.f32.mrf.mxu0
        %8491 = vdwg.mxu0
        %v8492 = vmax.f32 %v8489, 0.0
        %v8493 = vld [vmem:[#allocation2 + $0x70] sm:$0xff]
        %v8494 = vld [vmem:[#allocation2 + $0xe8] sm:$0xff]
        %v8495 = vld [vmem:[%s2 + $0x12] sm:$0x1]
        %v8497 = vlaneseq
        %v8498 = vshrl.u32 %v8497, 7
        %v8499 = vsub.s32 0, %v8498
        %v8500 = vrot.slane %v8495, %v8499
        %v8503 = vsel %vm8036, %v8492, 0
        %8505 = vmatprep.subr.mxu0 0.0
        %8506 = vmatpush1.msra.mxu0 0.0
        %8507 = vmatprep.subr.mxu0 0.0
        %8508 = vmatpush1.msra.mxu0 0.0
        %8509 = vmatprep.subr.mxu0 0.0
        %8510 = vmatpush1.msra.mxu0 0.0
        %8511 = vmatprep.subr.mxu0 0.0
        %8512 = vmatpush1.msra.mxu0 0.0
        %8513 = vmatprep.subr.mxu0 0.0
        %8514 = vmatpush1.msra.mxu0 0.0
        %8515 = vmatprep.subr.mxu0 0.0
        %8516 = vmatpush1.msra.mxu0 0.0
        %8517 = vmatprep.subr.mxu0 0.0
        %8518 = vmatpush1.msra.mxu0 0.0
        %8519 = vmatprep.subr.mxu0 0.0
        %8520 = vmatpush1.msra.mxu0 0.0
        %8521 = vmatprep.subr.mxu0 0.0
        %8522 = vmatpush1.msra.mxu0 0.0
        %8523 = vmatprep.subr.mxu0 0.0
        %8524 = vmatpush1.msra.mxu0 0.0
        %8525 = vmatprep.subr.mxu0 0.0
        %8526 = vmatpush1.msra.mxu0 0.0
        %8527 = vmatprep.subr.mxu0 0.0
        %8528 = vmatpush1.msra.mxu0 0.0
        %8529 = vmatprep.subr.mxu0 0.0
        %8530 = vmatpush1.msra.mxu0 0.0
        %8531 = vmatprep.subr.mxu0 0.0
        %8532 = vmatpush1.msra.mxu0 0.0
        %8533 = vmatprep.subr.mxu0 0.0
        %8534 = vmatpush1.msra.mxu0 %v8494
        %8535 = vmatprep.subr.mxu0 0.0
        %8536 = vmatpush1.msra.mxu0 %v8493
        %8537 = vmatprep.subr.mxu0 0.0
        %8538 = vmatpush2.msra.mxu0 0.0
        %8539 = vmatprep.subr.mxu0 0.0
        %8540 = vmatpush2.msra.mxu0 0.0
        %8541 = vmatprep.subr.mxu0 0.0
        %8542 = vmatpush2.msra.mxu0 0.0
        %8543 = vmatprep.subr.mxu0 0.0
        %8544 = vmatpush2.msra.mxu0 0.0
        %8545 = vmatprep.subr.mxu0 0.0
        %8546 = vmatpush2.msra.mxu0 0.0
        %8547 = vmatprep.subr.mxu0 0.0
        %8548 = vmatpush2.msra.mxu0 0.0
        %8549 = vmatprep.subr.mxu0 0.0
        %8550 = vmatpush2.msra.mxu0 0.0
        %8551 = vmatprep.subr.mxu0 0.0
        %8552 = vmatpush2.msra.mxu0 0.0
        %8553 = vmatprep.subr.mxu0 0.0
        %8554 = vmatpush2.msra.mxu0 0.0
        %8555 = vmatprep.subr.mxu0 0.0
        %8556 = vmatpush2.msra.mxu0 0.0
        %8557 = vmatprep.subr.mxu0 0.0
        %8558 = vmatpush2.msra.mxu0 0.0
        %8559 = vmatprep.subr.mxu0 0.0
        %8560 = vmatpush2.msra.mxu0 0.0
        %8561 = vmatprep.subr.mxu0 0.0
        %8562 = vmatpush2.msra.mxu0 0.0
        %8563 = vmatprep.subr.mxu0 0.0
        %8564 = vmatpush2.msra.mxu0 0.0
        %8565 = vmatprep.subr.mxu0 0.0
        %8566 = vmatpush2.msra.mxu0 0.0
        %8567 = vmatprep.subr.mxu0 0.0
        %8568 = vmatpush2.msra.mxu0 0.0
        %8569 = vmatprep.mubr.f32.mxu0 0.0
        %8570 = vmatmul.mubr.f32.gmra.mxu0 %v8503
        %v8571 = vpop.f32.mrf.mxu0
        %v8572 = vadd.f32 %v8500, %v8571
        %v8573 = vpop.f32.mrf.mxu0
        %8574 = vdwg.mxu0
        %vm8575 = vcmask 7168
        %8576 = vst.msk [vmem:[%s180] sm:$0xff] %vm8575, %v8572
        %p8577 = scmp.lt.s32.totalorder %s15, 1
        %s8578 = scalar_select %p8577, %s15, 1
        %s8579 = smul.addr %s8578, 8
        %s8580 = scalar_lea.vmem %s3, %s8579
        // Predicated region
        $region37: #{tpu_custom_call.1} parent=31 // pred_check
          %p8581 = pneg %p101
        $region38: #{tpu_custom_call.1} parent=31 // pred_check_branch
          %8583 = sbr.rel (%p8581) target = $region40
        $region39: #{tpu_custom_call.1} parent=31 // pred_region
          _
        $region40: #{tpu_custom_call.1} parent=31 // pred_fallthru
          _
      $region32: #{tpu_custom_call.1} parent=5 // pred_fallthru
        _
      %p8584 = scmp.le.s32.totalorder 2, %s10
      // Predicated region
      $region41: #{tpu_custom_call.1} parent=5 // pred_check
        %p8585 = pneg %p8584
      $region42: #{tpu_custom_call.1} parent=5 // pred_check_branch
        %8587 = sbr.rel (%p8585) target = $region44
      $region43: #{tpu_custom_call.1} parent=5 // pred_region
        %s8588 = ssub.s32 %s10, 2
        // Predicated region
        $region45: #{tpu_custom_call.1} parent=43 // pred_check
          %p8589 = pneg %p107
        $region46: #{tpu_custom_call.1} parent=43 // pred_check_branch
          %8591 = sbr.rel (%p8589) target = $region48
        $region47: #{tpu_custom_call.1} parent=43 // pred_region
          %p8592 = scmp.lt.s32.totalorder %s16, 1
          %s8593 = scalar_select %p8592, %s16, 1
          %s8594 = smul.addr %s8593, 8
          %s8595 = scalar_lea.vmem %s3, %s8594
        $region48: #{tpu_custom_call.1} parent=43 // pred_fallthru
          _
      $region44: #{tpu_custom_call.1} parent=5 // pred_fallthru
        _
    $region6: #{tpu_custom_call.1} parent=1 // loop_footer
      %s14 = sadd.s32 1, %s10
    $region7: #{tpu_custom_call.1} parent=1 // loop_footer_branch
      %9 = sbr.rel target = $region3
    $region8: #{tpu_custom_call.1} parent=1 // loop_exit
      _
    %8596 = vsyncpa [#allocation3], 1
    %s8597 = scalar_lea.sflag [#allocation3], 1
    %8598 = vsyncpa %s8597, 1

</llo_original>
